<compile_context>
chip_gen: v7x
topology: tpu7x:2x2x1
jax: 0.10.0
libtpu: 0.0.40
codegen_flags: <defaults>
</compile_context>

<pallas_src>
import jax
import jax.numpy as jnp
from jax.experimental import pallas as pl
from jax.experimental.pallas import tpu as pltpu

IN_FEATURES = 49152          # 3 * 128 * 128, fixed by nn.Linear(49152, 2)
OUT_FEATURES = 2


def dense_kernel(x_ref, w_ref, b_ref, o_ref):
    """y = x @ W^T + b with W in PyTorch (out, in) layout and out = 2.

    x_ref: (B, K) f32
    w_ref: (2, K) f32      (unpadded, natural layout: sublane dim = 2, lane dim = K)
    b_ref: (1, 2) f32
    o_ref: (B, 2) f32
    """
    x = x_ref[...]                                               # (B, K)

    # One elementwise multiply + lane reduction per output feature (N=2).
    # Pure VPU + XLU work; no lane-padded weights, no MXU needed at N=2.
    y0 = jnp.sum(x * w_ref[0:1, :], axis=-1, keepdims=True)      # (B, 1)
    y1 = jnp.sum(x * w_ref[1:2, :], axis=-1, keepdims=True)      # (B, 1)

    # Assemble the (B, 2) result without a lane-concat: select column 0 vs 1.
    col = jax.lax.broadcasted_iota(jnp.int32, o_ref.shape, dimension=1)
    y = jnp.where(col == 0, y0, y1) + b_ref[...]                 # (B, 2)
    o_ref[...] = y.astype(o_ref.dtype)


@jax.jit
def dense_forward(x, weight, bias):
    """Equivalent of Dense.forward: flatten NCHW input, apply Linear(49152, 2).

    x:      (B, 3, 128, 128) float32
    weight: (2, 49152) float32   (PyTorch nn.Linear layout: out x in, passed as-is)
    bias:   (2,) float32
    returns (B, 2) float32
    """
    B = x.shape[0]
    x_flat = x.reshape((B, -1))                 # (B, K) — metadata-only reshape
    K = x_flat.shape[1]
    assert K == IN_FEATURES

    b2d = bias.reshape((1, OUT_FEATURES))       # tiny, resident bias block

    return pl.pallas_call(
        dense_kernel,
        out_shape=jax.ShapeDtypeStruct((B, OUT_FEATURES), jnp.float32),
        grid_spec=pltpu.PrefetchScalarGridSpec(
            num_scalar_prefetch=0,
            grid=(1,),                                            # whole K resident, one step
            in_specs=[
                pl.BlockSpec((B, K), lambda i: (0, 0)),           # x, full block
                pl.BlockSpec((OUT_FEATURES, K), lambda i: (0, 0)),  # weight, unpadded
                pl.BlockSpec((1, OUT_FEATURES), lambda i: (0, 0)),  # bias
            ],
            out_specs=pl.BlockSpec((B, OUT_FEATURES), lambda i: (0, 0)),
        ),
        compiler_params=pltpu.CompilerParams(
            dimension_semantics=("arbitrary",),
        ),
    )(x_flat, weight, b2d)


if __name__ == "__main__":
    key = jax.random.PRNGKey(0)
    kx, kw, kb = jax.random.split(key, 3)

    B = 2
    # Input consistent with 49152 = 3 * 128 * 128 flattened features (NCHW).
    x = jax.random.normal(kx, (B, 3, 128, 128), dtype=jnp.float32)

    # Parameter init matching nn.Linear(49152, 2) shapes (PyTorch-default-like
    # uniform in [-1/sqrt(in_features), 1/sqrt(in_features)]).
    bound = 1.0 / (IN_FEATURES ** 0.5)
    weight = jax.random.uniform(
        kw, (OUT_FEATURES, IN_FEATURES), dtype=jnp.float32, minval=-bound, maxval=bound
    )
    bias = jax.random.uniform(
        kb, (OUT_FEATURES,), dtype=jnp.float32, minval=-bound, maxval=bound
    )

    y = dense_forward(x, weight, bias)
    y = jax.block_until_ready(y)

    # Sanity check against plain-JAX reference.
    y_ref = x.reshape((B, -1)) @ weight.T + bias
    assert y.shape == (B, OUT_FEATURES)
    assert jnp.allclose(y, y_ref, atol=1e-3, rtol=1e-3)

    print("KERNEL_OK")
</pallas_src>

<mosaic_0001>
module attributes {stable_mosaic.version = 11 : i64} {
  func.func @dense_kernel(%arg0: i32, %arg1: memref<2x49152xf32, #tpu.memory_space<vmem>>, %arg2: memref<2x49152xf32, #tpu.memory_space<vmem>>, %arg3: memref<1x2xf32, #tpu.memory_space<vmem>>, %arg4: memref<2x2xf32, #tpu.memory_space<vmem>>) attributes {dimension_semantics = [#tpu.dimension_semantics<arbitrary>], iteration_bounds = array<i64: 1>, scalar_prefetch = 0 : i64, scratch_operands = 0 : i64, tpu.core_type = #tpu.core_type<tc>, window_params = [{pipeline_mode = #tpu.pipeline_mode<synchronous>, transform_indices = @transform_0, window_bounds = array<i64: 2, 49152>}, {pipeline_mode = #tpu.pipeline_mode<synchronous>, transform_indices = @transform_1, window_bounds = array<i64: 2, 49152>}, {pipeline_mode = #tpu.pipeline_mode<synchronous>, transform_indices = @transform_2, window_bounds = array<i64: 1, 2>}, {pipeline_mode = #tpu.pipeline_mode<synchronous>, transform_indices = @transform_3, window_bounds = array<i64: 2, 2>}]} {
    %c0 = arith.constant 0 : index
    %c0_0 = arith.constant 0 : index
    %0 = vector.load %arg1[%c0, %c0_0] : memref<2x49152xf32, #tpu.memory_space<vmem>>, vector<2x49152xf32>
    %c0_1 = arith.constant 0 : index
    %c0_2 = arith.constant 0 : index
    %1 = vector.load %arg2[%c0_1, %c0_2] : memref<2x49152xf32, #tpu.memory_space<vmem>>, vector<1x49152xf32>
    %2 = vector.broadcast %1 : vector<1x49152xf32> to vector<2x49152xf32>
    %3 = arith.mulf %0, %2 : vector<2x49152xf32>
    %cst = arith.constant dense<0.000000e+00> : vector<2xf32>
    %4 = vector.multi_reduction <add>, %3, %cst [1] : vector<2x49152xf32> to vector<2xf32>
    %5 = vector.shape_cast %4 : vector<2xf32> to vector<2x1xf32>
    %c1 = arith.constant 1 : index
    %c0_3 = arith.constant 0 : index
    %6 = vector.load %arg2[%c1, %c0_3] : memref<2x49152xf32, #tpu.memory_space<vmem>>, vector<1x49152xf32>
    %7 = vector.broadcast %6 : vector<1x49152xf32> to vector<2x49152xf32>
    %8 = arith.mulf %0, %7 : vector<2x49152xf32>
    %cst_4 = arith.constant dense<0.000000e+00> : vector<2xf32>
    %9 = vector.multi_reduction <add>, %8, %cst_4 [1] : vector<2x49152xf32> to vector<2xf32>
    %10 = vector.shape_cast %9 : vector<2xf32> to vector<2x1xf32>
    %11 = tpu.iota {dimensions = array<i32: 1>} : vector<2x2xi32>
    %c0_i32 = arith.constant 0 : i32
    %12 = vector.broadcast %c0_i32 : i32 to vector<2x2xi32>
    %13 = arith.cmpi eq, %11, %12 : vector<2x2xi32>
    %14 = vector.shape_cast %5 : vector<2x1xf32> to vector<2x1xf32>
    %15 = vector.broadcast %14 : vector<2x1xf32> to vector<2x2xf32>
    %16 = vector.shape_cast %10 : vector<2x1xf32> to vector<2x1xf32>
    %17 = vector.broadcast %16 : vector<2x1xf32> to vector<2x2xf32>
    %18 = arith.select %13, %15, %17 : vector<2x2xi1>, vector<2x2xf32>
    %c0_5 = arith.constant 0 : index
    %c0_6 = arith.constant 0 : index
    %19 = vector.load %arg3[%c0_5, %c0_6] : memref<1x2xf32, #tpu.memory_space<vmem>>, vector<1x2xf32>
    %20 = vector.broadcast %19 : vector<1x2xf32> to vector<2x2xf32>
    %21 = arith.addf %18, %20 : vector<2x2xf32>
    %c0_7 = arith.constant 0 : index
    %c0_8 = arith.constant 0 : index
    %22 = vector.load %arg4[%c0_7, %c0_8] : memref<2x2xf32, #tpu.memory_space<vmem>>, vector<2x2xf32>
    tpu.vector_store %arg4[%c0_7, %c0_8], %21 {strides = array<i32>} : memref<2x2xf32, #tpu.memory_space<vmem>>, vector<2x2xf32>,
    return
  }
  func.func @transform_0(%arg0: i32) -> (i32, i32) {
    %c0_i32 = arith.constant 0 : i32
    %c0_i32_0 = arith.constant 0 : i32
    %c0_i32_1 = arith.constant 0 : i32
    return %c0_i32, %c0_i32_0 : i32, i32
  }
  func.func @transform_1(%arg0: i32) -> (i32, i32) {
    %c0_i32 = arith.constant 0 : i32
    %c0_i32_0 = arith.constant 0 : i32
    %c0_i32_1 = arith.constant 0 : i32
    return %c0_i32, %c0_i32_0 : i32, i32
  }
  func.func @transform_2(%arg0: i32) -> (i32, i32) {
    %c0_i32 = arith.constant 0 : i32
    %c0_i32_0 = arith.constant 0 : i32
    %c0_i32_1 = arith.constant 0 : i32
    return %c0_i32, %c0_i32_0 : i32, i32
  }
  func.func @transform_3(%arg0: i32) -> (i32, i32) {
    %c0_i32 = arith.constant 0 : i32
    %c0_i32_0 = arith.constant 0 : i32
    %c0_i32_1 = arith.constant 0 : i32
    return %c0_i32, %c0_i32_0 : i32, i32
  }
}

</mosaic_0001>

<llo_original>
// kernel: dense_forward.1
$region0: #{dense_forward.1}
  #allocation0 [shape = 'u32[]', space=smem, size = 0x4, offset = 0x4, fixed_abs, tag = 'smem constant byte address 0x4 - core index']
  #allocation1 [shape = 'u32[144,128]{1,0:T(1,128)}', space=vmem, size = 0x12000, scoped, tag = 'internal scratch']
  %s0 = inlined_call_operand.vmem [shape: f32[2,49152], index: 0, kind: input, shape index: {}]
  %s1 = inlined_call_operand.vmem [shape: f32[2,49152], index: 1, kind: input, shape index: {}]
  %s2 = inlined_call_operand.vmem [shape: f32[1,2], index: 2, kind: input, shape index: {}]
  %s3 = inlined_call_operand.hbm [shape: f32[2,2], index: 3, kind: output, shape index: {}]
  %s4 = sld [smem:[#allocation0]]
  $region22: #{dense_forward.1} parent=0
    _
  %s6 = ssub.s32 1, %s4
  %s7 = scalar_select 0, %s6, %s4
  $region1: #{dense_forward.1} parent=0
    #allocation2 [shape = 'u8[1024]{0}', space=vmem, size = 0x400, scoped, tag = 'output window, operand 0, single buffered']
    #allocation3 [shape = 's32[1]{0}', space=sflag, size = 0x4, scoped, tag = 'scoped memory for dense_forward.1']
    %8 = vsyncpa [#allocation3], 0
    // Predicated region
    $region2: #{dense_forward.1} parent=1 // pred_check
      _
    $region3: #{dense_forward.1} parent=1 // pred_check_branch
      %10 = sbr.rel (0) target = $region5
    $region4: #{dense_forward.1} parent=1 // pred_region
      _
    $region5: #{dense_forward.1} parent=1 // pred_fallthru
      _
    // Predicated region
    $region6: #{dense_forward.1} parent=1 // pred_check
      _
    $region7: #{dense_forward.1} parent=1 // pred_check_branch
      %12 = sbr.rel (0) target = $region9
    $region8: #{dense_forward.1} parent=1 // pred_region
      _
    $region9: #{dense_forward.1} parent=1 // pred_fallthru
      _
    // Predicated region
    $region10: #{dense_forward.1} parent=1 // pred_check
      _
    $region11: #{dense_forward.1} parent=1 // pred_check_branch
      %14 = sbr.rel (0) target = $region13
    $region12: #{dense_forward.1} parent=1 // pred_region
      _
    $region13: #{dense_forward.1} parent=1 // pred_fallthru
      _
    %v15 = vld [vmem:[%s0] sm:$0xff]
    %v16 = vld [vmem:[%s0 + $0x8] sm:$0xff]
    %v17 = vld [vmem:[%s0 + $0x10] sm:$0xff]
    %v18 = vld [vmem:[%s0 + $0x18] sm:$0xff]
    %v19 = vld [vmem:[%s0 + $0x20] sm:$0xff]
    %v20 = vld [vmem:[%s0 + $0x28] sm:$0xff]
    %v21 = vld [vmem:[%s0 + $0x30] sm:$0xff]
    %v22 = vld [vmem:[%s0 + $0x38] sm:$0xff]
    %v23 = vld [vmem:[%s0 + $0x40] sm:$0xff]
    %v24 = vld [vmem:[%s0 + $0x48] sm:$0xff]
    %v25 = vld [vmem:[%s0 + $0x50] sm:$0xff]
    %v26 = vld [vmem:[%s0 + $0x58] sm:$0xff]
    %v27 = vld [vmem:[%s0 + $0x60] sm:$0xff]
    %v28 = vld [vmem:[%s0 + $0x68] sm:$0xff]
    %v29 = vld [vmem:[%s0 + $0x70] sm:$0xff]
    %v30 = vld [vmem:[%s0 + $0x78] sm:$0xff]
    %v31 = vld [vmem:[%s0 + $0x80] sm:$0xff]
    %v32 = vld [vmem:[%s0 + $0x88] sm:$0xff]
    %v33 = vld [vmem:[%s0 + $0x90] sm:$0xff]
    %v34 = vld [vmem:[%s0 + $0x98] sm:$0xff]
    %v35 = vld [vmem:[%s0 + $0xa0] sm:$0xff]
    %v36 = vld [vmem:[%s0 + $0xa8] sm:$0xff]
    %v37 = vld [vmem:[%s0 + $0xb0] sm:$0xff]
    %v38 = vld [vmem:[%s0 + $0xb8] sm:$0xff]
    %v39 = vld [vmem:[%s0 + $0xc0] sm:$0xff]
    %v40 = vld [vmem:[%s0 + $0xc8] sm:$0xff]
    %v41 = vld [vmem:[%s0 + $0xd0] sm:$0xff]
    %v42 = vld [vmem:[%s0 + $0xd8] sm:$0xff]
    %v43 = vld [vmem:[%s0 + $0xe0] sm:$0xff]
    %v44 = vld [vmem:[%s0 + $0xe8] sm:$0xff]
    %v45 = vld [vmem:[%s0 + $0xf0] sm:$0xff]
    %v46 = vld [vmem:[%s0 + $0xf8] sm:$0xff]
    %v47 = vld [vmem:[%s0 + $0x100] sm:$0xff]
    %v48 = vld [vmem:[%s0 + $0x108] sm:$0xff]
    %v49 = vld [vmem:[%s0 + $0x110] sm:$0xff]
    %v50 = vld [vmem:[%s0 + $0x118] sm:$0xff]
    %v51 = vld [vmem:[%s0 + $0x120] sm:$0xff]
    %v52 = vld [vmem:[%s0 + $0x128] sm:$0xff]
    %v53 = vld [vmem:[%s0 + $0x130] sm:$0xff]
    %v54 = vld [vmem:[%s0 + $0x138] sm:$0xff]
    %v55 = vld [vmem:[%s0 + $0x140] sm:$0xff]
    %v56 = vld [vmem:[%s0 + $0x148] sm:$0xff]
    %v57 = vld [vmem:[%s0 + $0x150] sm:$0xff]
    %v58 = vld [vmem:[%s0 + $0x158] sm:$0xff]
    %v59 = vld [vmem:[%s0 + $0x160] sm:$0xff]
    %v60 = vld [vmem:[%s0 + $0x168] sm:$0xff]
    %v61 = vld [vmem:[%s0 + $0x170] sm:$0xff]
    %v62 = vld [vmem:[%s0 + $0x178] sm:$0xff]
    %v63 = vld [vmem:[%s0 + $0x180] sm:$0xff]
    %v64 = vld [vmem:[%s0 + $0x188] sm:$0xff]
    %v65 = vld [vmem:[%s0 + $0x190] sm:$0xff]
    %v66 = vld [vmem:[%s0 + $0x198] sm:$0xff]
    %v67 = vld [vmem:[%s0 + $0x1a0] sm:$0xff]
    %v68 = vld [vmem:[%s0 + $0x1a8] sm:$0xff]
    %v69 = vld [vmem:[%s0 + $0x1b0] sm:$0xff]
    %v70 = vld [vmem:[%s0 + $0x1b8] sm:$0xff]
    %v71 = vld [vmem:[%s0 + $0x1c0] sm:$0xff]
    %v72 = vld [vmem:[%s0 + $0x1c8] sm:$0xff]
    %v73 = vld [vmem:[%s0 + $0x1d0] sm:$0xff]
    %v74 = vld [vmem:[%s0 + $0x1d8] sm:$0xff]
    %v75 = vld [vmem:[%s0 + $0x1e0] sm:$0xff]
    %v76 = vld [vmem:[%s0 + $0x1e8] sm:$0xff]
    %v77 = vld [vmem:[%s0 + $0x1f0] sm:$0xff]
    %v78 = vld [vmem:[%s0 + $0x1f8] sm:$0xff]
    %v79 = vld [vmem:[%s0 + $0x200] sm:$0xff]
    %v80 = vld [vmem:[%s0 + $0x208] sm:$0xff]
    %v81 = vld [vmem:[%s0 + $0x210] sm:$0xff]
    %v82 = vld [vmem:[%s0 + $0x218] sm:$0xff]
    %v83 = vld [vmem:[%s0 + $0x220] sm:$0xff]
    %v84 = vld [vmem:[%s0 + $0x228] sm:$0xff]
    %v85 = vld [vmem:[%s0 + $0x230] sm:$0xff]
    %v86 = vld [vmem:[%s0 + $0x238] sm:$0xff]
    %v87 = vld [vmem:[%s0 + $0x240] sm:$0xff]
    %v88 = vld [vmem:[%s0 + $0x248] sm:$0xff]
    %v89 = vld [vmem:[%s0 + $0x250] sm:$0xff]
    %v90 = vld [vmem:[%s0 + $0x258] sm:$0xff]
    %v91 = vld [vmem:[%s0 + $0x260] sm:$0xff]
    %v92 = vld [vmem:[%s0 + $0x268] sm:$0xff]
    %v93 = vld [vmem:[%s0 + $0x270] sm:$0xff]
    %v94 = vld [vmem:[%s0 + $0x278] sm:$0xff]
    %v95 = vld [vmem:[%s0 + $0x280] sm:$0xff]
    %v96 = vld [vmem:[%s0 + $0x288] sm:$0xff]
    %v97 = vld [vmem:[%s0 + $0x290] sm:$0xff]
    %v98 = vld [vmem:[%s0 + $0x298] sm:$0xff]
    %v99 = vld [vmem:[%s0 + $0x2a0] sm:$0xff]
    %v100 = vld [vmem:[%s0 + $0x2a8] sm:$0xff]
    %v101 = vld [vmem:[%s0 + $0x2b0] sm:$0xff]
    %v102 = vld [vmem:[%s0 + $0x2b8] sm:$0xff]
    %v103 = vld [vmem:[%s0 + $0x2c0] sm:$0xff]
    %v104 = vld [vmem:[%s0 + $0x2c8] sm:$0xff]
    %v105 = vld [vmem:[%s0 + $0x2d0] sm:$0xff]
    %v106 = vld [vmem:[%s0 + $0x2d8] sm:$0xff]
    %v107 = vld [vmem:[%s0 + $0x2e0] sm:$0xff]
    %v108 = vld [vmem:[%s0 + $0x2e8] sm:$0xff]
    %v109 = vld [vmem:[%s0 + $0x2f0] sm:$0xff]
    %v110 = vld [vmem:[%s0 + $0x2f8] sm:$0xff]
    %v111 = vld [vmem:[%s1] ss:$2 sm:$0xff]
    %s112 = scalar_lea.vmem %s1, 16
    %v113 = vld [vmem:[%s112] ss:$2 sm:$0xff]
    %s114 = scalar_lea.vmem %s1, 32
    %v115 = vld [vmem:[%s114] ss:$2 sm:$0xff]
    %s116 = scalar_lea.vmem %s1, 48
    %v117 = vld [vmem:[%s116] ss:$2 sm:$0xff]
    %s118 = scalar_lea.vmem %s1, 64
    %v119 = vld [vmem:[%s118] ss:$2 sm:$0xff]
    %s120 = scalar_lea.vmem %s1, 80
    %v121 = vld [vmem:[%s120] ss:$2 sm:$0xff]
    %s122 = scalar_lea.vmem %s1, 96
    %v123 = vld [vmem:[%s122] ss:$2 sm:$0xff]
    %s124 = scalar_lea.vmem %s1, 112
    %v125 = vld [vmem:[%s124] ss:$2 sm:$0xff]
    %s126 = scalar_lea.vmem %s1, 128
    %v127 = vld [vmem:[%s126] ss:$2 sm:$0xff]
    %s128 = scalar_lea.vmem %s1, 144
    %v129 = vld [vmem:[%s128] ss:$2 sm:$0xff]
    %s130 = scalar_lea.vmem %s1, 160
    %v131 = vld [vmem:[%s130] ss:$2 sm:$0xff]
    %s132 = scalar_lea.vmem %s1, 176
    %v133 = vld [vmem:[%s132] ss:$2 sm:$0xff]
    %s134 = scalar_lea.vmem %s1, 192
    %v135 = vld [vmem:[%s134] ss:$2 sm:$0xff]
    %s136 = scalar_lea.vmem %s1, 208
    %v137 = vld [vmem:[%s136] ss:$2 sm:$0xff]
    %s138 = scalar_lea.vmem %s1, 224
    %v139 = vld [vmem:[%s138] ss:$2 sm:$0xff]
    %s140 = scalar_lea.vmem %s1, 240
    %v141 = vld [vmem:[%s140] ss:$2 sm:$0xff]
    %s142 = scalar_lea.vmem %s1, 256
    %v143 = vld [vmem:[%s142] ss:$2 sm:$0xff]
    %s144 = scalar_lea.vmem %s1, 272
    %v145 = vld [vmem:[%s144] ss:$2 sm:$0xff]
    %s146 = scalar_lea.vmem %s1, 288
    %v147 = vld [vmem:[%s146] ss:$2 sm:$0xff]
    %s148 = scalar_lea.vmem %s1, 304
    %v149 = vld [vmem:[%s148] ss:$2 sm:$0xff]
    %s150 = scalar_lea.vmem %s1, 320
    %v151 = vld [vmem:[%s150] ss:$2 sm:$0xff]
    %s152 = scalar_lea.vmem %s1, 336
    %v153 = vld [vmem:[%s152] ss:$2 sm:$0xff]
    %s154 = scalar_lea.vmem %s1, 352
    %v155 = vld [vmem:[%s154] ss:$2 sm:$0xff]
    %s156 = scalar_lea.vmem %s1, 368
    %v157 = vld [vmem:[%s156] ss:$2 sm:$0xff]
    %s158 = scalar_lea.vmem %s1, 384
    %v159 = vld [vmem:[%s158] ss:$2 sm:$0xff]
    %s160 = scalar_lea.vmem %s1, 400
    %v161 = vld [vmem:[%s160] ss:$2 sm:$0xff]
    %s162 = scalar_lea.vmem %s1, 416
    %v163 = vld [vmem:[%s162] ss:$2 sm:$0xff]
    %s164 = scalar_lea.vmem %s1, 432
    %v165 = vld [vmem:[%s164] ss:$2 sm:$0xff]
    %s166 = scalar_lea.vmem %s1, 448
    %v167 = vld [vmem:[%s166] ss:$2 sm:$0xff]
    %s168 = scalar_lea.vmem %s1, 464
    %v169 = vld [vmem:[%s168] ss:$2 sm:$0xff]
    %s170 = scalar_lea.vmem %s1, 480
    %v171 = vld [vmem:[%s170] ss:$2 sm:$0xff]
    %s172 = scalar_lea.vmem %s1, 496
    %v173 = vld [vmem:[%s172] ss:$2 sm:$0xff]
    %s174 = scalar_lea.vmem %s1, 512
    %v175 = vld [vmem:[%s174] ss:$2 sm:$0xff]
    %s176 = scalar_lea.vmem %s1, 528
    %v177 = vld [vmem:[%s176] ss:$2 sm:$0xff]
    %s178 = scalar_lea.vmem %s1, 544
    %v179 = vld [vmem:[%s178] ss:$2 sm:$0xff]
    %s180 = scalar_lea.vmem %s1, 560
    %v181 = vld [vmem:[%s180] ss:$2 sm:$0xff]
    %s182 = scalar_lea.vmem %s1, 576
    %v183 = vld [vmem:[%s182] ss:$2 sm:$0xff]
    %s184 = scalar_lea.vmem %s1, 592
    %v185 = vld [vmem:[%s184] ss:$2 sm:$0xff]
    %s186 = scalar_lea.vmem %s1, 608
    %v187 = vld [vmem:[%s186] ss:$2 sm:$0xff]
    %s188 = scalar_lea.vmem %s1, 624
    %v189 = vld [vmem:[%s188] ss:$2 sm:$0xff]
    %s190 = scalar_lea.vmem %s1, 640
    %v191 = vld [vmem:[%s190] ss:$2 sm:$0xff]
    %s192 = scalar_lea.vmem %s1, 656
    %v193 = vld [vmem:[%s192] ss:$2 sm:$0xff]
    %s194 = scalar_lea.vmem %s1, 672
    %v195 = vld [vmem:[%s194] ss:$2 sm:$0xff]
    %s196 = scalar_lea.vmem %s1, 688
    %v197 = vld [vmem:[%s196] ss:$2 sm:$0xff]
    %s198 = scalar_lea.vmem %s1, 704
    %v199 = vld [vmem:[%s198] ss:$2 sm:$0xff]
    %s200 = scalar_lea.vmem %s1, 720
    %v201 = vld [vmem:[%s200] ss:$2 sm:$0xff]
    %s202 = scalar_lea.vmem %s1, 736
    %v203 = vld [vmem:[%s202] ss:$2 sm:$0xff]
    %s204 = scalar_lea.vmem %s1, 752
    %v205 = vld [vmem:[%s204] ss:$2 sm:$0xff]
    %v254 = vlaneseq
    %v255 = vshrl.u32 %v254, 7
    %v256 = vsub.s32 0, %v255
    %v257 = vrot.slane %v111, %v256
    %v258 = vlaneseq
    %v259 = vshrl.u32 %v258, 7
    %v260 = vsub.s32 1, %v259
    %v261 = vrot.slane %v111, %v260
    %v262 = vlaneseq
    %v263 = vshrl.u32 %v262, 7
    %v264 = vsub.s32 2, %v263
    %v265 = vrot.slane %v111, %v264
    %v266 = vlaneseq
    %v267 = vshrl.u32 %v266, 7
    %v268 = vsub.s32 3, %v267
    %v269 = vrot.slane %v111, %v268
    %v270 = vlaneseq
    %v271 = vshrl.u32 %v270, 7
    %v272 = vsub.s32 4, %v271
    %v273 = vrot.slane %v111, %v272
    %v274 = vlaneseq
    %v275 = vshrl.u32 %v274, 7
    %v276 = vsub.s32 5, %v275
    %v277 = vrot.slane %v111, %v276
    %v278 = vlaneseq
    %v279 = vshrl.u32 %v278, 7
    %v280 = vsub.s32 6, %v279
    %v281 = vrot.slane %v111, %v280
    %v282 = vlaneseq
    %v283 = vshrl.u32 %v282, 7
    %v284 = vsub.s32 7, %v283
    %v285 = vrot.slane %v111, %v284
    %v286 = vlaneseq
    %v287 = vshrl.u32 %v286, 7
    %v288 = vsub.s32 0, %v287
    %v289 = vrot.slane %v113, %v288
    %v290 = vlaneseq
    %v291 = vshrl.u32 %v290, 7
    %v292 = vsub.s32 1, %v291
    %v293 = vrot.slane %v113, %v292
    %v294 = vlaneseq
    %v295 = vshrl.u32 %v294, 7
    %v296 = vsub.s32 2, %v295
    %v297 = vrot.slane %v113, %v296
    %v298 = vlaneseq
    %v299 = vshrl.u32 %v298, 7
    %v300 = vsub.s32 3, %v299
    %v301 = vrot.slane %v113, %v300
    %v302 = vlaneseq
    %v303 = vshrl.u32 %v302, 7
    %v304 = vsub.s32 4, %v303
    %v305 = vrot.slane %v113, %v304
    %v306 = vlaneseq
    %v307 = vshrl.u32 %v306, 7
    %v308 = vsub.s32 5, %v307
    %v309 = vrot.slane %v113, %v308
    %v310 = vlaneseq
    %v311 = vshrl.u32 %v310, 7
    %v312 = vsub.s32 6, %v311
    %v313 = vrot.slane %v113, %v312
    %v314 = vlaneseq
    %v315 = vshrl.u32 %v314, 7
    %v316 = vsub.s32 7, %v315
    %v317 = vrot.slane %v113, %v316
    %v318 = vlaneseq
    %v319 = vshrl.u32 %v318, 7
    %v320 = vsub.s32 0, %v319
    %v321 = vrot.slane %v115, %v320
    %v322 = vlaneseq
    %v323 = vshrl.u32 %v322, 7
    %v324 = vsub.s32 1, %v323
    %v325 = vrot.slane %v115, %v324
    %v326 = vlaneseq
    %v327 = vshrl.u32 %v326, 7
    %v328 = vsub.s32 2, %v327
    %v329 = vrot.slane %v115, %v328
    %v330 = vlaneseq
    %v331 = vshrl.u32 %v330, 7
    %v332 = vsub.s32 3, %v331
    %v333 = vrot.slane %v115, %v332
    %v334 = vlaneseq
    %v335 = vshrl.u32 %v334, 7
    %v336 = vsub.s32 4, %v335
    %v337 = vrot.slane %v115, %v336
    %v338 = vlaneseq
    %v339 = vshrl.u32 %v338, 7
    %v340 = vsub.s32 5, %v339
    %v341 = vrot.slane %v115, %v340
    %v342 = vlaneseq
    %v343 = vshrl.u32 %v342, 7
    %v344 = vsub.s32 6, %v343
    %v345 = vrot.slane %v115, %v344
    %v346 = vlaneseq
    %v347 = vshrl.u32 %v346, 7
    %v348 = vsub.s32 7, %v347
    %v349 = vrot.slane %v115, %v348
    %v350 = vlaneseq
    %v351 = vshrl.u32 %v350, 7
    %v352 = vsub.s32 0, %v351
    %v353 = vrot.slane %v117, %v352
    %v354 = vlaneseq
    %v355 = vshrl.u32 %v354, 7
    %v356 = vsub.s32 1, %v355
    %v357 = vrot.slane %v117, %v356
    %v358 = vlaneseq
    %v359 = vshrl.u32 %v358, 7
    %v360 = vsub.s32 2, %v359
    %v361 = vrot.slane %v117, %v360
    %v362 = vlaneseq
    %v363 = vshrl.u32 %v362, 7
    %v364 = vsub.s32 3, %v363
    %v365 = vrot.slane %v117, %v364
    %v366 = vlaneseq
    %v367 = vshrl.u32 %v366, 7
    %v368 = vsub.s32 4, %v367
    %v369 = vrot.slane %v117, %v368
    %v370 = vlaneseq
    %v371 = vshrl.u32 %v370, 7
    %v372 = vsub.s32 5, %v371
    %v373 = vrot.slane %v117, %v372
    %v374 = vlaneseq
    %v375 = vshrl.u32 %v374, 7
    %v376 = vsub.s32 6, %v375
    %v377 = vrot.slane %v117, %v376
    %v378 = vlaneseq
    %v379 = vshrl.u32 %v378, 7
    %v380 = vsub.s32 7, %v379
    %v381 = vrot.slane %v117, %v380
    %v382 = vlaneseq
    %v383 = vshrl.u32 %v382, 7
    %v384 = vsub.s32 0, %v383
    %v385 = vrot.slane %v119, %v384
    %v386 = vlaneseq
    %v387 = vshrl.u32 %v386, 7
    %v388 = vsub.s32 1, %v387
    %v389 = vrot.slane %v119, %v388
    %v390 = vlaneseq
    %v391 = vshrl.u32 %v390, 7
    %v392 = vsub.s32 2, %v391
    %v393 = vrot.slane %v119, %v392
    %v394 = vlaneseq
    %v395 = vshrl.u32 %v394, 7
    %v396 = vsub.s32 3, %v395
    %v397 = vrot.slane %v119, %v396
    %v398 = vlaneseq
    %v399 = vshrl.u32 %v398, 7
    %v400 = vsub.s32 4, %v399
    %v401 = vrot.slane %v119, %v400
    %v402 = vlaneseq
    %v403 = vshrl.u32 %v402, 7
    %v404 = vsub.s32 5, %v403
    %v405 = vrot.slane %v119, %v404
    %v406 = vlaneseq
    %v407 = vshrl.u32 %v406, 7
    %v408 = vsub.s32 6, %v407
    %v409 = vrot.slane %v119, %v408
    %v410 = vlaneseq
    %v411 = vshrl.u32 %v410, 7
    %v412 = vsub.s32 7, %v411
    %v413 = vrot.slane %v119, %v412
    %v414 = vlaneseq
    %v415 = vshrl.u32 %v414, 7
    %v416 = vsub.s32 0, %v415
    %v417 = vrot.slane %v121, %v416
    %v418 = vlaneseq
    %v419 = vshrl.u32 %v418, 7
    %v420 = vsub.s32 1, %v419
    %v421 = vrot.slane %v121, %v420
    %v422 = vlaneseq
    %v423 = vshrl.u32 %v422, 7
    %v424 = vsub.s32 2, %v423
    %v425 = vrot.slane %v121, %v424
    %v426 = vlaneseq
    %v427 = vshrl.u32 %v426, 7
    %v428 = vsub.s32 3, %v427
    %v429 = vrot.slane %v121, %v428
    %v430 = vlaneseq
    %v431 = vshrl.u32 %v430, 7
    %v432 = vsub.s32 4, %v431
    %v433 = vrot.slane %v121, %v432
    %v434 = vlaneseq
    %v435 = vshrl.u32 %v434, 7
    %v436 = vsub.s32 5, %v435
    %v437 = vrot.slane %v121, %v436
    %v438 = vlaneseq
    %v439 = vshrl.u32 %v438, 7
    %v440 = vsub.s32 6, %v439
    %v441 = vrot.slane %v121, %v440
    %v442 = vlaneseq
    %v443 = vshrl.u32 %v442, 7
    %v444 = vsub.s32 7, %v443
    %v445 = vrot.slane %v121, %v444
    %v446 = vlaneseq
    %v447 = vshrl.u32 %v446, 7
    %v448 = vsub.s32 0, %v447
    %v449 = vrot.slane %v123, %v448
    %v450 = vlaneseq
    %v451 = vshrl.u32 %v450, 7
    %v452 = vsub.s32 1, %v451
    %v453 = vrot.slane %v123, %v452
    %v454 = vlaneseq
    %v455 = vshrl.u32 %v454, 7
    %v456 = vsub.s32 2, %v455
    %v457 = vrot.slane %v123, %v456
    %v458 = vlaneseq
    %v459 = vshrl.u32 %v458, 7
    %v460 = vsub.s32 3, %v459
    %v461 = vrot.slane %v123, %v460
    %v462 = vlaneseq
    %v463 = vshrl.u32 %v462, 7
    %v464 = vsub.s32 4, %v463
    %v465 = vrot.slane %v123, %v464
    %v466 = vlaneseq
    %v467 = vshrl.u32 %v466, 7
    %v468 = vsub.s32 5, %v467
    %v469 = vrot.slane %v123, %v468
    %v470 = vlaneseq
    %v471 = vshrl.u32 %v470, 7
    %v472 = vsub.s32 6, %v471
    %v473 = vrot.slane %v123, %v472
    %v474 = vlaneseq
    %v475 = vshrl.u32 %v474, 7
    %v476 = vsub.s32 7, %v475
    %v477 = vrot.slane %v123, %v476
    %v478 = vlaneseq
    %v479 = vshrl.u32 %v478, 7
    %v480 = vsub.s32 0, %v479
    %v481 = vrot.slane %v125, %v480
    %v482 = vlaneseq
    %v483 = vshrl.u32 %v482, 7
    %v484 = vsub.s32 1, %v483
    %v485 = vrot.slane %v125, %v484
    %v486 = vlaneseq
    %v487 = vshrl.u32 %v486, 7
    %v488 = vsub.s32 2, %v487
    %v489 = vrot.slane %v125, %v488
    %v490 = vlaneseq
    %v491 = vshrl.u32 %v490, 7
    %v492 = vsub.s32 3, %v491
    %v493 = vrot.slane %v125, %v492
    %v494 = vlaneseq
    %v495 = vshrl.u32 %v494, 7
    %v496 = vsub.s32 4, %v495
    %v497 = vrot.slane %v125, %v496
    %v498 = vlaneseq
    %v499 = vshrl.u32 %v498, 7
    %v500 = vsub.s32 5, %v499
    %v501 = vrot.slane %v125, %v500
    %v502 = vlaneseq
    %v503 = vshrl.u32 %v502, 7
    %v504 = vsub.s32 6, %v503
    %v505 = vrot.slane %v125, %v504
    %v506 = vlaneseq
    %v507 = vshrl.u32 %v506, 7
    %v508 = vsub.s32 7, %v507
    %v509 = vrot.slane %v125, %v508
    %v510 = vlaneseq
    %v511 = vshrl.u32 %v510, 7
    %v512 = vsub.s32 0, %v511
    %v513 = vrot.slane %v127, %v512
    %v514 = vlaneseq
    %v515 = vshrl.u32 %v514, 7
    %v516 = vsub.s32 1, %v515
    %v517 = vrot.slane %v127, %v516
    %v518 = vlaneseq
    %v519 = vshrl.u32 %v518, 7
    %v520 = vsub.s32 2, %v519
    %v521 = vrot.slane %v127, %v520
    %v522 = vlaneseq
    %v523 = vshrl.u32 %v522, 7
    %v524 = vsub.s32 3, %v523
    %v525 = vrot.slane %v127, %v524
    %v526 = vlaneseq
    %v527 = vshrl.u32 %v526, 7
    %v528 = vsub.s32 4, %v527
    %v529 = vrot.slane %v127, %v528
    %v530 = vlaneseq
    %v531 = vshrl.u32 %v530, 7
    %v532 = vsub.s32 5, %v531
    %v533 = vrot.slane %v127, %v532
    %v534 = vlaneseq
    %v535 = vshrl.u32 %v534, 7
    %v536 = vsub.s32 6, %v535
    %v537 = vrot.slane %v127, %v536
    %v538 = vlaneseq
    %v539 = vshrl.u32 %v538, 7
    %v540 = vsub.s32 7, %v539
    %v541 = vrot.slane %v127, %v540
    %v542 = vlaneseq
    %v543 = vshrl.u32 %v542, 7
    %v544 = vsub.s32 0, %v543
    %v545 = vrot.slane %v129, %v544
    %v546 = vlaneseq
    %v547 = vshrl.u32 %v546, 7
    %v548 = vsub.s32 1, %v547
    %v549 = vrot.slane %v129, %v548
    %v550 = vlaneseq
    %v551 = vshrl.u32 %v550, 7
    %v552 = vsub.s32 2, %v551
    %v553 = vrot.slane %v129, %v552
    %v554 = vlaneseq
    %v555 = vshrl.u32 %v554, 7
    %v556 = vsub.s32 3, %v555
    %v557 = vrot.slane %v129, %v556
    %v558 = vlaneseq
    %v559 = vshrl.u32 %v558, 7
    %v560 = vsub.s32 4, %v559
    %v561 = vrot.slane %v129, %v560
    %v562 = vlaneseq
    %v563 = vshrl.u32 %v562, 7
    %v564 = vsub.s32 5, %v563
    %v565 = vrot.slane %v129, %v564
    %v566 = vlaneseq
    %v567 = vshrl.u32 %v566, 7
    %v568 = vsub.s32 6, %v567
    %v569 = vrot.slane %v129, %v568
    %v570 = vlaneseq
    %v571 = vshrl.u32 %v570, 7
    %v572 = vsub.s32 7, %v571
    %v573 = vrot.slane %v129, %v572
    %v574 = vlaneseq
    %v575 = vshrl.u32 %v574, 7
    %v576 = vsub.s32 0, %v575
    %v577 = vrot.slane %v131, %v576
    %v578 = vlaneseq
    %v579 = vshrl.u32 %v578, 7
    %v580 = vsub.s32 1, %v579
    %v581 = vrot.slane %v131, %v580
    %v582 = vlaneseq
    %v583 = vshrl.u32 %v582, 7
    %v584 = vsub.s32 2, %v583
    %v585 = vrot.slane %v131, %v584
    %v586 = vlaneseq
    %v587 = vshrl.u32 %v586, 7
    %v588 = vsub.s32 3, %v587
    %v589 = vrot.slane %v131, %v588
    %v590 = vlaneseq
    %v591 = vshrl.u32 %v590, 7
    %v592 = vsub.s32 4, %v591
    %v593 = vrot.slane %v131, %v592
    %v594 = vlaneseq
    %v595 = vshrl.u32 %v594, 7
    %v596 = vsub.s32 5, %v595
    %v597 = vrot.slane %v131, %v596
    %v598 = vlaneseq
    %v599 = vshrl.u32 %v598, 7
    %v600 = vsub.s32 6, %v599
    %v601 = vrot.slane %v131, %v600
    %v602 = vlaneseq
    %v603 = vshrl.u32 %v602, 7
    %v604 = vsub.s32 7, %v603
    %v605 = vrot.slane %v131, %v604
    %v606 = vlaneseq
    %v607 = vshrl.u32 %v606, 7
    %v608 = vsub.s32 0, %v607
    %v609 = vrot.slane %v133, %v608
    %v610 = vlaneseq
    %v611 = vshrl.u32 %v610, 7
    %v612 = vsub.s32 1, %v611
    %v613 = vrot.slane %v133, %v612
    %v614 = vlaneseq
    %v615 = vshrl.u32 %v614, 7
    %v616 = vsub.s32 2, %v615
    %v617 = vrot.slane %v133, %v616
    %v618 = vlaneseq
    %v619 = vshrl.u32 %v618, 7
    %v620 = vsub.s32 3, %v619
    %v621 = vrot.slane %v133, %v620
    %v622 = vlaneseq
    %v623 = vshrl.u32 %v622, 7
    %v624 = vsub.s32 4, %v623
    %v625 = vrot.slane %v133, %v624
    %v626 = vlaneseq
    %v627 = vshrl.u32 %v626, 7
    %v628 = vsub.s32 5, %v627
    %v629 = vrot.slane %v133, %v628
    %v630 = vlaneseq
    %v631 = vshrl.u32 %v630, 7
    %v632 = vsub.s32 6, %v631
    %v633 = vrot.slane %v133, %v632
    %v634 = vlaneseq
    %v635 = vshrl.u32 %v634, 7
    %v636 = vsub.s32 7, %v635
    %v637 = vrot.slane %v133, %v636
    %v638 = vlaneseq
    %v639 = vshrl.u32 %v638, 7
    %v640 = vsub.s32 0, %v639
    %v641 = vrot.slane %v135, %v640
    %v642 = vlaneseq
    %v643 = vshrl.u32 %v642, 7
    %v644 = vsub.s32 1, %v643
    %v645 = vrot.slane %v135, %v644
    %v646 = vlaneseq
    %v647 = vshrl.u32 %v646, 7
    %v648 = vsub.s32 2, %v647
    %v649 = vrot.slane %v135, %v648
    %v650 = vlaneseq
    %v651 = vshrl.u32 %v650, 7
    %v652 = vsub.s32 3, %v651
    %v653 = vrot.slane %v135, %v652
    %v654 = vlaneseq
    %v655 = vshrl.u32 %v654, 7
    %v656 = vsub.s32 4, %v655
    %v657 = vrot.slane %v135, %v656
    %v658 = vlaneseq
    %v659 = vshrl.u32 %v658, 7
    %v660 = vsub.s32 5, %v659
    %v661 = vrot.slane %v135, %v660
    %v662 = vlaneseq
    %v663 = vshrl.u32 %v662, 7
    %v664 = vsub.s32 6, %v663
    %v665 = vrot.slane %v135, %v664
    %v666 = vlaneseq
    %v667 = vshrl.u32 %v666, 7
    %v668 = vsub.s32 7, %v667
    %v669 = vrot.slane %v135, %v668
    %v670 = vlaneseq
    %v671 = vshrl.u32 %v670, 7
    %v672 = vsub.s32 0, %v671
    %v673 = vrot.slane %v137, %v672
    %v674 = vlaneseq
    %v675 = vshrl.u32 %v674, 7
    %v676 = vsub.s32 1, %v675
    %v677 = vrot.slane %v137, %v676
    %v678 = vlaneseq
    %v679 = vshrl.u32 %v678, 7
    %v680 = vsub.s32 2, %v679
    %v681 = vrot.slane %v137, %v680
    %v682 = vlaneseq
    %v683 = vshrl.u32 %v682, 7
    %v684 = vsub.s32 3, %v683
    %v685 = vrot.slane %v137, %v684
    %v686 = vlaneseq
    %v687 = vshrl.u32 %v686, 7
    %v688 = vsub.s32 4, %v687
    %v689 = vrot.slane %v137, %v688
    %v690 = vlaneseq
    %v691 = vshrl.u32 %v690, 7
    %v692 = vsub.s32 5, %v691
    %v693 = vrot.slane %v137, %v692
    %v694 = vlaneseq
    %v695 = vshrl.u32 %v694, 7
    %v696 = vsub.s32 6, %v695
    %v697 = vrot.slane %v137, %v696
    %v698 = vlaneseq
    %v699 = vshrl.u32 %v698, 7
    %v700 = vsub.s32 7, %v699
    %v701 = vrot.slane %v137, %v700
    %v702 = vlaneseq
    %v703 = vshrl.u32 %v702, 7
    %v704 = vsub.s32 0, %v703
    %v705 = vrot.slane %v139, %v704
    %v706 = vlaneseq
    %v707 = vshrl.u32 %v706, 7
    %v708 = vsub.s32 1, %v707
    %v709 = vrot.slane %v139, %v708
    %v710 = vlaneseq
    %v711 = vshrl.u32 %v710, 7
    %v712 = vsub.s32 2, %v711
    %v713 = vrot.slane %v139, %v712
    %v714 = vlaneseq
    %v715 = vshrl.u32 %v714, 7
    %v716 = vsub.s32 3, %v715
    %v717 = vrot.slane %v139, %v716
    %v718 = vlaneseq
    %v719 = vshrl.u32 %v718, 7
    %v720 = vsub.s32 4, %v719
    %v721 = vrot.slane %v139, %v720
    %v722 = vlaneseq
    %v723 = vshrl.u32 %v722, 7
    %v724 = vsub.s32 5, %v723
    %v725 = vrot.slane %v139, %v724
    %v726 = vlaneseq
    %v727 = vshrl.u32 %v726, 7
    %v728 = vsub.s32 6, %v727
    %v729 = vrot.slane %v139, %v728
    %v730 = vlaneseq
    %v731 = vshrl.u32 %v730, 7
    %v732 = vsub.s32 7, %v731
    %v733 = vrot.slane %v139, %v732
    %v734 = vlaneseq
    %v735 = vshrl.u32 %v734, 7
    %v736 = vsub.s32 0, %v735
    %v737 = vrot.slane %v141, %v736
    %v738 = vlaneseq
    %v739 = vshrl.u32 %v738, 7
    %v740 = vsub.s32 1, %v739
    %v741 = vrot.slane %v141, %v740
    %v742 = vlaneseq
    %v743 = vshrl.u32 %v742, 7
    %v744 = vsub.s32 2, %v743
    %v745 = vrot.slane %v141, %v744
    %v746 = vlaneseq
    %v747 = vshrl.u32 %v746, 7
    %v748 = vsub.s32 3, %v747
    %v749 = vrot.slane %v141, %v748
    %v750 = vlaneseq
    %v751 = vshrl.u32 %v750, 7
    %v752 = vsub.s32 4, %v751
    %v753 = vrot.slane %v141, %v752
    %v754 = vlaneseq
    %v755 = vshrl.u32 %v754, 7
    %v756 = vsub.s32 5, %v755
    %v757 = vrot.slane %v141, %v756
    %v758 = vlaneseq
    %v759 = vshrl.u32 %v758, 7
    %v760 = vsub.s32 6, %v759
    %v761 = vrot.slane %v141, %v760
    %v762 = vlaneseq
    %v763 = vshrl.u32 %v762, 7
    %v764 = vsub.s32 7, %v763
    %v765 = vrot.slane %v141, %v764
    %v766 = vlaneseq
    %v767 = vshrl.u32 %v766, 7
    %v768 = vsub.s32 0, %v767
    %v769 = vrot.slane %v143, %v768
    %v770 = vlaneseq
    %v771 = vshrl.u32 %v770, 7
    %v772 = vsub.s32 1, %v771
    %v773 = vrot.slane %v143, %v772
    %v774 = vlaneseq
    %v775 = vshrl.u32 %v774, 7
    %v776 = vsub.s32 2, %v775
    %v777 = vrot.slane %v143, %v776
    %v778 = vlaneseq
    %v779 = vshrl.u32 %v778, 7
    %v780 = vsub.s32 3, %v779
    %v781 = vrot.slane %v143, %v780
    %v782 = vlaneseq
    %v783 = vshrl.u32 %v782, 7
    %v784 = vsub.s32 4, %v783
    %v785 = vrot.slane %v143, %v784
    %v786 = vlaneseq
    %v787 = vshrl.u32 %v786, 7
    %v788 = vsub.s32 5, %v787
    %v789 = vrot.slane %v143, %v788
    %v790 = vlaneseq
    %v791 = vshrl.u32 %v790, 7
    %v792 = vsub.s32 6, %v791
    %v793 = vrot.slane %v143, %v792
    %v794 = vlaneseq
    %v795 = vshrl.u32 %v794, 7
    %v796 = vsub.s32 7, %v795
    %v797 = vrot.slane %v143, %v796
    %v798 = vlaneseq
    %v799 = vshrl.u32 %v798, 7
    %v800 = vsub.s32 0, %v799
    %v801 = vrot.slane %v145, %v800
    %v802 = vlaneseq
    %v803 = vshrl.u32 %v802, 7
    %v804 = vsub.s32 1, %v803
    %v805 = vrot.slane %v145, %v804
    %v806 = vlaneseq
    %v807 = vshrl.u32 %v806, 7
    %v808 = vsub.s32 2, %v807
    %v809 = vrot.slane %v145, %v808
    %v810 = vlaneseq
    %v811 = vshrl.u32 %v810, 7
    %v812 = vsub.s32 3, %v811
    %v813 = vrot.slane %v145, %v812
    %v814 = vlaneseq
    %v815 = vshrl.u32 %v814, 7
    %v816 = vsub.s32 4, %v815
    %v817 = vrot.slane %v145, %v816
    %v818 = vlaneseq
    %v819 = vshrl.u32 %v818, 7
    %v820 = vsub.s32 5, %v819
    %v821 = vrot.slane %v145, %v820
    %v822 = vlaneseq
    %v823 = vshrl.u32 %v822, 7
    %v824 = vsub.s32 6, %v823
    %v825 = vrot.slane %v145, %v824
    %v826 = vlaneseq
    %v827 = vshrl.u32 %v826, 7
    %v828 = vsub.s32 7, %v827
    %v829 = vrot.slane %v145, %v828
    %v830 = vlaneseq
    %v831 = vshrl.u32 %v830, 7
    %v832 = vsub.s32 0, %v831
    %v833 = vrot.slane %v147, %v832
    %v834 = vlaneseq
    %v835 = vshrl.u32 %v834, 7
    %v836 = vsub.s32 1, %v835
    %v837 = vrot.slane %v147, %v836
    %v838 = vlaneseq
    %v839 = vshrl.u32 %v838, 7
    %v840 = vsub.s32 2, %v839
    %v841 = vrot.slane %v147, %v840
    %v842 = vlaneseq
    %v843 = vshrl.u32 %v842, 7
    %v844 = vsub.s32 3, %v843
    %v845 = vrot.slane %v147, %v844
    %v846 = vlaneseq
    %v847 = vshrl.u32 %v846, 7
    %v848 = vsub.s32 4, %v847
    %v849 = vrot.slane %v147, %v848
    %v850 = vlaneseq
    %v851 = vshrl.u32 %v850, 7
    %v852 = vsub.s32 5, %v851
    %v853 = vrot.slane %v147, %v852
    %v854 = vlaneseq
    %v855 = vshrl.u32 %v854, 7
    %v856 = vsub.s32 6, %v855
    %v857 = vrot.slane %v147, %v856
    %v858 = vlaneseq
    %v859 = vshrl.u32 %v858, 7
    %v860 = vsub.s32 7, %v859
    %v861 = vrot.slane %v147, %v860
    %v862 = vlaneseq
    %v863 = vshrl.u32 %v862, 7
    %v864 = vsub.s32 0, %v863
    %v865 = vrot.slane %v149, %v864
    %v866 = vlaneseq
    %v867 = vshrl.u32 %v866, 7
    %v868 = vsub.s32 1, %v867
    %v869 = vrot.slane %v149, %v868
    %v870 = vlaneseq
    %v871 = vshrl.u32 %v870, 7
    %v872 = vsub.s32 2, %v871
    %v873 = vrot.slane %v149, %v872
    %v874 = vlaneseq
    %v875 = vshrl.u32 %v874, 7
    %v876 = vsub.s32 3, %v875
    %v877 = vrot.slane %v149, %v876
    %v878 = vlaneseq
    %v879 = vshrl.u32 %v878, 7
    %v880 = vsub.s32 4, %v879
    %v881 = vrot.slane %v149, %v880
    %v882 = vlaneseq
    %v883 = vshrl.u32 %v882, 7
    %v884 = vsub.s32 5, %v883
    %v885 = vrot.slane %v149, %v884
    %v886 = vlaneseq
    %v887 = vshrl.u32 %v886, 7
    %v888 = vsub.s32 6, %v887
    %v889 = vrot.slane %v149, %v888
    %v890 = vlaneseq
    %v891 = vshrl.u32 %v890, 7
    %v892 = vsub.s32 7, %v891
    %v893 = vrot.slane %v149, %v892
    %v894 = vlaneseq
    %v895 = vshrl.u32 %v894, 7
    %v896 = vsub.s32 0, %v895
    %v897 = vrot.slane %v151, %v896
    %v898 = vlaneseq
    %v899 = vshrl.u32 %v898, 7
    %v900 = vsub.s32 1, %v899
    %v901 = vrot.slane %v151, %v900
    %v902 = vlaneseq
    %v903 = vshrl.u32 %v902, 7
    %v904 = vsub.s32 2, %v903
    %v905 = vrot.slane %v151, %v904
    %v906 = vlaneseq
    %v907 = vshrl.u32 %v906, 7
    %v908 = vsub.s32 3, %v907
    %v909 = vrot.slane %v151, %v908
    %v910 = vlaneseq
    %v911 = vshrl.u32 %v910, 7
    %v912 = vsub.s32 4, %v911
    %v913 = vrot.slane %v151, %v912
    %v914 = vlaneseq
    %v915 = vshrl.u32 %v914, 7
    %v916 = vsub.s32 5, %v915
    %v917 = vrot.slane %v151, %v916
    %v918 = vlaneseq
    %v919 = vshrl.u32 %v918, 7
    %v920 = vsub.s32 6, %v919
    %v921 = vrot.slane %v151, %v920
    %v922 = vlaneseq
    %v923 = vshrl.u32 %v922, 7
    %v924 = vsub.s32 7, %v923
    %v925 = vrot.slane %v151, %v924
    %v926 = vlaneseq
    %v927 = vshrl.u32 %v926, 7
    %v928 = vsub.s32 0, %v927
    %v929 = vrot.slane %v153, %v928
    %v930 = vlaneseq
    %v931 = vshrl.u32 %v930, 7
    %v932 = vsub.s32 1, %v931
    %v933 = vrot.slane %v153, %v932
    %v934 = vlaneseq
    %v935 = vshrl.u32 %v934, 7
    %v936 = vsub.s32 2, %v935
    %v937 = vrot.slane %v153, %v936
    %v938 = vlaneseq
    %v939 = vshrl.u32 %v938, 7
    %v940 = vsub.s32 3, %v939
    %v941 = vrot.slane %v153, %v940
    %v942 = vlaneseq
    %v943 = vshrl.u32 %v942, 7
    %v944 = vsub.s32 4, %v943
    %v945 = vrot.slane %v153, %v944
    %v946 = vlaneseq
    %v947 = vshrl.u32 %v946, 7
    %v948 = vsub.s32 5, %v947
    %v949 = vrot.slane %v153, %v948
    %v950 = vlaneseq
    %v951 = vshrl.u32 %v950, 7
    %v952 = vsub.s32 6, %v951
    %v953 = vrot.slane %v153, %v952
    %v954 = vlaneseq
    %v955 = vshrl.u32 %v954, 7
    %v956 = vsub.s32 7, %v955
    %v957 = vrot.slane %v153, %v956
    %v958 = vlaneseq
    %v959 = vshrl.u32 %v958, 7
    %v960 = vsub.s32 0, %v959
    %v961 = vrot.slane %v155, %v960
    %v962 = vlaneseq
    %v963 = vshrl.u32 %v962, 7
    %v964 = vsub.s32 1, %v963
    %v965 = vrot.slane %v155, %v964
    %v966 = vlaneseq
    %v967 = vshrl.u32 %v966, 7
    %v968 = vsub.s32 2, %v967
    %v969 = vrot.slane %v155, %v968
    %v970 = vlaneseq
    %v971 = vshrl.u32 %v970, 7
    %v972 = vsub.s32 3, %v971
    %v973 = vrot.slane %v155, %v972
    %v974 = vlaneseq
    %v975 = vshrl.u32 %v974, 7
    %v976 = vsub.s32 4, %v975
    %v977 = vrot.slane %v155, %v976
    %v978 = vlaneseq
    %v979 = vshrl.u32 %v978, 7
    %v980 = vsub.s32 5, %v979
    %v981 = vrot.slane %v155, %v980
    %v982 = vlaneseq
    %v983 = vshrl.u32 %v982, 7
    %v984 = vsub.s32 6, %v983
    %v985 = vrot.slane %v155, %v984
    %v986 = vlaneseq
    %v987 = vshrl.u32 %v986, 7
    %v988 = vsub.s32 7, %v987
    %v989 = vrot.slane %v155, %v988
    %v990 = vlaneseq
    %v991 = vshrl.u32 %v990, 7
    %v992 = vsub.s32 0, %v991
    %v993 = vrot.slane %v157, %v992
    %v994 = vlaneseq
    %v995 = vshrl.u32 %v994, 7
    %v996 = vsub.s32 1, %v995
    %v997 = vrot.slane %v157, %v996
    %v998 = vlaneseq
    %v999 = vshrl.u32 %v998, 7
    %v1000 = vsub.s32 2, %v999
    %v1001 = vrot.slane %v157, %v1000
    %v1002 = vlaneseq
    %v1003 = vshrl.u32 %v1002, 7
    %v1004 = vsub.s32 3, %v1003
    %v1005 = vrot.slane %v157, %v1004
    %v1006 = vlaneseq
    %v1007 = vshrl.u32 %v1006, 7
    %v1008 = vsub.s32 4, %v1007
    %v1009 = vrot.slane %v157, %v1008
    %v1010 = vlaneseq
    %v1011 = vshrl.u32 %v1010, 7
    %v1012 = vsub.s32 5, %v1011
    %v1013 = vrot.slane %v157, %v1012
    %v1014 = vlaneseq
    %v1015 = vshrl.u32 %v1014, 7
    %v1016 = vsub.s32 6, %v1015
    %v1017 = vrot.slane %v157, %v1016
    %v1018 = vlaneseq
    %v1019 = vshrl.u32 %v1018, 7
    %v1020 = vsub.s32 7, %v1019
    %v1021 = vrot.slane %v157, %v1020
    %v1022 = vlaneseq
    %v1023 = vshrl.u32 %v1022, 7
    %v1024 = vsub.s32 0, %v1023
    %v1025 = vrot.slane %v159, %v1024
    %v1026 = vlaneseq
    %v1027 = vshrl.u32 %v1026, 7
    %v1028 = vsub.s32 1, %v1027
    %v1029 = vrot.slane %v159, %v1028
    %v1030 = vlaneseq
    %v1031 = vshrl.u32 %v1030, 7
    %v1032 = vsub.s32 2, %v1031
    %v1033 = vrot.slane %v159, %v1032
    %v1034 = vlaneseq
    %v1035 = vshrl.u32 %v1034, 7
    %v1036 = vsub.s32 3, %v1035
    %v1037 = vrot.slane %v159, %v1036
    %v1038 = vlaneseq
    %v1039 = vshrl.u32 %v1038, 7
    %v1040 = vsub.s32 4, %v1039
    %v1041 = vrot.slane %v159, %v1040
    %v1042 = vlaneseq
    %v1043 = vshrl.u32 %v1042, 7
    %v1044 = vsub.s32 5, %v1043
    %v1045 = vrot.slane %v159, %v1044
    %v1046 = vlaneseq
    %v1047 = vshrl.u32 %v1046, 7
    %v1048 = vsub.s32 6, %v1047
    %v1049 = vrot.slane %v159, %v1048
    %v1050 = vlaneseq
    %v1051 = vshrl.u32 %v1050, 7
    %v1052 = vsub.s32 7, %v1051
    %v1053 = vrot.slane %v159, %v1052
    %v1054 = vlaneseq
    %v1055 = vshrl.u32 %v1054, 7
    %v1056 = vsub.s32 0, %v1055
    %v1057 = vrot.slane %v161, %v1056
    %v1058 = vlaneseq
    %v1059 = vshrl.u32 %v1058, 7
    %v1060 = vsub.s32 1, %v1059
    %v1061 = vrot.slane %v161, %v1060
    %v1062 = vlaneseq
    %v1063 = vshrl.u32 %v1062, 7
    %v1064 = vsub.s32 2, %v1063
    %v1065 = vrot.slane %v161, %v1064
    %v1066 = vlaneseq
    %v1067 = vshrl.u32 %v1066, 7
    %v1068 = vsub.s32 3, %v1067
    %v1069 = vrot.slane %v161, %v1068
    %v1070 = vlaneseq
    %v1071 = vshrl.u32 %v1070, 7
    %v1072 = vsub.s32 4, %v1071
    %v1073 = vrot.slane %v161, %v1072
    %v1074 = vlaneseq
    %v1075 = vshrl.u32 %v1074, 7
    %v1076 = vsub.s32 5, %v1075
    %v1077 = vrot.slane %v161, %v1076
    %v1078 = vlaneseq
    %v1079 = vshrl.u32 %v1078, 7
    %v1080 = vsub.s32 6, %v1079
    %v1081 = vrot.slane %v161, %v1080
    %v1082 = vlaneseq
    %v1083 = vshrl.u32 %v1082, 7
    %v1084 = vsub.s32 7, %v1083
    %v1085 = vrot.slane %v161, %v1084
    %v1086 = vlaneseq
    %v1087 = vshrl.u32 %v1086, 7
    %v1088 = vsub.s32 0, %v1087
    %v1089 = vrot.slane %v163, %v1088
    %v1090 = vlaneseq
    %v1091 = vshrl.u32 %v1090, 7
    %v1092 = vsub.s32 1, %v1091
    %v1093 = vrot.slane %v163, %v1092
    %v1094 = vlaneseq
    %v1095 = vshrl.u32 %v1094, 7
    %v1096 = vsub.s32 2, %v1095
    %v1097 = vrot.slane %v163, %v1096
    %v1098 = vlaneseq
    %v1099 = vshrl.u32 %v1098, 7
    %v1100 = vsub.s32 3, %v1099
    %v1101 = vrot.slane %v163, %v1100
    %v1102 = vlaneseq
    %v1103 = vshrl.u32 %v1102, 7
    %v1104 = vsub.s32 4, %v1103
    %v1105 = vrot.slane %v163, %v1104
    %v1106 = vlaneseq
    %v1107 = vshrl.u32 %v1106, 7
    %v1108 = vsub.s32 5, %v1107
    %v1109 = vrot.slane %v163, %v1108
    %v1110 = vlaneseq
    %v1111 = vshrl.u32 %v1110, 7
    %v1112 = vsub.s32 6, %v1111
    %v1113 = vrot.slane %v163, %v1112
    %v1114 = vlaneseq
    %v1115 = vshrl.u32 %v1114, 7
    %v1116 = vsub.s32 7, %v1115
    %v1117 = vrot.slane %v163, %v1116
    %v1118 = vlaneseq
    %v1119 = vshrl.u32 %v1118, 7
    %v1120 = vsub.s32 0, %v1119
    %v1121 = vrot.slane %v165, %v1120
    %v1122 = vlaneseq
    %v1123 = vshrl.u32 %v1122, 7
    %v1124 = vsub.s32 1, %v1123
    %v1125 = vrot.slane %v165, %v1124
    %v1126 = vlaneseq
    %v1127 = vshrl.u32 %v1126, 7
    %v1128 = vsub.s32 2, %v1127
    %v1129 = vrot.slane %v165, %v1128
    %v1130 = vlaneseq
    %v1131 = vshrl.u32 %v1130, 7
    %v1132 = vsub.s32 3, %v1131
    %v1133 = vrot.slane %v165, %v1132
    %v1134 = vlaneseq
    %v1135 = vshrl.u32 %v1134, 7
    %v1136 = vsub.s32 4, %v1135
    %v1137 = vrot.slane %v165, %v1136
    %v1138 = vlaneseq
    %v1139 = vshrl.u32 %v1138, 7
    %v1140 = vsub.s32 5, %v1139
    %v1141 = vrot.slane %v165, %v1140
    %v1142 = vlaneseq
    %v1143 = vshrl.u32 %v1142, 7
    %v1144 = vsub.s32 6, %v1143
    %v1145 = vrot.slane %v165, %v1144
    %v1146 = vlaneseq
    %v1147 = vshrl.u32 %v1146, 7
    %v1148 = vsub.s32 7, %v1147
    %v1149 = vrot.slane %v165, %v1148
    %v1150 = vlaneseq
    %v1151 = vshrl.u32 %v1150, 7
    %v1152 = vsub.s32 0, %v1151
    %v1153 = vrot.slane %v167, %v1152
    %v1154 = vlaneseq
    %v1155 = vshrl.u32 %v1154, 7
    %v1156 = vsub.s32 1, %v1155
    %v1157 = vrot.slane %v167, %v1156
    %v1158 = vlaneseq
    %v1159 = vshrl.u32 %v1158, 7
    %v1160 = vsub.s32 2, %v1159
    %v1161 = vrot.slane %v167, %v1160
    %v1162 = vlaneseq
    %v1163 = vshrl.u32 %v1162, 7
    %v1164 = vsub.s32 3, %v1163
    %v1165 = vrot.slane %v167, %v1164
    %v1166 = vlaneseq
    %v1167 = vshrl.u32 %v1166, 7
    %v1168 = vsub.s32 4, %v1167
    %v1169 = vrot.slane %v167, %v1168
    %v1170 = vlaneseq
    %v1171 = vshrl.u32 %v1170, 7
    %v1172 = vsub.s32 5, %v1171
    %v1173 = vrot.slane %v167, %v1172
    %v1174 = vlaneseq
    %v1175 = vshrl.u32 %v1174, 7
    %v1176 = vsub.s32 6, %v1175
    %v1177 = vrot.slane %v167, %v1176
    %v1178 = vlaneseq
    %v1179 = vshrl.u32 %v1178, 7
    %v1180 = vsub.s32 7, %v1179
    %v1181 = vrot.slane %v167, %v1180
    %v1182 = vlaneseq
    %v1183 = vshrl.u32 %v1182, 7
    %v1184 = vsub.s32 0, %v1183
    %v1185 = vrot.slane %v169, %v1184
    %v1186 = vlaneseq
    %v1187 = vshrl.u32 %v1186, 7
    %v1188 = vsub.s32 1, %v1187
    %v1189 = vrot.slane %v169, %v1188
    %v1190 = vlaneseq
    %v1191 = vshrl.u32 %v1190, 7
    %v1192 = vsub.s32 2, %v1191
    %v1193 = vrot.slane %v169, %v1192
    %v1194 = vlaneseq
    %v1195 = vshrl.u32 %v1194, 7
    %v1196 = vsub.s32 3, %v1195
    %v1197 = vrot.slane %v169, %v1196
    %v1198 = vlaneseq
    %v1199 = vshrl.u32 %v1198, 7
    %v1200 = vsub.s32 4, %v1199
    %v1201 = vrot.slane %v169, %v1200
    %v1202 = vlaneseq
    %v1203 = vshrl.u32 %v1202, 7
    %v1204 = vsub.s32 5, %v1203
    %v1205 = vrot.slane %v169, %v1204
    %v1206 = vlaneseq
    %v1207 = vshrl.u32 %v1206, 7
    %v1208 = vsub.s32 6, %v1207
    %v1209 = vrot.slane %v169, %v1208
    %v1210 = vlaneseq
    %v1211 = vshrl.u32 %v1210, 7
    %v1212 = vsub.s32 7, %v1211
    %v1213 = vrot.slane %v169, %v1212
    %v1214 = vlaneseq
    %v1215 = vshrl.u32 %v1214, 7
    %v1216 = vsub.s32 0, %v1215
    %v1217 = vrot.slane %v171, %v1216
    %v1218 = vlaneseq
    %v1219 = vshrl.u32 %v1218, 7
    %v1220 = vsub.s32 1, %v1219
    %v1221 = vrot.slane %v171, %v1220
    %v1222 = vlaneseq
    %v1223 = vshrl.u32 %v1222, 7
    %v1224 = vsub.s32 2, %v1223
    %v1225 = vrot.slane %v171, %v1224
    %v1226 = vlaneseq
    %v1227 = vshrl.u32 %v1226, 7
    %v1228 = vsub.s32 3, %v1227
    %v1229 = vrot.slane %v171, %v1228
    %v1230 = vlaneseq
    %v1231 = vshrl.u32 %v1230, 7
    %v1232 = vsub.s32 4, %v1231
    %v1233 = vrot.slane %v171, %v1232
    %v1234 = vlaneseq
    %v1235 = vshrl.u32 %v1234, 7
    %v1236 = vsub.s32 5, %v1235
    %v1237 = vrot.slane %v171, %v1236
    %v1238 = vlaneseq
    %v1239 = vshrl.u32 %v1238, 7
    %v1240 = vsub.s32 6, %v1239
    %v1241 = vrot.slane %v171, %v1240
    %v1242 = vlaneseq
    %v1243 = vshrl.u32 %v1242, 7
    %v1244 = vsub.s32 7, %v1243
    %v1245 = vrot.slane %v171, %v1244
    %v1246 = vlaneseq
    %v1247 = vshrl.u32 %v1246, 7
    %v1248 = vsub.s32 0, %v1247
    %v1249 = vrot.slane %v173, %v1248
    %v1250 = vlaneseq
    %v1251 = vshrl.u32 %v1250, 7
    %v1252 = vsub.s32 1, %v1251
    %v1253 = vrot.slane %v173, %v1252
    %v1254 = vlaneseq
    %v1255 = vshrl.u32 %v1254, 7
    %v1256 = vsub.s32 2, %v1255
    %v1257 = vrot.slane %v173, %v1256
    %v1258 = vlaneseq
    %v1259 = vshrl.u32 %v1258, 7
    %v1260 = vsub.s32 3, %v1259
    %v1261 = vrot.slane %v173, %v1260
    %v1262 = vlaneseq
    %v1263 = vshrl.u32 %v1262, 7
    %v1264 = vsub.s32 4, %v1263
    %v1265 = vrot.slane %v173, %v1264
    %v1266 = vlaneseq
    %v1267 = vshrl.u32 %v1266, 7
    %v1268 = vsub.s32 5, %v1267
    %v1269 = vrot.slane %v173, %v1268
    %v1270 = vlaneseq
    %v1271 = vshrl.u32 %v1270, 7
    %v1272 = vsub.s32 6, %v1271
    %v1273 = vrot.slane %v173, %v1272
    %v1274 = vlaneseq
    %v1275 = vshrl.u32 %v1274, 7
    %v1276 = vsub.s32 7, %v1275
    %v1277 = vrot.slane %v173, %v1276
    %v1278 = vlaneseq
    %v1279 = vshrl.u32 %v1278, 7
    %v1280 = vsub.s32 0, %v1279
    %v1281 = vrot.slane %v175, %v1280
    %v1282 = vlaneseq
    %v1283 = vshrl.u32 %v1282, 7
    %v1284 = vsub.s32 1, %v1283
    %v1285 = vrot.slane %v175, %v1284
    %v1286 = vlaneseq
    %v1287 = vshrl.u32 %v1286, 7
    %v1288 = vsub.s32 2, %v1287
    %v1289 = vrot.slane %v175, %v1288
    %v1290 = vlaneseq
    %v1291 = vshrl.u32 %v1290, 7
    %v1292 = vsub.s32 3, %v1291
    %v1293 = vrot.slane %v175, %v1292
    %v1294 = vlaneseq
    %v1295 = vshrl.u32 %v1294, 7
    %v1296 = vsub.s32 4, %v1295
    %v1297 = vrot.slane %v175, %v1296
    %v1298 = vlaneseq
    %v1299 = vshrl.u32 %v1298, 7
    %v1300 = vsub.s32 5, %v1299
    %v1301 = vrot.slane %v175, %v1300
    %v1302 = vlaneseq
    %v1303 = vshrl.u32 %v1302, 7
    %v1304 = vsub.s32 6, %v1303
    %v1305 = vrot.slane %v175, %v1304
    %v1306 = vlaneseq
    %v1307 = vshrl.u32 %v1306, 7
    %v1308 = vsub.s32 7, %v1307
    %v1309 = vrot.slane %v175, %v1308
    %v1310 = vlaneseq
    %v1311 = vshrl.u32 %v1310, 7
    %v1312 = vsub.s32 0, %v1311
    %v1313 = vrot.slane %v177, %v1312
    %v1314 = vlaneseq
    %v1315 = vshrl.u32 %v1314, 7
    %v1316 = vsub.s32 1, %v1315
    %v1317 = vrot.slane %v177, %v1316
    %v1318 = vlaneseq
    %v1319 = vshrl.u32 %v1318, 7
    %v1320 = vsub.s32 2, %v1319
    %v1321 = vrot.slane %v177, %v1320
    %v1322 = vlaneseq
    %v1323 = vshrl.u32 %v1322, 7
    %v1324 = vsub.s32 3, %v1323
    %v1325 = vrot.slane %v177, %v1324
    %v1326 = vlaneseq
    %v1327 = vshrl.u32 %v1326, 7
    %v1328 = vsub.s32 4, %v1327
    %v1329 = vrot.slane %v177, %v1328
    %v1330 = vlaneseq
    %v1331 = vshrl.u32 %v1330, 7
    %v1332 = vsub.s32 5, %v1331
    %v1333 = vrot.slane %v177, %v1332
    %v1334 = vlaneseq
    %v1335 = vshrl.u32 %v1334, 7
    %v1336 = vsub.s32 6, %v1335
    %v1337 = vrot.slane %v177, %v1336
    %v1338 = vlaneseq
    %v1339 = vshrl.u32 %v1338, 7
    %v1340 = vsub.s32 7, %v1339
    %v1341 = vrot.slane %v177, %v1340
    %v1342 = vlaneseq
    %v1343 = vshrl.u32 %v1342, 7
    %v1344 = vsub.s32 0, %v1343
    %v1345 = vrot.slane %v179, %v1344
    %v1346 = vlaneseq
    %v1347 = vshrl.u32 %v1346, 7
    %v1348 = vsub.s32 1, %v1347
    %v1349 = vrot.slane %v179, %v1348
    %v1350 = vlaneseq
    %v1351 = vshrl.u32 %v1350, 7
    %v1352 = vsub.s32 2, %v1351
    %v1353 = vrot.slane %v179, %v1352
    %v1354 = vlaneseq
    %v1355 = vshrl.u32 %v1354, 7
    %v1356 = vsub.s32 3, %v1355
    %v1357 = vrot.slane %v179, %v1356
    %v1358 = vlaneseq
    %v1359 = vshrl.u32 %v1358, 7
    %v1360 = vsub.s32 4, %v1359
    %v1361 = vrot.slane %v179, %v1360
    %v1362 = vlaneseq
    %v1363 = vshrl.u32 %v1362, 7
    %v1364 = vsub.s32 5, %v1363
    %v1365 = vrot.slane %v179, %v1364
    %v1366 = vlaneseq
    %v1367 = vshrl.u32 %v1366, 7
    %v1368 = vsub.s32 6, %v1367
    %v1369 = vrot.slane %v179, %v1368
    %v1370 = vlaneseq
    %v1371 = vshrl.u32 %v1370, 7
    %v1372 = vsub.s32 7, %v1371
    %v1373 = vrot.slane %v179, %v1372
    %v1374 = vlaneseq
    %v1375 = vshrl.u32 %v1374, 7
    %v1376 = vsub.s32 0, %v1375
    %v1377 = vrot.slane %v181, %v1376
    %v1378 = vlaneseq
    %v1379 = vshrl.u32 %v1378, 7
    %v1380 = vsub.s32 1, %v1379
    %v1381 = vrot.slane %v181, %v1380
    %v1382 = vlaneseq
    %v1383 = vshrl.u32 %v1382, 7
    %v1384 = vsub.s32 2, %v1383
    %v1385 = vrot.slane %v181, %v1384
    %v1386 = vlaneseq
    %v1387 = vshrl.u32 %v1386, 7
    %v1388 = vsub.s32 3, %v1387
    %v1389 = vrot.slane %v181, %v1388
    %v1390 = vlaneseq
    %v1391 = vshrl.u32 %v1390, 7
    %v1392 = vsub.s32 4, %v1391
    %v1393 = vrot.slane %v181, %v1392
    %v1394 = vlaneseq
    %v1395 = vshrl.u32 %v1394, 7
    %v1396 = vsub.s32 5, %v1395
    %v1397 = vrot.slane %v181, %v1396
    %v1398 = vlaneseq
    %v1399 = vshrl.u32 %v1398, 7
    %v1400 = vsub.s32 6, %v1399
    %v1401 = vrot.slane %v181, %v1400
    %v1402 = vlaneseq
    %v1403 = vshrl.u32 %v1402, 7
    %v1404 = vsub.s32 7, %v1403
    %v1405 = vrot.slane %v181, %v1404
    %v1406 = vlaneseq
    %v1407 = vshrl.u32 %v1406, 7
    %v1408 = vsub.s32 0, %v1407
    %v1409 = vrot.slane %v183, %v1408
    %v1410 = vlaneseq
    %v1411 = vshrl.u32 %v1410, 7
    %v1412 = vsub.s32 1, %v1411
    %v1413 = vrot.slane %v183, %v1412
    %v1414 = vlaneseq
    %v1415 = vshrl.u32 %v1414, 7
    %v1416 = vsub.s32 2, %v1415
    %v1417 = vrot.slane %v183, %v1416
    %v1418 = vlaneseq
    %v1419 = vshrl.u32 %v1418, 7
    %v1420 = vsub.s32 3, %v1419
    %v1421 = vrot.slane %v183, %v1420
    %v1422 = vlaneseq
    %v1423 = vshrl.u32 %v1422, 7
    %v1424 = vsub.s32 4, %v1423
    %v1425 = vrot.slane %v183, %v1424
    %v1426 = vlaneseq
    %v1427 = vshrl.u32 %v1426, 7
    %v1428 = vsub.s32 5, %v1427
    %v1429 = vrot.slane %v183, %v1428
    %v1430 = vlaneseq
    %v1431 = vshrl.u32 %v1430, 7
    %v1432 = vsub.s32 6, %v1431
    %v1433 = vrot.slane %v183, %v1432
    %v1434 = vlaneseq
    %v1435 = vshrl.u32 %v1434, 7
    %v1436 = vsub.s32 7, %v1435
    %v1437 = vrot.slane %v183, %v1436
    %v1438 = vlaneseq
    %v1439 = vshrl.u32 %v1438, 7
    %v1440 = vsub.s32 0, %v1439
    %v1441 = vrot.slane %v185, %v1440
    %v1442 = vlaneseq
    %v1443 = vshrl.u32 %v1442, 7
    %v1444 = vsub.s32 1, %v1443
    %v1445 = vrot.slane %v185, %v1444
    %v1446 = vlaneseq
    %v1447 = vshrl.u32 %v1446, 7
    %v1448 = vsub.s32 2, %v1447
    %v1449 = vrot.slane %v185, %v1448
    %v1450 = vlaneseq
    %v1451 = vshrl.u32 %v1450, 7
    %v1452 = vsub.s32 3, %v1451
    %v1453 = vrot.slane %v185, %v1452
    %v1454 = vlaneseq
    %v1455 = vshrl.u32 %v1454, 7
    %v1456 = vsub.s32 4, %v1455
    %v1457 = vrot.slane %v185, %v1456
    %v1458 = vlaneseq
    %v1459 = vshrl.u32 %v1458, 7
    %v1460 = vsub.s32 5, %v1459
    %v1461 = vrot.slane %v185, %v1460
    %v1462 = vlaneseq
    %v1463 = vshrl.u32 %v1462, 7
    %v1464 = vsub.s32 6, %v1463
    %v1465 = vrot.slane %v185, %v1464
    %v1466 = vlaneseq
    %v1467 = vshrl.u32 %v1466, 7
    %v1468 = vsub.s32 7, %v1467
    %v1469 = vrot.slane %v185, %v1468
    %v1470 = vlaneseq
    %v1471 = vshrl.u32 %v1470, 7
    %v1472 = vsub.s32 0, %v1471
    %v1473 = vrot.slane %v187, %v1472
    %v1474 = vlaneseq
    %v1475 = vshrl.u32 %v1474, 7
    %v1476 = vsub.s32 1, %v1475
    %v1477 = vrot.slane %v187, %v1476
    %v1478 = vlaneseq
    %v1479 = vshrl.u32 %v1478, 7
    %v1480 = vsub.s32 2, %v1479
    %v1481 = vrot.slane %v187, %v1480
    %v1482 = vlaneseq
    %v1483 = vshrl.u32 %v1482, 7
    %v1484 = vsub.s32 3, %v1483
    %v1485 = vrot.slane %v187, %v1484
    %v1486 = vlaneseq
    %v1487 = vshrl.u32 %v1486, 7
    %v1488 = vsub.s32 4, %v1487
    %v1489 = vrot.slane %v187, %v1488
    %v1490 = vlaneseq
    %v1491 = vshrl.u32 %v1490, 7
    %v1492 = vsub.s32 5, %v1491
    %v1493 = vrot.slane %v187, %v1492
    %v1494 = vlaneseq
    %v1495 = vshrl.u32 %v1494, 7
    %v1496 = vsub.s32 6, %v1495
    %v1497 = vrot.slane %v187, %v1496
    %v1498 = vlaneseq
    %v1499 = vshrl.u32 %v1498, 7
    %v1500 = vsub.s32 7, %v1499
    %v1501 = vrot.slane %v187, %v1500
    %v1502 = vlaneseq
    %v1503 = vshrl.u32 %v1502, 7
    %v1504 = vsub.s32 0, %v1503
    %v1505 = vrot.slane %v189, %v1504
    %v1506 = vlaneseq
    %v1507 = vshrl.u32 %v1506, 7
    %v1508 = vsub.s32 1, %v1507
    %v1509 = vrot.slane %v189, %v1508
    %v1510 = vlaneseq
    %v1511 = vshrl.u32 %v1510, 7
    %v1512 = vsub.s32 2, %v1511
    %v1513 = vrot.slane %v189, %v1512
    %v1514 = vlaneseq
    %v1515 = vshrl.u32 %v1514, 7
    %v1516 = vsub.s32 3, %v1515
    %v1517 = vrot.slane %v189, %v1516
    %v1518 = vlaneseq
    %v1519 = vshrl.u32 %v1518, 7
    %v1520 = vsub.s32 4, %v1519
    %v1521 = vrot.slane %v189, %v1520
    %v1522 = vlaneseq
    %v1523 = vshrl.u32 %v1522, 7
    %v1524 = vsub.s32 5, %v1523
    %v1525 = vrot.slane %v189, %v1524
    %v1526 = vlaneseq
    %v1527 = vshrl.u32 %v1526, 7
    %v1528 = vsub.s32 6, %v1527
    %v1529 = vrot.slane %v189, %v1528
    %v1530 = vlaneseq
    %v1531 = vshrl.u32 %v1530, 7
    %v1532 = vsub.s32 7, %v1531
    %v1533 = vrot.slane %v189, %v1532
    %v1534 = vlaneseq
    %v1535 = vshrl.u32 %v1534, 7
    %v1536 = vsub.s32 0, %v1535
    %v1537 = vrot.slane %v191, %v1536
    %v1538 = vlaneseq
    %v1539 = vshrl.u32 %v1538, 7
    %v1540 = vsub.s32 1, %v1539
    %v1541 = vrot.slane %v191, %v1540
    %v1542 = vlaneseq
    %v1543 = vshrl.u32 %v1542, 7
    %v1544 = vsub.s32 2, %v1543
    %v1545 = vrot.slane %v191, %v1544
    %v1546 = vlaneseq
    %v1547 = vshrl.u32 %v1546, 7
    %v1548 = vsub.s32 3, %v1547
    %v1549 = vrot.slane %v191, %v1548
    %v1550 = vlaneseq
    %v1551 = vshrl.u32 %v1550, 7
    %v1552 = vsub.s32 4, %v1551
    %v1553 = vrot.slane %v191, %v1552
    %v1554 = vlaneseq
    %v1555 = vshrl.u32 %v1554, 7
    %v1556 = vsub.s32 5, %v1555
    %v1557 = vrot.slane %v191, %v1556
    %v1558 = vlaneseq
    %v1559 = vshrl.u32 %v1558, 7
    %v1560 = vsub.s32 6, %v1559
    %v1561 = vrot.slane %v191, %v1560
    %v1562 = vlaneseq
    %v1563 = vshrl.u32 %v1562, 7
    %v1564 = vsub.s32 7, %v1563
    %v1565 = vrot.slane %v191, %v1564
    %v1566 = vlaneseq
    %v1567 = vshrl.u32 %v1566, 7
    %v1568 = vsub.s32 0, %v1567
    %v1569 = vrot.slane %v193, %v1568
    %v1570 = vlaneseq
    %v1571 = vshrl.u32 %v1570, 7
    %v1572 = vsub.s32 1, %v1571
    %v1573 = vrot.slane %v193, %v1572
    %v1574 = vlaneseq
    %v1575 = vshrl.u32 %v1574, 7
    %v1576 = vsub.s32 2, %v1575
    %v1577 = vrot.slane %v193, %v1576
    %v1578 = vlaneseq
    %v1579 = vshrl.u32 %v1578, 7
    %v1580 = vsub.s32 3, %v1579
    %v1581 = vrot.slane %v193, %v1580
    %v1582 = vlaneseq
    %v1583 = vshrl.u32 %v1582, 7
    %v1584 = vsub.s32 4, %v1583
    %v1585 = vrot.slane %v193, %v1584
    %v1586 = vlaneseq
    %v1587 = vshrl.u32 %v1586, 7
    %v1588 = vsub.s32 5, %v1587
    %v1589 = vrot.slane %v193, %v1588
    %v1590 = vlaneseq
    %v1591 = vshrl.u32 %v1590, 7
    %v1592 = vsub.s32 6, %v1591
    %v1593 = vrot.slane %v193, %v1592
    %v1594 = vlaneseq
    %v1595 = vshrl.u32 %v1594, 7
    %v1596 = vsub.s32 7, %v1595
    %v1597 = vrot.slane %v193, %v1596
    %v1598 = vlaneseq
    %v1599 = vshrl.u32 %v1598, 7
    %v1600 = vsub.s32 0, %v1599
    %v1601 = vrot.slane %v195, %v1600
    %v1602 = vlaneseq
    %v1603 = vshrl.u32 %v1602, 7
    %v1604 = vsub.s32 1, %v1603
    %v1605 = vrot.slane %v195, %v1604
    %v1606 = vlaneseq
    %v1607 = vshrl.u32 %v1606, 7
    %v1608 = vsub.s32 2, %v1607
    %v1609 = vrot.slane %v195, %v1608
    %v1610 = vlaneseq
    %v1611 = vshrl.u32 %v1610, 7
    %v1612 = vsub.s32 3, %v1611
    %v1613 = vrot.slane %v195, %v1612
    %v1614 = vlaneseq
    %v1615 = vshrl.u32 %v1614, 7
    %v1616 = vsub.s32 4, %v1615
    %v1617 = vrot.slane %v195, %v1616
    %v1618 = vlaneseq
    %v1619 = vshrl.u32 %v1618, 7
    %v1620 = vsub.s32 5, %v1619
    %v1621 = vrot.slane %v195, %v1620
    %v1622 = vlaneseq
    %v1623 = vshrl.u32 %v1622, 7
    %v1624 = vsub.s32 6, %v1623
    %v1625 = vrot.slane %v195, %v1624
    %v1626 = vlaneseq
    %v1627 = vshrl.u32 %v1626, 7
    %v1628 = vsub.s32 7, %v1627
    %v1629 = vrot.slane %v195, %v1628
    %v1630 = vlaneseq
    %v1631 = vshrl.u32 %v1630, 7
    %v1632 = vsub.s32 0, %v1631
    %v1633 = vrot.slane %v197, %v1632
    %v1634 = vlaneseq
    %v1635 = vshrl.u32 %v1634, 7
    %v1636 = vsub.s32 1, %v1635
    %v1637 = vrot.slane %v197, %v1636
    %v1638 = vlaneseq
    %v1639 = vshrl.u32 %v1638, 7
    %v1640 = vsub.s32 2, %v1639
    %v1641 = vrot.slane %v197, %v1640
    %v1642 = vlaneseq
    %v1643 = vshrl.u32 %v1642, 7
    %v1644 = vsub.s32 3, %v1643
    %v1645 = vrot.slane %v197, %v1644
    %v1646 = vlaneseq
    %v1647 = vshrl.u32 %v1646, 7
    %v1648 = vsub.s32 4, %v1647
    %v1649 = vrot.slane %v197, %v1648
    %v1650 = vlaneseq
    %v1651 = vshrl.u32 %v1650, 7
    %v1652 = vsub.s32 5, %v1651
    %v1653 = vrot.slane %v197, %v1652
    %v1654 = vlaneseq
    %v1655 = vshrl.u32 %v1654, 7
    %v1656 = vsub.s32 6, %v1655
    %v1657 = vrot.slane %v197, %v1656
    %v1658 = vlaneseq
    %v1659 = vshrl.u32 %v1658, 7
    %v1660 = vsub.s32 7, %v1659
    %v1661 = vrot.slane %v197, %v1660
    %v1662 = vlaneseq
    %v1663 = vshrl.u32 %v1662, 7
    %v1664 = vsub.s32 0, %v1663
    %v1665 = vrot.slane %v199, %v1664
    %v1666 = vlaneseq
    %v1667 = vshrl.u32 %v1666, 7
    %v1668 = vsub.s32 1, %v1667
    %v1669 = vrot.slane %v199, %v1668
    %v1670 = vlaneseq
    %v1671 = vshrl.u32 %v1670, 7
    %v1672 = vsub.s32 2, %v1671
    %v1673 = vrot.slane %v199, %v1672
    %v1674 = vlaneseq
    %v1675 = vshrl.u32 %v1674, 7
    %v1676 = vsub.s32 3, %v1675
    %v1677 = vrot.slane %v199, %v1676
    %v1678 = vlaneseq
    %v1679 = vshrl.u32 %v1678, 7
    %v1680 = vsub.s32 4, %v1679
    %v1681 = vrot.slane %v199, %v1680
    %v1682 = vlaneseq
    %v1683 = vshrl.u32 %v1682, 7
    %v1684 = vsub.s32 5, %v1683
    %v1685 = vrot.slane %v199, %v1684
    %v1686 = vlaneseq
    %v1687 = vshrl.u32 %v1686, 7
    %v1688 = vsub.s32 6, %v1687
    %v1689 = vrot.slane %v199, %v1688
    %v1690 = vlaneseq
    %v1691 = vshrl.u32 %v1690, 7
    %v1692 = vsub.s32 7, %v1691
    %v1693 = vrot.slane %v199, %v1692
    %v1694 = vlaneseq
    %v1695 = vshrl.u32 %v1694, 7
    %v1696 = vsub.s32 0, %v1695
    %v1697 = vrot.slane %v201, %v1696
    %v1698 = vlaneseq
    %v1699 = vshrl.u32 %v1698, 7
    %v1700 = vsub.s32 1, %v1699
    %v1701 = vrot.slane %v201, %v1700
    %v1702 = vlaneseq
    %v1703 = vshrl.u32 %v1702, 7
    %v1704 = vsub.s32 2, %v1703
    %v1705 = vrot.slane %v201, %v1704
    %v1706 = vlaneseq
    %v1707 = vshrl.u32 %v1706, 7
    %v1708 = vsub.s32 3, %v1707
    %v1709 = vrot.slane %v201, %v1708
    %v1710 = vlaneseq
    %v1711 = vshrl.u32 %v1710, 7
    %v1712 = vsub.s32 4, %v1711
    %v1713 = vrot.slane %v201, %v1712
    %v1714 = vlaneseq
    %v1715 = vshrl.u32 %v1714, 7
    %v1716 = vsub.s32 5, %v1715
    %v1717 = vrot.slane %v201, %v1716
    %v1718 = vlaneseq
    %v1719 = vshrl.u32 %v1718, 7
    %v1720 = vsub.s32 6, %v1719
    %v1721 = vrot.slane %v201, %v1720
    %v1722 = vlaneseq
    %v1723 = vshrl.u32 %v1722, 7
    %v1724 = vsub.s32 7, %v1723
    %v1725 = vrot.slane %v201, %v1724
    %v1726 = vlaneseq
    %v1727 = vshrl.u32 %v1726, 7
    %v1728 = vsub.s32 0, %v1727
    %v1729 = vrot.slane %v203, %v1728
    %v1730 = vlaneseq
    %v1731 = vshrl.u32 %v1730, 7
    %v1732 = vsub.s32 1, %v1731
    %v1733 = vrot.slane %v203, %v1732
    %v1734 = vlaneseq
    %v1735 = vshrl.u32 %v1734, 7
    %v1736 = vsub.s32 2, %v1735
    %v1737 = vrot.slane %v203, %v1736
    %v1738 = vlaneseq
    %v1739 = vshrl.u32 %v1738, 7
    %v1740 = vsub.s32 3, %v1739
    %v1741 = vrot.slane %v203, %v1740
    %v1742 = vlaneseq
    %v1743 = vshrl.u32 %v1742, 7
    %v1744 = vsub.s32 4, %v1743
    %v1745 = vrot.slane %v203, %v1744
    %v1746 = vlaneseq
    %v1747 = vshrl.u32 %v1746, 7
    %v1748 = vsub.s32 5, %v1747
    %v1749 = vrot.slane %v203, %v1748
    %v1750 = vlaneseq
    %v1751 = vshrl.u32 %v1750, 7
    %v1752 = vsub.s32 6, %v1751
    %v1753 = vrot.slane %v203, %v1752
    %v1754 = vlaneseq
    %v1755 = vshrl.u32 %v1754, 7
    %v1756 = vsub.s32 7, %v1755
    %v1757 = vrot.slane %v203, %v1756
    %v1758 = vlaneseq
    %v1759 = vshrl.u32 %v1758, 7
    %v1760 = vsub.s32 0, %v1759
    %v1761 = vrot.slane %v205, %v1760
    %v1762 = vlaneseq
    %v1763 = vshrl.u32 %v1762, 7
    %v1764 = vsub.s32 1, %v1763
    %v1765 = vrot.slane %v205, %v1764
    %v1766 = vlaneseq
    %v1767 = vshrl.u32 %v1766, 7
    %v1768 = vsub.s32 2, %v1767
    %v1769 = vrot.slane %v205, %v1768
    %v1770 = vlaneseq
    %v1771 = vshrl.u32 %v1770, 7
    %v1772 = vsub.s32 3, %v1771
    %v1773 = vrot.slane %v205, %v1772
    %v1774 = vlaneseq
    %v1775 = vshrl.u32 %v1774, 7
    %v1776 = vsub.s32 4, %v1775
    %v1777 = vrot.slane %v205, %v1776
    %v1778 = vlaneseq
    %v1779 = vshrl.u32 %v1778, 7
    %v1780 = vsub.s32 5, %v1779
    %v1781 = vrot.slane %v205, %v1780
    %v1782 = vlaneseq
    %v1783 = vshrl.u32 %v1782, 7
    %v1784 = vsub.s32 6, %v1783
    %v1785 = vrot.slane %v205, %v1784
    %v1786 = vlaneseq
    %v1787 = vshrl.u32 %v1786, 7
    %v1788 = vsub.s32 7, %v1787
    %v1789 = vrot.slane %v205, %v1788
    %v1790 = vcombine.low %v257, %v261
    %v1791 = vcombine.low %v265, %v269
    %v1793 = vunpack.c.l.s4 1983009808
    %v1794 = vunpack.c.0.s8 %v1793
    %v1795 = vlaneseq
    %v1796 = vshrl.u32 %v1795, 7
    %v1797 = vsub.s32 %v1794, %v1796
    %v1798 = vrot.slane %v1790, %v1797
    %v1800 = vunpack.c.l.s4 1983009808
    %v1801 = vunpack.c.0.s8 %v1800
    %v1802 = vlaneseq
    %v1803 = vshrl.u32 %v1802, 7
    %v1804 = vsub.s32 %v1801, %v1803
    %v1805 = vrot.slane %v1791, %v1804
    %v1806 = vcombine.low %v1798, %v1805
    %v1807 = vcombine.low %v273, %v277
    %v1808 = vcombine.low %v281, %v285
    %v1810 = vunpack.c.l.s4 1983009808
    %v1811 = vunpack.c.0.s8 %v1810
    %v1812 = vlaneseq
    %v1813 = vshrl.u32 %v1812, 7
    %v1814 = vsub.s32 %v1811, %v1813
    %v1815 = vrot.slane %v1807, %v1814
    %v1817 = vunpack.c.l.s4 1983009808
    %v1818 = vunpack.c.0.s8 %v1817
    %v1819 = vlaneseq
    %v1820 = vshrl.u32 %v1819, 7
    %v1821 = vsub.s32 %v1818, %v1820
    %v1822 = vrot.slane %v1808, %v1821
    %v1823 = vcombine.low %v1815, %v1822
    %v1824 = vcombine.low %v289, %v293
    %v1825 = vcombine.low %v297, %v301
    %v1827 = vunpack.c.l.s4 1983009808
    %v1828 = vunpack.c.0.s8 %v1827
    %v1829 = vlaneseq
    %v1830 = vshrl.u32 %v1829, 7
    %v1831 = vsub.s32 %v1828, %v1830
    %v1832 = vrot.slane %v1824, %v1831
    %v1834 = vunpack.c.l.s4 1983009808
    %v1835 = vunpack.c.0.s8 %v1834
    %v1836 = vlaneseq
    %v1837 = vshrl.u32 %v1836, 7
    %v1838 = vsub.s32 %v1835, %v1837
    %v1839 = vrot.slane %v1825, %v1838
    %v1840 = vcombine.low %v1832, %v1839
    %v1841 = vcombine.low %v305, %v309
    %v1842 = vcombine.low %v313, %v317
    %v1844 = vunpack.c.l.s4 1983009808
    %v1845 = vunpack.c.0.s8 %v1844
    %v1846 = vlaneseq
    %v1847 = vshrl.u32 %v1846, 7
    %v1848 = vsub.s32 %v1845, %v1847
    %v1849 = vrot.slane %v1841, %v1848
    %v1851 = vunpack.c.l.s4 1983009808
    %v1852 = vunpack.c.0.s8 %v1851
    %v1853 = vlaneseq
    %v1854 = vshrl.u32 %v1853, 7
    %v1855 = vsub.s32 %v1852, %v1854
    %v1856 = vrot.slane %v1842, %v1855
    %v1857 = vcombine.low %v1849, %v1856
    %v1858 = vcombine.low %v321, %v325
    %v1859 = vcombine.low %v329, %v333
    %v1861 = vunpack.c.l.s4 1983009808
    %v1862 = vunpack.c.0.s8 %v1861
    %v1863 = vlaneseq
    %v1864 = vshrl.u32 %v1863, 7
    %v1865 = vsub.s32 %v1862, %v1864
    %v1866 = vrot.slane %v1858, %v1865
    %v1868 = vunpack.c.l.s4 1983009808
    %v1869 = vunpack.c.0.s8 %v1868
    %v1870 = vlaneseq
    %v1871 = vshrl.u32 %v1870, 7
    %v1872 = vsub.s32 %v1869, %v1871
    %v1873 = vrot.slane %v1859, %v1872
    %v1874 = vcombine.low %v1866, %v1873
    %v1875 = vcombine.low %v337, %v341
    %v1876 = vcombine.low %v345, %v349
    %v1878 = vunpack.c.l.s4 1983009808
    %v1879 = vunpack.c.0.s8 %v1878
    %v1880 = vlaneseq
    %v1881 = vshrl.u32 %v1880, 7
    %v1882 = vsub.s32 %v1879, %v1881
    %v1883 = vrot.slane %v1875, %v1882
    %v1885 = vunpack.c.l.s4 1983009808
    %v1886 = vunpack.c.0.s8 %v1885
    %v1887 = vlaneseq
    %v1888 = vshrl.u32 %v1887, 7
    %v1889 = vsub.s32 %v1886, %v1888
    %v1890 = vrot.slane %v1876, %v1889
    %v1891 = vcombine.low %v1883, %v1890
    %v1892 = vcombine.low %v353, %v357
    %v1893 = vcombine.low %v361, %v365
    %v1895 = vunpack.c.l.s4 1983009808
    %v1896 = vunpack.c.0.s8 %v1895
    %v1897 = vlaneseq
    %v1898 = vshrl.u32 %v1897, 7
    %v1899 = vsub.s32 %v1896, %v1898
    %v1900 = vrot.slane %v1892, %v1899
    %v1902 = vunpack.c.l.s4 1983009808
    %v1903 = vunpack.c.0.s8 %v1902
    %v1904 = vlaneseq
    %v1905 = vshrl.u32 %v1904, 7
    %v1906 = vsub.s32 %v1903, %v1905
    %v1907 = vrot.slane %v1893, %v1906
    %v1908 = vcombine.low %v1900, %v1907
    %v1909 = vcombine.low %v369, %v373
    %v1910 = vcombine.low %v377, %v381
    %v1912 = vunpack.c.l.s4 1983009808
    %v1913 = vunpack.c.0.s8 %v1912
    %v1914 = vlaneseq
    %v1915 = vshrl.u32 %v1914, 7
    %v1916 = vsub.s32 %v1913, %v1915
    %v1917 = vrot.slane %v1909, %v1916
    %v1919 = vunpack.c.l.s4 1983009808
    %v1920 = vunpack.c.0.s8 %v1919
    %v1921 = vlaneseq
    %v1922 = vshrl.u32 %v1921, 7
    %v1923 = vsub.s32 %v1920, %v1922
    %v1924 = vrot.slane %v1910, %v1923
    %v1925 = vcombine.low %v1917, %v1924
    %v1926 = vcombine.low %v385, %v389
    %v1927 = vcombine.low %v393, %v397
    %v1929 = vunpack.c.l.s4 1983009808
    %v1930 = vunpack.c.0.s8 %v1929
    %v1931 = vlaneseq
    %v1932 = vshrl.u32 %v1931, 7
    %v1933 = vsub.s32 %v1930, %v1932
    %v1934 = vrot.slane %v1926, %v1933
    %v1936 = vunpack.c.l.s4 1983009808
    %v1937 = vunpack.c.0.s8 %v1936
    %v1938 = vlaneseq
    %v1939 = vshrl.u32 %v1938, 7
    %v1940 = vsub.s32 %v1937, %v1939
    %v1941 = vrot.slane %v1927, %v1940
    %v1942 = vcombine.low %v1934, %v1941
    %v1943 = vcombine.low %v401, %v405
    %v1944 = vcombine.low %v409, %v413
    %v1946 = vunpack.c.l.s4 1983009808
    %v1947 = vunpack.c.0.s8 %v1946
    %v1948 = vlaneseq
    %v1949 = vshrl.u32 %v1948, 7
    %v1950 = vsub.s32 %v1947, %v1949
    %v1951 = vrot.slane %v1943, %v1950
    %v1953 = vunpack.c.l.s4 1983009808
    %v1954 = vunpack.c.0.s8 %v1953
    %v1955 = vlaneseq
    %v1956 = vshrl.u32 %v1955, 7
    %v1957 = vsub.s32 %v1954, %v1956
    %v1958 = vrot.slane %v1944, %v1957
    %v1959 = vcombine.low %v1951, %v1958
    %v1960 = vcombine.low %v417, %v421
    %v1961 = vcombine.low %v425, %v429
    %v1963 = vunpack.c.l.s4 1983009808
    %v1964 = vunpack.c.0.s8 %v1963
    %v1965 = vlaneseq
    %v1966 = vshrl.u32 %v1965, 7
    %v1967 = vsub.s32 %v1964, %v1966
    %v1968 = vrot.slane %v1960, %v1967
    %v1970 = vunpack.c.l.s4 1983009808
    %v1971 = vunpack.c.0.s8 %v1970
    %v1972 = vlaneseq
    %v1973 = vshrl.u32 %v1972, 7
    %v1974 = vsub.s32 %v1971, %v1973
    %v1975 = vrot.slane %v1961, %v1974
    %v1976 = vcombine.low %v1968, %v1975
    %v1977 = vcombine.low %v433, %v437
    %v1978 = vcombine.low %v441, %v445
    %v1980 = vunpack.c.l.s4 1983009808
    %v1981 = vunpack.c.0.s8 %v1980
    %v1982 = vlaneseq
    %v1983 = vshrl.u32 %v1982, 7
    %v1984 = vsub.s32 %v1981, %v1983
    %v1985 = vrot.slane %v1977, %v1984
    %v1987 = vunpack.c.l.s4 1983009808
    %v1988 = vunpack.c.0.s8 %v1987
    %v1989 = vlaneseq
    %v1990 = vshrl.u32 %v1989, 7
    %v1991 = vsub.s32 %v1988, %v1990
    %v1992 = vrot.slane %v1978, %v1991
    %v1993 = vcombine.low %v1985, %v1992
    %v1994 = vcombine.low %v449, %v453
    %v1995 = vcombine.low %v457, %v461
    %v1997 = vunpack.c.l.s4 1983009808
    %v1998 = vunpack.c.0.s8 %v1997
    %v1999 = vlaneseq
    %v2000 = vshrl.u32 %v1999, 7
    %v2001 = vsub.s32 %v1998, %v2000
    %v2002 = vrot.slane %v1994, %v2001
    %v2004 = vunpack.c.l.s4 1983009808
    %v2005 = vunpack.c.0.s8 %v2004
    %v2006 = vlaneseq
    %v2007 = vshrl.u32 %v2006, 7
    %v2008 = vsub.s32 %v2005, %v2007
    %v2009 = vrot.slane %v1995, %v2008
    %v2010 = vcombine.low %v2002, %v2009
    %v2011 = vcombine.low %v465, %v469
    %v2012 = vcombine.low %v473, %v477
    %v2014 = vunpack.c.l.s4 1983009808
    %v2015 = vunpack.c.0.s8 %v2014
    %v2016 = vlaneseq
    %v2017 = vshrl.u32 %v2016, 7
    %v2018 = vsub.s32 %v2015, %v2017
    %v2019 = vrot.slane %v2011, %v2018
    %v2021 = vunpack.c.l.s4 1983009808
    %v2022 = vunpack.c.0.s8 %v2021
    %v2023 = vlaneseq
    %v2024 = vshrl.u32 %v2023, 7
    %v2025 = vsub.s32 %v2022, %v2024
    %v2026 = vrot.slane %v2012, %v2025
    %v2027 = vcombine.low %v2019, %v2026
    %v2028 = vcombine.low %v481, %v485
    %v2029 = vcombine.low %v489, %v493
    %v2031 = vunpack.c.l.s4 1983009808
    %v2032 = vunpack.c.0.s8 %v2031
    %v2033 = vlaneseq
    %v2034 = vshrl.u32 %v2033, 7
    %v2035 = vsub.s32 %v2032, %v2034
    %v2036 = vrot.slane %v2028, %v2035
    %v2038 = vunpack.c.l.s4 1983009808
    %v2039 = vunpack.c.0.s8 %v2038
    %v2040 = vlaneseq
    %v2041 = vshrl.u32 %v2040, 7
    %v2042 = vsub.s32 %v2039, %v2041
    %v2043 = vrot.slane %v2029, %v2042
    %v2044 = vcombine.low %v2036, %v2043
    %v2045 = vcombine.low %v497, %v501
    %v2046 = vcombine.low %v505, %v509
    %v2048 = vunpack.c.l.s4 1983009808
    %v2049 = vunpack.c.0.s8 %v2048
    %v2050 = vlaneseq
    %v2051 = vshrl.u32 %v2050, 7
    %v2052 = vsub.s32 %v2049, %v2051
    %v2053 = vrot.slane %v2045, %v2052
    %v2055 = vunpack.c.l.s4 1983009808
    %v2056 = vunpack.c.0.s8 %v2055
    %v2057 = vlaneseq
    %v2058 = vshrl.u32 %v2057, 7
    %v2059 = vsub.s32 %v2056, %v2058
    %v2060 = vrot.slane %v2046, %v2059
    %v2061 = vcombine.low %v2053, %v2060
    %v2062 = vcombine.low %v513, %v517
    %v2063 = vcombine.low %v521, %v525
    %v2065 = vunpack.c.l.s4 1983009808
    %v2066 = vunpack.c.0.s8 %v2065
    %v2067 = vlaneseq
    %v2068 = vshrl.u32 %v2067, 7
    %v2069 = vsub.s32 %v2066, %v2068
    %v2070 = vrot.slane %v2062, %v2069
    %v2072 = vunpack.c.l.s4 1983009808
    %v2073 = vunpack.c.0.s8 %v2072
    %v2074 = vlaneseq
    %v2075 = vshrl.u32 %v2074, 7
    %v2076 = vsub.s32 %v2073, %v2075
    %v2077 = vrot.slane %v2063, %v2076
    %v2078 = vcombine.low %v2070, %v2077
    %v2079 = vcombine.low %v529, %v533
    %v2080 = vcombine.low %v537, %v541
    %v2082 = vunpack.c.l.s4 1983009808
    %v2083 = vunpack.c.0.s8 %v2082
    %v2084 = vlaneseq
    %v2085 = vshrl.u32 %v2084, 7
    %v2086 = vsub.s32 %v2083, %v2085
    %v2087 = vrot.slane %v2079, %v2086
    %v2089 = vunpack.c.l.s4 1983009808
    %v2090 = vunpack.c.0.s8 %v2089
    %v2091 = vlaneseq
    %v2092 = vshrl.u32 %v2091, 7
    %v2093 = vsub.s32 %v2090, %v2092
    %v2094 = vrot.slane %v2080, %v2093
    %v2095 = vcombine.low %v2087, %v2094
    %v2096 = vcombine.low %v545, %v549
    %v2097 = vcombine.low %v553, %v557
    %v2099 = vunpack.c.l.s4 1983009808
    %v2100 = vunpack.c.0.s8 %v2099
    %v2101 = vlaneseq
    %v2102 = vshrl.u32 %v2101, 7
    %v2103 = vsub.s32 %v2100, %v2102
    %v2104 = vrot.slane %v2096, %v2103
    %v2106 = vunpack.c.l.s4 1983009808
    %v2107 = vunpack.c.0.s8 %v2106
    %v2108 = vlaneseq
    %v2109 = vshrl.u32 %v2108, 7
    %v2110 = vsub.s32 %v2107, %v2109
    %v2111 = vrot.slane %v2097, %v2110
    %v2112 = vcombine.low %v2104, %v2111
    %v2113 = vcombine.low %v561, %v565
    %v2114 = vcombine.low %v569, %v573
    %v2116 = vunpack.c.l.s4 1983009808
    %v2117 = vunpack.c.0.s8 %v2116
    %v2118 = vlaneseq
    %v2119 = vshrl.u32 %v2118, 7
    %v2120 = vsub.s32 %v2117, %v2119
    %v2121 = vrot.slane %v2113, %v2120
    %v2123 = vunpack.c.l.s4 1983009808
    %v2124 = vunpack.c.0.s8 %v2123
    %v2125 = vlaneseq
    %v2126 = vshrl.u32 %v2125, 7
    %v2127 = vsub.s32 %v2124, %v2126
    %v2128 = vrot.slane %v2114, %v2127
    %v2129 = vcombine.low %v2121, %v2128
    %v2130 = vcombine.low %v577, %v581
    %v2131 = vcombine.low %v585, %v589
    %v2133 = vunpack.c.l.s4 1983009808
    %v2134 = vunpack.c.0.s8 %v2133
    %v2135 = vlaneseq
    %v2136 = vshrl.u32 %v2135, 7
    %v2137 = vsub.s32 %v2134, %v2136
    %v2138 = vrot.slane %v2130, %v2137
    %v2140 = vunpack.c.l.s4 1983009808
    %v2141 = vunpack.c.0.s8 %v2140
    %v2142 = vlaneseq
    %v2143 = vshrl.u32 %v2142, 7
    %v2144 = vsub.s32 %v2141, %v2143
    %v2145 = vrot.slane %v2131, %v2144
    %v2146 = vcombine.low %v2138, %v2145
    %v2147 = vcombine.low %v593, %v597
    %v2148 = vcombine.low %v601, %v605
    %v2150 = vunpack.c.l.s4 1983009808
    %v2151 = vunpack.c.0.s8 %v2150
    %v2152 = vlaneseq
    %v2153 = vshrl.u32 %v2152, 7
    %v2154 = vsub.s32 %v2151, %v2153
    %v2155 = vrot.slane %v2147, %v2154
    %v2157 = vunpack.c.l.s4 1983009808
    %v2158 = vunpack.c.0.s8 %v2157
    %v2159 = vlaneseq
    %v2160 = vshrl.u32 %v2159, 7
    %v2161 = vsub.s32 %v2158, %v2160
    %v2162 = vrot.slane %v2148, %v2161
    %v2163 = vcombine.low %v2155, %v2162
    %v2164 = vcombine.low %v609, %v613
    %v2165 = vcombine.low %v617, %v621
    %v2167 = vunpack.c.l.s4 1983009808
    %v2168 = vunpack.c.0.s8 %v2167
    %v2169 = vlaneseq
    %v2170 = vshrl.u32 %v2169, 7
    %v2171 = vsub.s32 %v2168, %v2170
    %v2172 = vrot.slane %v2164, %v2171
    %v2174 = vunpack.c.l.s4 1983009808
    %v2175 = vunpack.c.0.s8 %v2174
    %v2176 = vlaneseq
    %v2177 = vshrl.u32 %v2176, 7
    %v2178 = vsub.s32 %v2175, %v2177
    %v2179 = vrot.slane %v2165, %v2178
    %v2180 = vcombine.low %v2172, %v2179
    %v2181 = vcombine.low %v625, %v629
    %v2182 = vcombine.low %v633, %v637
    %v2184 = vunpack.c.l.s4 1983009808
    %v2185 = vunpack.c.0.s8 %v2184
    %v2186 = vlaneseq
    %v2187 = vshrl.u32 %v2186, 7
    %v2188 = vsub.s32 %v2185, %v2187
    %v2189 = vrot.slane %v2181, %v2188
    %v2191 = vunpack.c.l.s4 1983009808
    %v2192 = vunpack.c.0.s8 %v2191
    %v2193 = vlaneseq
    %v2194 = vshrl.u32 %v2193, 7
    %v2195 = vsub.s32 %v2192, %v2194
    %v2196 = vrot.slane %v2182, %v2195
    %v2197 = vcombine.low %v2189, %v2196
    %v2198 = vcombine.low %v641, %v645
    %v2199 = vcombine.low %v649, %v653
    %v2201 = vunpack.c.l.s4 1983009808
    %v2202 = vunpack.c.0.s8 %v2201
    %v2203 = vlaneseq
    %v2204 = vshrl.u32 %v2203, 7
    %v2205 = vsub.s32 %v2202, %v2204
    %v2206 = vrot.slane %v2198, %v2205
    %v2208 = vunpack.c.l.s4 1983009808
    %v2209 = vunpack.c.0.s8 %v2208
    %v2210 = vlaneseq
    %v2211 = vshrl.u32 %v2210, 7
    %v2212 = vsub.s32 %v2209, %v2211
    %v2213 = vrot.slane %v2199, %v2212
    %v2214 = vcombine.low %v2206, %v2213
    %v2215 = vcombine.low %v657, %v661
    %v2216 = vcombine.low %v665, %v669
    %v2218 = vunpack.c.l.s4 1983009808
    %v2219 = vunpack.c.0.s8 %v2218
    %v2220 = vlaneseq
    %v2221 = vshrl.u32 %v2220, 7
    %v2222 = vsub.s32 %v2219, %v2221
    %v2223 = vrot.slane %v2215, %v2222
    %v2225 = vunpack.c.l.s4 1983009808
    %v2226 = vunpack.c.0.s8 %v2225
    %v2227 = vlaneseq
    %v2228 = vshrl.u32 %v2227, 7
    %v2229 = vsub.s32 %v2226, %v2228
    %v2230 = vrot.slane %v2216, %v2229
    %v2231 = vcombine.low %v2223, %v2230
    %v2232 = vcombine.low %v673, %v677
    %v2233 = vcombine.low %v681, %v685
    %v2235 = vunpack.c.l.s4 1983009808
    %v2236 = vunpack.c.0.s8 %v2235
    %v2237 = vlaneseq
    %v2238 = vshrl.u32 %v2237, 7
    %v2239 = vsub.s32 %v2236, %v2238
    %v2240 = vrot.slane %v2232, %v2239
    %v2242 = vunpack.c.l.s4 1983009808
    %v2243 = vunpack.c.0.s8 %v2242
    %v2244 = vlaneseq
    %v2245 = vshrl.u32 %v2244, 7
    %v2246 = vsub.s32 %v2243, %v2245
    %v2247 = vrot.slane %v2233, %v2246
    %v2248 = vcombine.low %v2240, %v2247
    %v2249 = vcombine.low %v689, %v693
    %v2250 = vcombine.low %v697, %v701
    %v2252 = vunpack.c.l.s4 1983009808
    %v2253 = vunpack.c.0.s8 %v2252
    %v2254 = vlaneseq
    %v2255 = vshrl.u32 %v2254, 7
    %v2256 = vsub.s32 %v2253, %v2255
    %v2257 = vrot.slane %v2249, %v2256
    %v2259 = vunpack.c.l.s4 1983009808
    %v2260 = vunpack.c.0.s8 %v2259
    %v2261 = vlaneseq
    %v2262 = vshrl.u32 %v2261, 7
    %v2263 = vsub.s32 %v2260, %v2262
    %v2264 = vrot.slane %v2250, %v2263
    %v2265 = vcombine.low %v2257, %v2264
    %v2266 = vcombine.low %v705, %v709
    %v2267 = vcombine.low %v713, %v717
    %v2269 = vunpack.c.l.s4 1983009808
    %v2270 = vunpack.c.0.s8 %v2269
    %v2271 = vlaneseq
    %v2272 = vshrl.u32 %v2271, 7
    %v2273 = vsub.s32 %v2270, %v2272
    %v2274 = vrot.slane %v2266, %v2273
    %v2276 = vunpack.c.l.s4 1983009808
    %v2277 = vunpack.c.0.s8 %v2276
    %v2278 = vlaneseq
    %v2279 = vshrl.u32 %v2278, 7
    %v2280 = vsub.s32 %v2277, %v2279
    %v2281 = vrot.slane %v2267, %v2280
    %v2282 = vcombine.low %v2274, %v2281
    %v2283 = vcombine.low %v721, %v725
    %v2284 = vcombine.low %v729, %v733
    %v2286 = vunpack.c.l.s4 1983009808
    %v2287 = vunpack.c.0.s8 %v2286
    %v2288 = vlaneseq
    %v2289 = vshrl.u32 %v2288, 7
    %v2290 = vsub.s32 %v2287, %v2289
    %v2291 = vrot.slane %v2283, %v2290
    %v2293 = vunpack.c.l.s4 1983009808
    %v2294 = vunpack.c.0.s8 %v2293
    %v2295 = vlaneseq
    %v2296 = vshrl.u32 %v2295, 7
    %v2297 = vsub.s32 %v2294, %v2296
    %v2298 = vrot.slane %v2284, %v2297
    %v2299 = vcombine.low %v2291, %v2298
    %v2300 = vcombine.low %v737, %v741
    %v2301 = vcombine.low %v745, %v749
    %v2303 = vunpack.c.l.s4 1983009808
    %v2304 = vunpack.c.0.s8 %v2303
    %v2305 = vlaneseq
    %v2306 = vshrl.u32 %v2305, 7
    %v2307 = vsub.s32 %v2304, %v2306
    %v2308 = vrot.slane %v2300, %v2307
    %v2310 = vunpack.c.l.s4 1983009808
    %v2311 = vunpack.c.0.s8 %v2310
    %v2312 = vlaneseq
    %v2313 = vshrl.u32 %v2312, 7
    %v2314 = vsub.s32 %v2311, %v2313
    %v2315 = vrot.slane %v2301, %v2314
    %v2316 = vcombine.low %v2308, %v2315
    %v2317 = vcombine.low %v753, %v757
    %v2318 = vcombine.low %v761, %v765
    %v2320 = vunpack.c.l.s4 1983009808
    %v2321 = vunpack.c.0.s8 %v2320
    %v2322 = vlaneseq
    %v2323 = vshrl.u32 %v2322, 7
    %v2324 = vsub.s32 %v2321, %v2323
    %v2325 = vrot.slane %v2317, %v2324
    %v2327 = vunpack.c.l.s4 1983009808
    %v2328 = vunpack.c.0.s8 %v2327
    %v2329 = vlaneseq
    %v2330 = vshrl.u32 %v2329, 7
    %v2331 = vsub.s32 %v2328, %v2330
    %v2332 = vrot.slane %v2318, %v2331
    %v2333 = vcombine.low %v2325, %v2332
    %v2334 = vcombine.low %v769, %v773
    %v2335 = vcombine.low %v777, %v781
    %v2337 = vunpack.c.l.s4 1983009808
    %v2338 = vunpack.c.0.s8 %v2337
    %v2339 = vlaneseq
    %v2340 = vshrl.u32 %v2339, 7
    %v2341 = vsub.s32 %v2338, %v2340
    %v2342 = vrot.slane %v2334, %v2341
    %v2344 = vunpack.c.l.s4 1983009808
    %v2345 = vunpack.c.0.s8 %v2344
    %v2346 = vlaneseq
    %v2347 = vshrl.u32 %v2346, 7
    %v2348 = vsub.s32 %v2345, %v2347
    %v2349 = vrot.slane %v2335, %v2348
    %v2350 = vcombine.low %v2342, %v2349
    %v2351 = vcombine.low %v785, %v789
    %v2352 = vcombine.low %v793, %v797
    %v2354 = vunpack.c.l.s4 1983009808
    %v2355 = vunpack.c.0.s8 %v2354
    %v2356 = vlaneseq
    %v2357 = vshrl.u32 %v2356, 7
    %v2358 = vsub.s32 %v2355, %v2357
    %v2359 = vrot.slane %v2351, %v2358
    %v2361 = vunpack.c.l.s4 1983009808
    %v2362 = vunpack.c.0.s8 %v2361
    %v2363 = vlaneseq
    %v2364 = vshrl.u32 %v2363, 7
    %v2365 = vsub.s32 %v2362, %v2364
    %v2366 = vrot.slane %v2352, %v2365
    %v2367 = vcombine.low %v2359, %v2366
    %v2368 = vcombine.low %v801, %v805
    %v2369 = vcombine.low %v809, %v813
    %v2371 = vunpack.c.l.s4 1983009808
    %v2372 = vunpack.c.0.s8 %v2371
    %v2373 = vlaneseq
    %v2374 = vshrl.u32 %v2373, 7
    %v2375 = vsub.s32 %v2372, %v2374
    %v2376 = vrot.slane %v2368, %v2375
    %v2378 = vunpack.c.l.s4 1983009808
    %v2379 = vunpack.c.0.s8 %v2378
    %v2380 = vlaneseq
    %v2381 = vshrl.u32 %v2380, 7
    %v2382 = vsub.s32 %v2379, %v2381
    %v2383 = vrot.slane %v2369, %v2382
    %v2384 = vcombine.low %v2376, %v2383
    %v2385 = vcombine.low %v817, %v821
    %v2386 = vcombine.low %v825, %v829
    %v2388 = vunpack.c.l.s4 1983009808
    %v2389 = vunpack.c.0.s8 %v2388
    %v2390 = vlaneseq
    %v2391 = vshrl.u32 %v2390, 7
    %v2392 = vsub.s32 %v2389, %v2391
    %v2393 = vrot.slane %v2385, %v2392
    %v2395 = vunpack.c.l.s4 1983009808
    %v2396 = vunpack.c.0.s8 %v2395
    %v2397 = vlaneseq
    %v2398 = vshrl.u32 %v2397, 7
    %v2399 = vsub.s32 %v2396, %v2398
    %v2400 = vrot.slane %v2386, %v2399
    %v2401 = vcombine.low %v2393, %v2400
    %v2402 = vcombine.low %v833, %v837
    %v2403 = vcombine.low %v841, %v845
    %v2405 = vunpack.c.l.s4 1983009808
    %v2406 = vunpack.c.0.s8 %v2405
    %v2407 = vlaneseq
    %v2408 = vshrl.u32 %v2407, 7
    %v2409 = vsub.s32 %v2406, %v2408
    %v2410 = vrot.slane %v2402, %v2409
    %v2412 = vunpack.c.l.s4 1983009808
    %v2413 = vunpack.c.0.s8 %v2412
    %v2414 = vlaneseq
    %v2415 = vshrl.u32 %v2414, 7
    %v2416 = vsub.s32 %v2413, %v2415
    %v2417 = vrot.slane %v2403, %v2416
    %v2418 = vcombine.low %v2410, %v2417
    %v2419 = vcombine.low %v849, %v853
    %v2420 = vcombine.low %v857, %v861
    %v2422 = vunpack.c.l.s4 1983009808
    %v2423 = vunpack.c.0.s8 %v2422
    %v2424 = vlaneseq
    %v2425 = vshrl.u32 %v2424, 7
    %v2426 = vsub.s32 %v2423, %v2425
    %v2427 = vrot.slane %v2419, %v2426
    %v2429 = vunpack.c.l.s4 1983009808
    %v2430 = vunpack.c.0.s8 %v2429
    %v2431 = vlaneseq
    %v2432 = vshrl.u32 %v2431, 7
    %v2433 = vsub.s32 %v2430, %v2432
    %v2434 = vrot.slane %v2420, %v2433
    %v2435 = vcombine.low %v2427, %v2434
    %v2436 = vcombine.low %v865, %v869
    %v2437 = vcombine.low %v873, %v877
    %v2439 = vunpack.c.l.s4 1983009808
    %v2440 = vunpack.c.0.s8 %v2439
    %v2441 = vlaneseq
    %v2442 = vshrl.u32 %v2441, 7
    %v2443 = vsub.s32 %v2440, %v2442
    %v2444 = vrot.slane %v2436, %v2443
    %v2446 = vunpack.c.l.s4 1983009808
    %v2447 = vunpack.c.0.s8 %v2446
    %v2448 = vlaneseq
    %v2449 = vshrl.u32 %v2448, 7
    %v2450 = vsub.s32 %v2447, %v2449
    %v2451 = vrot.slane %v2437, %v2450
    %v2452 = vcombine.low %v2444, %v2451
    %v2453 = vcombine.low %v881, %v885
    %v2454 = vcombine.low %v889, %v893
    %v2456 = vunpack.c.l.s4 1983009808
    %v2457 = vunpack.c.0.s8 %v2456
    %v2458 = vlaneseq
    %v2459 = vshrl.u32 %v2458, 7
    %v2460 = vsub.s32 %v2457, %v2459
    %v2461 = vrot.slane %v2453, %v2460
    %v2463 = vunpack.c.l.s4 1983009808
    %v2464 = vunpack.c.0.s8 %v2463
    %v2465 = vlaneseq
    %v2466 = vshrl.u32 %v2465, 7
    %v2467 = vsub.s32 %v2464, %v2466
    %v2468 = vrot.slane %v2454, %v2467
    %v2469 = vcombine.low %v2461, %v2468
    %v2470 = vcombine.low %v897, %v901
    %v2471 = vcombine.low %v905, %v909
    %v2473 = vunpack.c.l.s4 1983009808
    %v2474 = vunpack.c.0.s8 %v2473
    %v2475 = vlaneseq
    %v2476 = vshrl.u32 %v2475, 7
    %v2477 = vsub.s32 %v2474, %v2476
    %v2478 = vrot.slane %v2470, %v2477
    %v2480 = vunpack.c.l.s4 1983009808
    %v2481 = vunpack.c.0.s8 %v2480
    %v2482 = vlaneseq
    %v2483 = vshrl.u32 %v2482, 7
    %v2484 = vsub.s32 %v2481, %v2483
    %v2485 = vrot.slane %v2471, %v2484
    %v2486 = vcombine.low %v2478, %v2485
    %v2487 = vcombine.low %v913, %v917
    %v2488 = vcombine.low %v921, %v925
    %v2490 = vunpack.c.l.s4 1983009808
    %v2491 = vunpack.c.0.s8 %v2490
    %v2492 = vlaneseq
    %v2493 = vshrl.u32 %v2492, 7
    %v2494 = vsub.s32 %v2491, %v2493
    %v2495 = vrot.slane %v2487, %v2494
    %v2497 = vunpack.c.l.s4 1983009808
    %v2498 = vunpack.c.0.s8 %v2497
    %v2499 = vlaneseq
    %v2500 = vshrl.u32 %v2499, 7
    %v2501 = vsub.s32 %v2498, %v2500
    %v2502 = vrot.slane %v2488, %v2501
    %v2503 = vcombine.low %v2495, %v2502
    %v2504 = vcombine.low %v929, %v933
    %v2505 = vcombine.low %v937, %v941
    %v2507 = vunpack.c.l.s4 1983009808
    %v2508 = vunpack.c.0.s8 %v2507
    %v2509 = vlaneseq
    %v2510 = vshrl.u32 %v2509, 7
    %v2511 = vsub.s32 %v2508, %v2510
    %v2512 = vrot.slane %v2504, %v2511
    %v2514 = vunpack.c.l.s4 1983009808
    %v2515 = vunpack.c.0.s8 %v2514
    %v2516 = vlaneseq
    %v2517 = vshrl.u32 %v2516, 7
    %v2518 = vsub.s32 %v2515, %v2517
    %v2519 = vrot.slane %v2505, %v2518
    %v2520 = vcombine.low %v2512, %v2519
    %v2521 = vcombine.low %v945, %v949
    %v2522 = vcombine.low %v953, %v957
    %v2524 = vunpack.c.l.s4 1983009808
    %v2525 = vunpack.c.0.s8 %v2524
    %v2526 = vlaneseq
    %v2527 = vshrl.u32 %v2526, 7
    %v2528 = vsub.s32 %v2525, %v2527
    %v2529 = vrot.slane %v2521, %v2528
    %v2531 = vunpack.c.l.s4 1983009808
    %v2532 = vunpack.c.0.s8 %v2531
    %v2533 = vlaneseq
    %v2534 = vshrl.u32 %v2533, 7
    %v2535 = vsub.s32 %v2532, %v2534
    %v2536 = vrot.slane %v2522, %v2535
    %v2537 = vcombine.low %v2529, %v2536
    %v2538 = vcombine.low %v961, %v965
    %v2539 = vcombine.low %v969, %v973
    %v2541 = vunpack.c.l.s4 1983009808
    %v2542 = vunpack.c.0.s8 %v2541
    %v2543 = vlaneseq
    %v2544 = vshrl.u32 %v2543, 7
    %v2545 = vsub.s32 %v2542, %v2544
    %v2546 = vrot.slane %v2538, %v2545
    %v2548 = vunpack.c.l.s4 1983009808
    %v2549 = vunpack.c.0.s8 %v2548
    %v2550 = vlaneseq
    %v2551 = vshrl.u32 %v2550, 7
    %v2552 = vsub.s32 %v2549, %v2551
    %v2553 = vrot.slane %v2539, %v2552
    %v2554 = vcombine.low %v2546, %v2553
    %v2555 = vcombine.low %v977, %v981
    %v2556 = vcombine.low %v985, %v989
    %v2558 = vunpack.c.l.s4 1983009808
    %v2559 = vunpack.c.0.s8 %v2558
    %v2560 = vlaneseq
    %v2561 = vshrl.u32 %v2560, 7
    %v2562 = vsub.s32 %v2559, %v2561
    %v2563 = vrot.slane %v2555, %v2562
    %v2565 = vunpack.c.l.s4 1983009808
    %v2566 = vunpack.c.0.s8 %v2565
    %v2567 = vlaneseq
    %v2568 = vshrl.u32 %v2567, 7
    %v2569 = vsub.s32 %v2566, %v2568
    %v2570 = vrot.slane %v2556, %v2569
    %v2571 = vcombine.low %v2563, %v2570
    %v2572 = vcombine.low %v993, %v997
    %v2573 = vcombine.low %v1001, %v1005
    %v2575 = vunpack.c.l.s4 1983009808
    %v2576 = vunpack.c.0.s8 %v2575
    %v2577 = vlaneseq
    %v2578 = vshrl.u32 %v2577, 7
    %v2579 = vsub.s32 %v2576, %v2578
    %v2580 = vrot.slane %v2572, %v2579
    %v2582 = vunpack.c.l.s4 1983009808
    %v2583 = vunpack.c.0.s8 %v2582
    %v2584 = vlaneseq
    %v2585 = vshrl.u32 %v2584, 7
    %v2586 = vsub.s32 %v2583, %v2585
    %v2587 = vrot.slane %v2573, %v2586
    %v2588 = vcombine.low %v2580, %v2587
    %v2589 = vcombine.low %v1009, %v1013
    %v2590 = vcombine.low %v1017, %v1021
    %v2592 = vunpack.c.l.s4 1983009808
    %v2593 = vunpack.c.0.s8 %v2592
    %v2594 = vlaneseq
    %v2595 = vshrl.u32 %v2594, 7
    %v2596 = vsub.s32 %v2593, %v2595
    %v2597 = vrot.slane %v2589, %v2596
    %v2599 = vunpack.c.l.s4 1983009808
    %v2600 = vunpack.c.0.s8 %v2599
    %v2601 = vlaneseq
    %v2602 = vshrl.u32 %v2601, 7
    %v2603 = vsub.s32 %v2600, %v2602
    %v2604 = vrot.slane %v2590, %v2603
    %v2605 = vcombine.low %v2597, %v2604
    %v2606 = vcombine.low %v1025, %v1029
    %v2607 = vcombine.low %v1033, %v1037
    %v2609 = vunpack.c.l.s4 1983009808
    %v2610 = vunpack.c.0.s8 %v2609
    %v2611 = vlaneseq
    %v2612 = vshrl.u32 %v2611, 7
    %v2613 = vsub.s32 %v2610, %v2612
    %v2614 = vrot.slane %v2606, %v2613
    %v2616 = vunpack.c.l.s4 1983009808
    %v2617 = vunpack.c.0.s8 %v2616
    %v2618 = vlaneseq
    %v2619 = vshrl.u32 %v2618, 7
    %v2620 = vsub.s32 %v2617, %v2619
    %v2621 = vrot.slane %v2607, %v2620
    %v2622 = vcombine.low %v2614, %v2621
    %v2623 = vcombine.low %v1041, %v1045
    %v2624 = vcombine.low %v1049, %v1053
    %v2626 = vunpack.c.l.s4 1983009808
    %v2627 = vunpack.c.0.s8 %v2626
    %v2628 = vlaneseq
    %v2629 = vshrl.u32 %v2628, 7
    %v2630 = vsub.s32 %v2627, %v2629
    %v2631 = vrot.slane %v2623, %v2630
    %v2633 = vunpack.c.l.s4 1983009808
    %v2634 = vunpack.c.0.s8 %v2633
    %v2635 = vlaneseq
    %v2636 = vshrl.u32 %v2635, 7
    %v2637 = vsub.s32 %v2634, %v2636
    %v2638 = vrot.slane %v2624, %v2637
    %v2639 = vcombine.low %v2631, %v2638
    %v2640 = vcombine.low %v1057, %v1061
    %v2641 = vcombine.low %v1065, %v1069
    %v2643 = vunpack.c.l.s4 1983009808
    %v2644 = vunpack.c.0.s8 %v2643
    %v2645 = vlaneseq
    %v2646 = vshrl.u32 %v2645, 7
    %v2647 = vsub.s32 %v2644, %v2646
    %v2648 = vrot.slane %v2640, %v2647
    %v2650 = vunpack.c.l.s4 1983009808
    %v2651 = vunpack.c.0.s8 %v2650
    %v2652 = vlaneseq
    %v2653 = vshrl.u32 %v2652, 7
    %v2654 = vsub.s32 %v2651, %v2653
    %v2655 = vrot.slane %v2641, %v2654
    %v2656 = vcombine.low %v2648, %v2655
    %v2657 = vcombine.low %v1073, %v1077
    %v2658 = vcombine.low %v1081, %v1085
    %v2660 = vunpack.c.l.s4 1983009808
    %v2661 = vunpack.c.0.s8 %v2660
    %v2662 = vlaneseq
    %v2663 = vshrl.u32 %v2662, 7
    %v2664 = vsub.s32 %v2661, %v2663
    %v2665 = vrot.slane %v2657, %v2664
    %v2667 = vunpack.c.l.s4 1983009808
    %v2668 = vunpack.c.0.s8 %v2667
    %v2669 = vlaneseq
    %v2670 = vshrl.u32 %v2669, 7
    %v2671 = vsub.s32 %v2668, %v2670
    %v2672 = vrot.slane %v2658, %v2671
    %v2673 = vcombine.low %v2665, %v2672
    %v2674 = vcombine.low %v1089, %v1093
    %v2675 = vcombine.low %v1097, %v1101
    %v2677 = vunpack.c.l.s4 1983009808
    %v2678 = vunpack.c.0.s8 %v2677
    %v2679 = vlaneseq
    %v2680 = vshrl.u32 %v2679, 7
    %v2681 = vsub.s32 %v2678, %v2680
    %v2682 = vrot.slane %v2674, %v2681
    %v2684 = vunpack.c.l.s4 1983009808
    %v2685 = vunpack.c.0.s8 %v2684
    %v2686 = vlaneseq
    %v2687 = vshrl.u32 %v2686, 7
    %v2688 = vsub.s32 %v2685, %v2687
    %v2689 = vrot.slane %v2675, %v2688
    %v2690 = vcombine.low %v2682, %v2689
    %v2691 = vcombine.low %v1105, %v1109
    %v2692 = vcombine.low %v1113, %v1117
    %v2694 = vunpack.c.l.s4 1983009808
    %v2695 = vunpack.c.0.s8 %v2694
    %v2696 = vlaneseq
    %v2697 = vshrl.u32 %v2696, 7
    %v2698 = vsub.s32 %v2695, %v2697
    %v2699 = vrot.slane %v2691, %v2698
    %v2701 = vunpack.c.l.s4 1983009808
    %v2702 = vunpack.c.0.s8 %v2701
    %v2703 = vlaneseq
    %v2704 = vshrl.u32 %v2703, 7
    %v2705 = vsub.s32 %v2702, %v2704
    %v2706 = vrot.slane %v2692, %v2705
    %v2707 = vcombine.low %v2699, %v2706
    %v2708 = vcombine.low %v1121, %v1125
    %v2709 = vcombine.low %v1129, %v1133
    %v2711 = vunpack.c.l.s4 1983009808
    %v2712 = vunpack.c.0.s8 %v2711
    %v2713 = vlaneseq
    %v2714 = vshrl.u32 %v2713, 7
    %v2715 = vsub.s32 %v2712, %v2714
    %v2716 = vrot.slane %v2708, %v2715
    %v2718 = vunpack.c.l.s4 1983009808
    %v2719 = vunpack.c.0.s8 %v2718
    %v2720 = vlaneseq
    %v2721 = vshrl.u32 %v2720, 7
    %v2722 = vsub.s32 %v2719, %v2721
    %v2723 = vrot.slane %v2709, %v2722
    %v2724 = vcombine.low %v2716, %v2723
    %v2725 = vcombine.low %v1137, %v1141
    %v2726 = vcombine.low %v1145, %v1149
    %v2728 = vunpack.c.l.s4 1983009808
    %v2729 = vunpack.c.0.s8 %v2728
    %v2730 = vlaneseq
    %v2731 = vshrl.u32 %v2730, 7
    %v2732 = vsub.s32 %v2729, %v2731
    %v2733 = vrot.slane %v2725, %v2732
    %v2735 = vunpack.c.l.s4 1983009808
    %v2736 = vunpack.c.0.s8 %v2735
    %v2737 = vlaneseq
    %v2738 = vshrl.u32 %v2737, 7
    %v2739 = vsub.s32 %v2736, %v2738
    %v2740 = vrot.slane %v2726, %v2739
    %v2741 = vcombine.low %v2733, %v2740
    %v2742 = vcombine.low %v1153, %v1157
    %v2743 = vcombine.low %v1161, %v1165
    %v2745 = vunpack.c.l.s4 1983009808
    %v2746 = vunpack.c.0.s8 %v2745
    %v2747 = vlaneseq
    %v2748 = vshrl.u32 %v2747, 7
    %v2749 = vsub.s32 %v2746, %v2748
    %v2750 = vrot.slane %v2742, %v2749
    %v2752 = vunpack.c.l.s4 1983009808
    %v2753 = vunpack.c.0.s8 %v2752
    %v2754 = vlaneseq
    %v2755 = vshrl.u32 %v2754, 7
    %v2756 = vsub.s32 %v2753, %v2755
    %v2757 = vrot.slane %v2743, %v2756
    %v2758 = vcombine.low %v2750, %v2757
    %v2759 = vcombine.low %v1169, %v1173
    %v2760 = vcombine.low %v1177, %v1181
    %v2762 = vunpack.c.l.s4 1983009808
    %v2763 = vunpack.c.0.s8 %v2762
    %v2764 = vlaneseq
    %v2765 = vshrl.u32 %v2764, 7
    %v2766 = vsub.s32 %v2763, %v2765
    %v2767 = vrot.slane %v2759, %v2766
    %v2769 = vunpack.c.l.s4 1983009808
    %v2770 = vunpack.c.0.s8 %v2769
    %v2771 = vlaneseq
    %v2772 = vshrl.u32 %v2771, 7
    %v2773 = vsub.s32 %v2770, %v2772
    %v2774 = vrot.slane %v2760, %v2773
    %v2775 = vcombine.low %v2767, %v2774
    %v2776 = vcombine.low %v1185, %v1189
    %v2777 = vcombine.low %v1193, %v1197
    %v2779 = vunpack.c.l.s4 1983009808
    %v2780 = vunpack.c.0.s8 %v2779
    %v2781 = vlaneseq
    %v2782 = vshrl.u32 %v2781, 7
    %v2783 = vsub.s32 %v2780, %v2782
    %v2784 = vrot.slane %v2776, %v2783
    %v2786 = vunpack.c.l.s4 1983009808
    %v2787 = vunpack.c.0.s8 %v2786
    %v2788 = vlaneseq
    %v2789 = vshrl.u32 %v2788, 7
    %v2790 = vsub.s32 %v2787, %v2789
    %v2791 = vrot.slane %v2777, %v2790
    %v2792 = vcombine.low %v2784, %v2791
    %v2793 = vcombine.low %v1201, %v1205
    %v2794 = vcombine.low %v1209, %v1213
    %v2796 = vunpack.c.l.s4 1983009808
    %v2797 = vunpack.c.0.s8 %v2796
    %v2798 = vlaneseq
    %v2799 = vshrl.u32 %v2798, 7
    %v2800 = vsub.s32 %v2797, %v2799
    %v2801 = vrot.slane %v2793, %v2800
    %v2803 = vunpack.c.l.s4 1983009808
    %v2804 = vunpack.c.0.s8 %v2803
    %v2805 = vlaneseq
    %v2806 = vshrl.u32 %v2805, 7
    %v2807 = vsub.s32 %v2804, %v2806
    %v2808 = vrot.slane %v2794, %v2807
    %v2809 = vcombine.low %v2801, %v2808
    %v2810 = vcombine.low %v1217, %v1221
    %v2811 = vcombine.low %v1225, %v1229
    %v2813 = vunpack.c.l.s4 1983009808
    %v2814 = vunpack.c.0.s8 %v2813
    %v2815 = vlaneseq
    %v2816 = vshrl.u32 %v2815, 7
    %v2817 = vsub.s32 %v2814, %v2816
    %v2818 = vrot.slane %v2810, %v2817
    %v2820 = vunpack.c.l.s4 1983009808
    %v2821 = vunpack.c.0.s8 %v2820
    %v2822 = vlaneseq
    %v2823 = vshrl.u32 %v2822, 7
    %v2824 = vsub.s32 %v2821, %v2823
    %v2825 = vrot.slane %v2811, %v2824
    %v2826 = vcombine.low %v2818, %v2825
    %v2827 = vcombine.low %v1233, %v1237
    %v2828 = vcombine.low %v1241, %v1245
    %v2830 = vunpack.c.l.s4 1983009808
    %v2831 = vunpack.c.0.s8 %v2830
    %v2832 = vlaneseq
    %v2833 = vshrl.u32 %v2832, 7
    %v2834 = vsub.s32 %v2831, %v2833
    %v2835 = vrot.slane %v2827, %v2834
    %v2837 = vunpack.c.l.s4 1983009808
    %v2838 = vunpack.c.0.s8 %v2837
    %v2839 = vlaneseq
    %v2840 = vshrl.u32 %v2839, 7
    %v2841 = vsub.s32 %v2838, %v2840
    %v2842 = vrot.slane %v2828, %v2841
    %v2843 = vcombine.low %v2835, %v2842
    %v2844 = vcombine.low %v1249, %v1253
    %v2845 = vcombine.low %v1257, %v1261
    %v2847 = vunpack.c.l.s4 1983009808
    %v2848 = vunpack.c.0.s8 %v2847
    %v2849 = vlaneseq
    %v2850 = vshrl.u32 %v2849, 7
    %v2851 = vsub.s32 %v2848, %v2850
    %v2852 = vrot.slane %v2844, %v2851
    %v2854 = vunpack.c.l.s4 1983009808
    %v2855 = vunpack.c.0.s8 %v2854
    %v2856 = vlaneseq
    %v2857 = vshrl.u32 %v2856, 7
    %v2858 = vsub.s32 %v2855, %v2857
    %v2859 = vrot.slane %v2845, %v2858
    %v2860 = vcombine.low %v2852, %v2859
    %v2861 = vcombine.low %v1265, %v1269
    %v2862 = vcombine.low %v1273, %v1277
    %v2864 = vunpack.c.l.s4 1983009808
    %v2865 = vunpack.c.0.s8 %v2864
    %v2866 = vlaneseq
    %v2867 = vshrl.u32 %v2866, 7
    %v2868 = vsub.s32 %v2865, %v2867
    %v2869 = vrot.slane %v2861, %v2868
    %v2871 = vunpack.c.l.s4 1983009808
    %v2872 = vunpack.c.0.s8 %v2871
    %v2873 = vlaneseq
    %v2874 = vshrl.u32 %v2873, 7
    %v2875 = vsub.s32 %v2872, %v2874
    %v2876 = vrot.slane %v2862, %v2875
    %v2877 = vcombine.low %v2869, %v2876
    %v2878 = vcombine.low %v1281, %v1285
    %v2879 = vcombine.low %v1289, %v1293
    %v2881 = vunpack.c.l.s4 1983009808
    %v2882 = vunpack.c.0.s8 %v2881
    %v2883 = vlaneseq
    %v2884 = vshrl.u32 %v2883, 7
    %v2885 = vsub.s32 %v2882, %v2884
    %v2886 = vrot.slane %v2878, %v2885
    %v2888 = vunpack.c.l.s4 1983009808
    %v2889 = vunpack.c.0.s8 %v2888
    %v2890 = vlaneseq
    %v2891 = vshrl.u32 %v2890, 7
    %v2892 = vsub.s32 %v2889, %v2891
    %v2893 = vrot.slane %v2879, %v2892
    %v2894 = vcombine.low %v2886, %v2893
    %v2895 = vcombine.low %v1297, %v1301
    %v2896 = vcombine.low %v1305, %v1309
    %v2898 = vunpack.c.l.s4 1983009808
    %v2899 = vunpack.c.0.s8 %v2898
    %v2900 = vlaneseq
    %v2901 = vshrl.u32 %v2900, 7
    %v2902 = vsub.s32 %v2899, %v2901
    %v2903 = vrot.slane %v2895, %v2902
    %v2905 = vunpack.c.l.s4 1983009808
    %v2906 = vunpack.c.0.s8 %v2905
    %v2907 = vlaneseq
    %v2908 = vshrl.u32 %v2907, 7
    %v2909 = vsub.s32 %v2906, %v2908
    %v2910 = vrot.slane %v2896, %v2909
    %v2911 = vcombine.low %v2903, %v2910
    %v2912 = vcombine.low %v1313, %v1317
    %v2913 = vcombine.low %v1321, %v1325
    %v2915 = vunpack.c.l.s4 1983009808
    %v2916 = vunpack.c.0.s8 %v2915
    %v2917 = vlaneseq
    %v2918 = vshrl.u32 %v2917, 7
    %v2919 = vsub.s32 %v2916, %v2918
    %v2920 = vrot.slane %v2912, %v2919
    %v2922 = vunpack.c.l.s4 1983009808
    %v2923 = vunpack.c.0.s8 %v2922
    %v2924 = vlaneseq
    %v2925 = vshrl.u32 %v2924, 7
    %v2926 = vsub.s32 %v2923, %v2925
    %v2927 = vrot.slane %v2913, %v2926
    %v2928 = vcombine.low %v2920, %v2927
    %v2929 = vcombine.low %v1329, %v1333
    %v2930 = vcombine.low %v1337, %v1341
    %v2932 = vunpack.c.l.s4 1983009808
    %v2933 = vunpack.c.0.s8 %v2932
    %v2934 = vlaneseq
    %v2935 = vshrl.u32 %v2934, 7
    %v2936 = vsub.s32 %v2933, %v2935
    %v2937 = vrot.slane %v2929, %v2936
    %v2939 = vunpack.c.l.s4 1983009808
    %v2940 = vunpack.c.0.s8 %v2939
    %v2941 = vlaneseq
    %v2942 = vshrl.u32 %v2941, 7
    %v2943 = vsub.s32 %v2940, %v2942
    %v2944 = vrot.slane %v2930, %v2943
    %v2945 = vcombine.low %v2937, %v2944
    %v2946 = vcombine.low %v1345, %v1349
    %v2947 = vcombine.low %v1353, %v1357
    %v2949 = vunpack.c.l.s4 1983009808
    %v2950 = vunpack.c.0.s8 %v2949
    %v2951 = vlaneseq
    %v2952 = vshrl.u32 %v2951, 7
    %v2953 = vsub.s32 %v2950, %v2952
    %v2954 = vrot.slane %v2946, %v2953
    %v2956 = vunpack.c.l.s4 1983009808
    %v2957 = vunpack.c.0.s8 %v2956
    %v2958 = vlaneseq
    %v2959 = vshrl.u32 %v2958, 7
    %v2960 = vsub.s32 %v2957, %v2959
    %v2961 = vrot.slane %v2947, %v2960
    %v2962 = vcombine.low %v2954, %v2961
    %v2963 = vcombine.low %v1361, %v1365
    %v2964 = vcombine.low %v1369, %v1373
    %v2966 = vunpack.c.l.s4 1983009808
    %v2967 = vunpack.c.0.s8 %v2966
    %v2968 = vlaneseq
    %v2969 = vshrl.u32 %v2968, 7
    %v2970 = vsub.s32 %v2967, %v2969
    %v2971 = vrot.slane %v2963, %v2970
    %v2973 = vunpack.c.l.s4 1983009808
    %v2974 = vunpack.c.0.s8 %v2973
    %v2975 = vlaneseq
    %v2976 = vshrl.u32 %v2975, 7
    %v2977 = vsub.s32 %v2974, %v2976
    %v2978 = vrot.slane %v2964, %v2977
    %v2979 = vcombine.low %v2971, %v2978
    %v2980 = vcombine.low %v1377, %v1381
    %v2981 = vcombine.low %v1385, %v1389
    %v2983 = vunpack.c.l.s4 1983009808
    %v2984 = vunpack.c.0.s8 %v2983
    %v2985 = vlaneseq
    %v2986 = vshrl.u32 %v2985, 7
    %v2987 = vsub.s32 %v2984, %v2986
    %v2988 = vrot.slane %v2980, %v2987
    %v2990 = vunpack.c.l.s4 1983009808
    %v2991 = vunpack.c.0.s8 %v2990
    %v2992 = vlaneseq
    %v2993 = vshrl.u32 %v2992, 7
    %v2994 = vsub.s32 %v2991, %v2993
    %v2995 = vrot.slane %v2981, %v2994
    %v2996 = vcombine.low %v2988, %v2995
    %v2997 = vcombine.low %v1393, %v1397
    %v2998 = vcombine.low %v1401, %v1405
    %v3000 = vunpack.c.l.s4 1983009808
    %v3001 = vunpack.c.0.s8 %v3000
    %v3002 = vlaneseq
    %v3003 = vshrl.u32 %v3002, 7
    %v3004 = vsub.s32 %v3001, %v3003
    %v3005 = vrot.slane %v2997, %v3004
    %v3007 = vunpack.c.l.s4 1983009808
    %v3008 = vunpack.c.0.s8 %v3007
    %v3009 = vlaneseq
    %v3010 = vshrl.u32 %v3009, 7
    %v3011 = vsub.s32 %v3008, %v3010
    %v3012 = vrot.slane %v2998, %v3011
    %v3013 = vcombine.low %v3005, %v3012
    %v3014 = vcombine.low %v1409, %v1413
    %v3015 = vcombine.low %v1417, %v1421
    %v3017 = vunpack.c.l.s4 1983009808
    %v3018 = vunpack.c.0.s8 %v3017
    %v3019 = vlaneseq
    %v3020 = vshrl.u32 %v3019, 7
    %v3021 = vsub.s32 %v3018, %v3020
    %v3022 = vrot.slane %v3014, %v3021
    %v3024 = vunpack.c.l.s4 1983009808
    %v3025 = vunpack.c.0.s8 %v3024
    %v3026 = vlaneseq
    %v3027 = vshrl.u32 %v3026, 7
    %v3028 = vsub.s32 %v3025, %v3027
    %v3029 = vrot.slane %v3015, %v3028
    %v3030 = vcombine.low %v3022, %v3029
    %v3031 = vcombine.low %v1425, %v1429
    %v3032 = vcombine.low %v1433, %v1437
    %v3034 = vunpack.c.l.s4 1983009808
    %v3035 = vunpack.c.0.s8 %v3034
    %v3036 = vlaneseq
    %v3037 = vshrl.u32 %v3036, 7
    %v3038 = vsub.s32 %v3035, %v3037
    %v3039 = vrot.slane %v3031, %v3038
    %v3041 = vunpack.c.l.s4 1983009808
    %v3042 = vunpack.c.0.s8 %v3041
    %v3043 = vlaneseq
    %v3044 = vshrl.u32 %v3043, 7
    %v3045 = vsub.s32 %v3042, %v3044
    %v3046 = vrot.slane %v3032, %v3045
    %v3047 = vcombine.low %v3039, %v3046
    %v3048 = vcombine.low %v1441, %v1445
    %v3049 = vcombine.low %v1449, %v1453
    %v3051 = vunpack.c.l.s4 1983009808
    %v3052 = vunpack.c.0.s8 %v3051
    %v3053 = vlaneseq
    %v3054 = vshrl.u32 %v3053, 7
    %v3055 = vsub.s32 %v3052, %v3054
    %v3056 = vrot.slane %v3048, %v3055
    %v3058 = vunpack.c.l.s4 1983009808
    %v3059 = vunpack.c.0.s8 %v3058
    %v3060 = vlaneseq
    %v3061 = vshrl.u32 %v3060, 7
    %v3062 = vsub.s32 %v3059, %v3061
    %v3063 = vrot.slane %v3049, %v3062
    %v3064 = vcombine.low %v3056, %v3063
    %v3065 = vcombine.low %v1457, %v1461
    %v3066 = vcombine.low %v1465, %v1469
    %v3068 = vunpack.c.l.s4 1983009808
    %v3069 = vunpack.c.0.s8 %v3068
    %v3070 = vlaneseq
    %v3071 = vshrl.u32 %v3070, 7
    %v3072 = vsub.s32 %v3069, %v3071
    %v3073 = vrot.slane %v3065, %v3072
    %v3075 = vunpack.c.l.s4 1983009808
    %v3076 = vunpack.c.0.s8 %v3075
    %v3077 = vlaneseq
    %v3078 = vshrl.u32 %v3077, 7
    %v3079 = vsub.s32 %v3076, %v3078
    %v3080 = vrot.slane %v3066, %v3079
    %v3081 = vcombine.low %v3073, %v3080
    %v3082 = vcombine.low %v1473, %v1477
    %v3083 = vcombine.low %v1481, %v1485
    %v3085 = vunpack.c.l.s4 1983009808
    %v3086 = vunpack.c.0.s8 %v3085
    %v3087 = vlaneseq
    %v3088 = vshrl.u32 %v3087, 7
    %v3089 = vsub.s32 %v3086, %v3088
    %v3090 = vrot.slane %v3082, %v3089
    %v3092 = vunpack.c.l.s4 1983009808
    %v3093 = vunpack.c.0.s8 %v3092
    %v3094 = vlaneseq
    %v3095 = vshrl.u32 %v3094, 7
    %v3096 = vsub.s32 %v3093, %v3095
    %v3097 = vrot.slane %v3083, %v3096
    %v3098 = vcombine.low %v3090, %v3097
    %v3099 = vcombine.low %v1489, %v1493
    %v3100 = vcombine.low %v1497, %v1501
    %v3102 = vunpack.c.l.s4 1983009808
    %v3103 = vunpack.c.0.s8 %v3102
    %v3104 = vlaneseq
    %v3105 = vshrl.u32 %v3104, 7
    %v3106 = vsub.s32 %v3103, %v3105
    %v3107 = vrot.slane %v3099, %v3106
    %v3109 = vunpack.c.l.s4 1983009808
    %v3110 = vunpack.c.0.s8 %v3109
    %v3111 = vlaneseq
    %v3112 = vshrl.u32 %v3111, 7
    %v3113 = vsub.s32 %v3110, %v3112
    %v3114 = vrot.slane %v3100, %v3113
    %v3115 = vcombine.low %v3107, %v3114
    %v3116 = vcombine.low %v1505, %v1509
    %v3117 = vcombine.low %v1513, %v1517
    %v3119 = vunpack.c.l.s4 1983009808
    %v3120 = vunpack.c.0.s8 %v3119
    %v3121 = vlaneseq
    %v3122 = vshrl.u32 %v3121, 7
    %v3123 = vsub.s32 %v3120, %v3122
    %v3124 = vrot.slane %v3116, %v3123
    %v3126 = vunpack.c.l.s4 1983009808
    %v3127 = vunpack.c.0.s8 %v3126
    %v3128 = vlaneseq
    %v3129 = vshrl.u32 %v3128, 7
    %v3130 = vsub.s32 %v3127, %v3129
    %v3131 = vrot.slane %v3117, %v3130
    %v3132 = vcombine.low %v3124, %v3131
    %v3133 = vcombine.low %v1521, %v1525
    %v3134 = vcombine.low %v1529, %v1533
    %v3136 = vunpack.c.l.s4 1983009808
    %v3137 = vunpack.c.0.s8 %v3136
    %v3138 = vlaneseq
    %v3139 = vshrl.u32 %v3138, 7
    %v3140 = vsub.s32 %v3137, %v3139
    %v3141 = vrot.slane %v3133, %v3140
    %v3143 = vunpack.c.l.s4 1983009808
    %v3144 = vunpack.c.0.s8 %v3143
    %v3145 = vlaneseq
    %v3146 = vshrl.u32 %v3145, 7
    %v3147 = vsub.s32 %v3144, %v3146
    %v3148 = vrot.slane %v3134, %v3147
    %v3149 = vcombine.low %v3141, %v3148
    %v3150 = vcombine.low %v1537, %v1541
    %v3151 = vcombine.low %v1545, %v1549
    %v3153 = vunpack.c.l.s4 1983009808
    %v3154 = vunpack.c.0.s8 %v3153
    %v3155 = vlaneseq
    %v3156 = vshrl.u32 %v3155, 7
    %v3157 = vsub.s32 %v3154, %v3156
    %v3158 = vrot.slane %v3150, %v3157
    %v3160 = vunpack.c.l.s4 1983009808
    %v3161 = vunpack.c.0.s8 %v3160
    %v3162 = vlaneseq
    %v3163 = vshrl.u32 %v3162, 7
    %v3164 = vsub.s32 %v3161, %v3163
    %v3165 = vrot.slane %v3151, %v3164
    %v3166 = vcombine.low %v3158, %v3165
    %v3167 = vcombine.low %v1553, %v1557
    %v3168 = vcombine.low %v1561, %v1565
    %v3170 = vunpack.c.l.s4 1983009808
    %v3171 = vunpack.c.0.s8 %v3170
    %v3172 = vlaneseq
    %v3173 = vshrl.u32 %v3172, 7
    %v3174 = vsub.s32 %v3171, %v3173
    %v3175 = vrot.slane %v3167, %v3174
    %v3177 = vunpack.c.l.s4 1983009808
    %v3178 = vunpack.c.0.s8 %v3177
    %v3179 = vlaneseq
    %v3180 = vshrl.u32 %v3179, 7
    %v3181 = vsub.s32 %v3178, %v3180
    %v3182 = vrot.slane %v3168, %v3181
    %v3183 = vcombine.low %v3175, %v3182
    %v3184 = vcombine.low %v1569, %v1573
    %v3185 = vcombine.low %v1577, %v1581
    %v3187 = vunpack.c.l.s4 1983009808
    %v3188 = vunpack.c.0.s8 %v3187
    %v3189 = vlaneseq
    %v3190 = vshrl.u32 %v3189, 7
    %v3191 = vsub.s32 %v3188, %v3190
    %v3192 = vrot.slane %v3184, %v3191
    %v3194 = vunpack.c.l.s4 1983009808
    %v3195 = vunpack.c.0.s8 %v3194
    %v3196 = vlaneseq
    %v3197 = vshrl.u32 %v3196, 7
    %v3198 = vsub.s32 %v3195, %v3197
    %v3199 = vrot.slane %v3185, %v3198
    %v3200 = vcombine.low %v3192, %v3199
    %v3201 = vcombine.low %v1585, %v1589
    %v3202 = vcombine.low %v1593, %v1597
    %v3204 = vunpack.c.l.s4 1983009808
    %v3205 = vunpack.c.0.s8 %v3204
    %v3206 = vlaneseq
    %v3207 = vshrl.u32 %v3206, 7
    %v3208 = vsub.s32 %v3205, %v3207
    %v3209 = vrot.slane %v3201, %v3208
    %v3211 = vunpack.c.l.s4 1983009808
    %v3212 = vunpack.c.0.s8 %v3211
    %v3213 = vlaneseq
    %v3214 = vshrl.u32 %v3213, 7
    %v3215 = vsub.s32 %v3212, %v3214
    %v3216 = vrot.slane %v3202, %v3215
    %v3217 = vcombine.low %v3209, %v3216
    %v3218 = vcombine.low %v1601, %v1605
    %v3219 = vcombine.low %v1609, %v1613
    %v3221 = vunpack.c.l.s4 1983009808
    %v3222 = vunpack.c.0.s8 %v3221
    %v3223 = vlaneseq
    %v3224 = vshrl.u32 %v3223, 7
    %v3225 = vsub.s32 %v3222, %v3224
    %v3226 = vrot.slane %v3218, %v3225
    %v3228 = vunpack.c.l.s4 1983009808
    %v3229 = vunpack.c.0.s8 %v3228
    %v3230 = vlaneseq
    %v3231 = vshrl.u32 %v3230, 7
    %v3232 = vsub.s32 %v3229, %v3231
    %v3233 = vrot.slane %v3219, %v3232
    %v3234 = vcombine.low %v3226, %v3233
    %v3235 = vcombine.low %v1617, %v1621
    %v3236 = vcombine.low %v1625, %v1629
    %v3238 = vunpack.c.l.s4 1983009808
    %v3239 = vunpack.c.0.s8 %v3238
    %v3240 = vlaneseq
    %v3241 = vshrl.u32 %v3240, 7
    %v3242 = vsub.s32 %v3239, %v3241
    %v3243 = vrot.slane %v3235, %v3242
    %v3245 = vunpack.c.l.s4 1983009808
    %v3246 = vunpack.c.0.s8 %v3245
    %v3247 = vlaneseq
    %v3248 = vshrl.u32 %v3247, 7
    %v3249 = vsub.s32 %v3246, %v3248
    %v3250 = vrot.slane %v3236, %v3249
    %v3251 = vcombine.low %v3243, %v3250
    %v3252 = vcombine.low %v1633, %v1637
    %v3253 = vcombine.low %v1641, %v1645
    %v3255 = vunpack.c.l.s4 1983009808
    %v3256 = vunpack.c.0.s8 %v3255
    %v3257 = vlaneseq
    %v3258 = vshrl.u32 %v3257, 7
    %v3259 = vsub.s32 %v3256, %v3258
    %v3260 = vrot.slane %v3252, %v3259
    %v3262 = vunpack.c.l.s4 1983009808
    %v3263 = vunpack.c.0.s8 %v3262
    %v3264 = vlaneseq
    %v3265 = vshrl.u32 %v3264, 7
    %v3266 = vsub.s32 %v3263, %v3265
    %v3267 = vrot.slane %v3253, %v3266
    %v3268 = vcombine.low %v3260, %v3267
    %v3269 = vcombine.low %v1649, %v1653
    %v3270 = vcombine.low %v1657, %v1661
    %v3272 = vunpack.c.l.s4 1983009808
    %v3273 = vunpack.c.0.s8 %v3272
    %v3274 = vlaneseq
    %v3275 = vshrl.u32 %v3274, 7
    %v3276 = vsub.s32 %v3273, %v3275
    %v3277 = vrot.slane %v3269, %v3276
    %v3279 = vunpack.c.l.s4 1983009808
    %v3280 = vunpack.c.0.s8 %v3279
    %v3281 = vlaneseq
    %v3282 = vshrl.u32 %v3281, 7
    %v3283 = vsub.s32 %v3280, %v3282
    %v3284 = vrot.slane %v3270, %v3283
    %v3285 = vcombine.low %v3277, %v3284
    %v3286 = vcombine.low %v1665, %v1669
    %v3287 = vcombine.low %v1673, %v1677
    %v3289 = vunpack.c.l.s4 1983009808
    %v3290 = vunpack.c.0.s8 %v3289
    %v3291 = vlaneseq
    %v3292 = vshrl.u32 %v3291, 7
    %v3293 = vsub.s32 %v3290, %v3292
    %v3294 = vrot.slane %v3286, %v3293
    %v3296 = vunpack.c.l.s4 1983009808
    %v3297 = vunpack.c.0.s8 %v3296
    %v3298 = vlaneseq
    %v3299 = vshrl.u32 %v3298, 7
    %v3300 = vsub.s32 %v3297, %v3299
    %v3301 = vrot.slane %v3287, %v3300
    %v3302 = vcombine.low %v3294, %v3301
    %v3303 = vcombine.low %v1681, %v1685
    %v3304 = vcombine.low %v1689, %v1693
    %v3306 = vunpack.c.l.s4 1983009808
    %v3307 = vunpack.c.0.s8 %v3306
    %v3308 = vlaneseq
    %v3309 = vshrl.u32 %v3308, 7
    %v3310 = vsub.s32 %v3307, %v3309
    %v3311 = vrot.slane %v3303, %v3310
    %v3313 = vunpack.c.l.s4 1983009808
    %v3314 = vunpack.c.0.s8 %v3313
    %v3315 = vlaneseq
    %v3316 = vshrl.u32 %v3315, 7
    %v3317 = vsub.s32 %v3314, %v3316
    %v3318 = vrot.slane %v3304, %v3317
    %v3319 = vcombine.low %v3311, %v3318
    %v3320 = vcombine.low %v1697, %v1701
    %v3321 = vcombine.low %v1705, %v1709
    %v3323 = vunpack.c.l.s4 1983009808
    %v3324 = vunpack.c.0.s8 %v3323
    %v3325 = vlaneseq
    %v3326 = vshrl.u32 %v3325, 7
    %v3327 = vsub.s32 %v3324, %v3326
    %v3328 = vrot.slane %v3320, %v3327
    %v3330 = vunpack.c.l.s4 1983009808
    %v3331 = vunpack.c.0.s8 %v3330
    %v3332 = vlaneseq
    %v3333 = vshrl.u32 %v3332, 7
    %v3334 = vsub.s32 %v3331, %v3333
    %v3335 = vrot.slane %v3321, %v3334
    %v3336 = vcombine.low %v3328, %v3335
    %v3337 = vcombine.low %v1713, %v1717
    %v3338 = vcombine.low %v1721, %v1725
    %v3340 = vunpack.c.l.s4 1983009808
    %v3341 = vunpack.c.0.s8 %v3340
    %v3342 = vlaneseq
    %v3343 = vshrl.u32 %v3342, 7
    %v3344 = vsub.s32 %v3341, %v3343
    %v3345 = vrot.slane %v3337, %v3344
    %v3347 = vunpack.c.l.s4 1983009808
    %v3348 = vunpack.c.0.s8 %v3347
    %v3349 = vlaneseq
    %v3350 = vshrl.u32 %v3349, 7
    %v3351 = vsub.s32 %v3348, %v3350
    %v3352 = vrot.slane %v3338, %v3351
    %v3353 = vcombine.low %v3345, %v3352
    %v3354 = vcombine.low %v1729, %v1733
    %v3355 = vcombine.low %v1737, %v1741
    %v3357 = vunpack.c.l.s4 1983009808
    %v3358 = vunpack.c.0.s8 %v3357
    %v3359 = vlaneseq
    %v3360 = vshrl.u32 %v3359, 7
    %v3361 = vsub.s32 %v3358, %v3360
    %v3362 = vrot.slane %v3354, %v3361
    %v3364 = vunpack.c.l.s4 1983009808
    %v3365 = vunpack.c.0.s8 %v3364
    %v3366 = vlaneseq
    %v3367 = vshrl.u32 %v3366, 7
    %v3368 = vsub.s32 %v3365, %v3367
    %v3369 = vrot.slane %v3355, %v3368
    %v3370 = vcombine.low %v3362, %v3369
    %v3371 = vcombine.low %v1745, %v1749
    %v3372 = vcombine.low %v1753, %v1757
    %v3374 = vunpack.c.l.s4 1983009808
    %v3375 = vunpack.c.0.s8 %v3374
    %v3376 = vlaneseq
    %v3377 = vshrl.u32 %v3376, 7
    %v3378 = vsub.s32 %v3375, %v3377
    %v3379 = vrot.slane %v3371, %v3378
    %v3381 = vunpack.c.l.s4 1983009808
    %v3382 = vunpack.c.0.s8 %v3381
    %v3383 = vlaneseq
    %v3384 = vshrl.u32 %v3383, 7
    %v3385 = vsub.s32 %v3382, %v3384
    %v3386 = vrot.slane %v3372, %v3385
    %v3387 = vcombine.low %v3379, %v3386
    %v3388 = vcombine.low %v1761, %v1765
    %v3389 = vcombine.low %v1769, %v1773
    %v3391 = vunpack.c.l.s4 1983009808
    %v3392 = vunpack.c.0.s8 %v3391
    %v3393 = vlaneseq
    %v3394 = vshrl.u32 %v3393, 7
    %v3395 = vsub.s32 %v3392, %v3394
    %v3396 = vrot.slane %v3388, %v3395
    %v3398 = vunpack.c.l.s4 1983009808
    %v3399 = vunpack.c.0.s8 %v3398
    %v3400 = vlaneseq
    %v3401 = vshrl.u32 %v3400, 7
    %v3402 = vsub.s32 %v3399, %v3401
    %v3403 = vrot.slane %v3389, %v3402
    %v3404 = vcombine.low %v3396, %v3403
    %v3405 = vcombine.low %v1777, %v1781
    %v3406 = vcombine.low %v1785, %v1789
    %v3408 = vunpack.c.l.s4 1983009808
    %v3409 = vunpack.c.0.s8 %v3408
    %v3410 = vlaneseq
    %v3411 = vshrl.u32 %v3410, 7
    %v3412 = vsub.s32 %v3409, %v3411
    %v3413 = vrot.slane %v3405, %v3412
    %v3415 = vunpack.c.l.s4 1983009808
    %v3416 = vunpack.c.0.s8 %v3415
    %v3417 = vlaneseq
    %v3418 = vshrl.u32 %v3417, 7
    %v3419 = vsub.s32 %v3416, %v3418
    %v3420 = vrot.slane %v3406, %v3419
    %v3421 = vcombine.low %v3413, %v3420
    %v3518 = vmul.f32 %v15, %v1806
    %v3519 = vmul.f32 %v16, %v1823
    %v3520 = vmul.f32 %v17, %v1840
    %v3521 = vmul.f32 %v18, %v1857
    %v3522 = vmul.f32 %v19, %v1874
    %v3523 = vmul.f32 %v20, %v1891
    %v3524 = vmul.f32 %v21, %v1908
    %v3525 = vmul.f32 %v22, %v1925
    %v3526 = vmul.f32 %v23, %v1942
    %v3527 = vmul.f32 %v24, %v1959
    %v3528 = vmul.f32 %v25, %v1976
    %v3529 = vmul.f32 %v26, %v1993
    %v3530 = vmul.f32 %v27, %v2010
    %v3531 = vmul.f32 %v28, %v2027
    %v3532 = vmul.f32 %v29, %v2044
    %v3533 = vmul.f32 %v30, %v2061
    %v3534 = vmul.f32 %v31, %v2078
    %v3535 = vmul.f32 %v32, %v2095
    %v3536 = vmul.f32 %v33, %v2112
    %v3537 = vmul.f32 %v34, %v2129
    %v3538 = vmul.f32 %v35, %v2146
    %v3539 = vmul.f32 %v36, %v2163
    %v3540 = vmul.f32 %v37, %v2180
    %v3541 = vmul.f32 %v38, %v2197
    %v3542 = vmul.f32 %v39, %v2214
    %v3543 = vmul.f32 %v40, %v2231
    %v3544 = vmul.f32 %v41, %v2248
    %v3545 = vmul.f32 %v42, %v2265
    %v3546 = vmul.f32 %v43, %v2282
    %v3547 = vmul.f32 %v44, %v2299
    %v3548 = vmul.f32 %v45, %v2316
    %v3549 = vmul.f32 %v46, %v2333
    %v3550 = vmul.f32 %v47, %v2350
    %v3551 = vmul.f32 %v48, %v2367
    %v3552 = vmul.f32 %v49, %v2384
    %v3553 = vmul.f32 %v50, %v2401
    %v3554 = vmul.f32 %v51, %v2418
    %v3555 = vmul.f32 %v52, %v2435
    %v3556 = vmul.f32 %v53, %v2452
    %v3557 = vmul.f32 %v54, %v2469
    %v3558 = vmul.f32 %v55, %v2486
    %v3559 = vmul.f32 %v56, %v2503
    %v3560 = vmul.f32 %v57, %v2520
    %v3561 = vmul.f32 %v58, %v2537
    %v3562 = vmul.f32 %v59, %v2554
    %v3563 = vmul.f32 %v60, %v2571
    %v3564 = vmul.f32 %v61, %v2588
    %v3565 = vmul.f32 %v62, %v2605
    %v3566 = vmul.f32 %v63, %v2622
    %v3567 = vmul.f32 %v64, %v2639
    %v3568 = vmul.f32 %v65, %v2656
    %v3569 = vmul.f32 %v66, %v2673
    %v3570 = vmul.f32 %v67, %v2690
    %v3571 = vmul.f32 %v68, %v2707
    %v3572 = vmul.f32 %v69, %v2724
    %v3573 = vmul.f32 %v70, %v2741
    %v3574 = vmul.f32 %v71, %v2758
    %v3575 = vmul.f32 %v72, %v2775
    %v3576 = vmul.f32 %v73, %v2792
    %v3577 = vmul.f32 %v74, %v2809
    %v3578 = vmul.f32 %v75, %v2826
    %v3579 = vmul.f32 %v76, %v2843
    %v3580 = vmul.f32 %v77, %v2860
    %v3581 = vmul.f32 %v78, %v2877
    %v3582 = vmul.f32 %v79, %v2894
    %v3583 = vmul.f32 %v80, %v2911
    %v3584 = vmul.f32 %v81, %v2928
    %v3585 = vmul.f32 %v82, %v2945
    %v3586 = vmul.f32 %v83, %v2962
    %v3587 = vmul.f32 %v84, %v2979
    %v3588 = vmul.f32 %v85, %v2996
    %v3589 = vmul.f32 %v86, %v3013
    %v3590 = vmul.f32 %v87, %v3030
    %v3591 = vmul.f32 %v88, %v3047
    %v3592 = vmul.f32 %v89, %v3064
    %v3593 = vmul.f32 %v90, %v3081
    %v3594 = vmul.f32 %v91, %v3098
    %v3595 = vmul.f32 %v92, %v3115
    %v3596 = vmul.f32 %v93, %v3132
    %v3597 = vmul.f32 %v94, %v3149
    %v3598 = vmul.f32 %v95, %v3166
    %v3599 = vmul.f32 %v96, %v3183
    %v3600 = vmul.f32 %v97, %v3200
    %v3601 = vmul.f32 %v98, %v3217
    %v3602 = vmul.f32 %v99, %v3234
    %v3603 = vmul.f32 %v100, %v3251
    %v3604 = vmul.f32 %v101, %v3268
    %v3605 = vmul.f32 %v102, %v3285
    %v3606 = vmul.f32 %v103, %v3302
    %v3607 = vmul.f32 %v104, %v3319
    %v3608 = vmul.f32 %v105, %v3336
    %v3609 = vmul.f32 %v106, %v3353
    %v3610 = vmul.f32 %v107, %v3370
    %v3611 = vmul.f32 %v108, %v3387
    %v3612 = vmul.f32 %v109, %v3404
    %v3613 = vmul.f32 %v110, %v3421
    %v3710 = vcombine.high %v3518, %v3518
    %v3712 = vunpack.c.l.s4 1983009808
    %v3713 = vunpack.c.0.s8 %v3712
    %v3714 = vlaneseq
    %v3715 = vshrl.u32 %v3714, 7
    %v3716 = vsub.s32 %v3713, %v3715
    %v3717 = vrot.slane %v3518, %v3716
    %v3719 = vunpack.c.l.s4 1983009808
    %v3720 = vunpack.c.0.s8 %v3719
    %v3721 = vlaneseq
    %v3722 = vshrl.u32 %v3721, 7
    %v3723 = vsub.s32 %v3720, %v3722
    %v3724 = vrot.slane %v3710, %v3723
    %v3725 = vcombine.high %v3717, %v3717
    %v3726 = vcombine.high %v3724, %v3724
    %v3727 = vcombine.high %v3519, %v3519
    %v3729 = vunpack.c.l.s4 1983009808
    %v3730 = vunpack.c.0.s8 %v3729
    %v3731 = vlaneseq
    %v3732 = vshrl.u32 %v3731, 7
    %v3733 = vsub.s32 %v3730, %v3732
    %v3734 = vrot.slane %v3519, %v3733
    %v3736 = vunpack.c.l.s4 1983009808
    %v3737 = vunpack.c.0.s8 %v3736
    %v3738 = vlaneseq
    %v3739 = vshrl.u32 %v3738, 7
    %v3740 = vsub.s32 %v3737, %v3739
    %v3741 = vrot.slane %v3727, %v3740
    %v3742 = vcombine.high %v3734, %v3734
    %v3743 = vcombine.high %v3741, %v3741
    %v3744 = vcombine.high %v3520, %v3520
    %v3746 = vunpack.c.l.s4 1983009808
    %v3747 = vunpack.c.0.s8 %v3746
    %v3748 = vlaneseq
    %v3749 = vshrl.u32 %v3748, 7
    %v3750 = vsub.s32 %v3747, %v3749
    %v3751 = vrot.slane %v3520, %v3750
    %v3753 = vunpack.c.l.s4 1983009808
    %v3754 = vunpack.c.0.s8 %v3753
    %v3755 = vlaneseq
    %v3756 = vshrl.u32 %v3755, 7
    %v3757 = vsub.s32 %v3754, %v3756
    %v3758 = vrot.slane %v3744, %v3757
    %v3759 = vcombine.high %v3751, %v3751
    %v3760 = vcombine.high %v3758, %v3758
    %v3761 = vcombine.high %v3521, %v3521
    %v3763 = vunpack.c.l.s4 1983009808
    %v3764 = vunpack.c.0.s8 %v3763
    %v3765 = vlaneseq
    %v3766 = vshrl.u32 %v3765, 7
    %v3767 = vsub.s32 %v3764, %v3766
    %v3768 = vrot.slane %v3521, %v3767
    %v3770 = vunpack.c.l.s4 1983009808
    %v3771 = vunpack.c.0.s8 %v3770
    %v3772 = vlaneseq
    %v3773 = vshrl.u32 %v3772, 7
    %v3774 = vsub.s32 %v3771, %v3773
    %v3775 = vrot.slane %v3761, %v3774
    %v3776 = vcombine.high %v3768, %v3768
    %v3777 = vcombine.high %v3775, %v3775
    %v3778 = vcombine.high %v3522, %v3522
    %v3780 = vunpack.c.l.s4 1983009808
    %v3781 = vunpack.c.0.s8 %v3780
    %v3782 = vlaneseq
    %v3783 = vshrl.u32 %v3782, 7
    %v3784 = vsub.s32 %v3781, %v3783
    %v3785 = vrot.slane %v3522, %v3784
    %v3787 = vunpack.c.l.s4 1983009808
    %v3788 = vunpack.c.0.s8 %v3787
    %v3789 = vlaneseq
    %v3790 = vshrl.u32 %v3789, 7
    %v3791 = vsub.s32 %v3788, %v3790
    %v3792 = vrot.slane %v3778, %v3791
    %v3793 = vcombine.high %v3785, %v3785
    %v3794 = vcombine.high %v3792, %v3792
    %v3795 = vcombine.high %v3523, %v3523
    %v3797 = vunpack.c.l.s4 1983009808
    %v3798 = vunpack.c.0.s8 %v3797
    %v3799 = vlaneseq
    %v3800 = vshrl.u32 %v3799, 7
    %v3801 = vsub.s32 %v3798, %v3800
    %v3802 = vrot.slane %v3523, %v3801
    %v3804 = vunpack.c.l.s4 1983009808
    %v3805 = vunpack.c.0.s8 %v3804
    %v3806 = vlaneseq
    %v3807 = vshrl.u32 %v3806, 7
    %v3808 = vsub.s32 %v3805, %v3807
    %v3809 = vrot.slane %v3795, %v3808
    %v3810 = vcombine.high %v3802, %v3802
    %v3811 = vcombine.high %v3809, %v3809
    %v3812 = vcombine.high %v3524, %v3524
    %v3814 = vunpack.c.l.s4 1983009808
    %v3815 = vunpack.c.0.s8 %v3814
    %v3816 = vlaneseq
    %v3817 = vshrl.u32 %v3816, 7
    %v3818 = vsub.s32 %v3815, %v3817
    %v3819 = vrot.slane %v3524, %v3818
    %v3821 = vunpack.c.l.s4 1983009808
    %v3822 = vunpack.c.0.s8 %v3821
    %v3823 = vlaneseq
    %v3824 = vshrl.u32 %v3823, 7
    %v3825 = vsub.s32 %v3822, %v3824
    %v3826 = vrot.slane %v3812, %v3825
    %v3827 = vcombine.high %v3819, %v3819
    %v3828 = vcombine.high %v3826, %v3826
    %v3829 = vcombine.high %v3525, %v3525
    %v3831 = vunpack.c.l.s4 1983009808
    %v3832 = vunpack.c.0.s8 %v3831
    %v3833 = vlaneseq
    %v3834 = vshrl.u32 %v3833, 7
    %v3835 = vsub.s32 %v3832, %v3834
    %v3836 = vrot.slane %v3525, %v3835
    %v3838 = vunpack.c.l.s4 1983009808
    %v3839 = vunpack.c.0.s8 %v3838
    %v3840 = vlaneseq
    %v3841 = vshrl.u32 %v3840, 7
    %v3842 = vsub.s32 %v3839, %v3841
    %v3843 = vrot.slane %v3829, %v3842
    %v3844 = vcombine.high %v3836, %v3836
    %v3845 = vcombine.high %v3843, %v3843
    %v3846 = vcombine.high %v3526, %v3526
    %v3848 = vunpack.c.l.s4 1983009808
    %v3849 = vunpack.c.0.s8 %v3848
    %v3850 = vlaneseq
    %v3851 = vshrl.u32 %v3850, 7
    %v3852 = vsub.s32 %v3849, %v3851
    %v3853 = vrot.slane %v3526, %v3852
    %v3855 = vunpack.c.l.s4 1983009808
    %v3856 = vunpack.c.0.s8 %v3855
    %v3857 = vlaneseq
    %v3858 = vshrl.u32 %v3857, 7
    %v3859 = vsub.s32 %v3856, %v3858
    %v3860 = vrot.slane %v3846, %v3859
    %v3861 = vcombine.high %v3853, %v3853
    %v3862 = vcombine.high %v3860, %v3860
    %v3863 = vcombine.high %v3527, %v3527
    %v3865 = vunpack.c.l.s4 1983009808
    %v3866 = vunpack.c.0.s8 %v3865
    %v3867 = vlaneseq
    %v3868 = vshrl.u32 %v3867, 7
    %v3869 = vsub.s32 %v3866, %v3868
    %v3870 = vrot.slane %v3527, %v3869
    %v3872 = vunpack.c.l.s4 1983009808
    %v3873 = vunpack.c.0.s8 %v3872
    %v3874 = vlaneseq
    %v3875 = vshrl.u32 %v3874, 7
    %v3876 = vsub.s32 %v3873, %v3875
    %v3877 = vrot.slane %v3863, %v3876
    %v3878 = vcombine.high %v3870, %v3870
    %v3879 = vcombine.high %v3877, %v3877
    %v3880 = vcombine.high %v3528, %v3528
    %v3882 = vunpack.c.l.s4 1983009808
    %v3883 = vunpack.c.0.s8 %v3882
    %v3884 = vlaneseq
    %v3885 = vshrl.u32 %v3884, 7
    %v3886 = vsub.s32 %v3883, %v3885
    %v3887 = vrot.slane %v3528, %v3886
    %v3889 = vunpack.c.l.s4 1983009808
    %v3890 = vunpack.c.0.s8 %v3889
    %v3891 = vlaneseq
    %v3892 = vshrl.u32 %v3891, 7
    %v3893 = vsub.s32 %v3890, %v3892
    %v3894 = vrot.slane %v3880, %v3893
    %v3895 = vcombine.high %v3887, %v3887
    %v3896 = vcombine.high %v3894, %v3894
    %v3897 = vcombine.high %v3529, %v3529
    %v3899 = vunpack.c.l.s4 1983009808
    %v3900 = vunpack.c.0.s8 %v3899
    %v3901 = vlaneseq
    %v3902 = vshrl.u32 %v3901, 7
    %v3903 = vsub.s32 %v3900, %v3902
    %v3904 = vrot.slane %v3529, %v3903
    %v3906 = vunpack.c.l.s4 1983009808
    %v3907 = vunpack.c.0.s8 %v3906
    %v3908 = vlaneseq
    %v3909 = vshrl.u32 %v3908, 7
    %v3910 = vsub.s32 %v3907, %v3909
    %v3911 = vrot.slane %v3897, %v3910
    %v3912 = vcombine.high %v3904, %v3904
    %v3913 = vcombine.high %v3911, %v3911
    %v3914 = vcombine.high %v3530, %v3530
    %v3916 = vunpack.c.l.s4 1983009808
    %v3917 = vunpack.c.0.s8 %v3916
    %v3918 = vlaneseq
    %v3919 = vshrl.u32 %v3918, 7
    %v3920 = vsub.s32 %v3917, %v3919
    %v3921 = vrot.slane %v3530, %v3920
    %v3923 = vunpack.c.l.s4 1983009808
    %v3924 = vunpack.c.0.s8 %v3923
    %v3925 = vlaneseq
    %v3926 = vshrl.u32 %v3925, 7
    %v3927 = vsub.s32 %v3924, %v3926
    %v3928 = vrot.slane %v3914, %v3927
    %v3929 = vcombine.high %v3921, %v3921
    %v3930 = vcombine.high %v3928, %v3928
    %v3931 = vcombine.high %v3531, %v3531
    %v3933 = vunpack.c.l.s4 1983009808
    %v3934 = vunpack.c.0.s8 %v3933
    %v3935 = vlaneseq
    %v3936 = vshrl.u32 %v3935, 7
    %v3937 = vsub.s32 %v3934, %v3936
    %v3938 = vrot.slane %v3531, %v3937
    %v3940 = vunpack.c.l.s4 1983009808
    %v3941 = vunpack.c.0.s8 %v3940
    %v3942 = vlaneseq
    %v3943 = vshrl.u32 %v3942, 7
    %v3944 = vsub.s32 %v3941, %v3943
    %v3945 = vrot.slane %v3931, %v3944
    %v3946 = vcombine.high %v3938, %v3938
    %v3947 = vcombine.high %v3945, %v3945
    %v3948 = vcombine.high %v3532, %v3532
    %v3950 = vunpack.c.l.s4 1983009808
    %v3951 = vunpack.c.0.s8 %v3950
    %v3952 = vlaneseq
    %v3953 = vshrl.u32 %v3952, 7
    %v3954 = vsub.s32 %v3951, %v3953
    %v3955 = vrot.slane %v3532, %v3954
    %v3957 = vunpack.c.l.s4 1983009808
    %v3958 = vunpack.c.0.s8 %v3957
    %v3959 = vlaneseq
    %v3960 = vshrl.u32 %v3959, 7
    %v3961 = vsub.s32 %v3958, %v3960
    %v3962 = vrot.slane %v3948, %v3961
    %v3963 = vcombine.high %v3955, %v3955
    %v3964 = vcombine.high %v3962, %v3962
    %v3965 = vcombine.high %v3533, %v3533
    %v3967 = vunpack.c.l.s4 1983009808
    %v3968 = vunpack.c.0.s8 %v3967
    %v3969 = vlaneseq
    %v3970 = vshrl.u32 %v3969, 7
    %v3971 = vsub.s32 %v3968, %v3970
    %v3972 = vrot.slane %v3533, %v3971
    %v3974 = vunpack.c.l.s4 1983009808
    %v3975 = vunpack.c.0.s8 %v3974
    %v3976 = vlaneseq
    %v3977 = vshrl.u32 %v3976, 7
    %v3978 = vsub.s32 %v3975, %v3977
    %v3979 = vrot.slane %v3965, %v3978
    %v3980 = vcombine.high %v3972, %v3972
    %v3981 = vcombine.high %v3979, %v3979
    %v3982 = vcombine.high %v3534, %v3534
    %v3984 = vunpack.c.l.s4 1983009808
    %v3985 = vunpack.c.0.s8 %v3984
    %v3986 = vlaneseq
    %v3987 = vshrl.u32 %v3986, 7
    %v3988 = vsub.s32 %v3985, %v3987
    %v3989 = vrot.slane %v3534, %v3988
    %v3991 = vunpack.c.l.s4 1983009808
    %v3992 = vunpack.c.0.s8 %v3991
    %v3993 = vlaneseq
    %v3994 = vshrl.u32 %v3993, 7
    %v3995 = vsub.s32 %v3992, %v3994
    %v3996 = vrot.slane %v3982, %v3995
    %v3997 = vcombine.high %v3989, %v3989
    %v3998 = vcombine.high %v3996, %v3996
    %v3999 = vcombine.high %v3535, %v3535
    %v4001 = vunpack.c.l.s4 1983009808
    %v4002 = vunpack.c.0.s8 %v4001
    %v4003 = vlaneseq
    %v4004 = vshrl.u32 %v4003, 7
    %v4005 = vsub.s32 %v4002, %v4004
    %v4006 = vrot.slane %v3535, %v4005
    %v4008 = vunpack.c.l.s4 1983009808
    %v4009 = vunpack.c.0.s8 %v4008
    %v4010 = vlaneseq
    %v4011 = vshrl.u32 %v4010, 7
    %v4012 = vsub.s32 %v4009, %v4011
    %v4013 = vrot.slane %v3999, %v4012
    %v4014 = vcombine.high %v4006, %v4006
    %v4015 = vcombine.high %v4013, %v4013
    %v4016 = vcombine.high %v3536, %v3536
    %v4018 = vunpack.c.l.s4 1983009808
    %v4019 = vunpack.c.0.s8 %v4018
    %v4020 = vlaneseq
    %v4021 = vshrl.u32 %v4020, 7
    %v4022 = vsub.s32 %v4019, %v4021
    %v4023 = vrot.slane %v3536, %v4022
    %v4025 = vunpack.c.l.s4 1983009808
    %v4026 = vunpack.c.0.s8 %v4025
    %v4027 = vlaneseq
    %v4028 = vshrl.u32 %v4027, 7
    %v4029 = vsub.s32 %v4026, %v4028
    %v4030 = vrot.slane %v4016, %v4029
    %v4031 = vcombine.high %v4023, %v4023
    %v4032 = vcombine.high %v4030, %v4030
    %v4033 = vcombine.high %v3537, %v3537
    %v4035 = vunpack.c.l.s4 1983009808
    %v4036 = vunpack.c.0.s8 %v4035
    %v4037 = vlaneseq
    %v4038 = vshrl.u32 %v4037, 7
    %v4039 = vsub.s32 %v4036, %v4038
    %v4040 = vrot.slane %v3537, %v4039
    %v4042 = vunpack.c.l.s4 1983009808
    %v4043 = vunpack.c.0.s8 %v4042
    %v4044 = vlaneseq
    %v4045 = vshrl.u32 %v4044, 7
    %v4046 = vsub.s32 %v4043, %v4045
    %v4047 = vrot.slane %v4033, %v4046
    %v4048 = vcombine.high %v4040, %v4040
    %v4049 = vcombine.high %v4047, %v4047
    %v4050 = vcombine.high %v3538, %v3538
    %v4052 = vunpack.c.l.s4 1983009808
    %v4053 = vunpack.c.0.s8 %v4052
    %v4054 = vlaneseq
    %v4055 = vshrl.u32 %v4054, 7
    %v4056 = vsub.s32 %v4053, %v4055
    %v4057 = vrot.slane %v3538, %v4056
    %v4059 = vunpack.c.l.s4 1983009808
    %v4060 = vunpack.c.0.s8 %v4059
    %v4061 = vlaneseq
    %v4062 = vshrl.u32 %v4061, 7
    %v4063 = vsub.s32 %v4060, %v4062
    %v4064 = vrot.slane %v4050, %v4063
    %v4065 = vcombine.high %v4057, %v4057
    %v4066 = vcombine.high %v4064, %v4064
    %v4067 = vcombine.high %v3539, %v3539
    %v4069 = vunpack.c.l.s4 1983009808
    %v4070 = vunpack.c.0.s8 %v4069
    %v4071 = vlaneseq
    %v4072 = vshrl.u32 %v4071, 7
    %v4073 = vsub.s32 %v4070, %v4072
    %v4074 = vrot.slane %v3539, %v4073
    %v4076 = vunpack.c.l.s4 1983009808
    %v4077 = vunpack.c.0.s8 %v4076
    %v4078 = vlaneseq
    %v4079 = vshrl.u32 %v4078, 7
    %v4080 = vsub.s32 %v4077, %v4079
    %v4081 = vrot.slane %v4067, %v4080
    %v4082 = vcombine.high %v4074, %v4074
    %v4083 = vcombine.high %v4081, %v4081
    %v4084 = vcombine.high %v3540, %v3540
    %v4086 = vunpack.c.l.s4 1983009808
    %v4087 = vunpack.c.0.s8 %v4086
    %v4088 = vlaneseq
    %v4089 = vshrl.u32 %v4088, 7
    %v4090 = vsub.s32 %v4087, %v4089
    %v4091 = vrot.slane %v3540, %v4090
    %v4093 = vunpack.c.l.s4 1983009808
    %v4094 = vunpack.c.0.s8 %v4093
    %v4095 = vlaneseq
    %v4096 = vshrl.u32 %v4095, 7
    %v4097 = vsub.s32 %v4094, %v4096
    %v4098 = vrot.slane %v4084, %v4097
    %v4099 = vcombine.high %v4091, %v4091
    %v4100 = vcombine.high %v4098, %v4098
    %v4101 = vcombine.high %v3541, %v3541
    %v4103 = vunpack.c.l.s4 1983009808
    %v4104 = vunpack.c.0.s8 %v4103
    %v4105 = vlaneseq
    %v4106 = vshrl.u32 %v4105, 7
    %v4107 = vsub.s32 %v4104, %v4106
    %v4108 = vrot.slane %v3541, %v4107
    %v4110 = vunpack.c.l.s4 1983009808
    %v4111 = vunpack.c.0.s8 %v4110
    %v4112 = vlaneseq
    %v4113 = vshrl.u32 %v4112, 7
    %v4114 = vsub.s32 %v4111, %v4113
    %v4115 = vrot.slane %v4101, %v4114
    %v4116 = vcombine.high %v4108, %v4108
    %v4117 = vcombine.high %v4115, %v4115
    %v4118 = vcombine.high %v3542, %v3542
    %v4120 = vunpack.c.l.s4 1983009808
    %v4121 = vunpack.c.0.s8 %v4120
    %v4122 = vlaneseq
    %v4123 = vshrl.u32 %v4122, 7
    %v4124 = vsub.s32 %v4121, %v4123
    %v4125 = vrot.slane %v3542, %v4124
    %v4127 = vunpack.c.l.s4 1983009808
    %v4128 = vunpack.c.0.s8 %v4127
    %v4129 = vlaneseq
    %v4130 = vshrl.u32 %v4129, 7
    %v4131 = vsub.s32 %v4128, %v4130
    %v4132 = vrot.slane %v4118, %v4131
    %v4133 = vcombine.high %v4125, %v4125
    %v4134 = vcombine.high %v4132, %v4132
    %v4135 = vcombine.high %v3543, %v3543
    %v4137 = vunpack.c.l.s4 1983009808
    %v4138 = vunpack.c.0.s8 %v4137
    %v4139 = vlaneseq
    %v4140 = vshrl.u32 %v4139, 7
    %v4141 = vsub.s32 %v4138, %v4140
    %v4142 = vrot.slane %v3543, %v4141
    %v4144 = vunpack.c.l.s4 1983009808
    %v4145 = vunpack.c.0.s8 %v4144
    %v4146 = vlaneseq
    %v4147 = vshrl.u32 %v4146, 7
    %v4148 = vsub.s32 %v4145, %v4147
    %v4149 = vrot.slane %v4135, %v4148
    %v4150 = vcombine.high %v4142, %v4142
    %v4151 = vcombine.high %v4149, %v4149
    %v4152 = vcombine.high %v3544, %v3544
    %v4154 = vunpack.c.l.s4 1983009808
    %v4155 = vunpack.c.0.s8 %v4154
    %v4156 = vlaneseq
    %v4157 = vshrl.u32 %v4156, 7
    %v4158 = vsub.s32 %v4155, %v4157
    %v4159 = vrot.slane %v3544, %v4158
    %v4161 = vunpack.c.l.s4 1983009808
    %v4162 = vunpack.c.0.s8 %v4161
    %v4163 = vlaneseq
    %v4164 = vshrl.u32 %v4163, 7
    %v4165 = vsub.s32 %v4162, %v4164
    %v4166 = vrot.slane %v4152, %v4165
    %v4167 = vcombine.high %v4159, %v4159
    %v4168 = vcombine.high %v4166, %v4166
    %v4169 = vcombine.high %v3545, %v3545
    %v4171 = vunpack.c.l.s4 1983009808
    %v4172 = vunpack.c.0.s8 %v4171
    %v4173 = vlaneseq
    %v4174 = vshrl.u32 %v4173, 7
    %v4175 = vsub.s32 %v4172, %v4174
    %v4176 = vrot.slane %v3545, %v4175
    %v4178 = vunpack.c.l.s4 1983009808
    %v4179 = vunpack.c.0.s8 %v4178
    %v4180 = vlaneseq
    %v4181 = vshrl.u32 %v4180, 7
    %v4182 = vsub.s32 %v4179, %v4181
    %v4183 = vrot.slane %v4169, %v4182
    %v4184 = vcombine.high %v4176, %v4176
    %v4185 = vcombine.high %v4183, %v4183
    %v4186 = vcombine.high %v3546, %v3546
    %v4188 = vunpack.c.l.s4 1983009808
    %v4189 = vunpack.c.0.s8 %v4188
    %v4190 = vlaneseq
    %v4191 = vshrl.u32 %v4190, 7
    %v4192 = vsub.s32 %v4189, %v4191
    %v4193 = vrot.slane %v3546, %v4192
    %v4195 = vunpack.c.l.s4 1983009808
    %v4196 = vunpack.c.0.s8 %v4195
    %v4197 = vlaneseq
    %v4198 = vshrl.u32 %v4197, 7
    %v4199 = vsub.s32 %v4196, %v4198
    %v4200 = vrot.slane %v4186, %v4199
    %v4201 = vcombine.high %v4193, %v4193
    %v4202 = vcombine.high %v4200, %v4200
    %v4203 = vcombine.high %v3547, %v3547
    %v4205 = vunpack.c.l.s4 1983009808
    %v4206 = vunpack.c.0.s8 %v4205
    %v4207 = vlaneseq
    %v4208 = vshrl.u32 %v4207, 7
    %v4209 = vsub.s32 %v4206, %v4208
    %v4210 = vrot.slane %v3547, %v4209
    %v4212 = vunpack.c.l.s4 1983009808
    %v4213 = vunpack.c.0.s8 %v4212
    %v4214 = vlaneseq
    %v4215 = vshrl.u32 %v4214, 7
    %v4216 = vsub.s32 %v4213, %v4215
    %v4217 = vrot.slane %v4203, %v4216
    %v4218 = vcombine.high %v4210, %v4210
    %v4219 = vcombine.high %v4217, %v4217
    %v4220 = vcombine.high %v3548, %v3548
    %v4222 = vunpack.c.l.s4 1983009808
    %v4223 = vunpack.c.0.s8 %v4222
    %v4224 = vlaneseq
    %v4225 = vshrl.u32 %v4224, 7
    %v4226 = vsub.s32 %v4223, %v4225
    %v4227 = vrot.slane %v3548, %v4226
    %v4229 = vunpack.c.l.s4 1983009808
    %v4230 = vunpack.c.0.s8 %v4229
    %v4231 = vlaneseq
    %v4232 = vshrl.u32 %v4231, 7
    %v4233 = vsub.s32 %v4230, %v4232
    %v4234 = vrot.slane %v4220, %v4233
    %v4235 = vcombine.high %v4227, %v4227
    %v4236 = vcombine.high %v4234, %v4234
    %v4237 = vcombine.high %v3549, %v3549
    %v4239 = vunpack.c.l.s4 1983009808
    %v4240 = vunpack.c.0.s8 %v4239
    %v4241 = vlaneseq
    %v4242 = vshrl.u32 %v4241, 7
    %v4243 = vsub.s32 %v4240, %v4242
    %v4244 = vrot.slane %v3549, %v4243
    %v4246 = vunpack.c.l.s4 1983009808
    %v4247 = vunpack.c.0.s8 %v4246
    %v4248 = vlaneseq
    %v4249 = vshrl.u32 %v4248, 7
    %v4250 = vsub.s32 %v4247, %v4249
    %v4251 = vrot.slane %v4237, %v4250
    %v4252 = vcombine.high %v4244, %v4244
    %v4253 = vcombine.high %v4251, %v4251
    %v4254 = vcombine.high %v3550, %v3550
    %v4256 = vunpack.c.l.s4 1983009808
    %v4257 = vunpack.c.0.s8 %v4256
    %v4258 = vlaneseq
    %v4259 = vshrl.u32 %v4258, 7
    %v4260 = vsub.s32 %v4257, %v4259
    %v4261 = vrot.slane %v3550, %v4260
    %v4263 = vunpack.c.l.s4 1983009808
    %v4264 = vunpack.c.0.s8 %v4263
    %v4265 = vlaneseq
    %v4266 = vshrl.u32 %v4265, 7
    %v4267 = vsub.s32 %v4264, %v4266
    %v4268 = vrot.slane %v4254, %v4267
    %v4269 = vcombine.high %v4261, %v4261
    %v4270 = vcombine.high %v4268, %v4268
    %v4271 = vcombine.high %v3551, %v3551
    %v4273 = vunpack.c.l.s4 1983009808
    %v4274 = vunpack.c.0.s8 %v4273
    %v4275 = vlaneseq
    %v4276 = vshrl.u32 %v4275, 7
    %v4277 = vsub.s32 %v4274, %v4276
    %v4278 = vrot.slane %v3551, %v4277
    %v4280 = vunpack.c.l.s4 1983009808
    %v4281 = vunpack.c.0.s8 %v4280
    %v4282 = vlaneseq
    %v4283 = vshrl.u32 %v4282, 7
    %v4284 = vsub.s32 %v4281, %v4283
    %v4285 = vrot.slane %v4271, %v4284
    %v4286 = vcombine.high %v4278, %v4278
    %v4287 = vcombine.high %v4285, %v4285
    %v4288 = vcombine.high %v3552, %v3552
    %v4290 = vunpack.c.l.s4 1983009808
    %v4291 = vunpack.c.0.s8 %v4290
    %v4292 = vlaneseq
    %v4293 = vshrl.u32 %v4292, 7
    %v4294 = vsub.s32 %v4291, %v4293
    %v4295 = vrot.slane %v3552, %v4294
    %v4297 = vunpack.c.l.s4 1983009808
    %v4298 = vunpack.c.0.s8 %v4297
    %v4299 = vlaneseq
    %v4300 = vshrl.u32 %v4299, 7
    %v4301 = vsub.s32 %v4298, %v4300
    %v4302 = vrot.slane %v4288, %v4301
    %v4303 = vcombine.high %v4295, %v4295
    %v4304 = vcombine.high %v4302, %v4302
    %v4305 = vcombine.high %v3553, %v3553
    %v4307 = vunpack.c.l.s4 1983009808
    %v4308 = vunpack.c.0.s8 %v4307
    %v4309 = vlaneseq
    %v4310 = vshrl.u32 %v4309, 7
    %v4311 = vsub.s32 %v4308, %v4310
    %v4312 = vrot.slane %v3553, %v4311
    %v4314 = vunpack.c.l.s4 1983009808
    %v4315 = vunpack.c.0.s8 %v4314
    %v4316 = vlaneseq
    %v4317 = vshrl.u32 %v4316, 7
    %v4318 = vsub.s32 %v4315, %v4317
    %v4319 = vrot.slane %v4305, %v4318
    %v4320 = vcombine.high %v4312, %v4312
    %v4321 = vcombine.high %v4319, %v4319
    %v4322 = vcombine.high %v3554, %v3554
    %v4324 = vunpack.c.l.s4 1983009808
    %v4325 = vunpack.c.0.s8 %v4324
    %v4326 = vlaneseq
    %v4327 = vshrl.u32 %v4326, 7
    %v4328 = vsub.s32 %v4325, %v4327
    %v4329 = vrot.slane %v3554, %v4328
    %v4331 = vunpack.c.l.s4 1983009808
    %v4332 = vunpack.c.0.s8 %v4331
    %v4333 = vlaneseq
    %v4334 = vshrl.u32 %v4333, 7
    %v4335 = vsub.s32 %v4332, %v4334
    %v4336 = vrot.slane %v4322, %v4335
    %v4337 = vcombine.high %v4329, %v4329
    %v4338 = vcombine.high %v4336, %v4336
    %v4339 = vcombine.high %v3555, %v3555
    %v4341 = vunpack.c.l.s4 1983009808
    %v4342 = vunpack.c.0.s8 %v4341
    %v4343 = vlaneseq
    %v4344 = vshrl.u32 %v4343, 7
    %v4345 = vsub.s32 %v4342, %v4344
    %v4346 = vrot.slane %v3555, %v4345
    %v4348 = vunpack.c.l.s4 1983009808
    %v4349 = vunpack.c.0.s8 %v4348
    %v4350 = vlaneseq
    %v4351 = vshrl.u32 %v4350, 7
    %v4352 = vsub.s32 %v4349, %v4351
    %v4353 = vrot.slane %v4339, %v4352
    %v4354 = vcombine.high %v4346, %v4346
    %v4355 = vcombine.high %v4353, %v4353
    %v4356 = vcombine.high %v3556, %v3556
    %v4358 = vunpack.c.l.s4 1983009808
    %v4359 = vunpack.c.0.s8 %v4358
    %v4360 = vlaneseq
    %v4361 = vshrl.u32 %v4360, 7
    %v4362 = vsub.s32 %v4359, %v4361
    %v4363 = vrot.slane %v3556, %v4362
    %v4365 = vunpack.c.l.s4 1983009808
    %v4366 = vunpack.c.0.s8 %v4365
    %v4367 = vlaneseq
    %v4368 = vshrl.u32 %v4367, 7
    %v4369 = vsub.s32 %v4366, %v4368
    %v4370 = vrot.slane %v4356, %v4369
    %v4371 = vcombine.high %v4363, %v4363
    %v4372 = vcombine.high %v4370, %v4370
    %v4373 = vcombine.high %v3557, %v3557
    %v4375 = vunpack.c.l.s4 1983009808
    %v4376 = vunpack.c.0.s8 %v4375
    %v4377 = vlaneseq
    %v4378 = vshrl.u32 %v4377, 7
    %v4379 = vsub.s32 %v4376, %v4378
    %v4380 = vrot.slane %v3557, %v4379
    %v4382 = vunpack.c.l.s4 1983009808
    %v4383 = vunpack.c.0.s8 %v4382
    %v4384 = vlaneseq
    %v4385 = vshrl.u32 %v4384, 7
    %v4386 = vsub.s32 %v4383, %v4385
    %v4387 = vrot.slane %v4373, %v4386
    %v4388 = vcombine.high %v4380, %v4380
    %v4389 = vcombine.high %v4387, %v4387
    %v4390 = vcombine.high %v3558, %v3558
    %v4392 = vunpack.c.l.s4 1983009808
    %v4393 = vunpack.c.0.s8 %v4392
    %v4394 = vlaneseq
    %v4395 = vshrl.u32 %v4394, 7
    %v4396 = vsub.s32 %v4393, %v4395
    %v4397 = vrot.slane %v3558, %v4396
    %v4399 = vunpack.c.l.s4 1983009808
    %v4400 = vunpack.c.0.s8 %v4399
    %v4401 = vlaneseq
    %v4402 = vshrl.u32 %v4401, 7
    %v4403 = vsub.s32 %v4400, %v4402
    %v4404 = vrot.slane %v4390, %v4403
    %v4405 = vcombine.high %v4397, %v4397
    %v4406 = vcombine.high %v4404, %v4404
    %v4407 = vcombine.high %v3559, %v3559
    %v4409 = vunpack.c.l.s4 1983009808
    %v4410 = vunpack.c.0.s8 %v4409
    %v4411 = vlaneseq
    %v4412 = vshrl.u32 %v4411, 7
    %v4413 = vsub.s32 %v4410, %v4412
    %v4414 = vrot.slane %v3559, %v4413
    %v4416 = vunpack.c.l.s4 1983009808
    %v4417 = vunpack.c.0.s8 %v4416
    %v4418 = vlaneseq
    %v4419 = vshrl.u32 %v4418, 7
    %v4420 = vsub.s32 %v4417, %v4419
    %v4421 = vrot.slane %v4407, %v4420
    %v4422 = vcombine.high %v4414, %v4414
    %v4423 = vcombine.high %v4421, %v4421
    %v4424 = vcombine.high %v3560, %v3560
    %v4426 = vunpack.c.l.s4 1983009808
    %v4427 = vunpack.c.0.s8 %v4426
    %v4428 = vlaneseq
    %v4429 = vshrl.u32 %v4428, 7
    %v4430 = vsub.s32 %v4427, %v4429
    %v4431 = vrot.slane %v3560, %v4430
    %v4433 = vunpack.c.l.s4 1983009808
    %v4434 = vunpack.c.0.s8 %v4433
    %v4435 = vlaneseq
    %v4436 = vshrl.u32 %v4435, 7
    %v4437 = vsub.s32 %v4434, %v4436
    %v4438 = vrot.slane %v4424, %v4437
    %v4439 = vcombine.high %v4431, %v4431
    %v4440 = vcombine.high %v4438, %v4438
    %v4441 = vcombine.high %v3561, %v3561
    %v4443 = vunpack.c.l.s4 1983009808
    %v4444 = vunpack.c.0.s8 %v4443
    %v4445 = vlaneseq
    %v4446 = vshrl.u32 %v4445, 7
    %v4447 = vsub.s32 %v4444, %v4446
    %v4448 = vrot.slane %v3561, %v4447
    %v4450 = vunpack.c.l.s4 1983009808
    %v4451 = vunpack.c.0.s8 %v4450
    %v4452 = vlaneseq
    %v4453 = vshrl.u32 %v4452, 7
    %v4454 = vsub.s32 %v4451, %v4453
    %v4455 = vrot.slane %v4441, %v4454
    %v4456 = vcombine.high %v4448, %v4448
    %v4457 = vcombine.high %v4455, %v4455
    %v4458 = vcombine.high %v3562, %v3562
    %v4460 = vunpack.c.l.s4 1983009808
    %v4461 = vunpack.c.0.s8 %v4460
    %v4462 = vlaneseq
    %v4463 = vshrl.u32 %v4462, 7
    %v4464 = vsub.s32 %v4461, %v4463
    %v4465 = vrot.slane %v3562, %v4464
    %v4467 = vunpack.c.l.s4 1983009808
    %v4468 = vunpack.c.0.s8 %v4467
    %v4469 = vlaneseq
    %v4470 = vshrl.u32 %v4469, 7
    %v4471 = vsub.s32 %v4468, %v4470
    %v4472 = vrot.slane %v4458, %v4471
    %v4473 = vcombine.high %v4465, %v4465
    %v4474 = vcombine.high %v4472, %v4472
    %v4475 = vcombine.high %v3563, %v3563
    %v4477 = vunpack.c.l.s4 1983009808
    %v4478 = vunpack.c.0.s8 %v4477
    %v4479 = vlaneseq
    %v4480 = vshrl.u32 %v4479, 7
    %v4481 = vsub.s32 %v4478, %v4480
    %v4482 = vrot.slane %v3563, %v4481
    %v4484 = vunpack.c.l.s4 1983009808
    %v4485 = vunpack.c.0.s8 %v4484
    %v4486 = vlaneseq
    %v4487 = vshrl.u32 %v4486, 7
    %v4488 = vsub.s32 %v4485, %v4487
    %v4489 = vrot.slane %v4475, %v4488
    %v4490 = vcombine.high %v4482, %v4482
    %v4491 = vcombine.high %v4489, %v4489
    %v4492 = vcombine.high %v3564, %v3564
    %v4494 = vunpack.c.l.s4 1983009808
    %v4495 = vunpack.c.0.s8 %v4494
    %v4496 = vlaneseq
    %v4497 = vshrl.u32 %v4496, 7
    %v4498 = vsub.s32 %v4495, %v4497
    %v4499 = vrot.slane %v3564, %v4498
    %v4501 = vunpack.c.l.s4 1983009808
    %v4502 = vunpack.c.0.s8 %v4501
    %v4503 = vlaneseq
    %v4504 = vshrl.u32 %v4503, 7
    %v4505 = vsub.s32 %v4502, %v4504
    %v4506 = vrot.slane %v4492, %v4505
    %v4507 = vcombine.high %v4499, %v4499
    %v4508 = vcombine.high %v4506, %v4506
    %v4509 = vcombine.high %v3565, %v3565
    %v4511 = vunpack.c.l.s4 1983009808
    %v4512 = vunpack.c.0.s8 %v4511
    %v4513 = vlaneseq
    %v4514 = vshrl.u32 %v4513, 7
    %v4515 = vsub.s32 %v4512, %v4514
    %v4516 = vrot.slane %v3565, %v4515
    %v4518 = vunpack.c.l.s4 1983009808
    %v4519 = vunpack.c.0.s8 %v4518
    %v4520 = vlaneseq
    %v4521 = vshrl.u32 %v4520, 7
    %v4522 = vsub.s32 %v4519, %v4521
    %v4523 = vrot.slane %v4509, %v4522
    %v4524 = vcombine.high %v4516, %v4516
    %v4525 = vcombine.high %v4523, %v4523
    %v4526 = vcombine.high %v3566, %v3566
    %v4528 = vunpack.c.l.s4 1983009808
    %v4529 = vunpack.c.0.s8 %v4528
    %v4530 = vlaneseq
    %v4531 = vshrl.u32 %v4530, 7
    %v4532 = vsub.s32 %v4529, %v4531
    %v4533 = vrot.slane %v3566, %v4532
    %v4535 = vunpack.c.l.s4 1983009808
    %v4536 = vunpack.c.0.s8 %v4535
    %v4537 = vlaneseq
    %v4538 = vshrl.u32 %v4537, 7
    %v4539 = vsub.s32 %v4536, %v4538
    %v4540 = vrot.slane %v4526, %v4539
    %v4541 = vcombine.high %v4533, %v4533
    %v4542 = vcombine.high %v4540, %v4540
    %v4543 = vcombine.high %v3567, %v3567
    %v4545 = vunpack.c.l.s4 1983009808
    %v4546 = vunpack.c.0.s8 %v4545
    %v4547 = vlaneseq
    %v4548 = vshrl.u32 %v4547, 7
    %v4549 = vsub.s32 %v4546, %v4548
    %v4550 = vrot.slane %v3567, %v4549
    %v4552 = vunpack.c.l.s4 1983009808
    %v4553 = vunpack.c.0.s8 %v4552
    %v4554 = vlaneseq
    %v4555 = vshrl.u32 %v4554, 7
    %v4556 = vsub.s32 %v4553, %v4555
    %v4557 = vrot.slane %v4543, %v4556
    %v4558 = vcombine.high %v4550, %v4550
    %v4559 = vcombine.high %v4557, %v4557
    %v4560 = vcombine.high %v3568, %v3568
    %v4562 = vunpack.c.l.s4 1983009808
    %v4563 = vunpack.c.0.s8 %v4562
    %v4564 = vlaneseq
    %v4565 = vshrl.u32 %v4564, 7
    %v4566 = vsub.s32 %v4563, %v4565
    %v4567 = vrot.slane %v3568, %v4566
    %v4569 = vunpack.c.l.s4 1983009808
    %v4570 = vunpack.c.0.s8 %v4569
    %v4571 = vlaneseq
    %v4572 = vshrl.u32 %v4571, 7
    %v4573 = vsub.s32 %v4570, %v4572
    %v4574 = vrot.slane %v4560, %v4573
    %v4575 = vcombine.high %v4567, %v4567
    %v4576 = vcombine.high %v4574, %v4574
    %v4577 = vcombine.high %v3569, %v3569
    %v4579 = vunpack.c.l.s4 1983009808
    %v4580 = vunpack.c.0.s8 %v4579
    %v4581 = vlaneseq
    %v4582 = vshrl.u32 %v4581, 7
    %v4583 = vsub.s32 %v4580, %v4582
    %v4584 = vrot.slane %v3569, %v4583
    %v4586 = vunpack.c.l.s4 1983009808
    %v4587 = vunpack.c.0.s8 %v4586
    %v4588 = vlaneseq
    %v4589 = vshrl.u32 %v4588, 7
    %v4590 = vsub.s32 %v4587, %v4589
    %v4591 = vrot.slane %v4577, %v4590
    %v4592 = vcombine.high %v4584, %v4584
    %v4593 = vcombine.high %v4591, %v4591
    %v4594 = vcombine.high %v3570, %v3570
    %v4596 = vunpack.c.l.s4 1983009808
    %v4597 = vunpack.c.0.s8 %v4596
    %v4598 = vlaneseq
    %v4599 = vshrl.u32 %v4598, 7
    %v4600 = vsub.s32 %v4597, %v4599
    %v4601 = vrot.slane %v3570, %v4600
    %v4603 = vunpack.c.l.s4 1983009808
    %v4604 = vunpack.c.0.s8 %v4603
    %v4605 = vlaneseq
    %v4606 = vshrl.u32 %v4605, 7
    %v4607 = vsub.s32 %v4604, %v4606
    %v4608 = vrot.slane %v4594, %v4607
    %v4609 = vcombine.high %v4601, %v4601
    %v4610 = vcombine.high %v4608, %v4608
    %v4611 = vcombine.high %v3571, %v3571
    %v4613 = vunpack.c.l.s4 1983009808
    %v4614 = vunpack.c.0.s8 %v4613
    %v4615 = vlaneseq
    %v4616 = vshrl.u32 %v4615, 7
    %v4617 = vsub.s32 %v4614, %v4616
    %v4618 = vrot.slane %v3571, %v4617
    %v4620 = vunpack.c.l.s4 1983009808
    %v4621 = vunpack.c.0.s8 %v4620
    %v4622 = vlaneseq
    %v4623 = vshrl.u32 %v4622, 7
    %v4624 = vsub.s32 %v4621, %v4623
    %v4625 = vrot.slane %v4611, %v4624
    %v4626 = vcombine.high %v4618, %v4618
    %v4627 = vcombine.high %v4625, %v4625
    %v4628 = vcombine.high %v3572, %v3572
    %v4630 = vunpack.c.l.s4 1983009808
    %v4631 = vunpack.c.0.s8 %v4630
    %v4632 = vlaneseq
    %v4633 = vshrl.u32 %v4632, 7
    %v4634 = vsub.s32 %v4631, %v4633
    %v4635 = vrot.slane %v3572, %v4634
    %v4637 = vunpack.c.l.s4 1983009808
    %v4638 = vunpack.c.0.s8 %v4637
    %v4639 = vlaneseq
    %v4640 = vshrl.u32 %v4639, 7
    %v4641 = vsub.s32 %v4638, %v4640
    %v4642 = vrot.slane %v4628, %v4641
    %v4643 = vcombine.high %v4635, %v4635
    %v4644 = vcombine.high %v4642, %v4642
    %v4645 = vcombine.high %v3573, %v3573
    %v4647 = vunpack.c.l.s4 1983009808
    %v4648 = vunpack.c.0.s8 %v4647
    %v4649 = vlaneseq
    %v4650 = vshrl.u32 %v4649, 7
    %v4651 = vsub.s32 %v4648, %v4650
    %v4652 = vrot.slane %v3573, %v4651
    %v4654 = vunpack.c.l.s4 1983009808
    %v4655 = vunpack.c.0.s8 %v4654
    %v4656 = vlaneseq
    %v4657 = vshrl.u32 %v4656, 7
    %v4658 = vsub.s32 %v4655, %v4657
    %v4659 = vrot.slane %v4645, %v4658
    %v4660 = vcombine.high %v4652, %v4652
    %v4661 = vcombine.high %v4659, %v4659
    %v4662 = vcombine.high %v3574, %v3574
    %v4664 = vunpack.c.l.s4 1983009808
    %v4665 = vunpack.c.0.s8 %v4664
    %v4666 = vlaneseq
    %v4667 = vshrl.u32 %v4666, 7
    %v4668 = vsub.s32 %v4665, %v4667
    %v4669 = vrot.slane %v3574, %v4668
    %v4671 = vunpack.c.l.s4 1983009808
    %v4672 = vunpack.c.0.s8 %v4671
    %v4673 = vlaneseq
    %v4674 = vshrl.u32 %v4673, 7
    %v4675 = vsub.s32 %v4672, %v4674
    %v4676 = vrot.slane %v4662, %v4675
    %v4677 = vcombine.high %v4669, %v4669
    %v4678 = vcombine.high %v4676, %v4676
    %v4679 = vcombine.high %v3575, %v3575
    %v4681 = vunpack.c.l.s4 1983009808
    %v4682 = vunpack.c.0.s8 %v4681
    %v4683 = vlaneseq
    %v4684 = vshrl.u32 %v4683, 7
    %v4685 = vsub.s32 %v4682, %v4684
    %v4686 = vrot.slane %v3575, %v4685
    %v4688 = vunpack.c.l.s4 1983009808
    %v4689 = vunpack.c.0.s8 %v4688
    %v4690 = vlaneseq
    %v4691 = vshrl.u32 %v4690, 7
    %v4692 = vsub.s32 %v4689, %v4691
    %v4693 = vrot.slane %v4679, %v4692
    %v4694 = vcombine.high %v4686, %v4686
    %v4695 = vcombine.high %v4693, %v4693
    %v4696 = vcombine.high %v3576, %v3576
    %v4698 = vunpack.c.l.s4 1983009808
    %v4699 = vunpack.c.0.s8 %v4698
    %v4700 = vlaneseq
    %v4701 = vshrl.u32 %v4700, 7
    %v4702 = vsub.s32 %v4699, %v4701
    %v4703 = vrot.slane %v3576, %v4702
    %v4705 = vunpack.c.l.s4 1983009808
    %v4706 = vunpack.c.0.s8 %v4705
    %v4707 = vlaneseq
    %v4708 = vshrl.u32 %v4707, 7
    %v4709 = vsub.s32 %v4706, %v4708
    %v4710 = vrot.slane %v4696, %v4709
    %v4711 = vcombine.high %v4703, %v4703
    %v4712 = vcombine.high %v4710, %v4710
    %v4713 = vcombine.high %v3577, %v3577
    %v4715 = vunpack.c.l.s4 1983009808
    %v4716 = vunpack.c.0.s8 %v4715
    %v4717 = vlaneseq
    %v4718 = vshrl.u32 %v4717, 7
    %v4719 = vsub.s32 %v4716, %v4718
    %v4720 = vrot.slane %v3577, %v4719
    %v4722 = vunpack.c.l.s4 1983009808
    %v4723 = vunpack.c.0.s8 %v4722
    %v4724 = vlaneseq
    %v4725 = vshrl.u32 %v4724, 7
    %v4726 = vsub.s32 %v4723, %v4725
    %v4727 = vrot.slane %v4713, %v4726
    %v4728 = vcombine.high %v4720, %v4720
    %v4729 = vcombine.high %v4727, %v4727
    %v4730 = vcombine.high %v3578, %v3578
    %v4732 = vunpack.c.l.s4 1983009808
    %v4733 = vunpack.c.0.s8 %v4732
    %v4734 = vlaneseq
    %v4735 = vshrl.u32 %v4734, 7
    %v4736 = vsub.s32 %v4733, %v4735
    %v4737 = vrot.slane %v3578, %v4736
    %v4739 = vunpack.c.l.s4 1983009808
    %v4740 = vunpack.c.0.s8 %v4739
    %v4741 = vlaneseq
    %v4742 = vshrl.u32 %v4741, 7
    %v4743 = vsub.s32 %v4740, %v4742
    %v4744 = vrot.slane %v4730, %v4743
    %v4745 = vcombine.high %v4737, %v4737
    %v4746 = vcombine.high %v4744, %v4744
    %v4747 = vcombine.high %v3579, %v3579
    %v4749 = vunpack.c.l.s4 1983009808
    %v4750 = vunpack.c.0.s8 %v4749
    %v4751 = vlaneseq
    %v4752 = vshrl.u32 %v4751, 7
    %v4753 = vsub.s32 %v4750, %v4752
    %v4754 = vrot.slane %v3579, %v4753
    %v4756 = vunpack.c.l.s4 1983009808
    %v4757 = vunpack.c.0.s8 %v4756
    %v4758 = vlaneseq
    %v4759 = vshrl.u32 %v4758, 7
    %v4760 = vsub.s32 %v4757, %v4759
    %v4761 = vrot.slane %v4747, %v4760
    %v4762 = vcombine.high %v4754, %v4754
    %v4763 = vcombine.high %v4761, %v4761
    %v4764 = vcombine.high %v3580, %v3580
    %v4766 = vunpack.c.l.s4 1983009808
    %v4767 = vunpack.c.0.s8 %v4766
    %v4768 = vlaneseq
    %v4769 = vshrl.u32 %v4768, 7
    %v4770 = vsub.s32 %v4767, %v4769
    %v4771 = vrot.slane %v3580, %v4770
    %v4773 = vunpack.c.l.s4 1983009808
    %v4774 = vunpack.c.0.s8 %v4773
    %v4775 = vlaneseq
    %v4776 = vshrl.u32 %v4775, 7
    %v4777 = vsub.s32 %v4774, %v4776
    %v4778 = vrot.slane %v4764, %v4777
    %v4779 = vcombine.high %v4771, %v4771
    %v4780 = vcombine.high %v4778, %v4778
    %v4781 = vcombine.high %v3581, %v3581
    %v4783 = vunpack.c.l.s4 1983009808
    %v4784 = vunpack.c.0.s8 %v4783
    %v4785 = vlaneseq
    %v4786 = vshrl.u32 %v4785, 7
    %v4787 = vsub.s32 %v4784, %v4786
    %v4788 = vrot.slane %v3581, %v4787
    %v4790 = vunpack.c.l.s4 1983009808
    %v4791 = vunpack.c.0.s8 %v4790
    %v4792 = vlaneseq
    %v4793 = vshrl.u32 %v4792, 7
    %v4794 = vsub.s32 %v4791, %v4793
    %v4795 = vrot.slane %v4781, %v4794
    %v4796 = vcombine.high %v4788, %v4788
    %v4797 = vcombine.high %v4795, %v4795
    %v4798 = vcombine.high %v3582, %v3582
    %v4800 = vunpack.c.l.s4 1983009808
    %v4801 = vunpack.c.0.s8 %v4800
    %v4802 = vlaneseq
    %v4803 = vshrl.u32 %v4802, 7
    %v4804 = vsub.s32 %v4801, %v4803
    %v4805 = vrot.slane %v3582, %v4804
    %v4807 = vunpack.c.l.s4 1983009808
    %v4808 = vunpack.c.0.s8 %v4807
    %v4809 = vlaneseq
    %v4810 = vshrl.u32 %v4809, 7
    %v4811 = vsub.s32 %v4808, %v4810
    %v4812 = vrot.slane %v4798, %v4811
    %v4813 = vcombine.high %v4805, %v4805
    %v4814 = vcombine.high %v4812, %v4812
    %v4815 = vcombine.high %v3583, %v3583
    %v4817 = vunpack.c.l.s4 1983009808
    %v4818 = vunpack.c.0.s8 %v4817
    %v4819 = vlaneseq
    %v4820 = vshrl.u32 %v4819, 7
    %v4821 = vsub.s32 %v4818, %v4820
    %v4822 = vrot.slane %v3583, %v4821
    %v4824 = vunpack.c.l.s4 1983009808
    %v4825 = vunpack.c.0.s8 %v4824
    %v4826 = vlaneseq
    %v4827 = vshrl.u32 %v4826, 7
    %v4828 = vsub.s32 %v4825, %v4827
    %v4829 = vrot.slane %v4815, %v4828
    %v4830 = vcombine.high %v4822, %v4822
    %v4831 = vcombine.high %v4829, %v4829
    %v4832 = vcombine.high %v3584, %v3584
    %v4834 = vunpack.c.l.s4 1983009808
    %v4835 = vunpack.c.0.s8 %v4834
    %v4836 = vlaneseq
    %v4837 = vshrl.u32 %v4836, 7
    %v4838 = vsub.s32 %v4835, %v4837
    %v4839 = vrot.slane %v3584, %v4838
    %v4841 = vunpack.c.l.s4 1983009808
    %v4842 = vunpack.c.0.s8 %v4841
    %v4843 = vlaneseq
    %v4844 = vshrl.u32 %v4843, 7
    %v4845 = vsub.s32 %v4842, %v4844
    %v4846 = vrot.slane %v4832, %v4845
    %v4847 = vcombine.high %v4839, %v4839
    %v4848 = vcombine.high %v4846, %v4846
    %v4849 = vcombine.high %v3585, %v3585
    %v4851 = vunpack.c.l.s4 1983009808
    %v4852 = vunpack.c.0.s8 %v4851
    %v4853 = vlaneseq
    %v4854 = vshrl.u32 %v4853, 7
    %v4855 = vsub.s32 %v4852, %v4854
    %v4856 = vrot.slane %v3585, %v4855
    %v4858 = vunpack.c.l.s4 1983009808
    %v4859 = vunpack.c.0.s8 %v4858
    %v4860 = vlaneseq
    %v4861 = vshrl.u32 %v4860, 7
    %v4862 = vsub.s32 %v4859, %v4861
    %v4863 = vrot.slane %v4849, %v4862
    %v4864 = vcombine.high %v4856, %v4856
    %v4865 = vcombine.high %v4863, %v4863
    %v4866 = vcombine.high %v3586, %v3586
    %v4868 = vunpack.c.l.s4 1983009808
    %v4869 = vunpack.c.0.s8 %v4868
    %v4870 = vlaneseq
    %v4871 = vshrl.u32 %v4870, 7
    %v4872 = vsub.s32 %v4869, %v4871
    %v4873 = vrot.slane %v3586, %v4872
    %v4875 = vunpack.c.l.s4 1983009808
    %v4876 = vunpack.c.0.s8 %v4875
    %v4877 = vlaneseq
    %v4878 = vshrl.u32 %v4877, 7
    %v4879 = vsub.s32 %v4876, %v4878
    %v4880 = vrot.slane %v4866, %v4879
    %v4881 = vcombine.high %v4873, %v4873
    %v4882 = vcombine.high %v4880, %v4880
    %v4883 = vcombine.high %v3587, %v3587
    %v4885 = vunpack.c.l.s4 1983009808
    %v4886 = vunpack.c.0.s8 %v4885
    %v4887 = vlaneseq
    %v4888 = vshrl.u32 %v4887, 7
    %v4889 = vsub.s32 %v4886, %v4888
    %v4890 = vrot.slane %v3587, %v4889
    %v4892 = vunpack.c.l.s4 1983009808
    %v4893 = vunpack.c.0.s8 %v4892
    %v4894 = vlaneseq
    %v4895 = vshrl.u32 %v4894, 7
    %v4896 = vsub.s32 %v4893, %v4895
    %v4897 = vrot.slane %v4883, %v4896
    %v4898 = vcombine.high %v4890, %v4890
    %v4899 = vcombine.high %v4897, %v4897
    %v4900 = vcombine.high %v3588, %v3588
    %v4902 = vunpack.c.l.s4 1983009808
    %v4903 = vunpack.c.0.s8 %v4902
    %v4904 = vlaneseq
    %v4905 = vshrl.u32 %v4904, 7
    %v4906 = vsub.s32 %v4903, %v4905
    %v4907 = vrot.slane %v3588, %v4906
    %v4909 = vunpack.c.l.s4 1983009808
    %v4910 = vunpack.c.0.s8 %v4909
    %v4911 = vlaneseq
    %v4912 = vshrl.u32 %v4911, 7
    %v4913 = vsub.s32 %v4910, %v4912
    %v4914 = vrot.slane %v4900, %v4913
    %v4915 = vcombine.high %v4907, %v4907
    %v4916 = vcombine.high %v4914, %v4914
    %v4917 = vcombine.high %v3589, %v3589
    %v4919 = vunpack.c.l.s4 1983009808
    %v4920 = vunpack.c.0.s8 %v4919
    %v4921 = vlaneseq
    %v4922 = vshrl.u32 %v4921, 7
    %v4923 = vsub.s32 %v4920, %v4922
    %v4924 = vrot.slane %v3589, %v4923
    %v4926 = vunpack.c.l.s4 1983009808
    %v4927 = vunpack.c.0.s8 %v4926
    %v4928 = vlaneseq
    %v4929 = vshrl.u32 %v4928, 7
    %v4930 = vsub.s32 %v4927, %v4929
    %v4931 = vrot.slane %v4917, %v4930
    %v4932 = vcombine.high %v4924, %v4924
    %v4933 = vcombine.high %v4931, %v4931
    %v4934 = vcombine.high %v3590, %v3590
    %v4936 = vunpack.c.l.s4 1983009808
    %v4937 = vunpack.c.0.s8 %v4936
    %v4938 = vlaneseq
    %v4939 = vshrl.u32 %v4938, 7
    %v4940 = vsub.s32 %v4937, %v4939
    %v4941 = vrot.slane %v3590, %v4940
    %v4943 = vunpack.c.l.s4 1983009808
    %v4944 = vunpack.c.0.s8 %v4943
    %v4945 = vlaneseq
    %v4946 = vshrl.u32 %v4945, 7
    %v4947 = vsub.s32 %v4944, %v4946
    %v4948 = vrot.slane %v4934, %v4947
    %v4949 = vcombine.high %v4941, %v4941
    %v4950 = vcombine.high %v4948, %v4948
    %v4951 = vcombine.high %v3591, %v3591
    %v4953 = vunpack.c.l.s4 1983009808
    %v4954 = vunpack.c.0.s8 %v4953
    %v4955 = vlaneseq
    %v4956 = vshrl.u32 %v4955, 7
    %v4957 = vsub.s32 %v4954, %v4956
    %v4958 = vrot.slane %v3591, %v4957
    %v4960 = vunpack.c.l.s4 1983009808
    %v4961 = vunpack.c.0.s8 %v4960
    %v4962 = vlaneseq
    %v4963 = vshrl.u32 %v4962, 7
    %v4964 = vsub.s32 %v4961, %v4963
    %v4965 = vrot.slane %v4951, %v4964
    %v4966 = vcombine.high %v4958, %v4958
    %v4967 = vcombine.high %v4965, %v4965
    %v4968 = vcombine.high %v3592, %v3592
    %v4970 = vunpack.c.l.s4 1983009808
    %v4971 = vunpack.c.0.s8 %v4970
    %v4972 = vlaneseq
    %v4973 = vshrl.u32 %v4972, 7
    %v4974 = vsub.s32 %v4971, %v4973
    %v4975 = vrot.slane %v3592, %v4974
    %v4977 = vunpack.c.l.s4 1983009808
    %v4978 = vunpack.c.0.s8 %v4977
    %v4979 = vlaneseq
    %v4980 = vshrl.u32 %v4979, 7
    %v4981 = vsub.s32 %v4978, %v4980
    %v4982 = vrot.slane %v4968, %v4981
    %v4983 = vcombine.high %v4975, %v4975
    %v4984 = vcombine.high %v4982, %v4982
    %v4985 = vcombine.high %v3593, %v3593
    %v4987 = vunpack.c.l.s4 1983009808
    %v4988 = vunpack.c.0.s8 %v4987
    %v4989 = vlaneseq
    %v4990 = vshrl.u32 %v4989, 7
    %v4991 = vsub.s32 %v4988, %v4990
    %v4992 = vrot.slane %v3593, %v4991
    %v4994 = vunpack.c.l.s4 1983009808
    %v4995 = vunpack.c.0.s8 %v4994
    %v4996 = vlaneseq
    %v4997 = vshrl.u32 %v4996, 7
    %v4998 = vsub.s32 %v4995, %v4997
    %v4999 = vrot.slane %v4985, %v4998
    %v5000 = vcombine.high %v4992, %v4992
    %v5001 = vcombine.high %v4999, %v4999
    %v5002 = vcombine.high %v3594, %v3594
    %v5004 = vunpack.c.l.s4 1983009808
    %v5005 = vunpack.c.0.s8 %v5004
    %v5006 = vlaneseq
    %v5007 = vshrl.u32 %v5006, 7
    %v5008 = vsub.s32 %v5005, %v5007
    %v5009 = vrot.slane %v3594, %v5008
    %v5011 = vunpack.c.l.s4 1983009808
    %v5012 = vunpack.c.0.s8 %v5011
    %v5013 = vlaneseq
    %v5014 = vshrl.u32 %v5013, 7
    %v5015 = vsub.s32 %v5012, %v5014
    %v5016 = vrot.slane %v5002, %v5015
    %v5017 = vcombine.high %v5009, %v5009
    %v5018 = vcombine.high %v5016, %v5016
    %v5019 = vcombine.high %v3595, %v3595
    %v5021 = vunpack.c.l.s4 1983009808
    %v5022 = vunpack.c.0.s8 %v5021
    %v5023 = vlaneseq
    %v5024 = vshrl.u32 %v5023, 7
    %v5025 = vsub.s32 %v5022, %v5024
    %v5026 = vrot.slane %v3595, %v5025
    %v5028 = vunpack.c.l.s4 1983009808
    %v5029 = vunpack.c.0.s8 %v5028
    %v5030 = vlaneseq
    %v5031 = vshrl.u32 %v5030, 7
    %v5032 = vsub.s32 %v5029, %v5031
    %v5033 = vrot.slane %v5019, %v5032
    %v5034 = vcombine.high %v5026, %v5026
    %v5035 = vcombine.high %v5033, %v5033
    %v5036 = vcombine.high %v3596, %v3596
    %v5038 = vunpack.c.l.s4 1983009808
    %v5039 = vunpack.c.0.s8 %v5038
    %v5040 = vlaneseq
    %v5041 = vshrl.u32 %v5040, 7
    %v5042 = vsub.s32 %v5039, %v5041
    %v5043 = vrot.slane %v3596, %v5042
    %v5045 = vunpack.c.l.s4 1983009808
    %v5046 = vunpack.c.0.s8 %v5045
    %v5047 = vlaneseq
    %v5048 = vshrl.u32 %v5047, 7
    %v5049 = vsub.s32 %v5046, %v5048
    %v5050 = vrot.slane %v5036, %v5049
    %v5051 = vcombine.high %v5043, %v5043
    %v5052 = vcombine.high %v5050, %v5050
    %v5053 = vcombine.high %v3597, %v3597
    %v5055 = vunpack.c.l.s4 1983009808
    %v5056 = vunpack.c.0.s8 %v5055
    %v5057 = vlaneseq
    %v5058 = vshrl.u32 %v5057, 7
    %v5059 = vsub.s32 %v5056, %v5058
    %v5060 = vrot.slane %v3597, %v5059
    %v5062 = vunpack.c.l.s4 1983009808
    %v5063 = vunpack.c.0.s8 %v5062
    %v5064 = vlaneseq
    %v5065 = vshrl.u32 %v5064, 7
    %v5066 = vsub.s32 %v5063, %v5065
    %v5067 = vrot.slane %v5053, %v5066
    %v5068 = vcombine.high %v5060, %v5060
    %v5069 = vcombine.high %v5067, %v5067
    %v5070 = vcombine.high %v3598, %v3598
    %v5072 = vunpack.c.l.s4 1983009808
    %v5073 = vunpack.c.0.s8 %v5072
    %v5074 = vlaneseq
    %v5075 = vshrl.u32 %v5074, 7
    %v5076 = vsub.s32 %v5073, %v5075
    %v5077 = vrot.slane %v3598, %v5076
    %v5079 = vunpack.c.l.s4 1983009808
    %v5080 = vunpack.c.0.s8 %v5079
    %v5081 = vlaneseq
    %v5082 = vshrl.u32 %v5081, 7
    %v5083 = vsub.s32 %v5080, %v5082
    %v5084 = vrot.slane %v5070, %v5083
    %v5085 = vcombine.high %v5077, %v5077
    %v5086 = vcombine.high %v5084, %v5084
    %v5087 = vcombine.high %v3599, %v3599
    %v5089 = vunpack.c.l.s4 1983009808
    %v5090 = vunpack.c.0.s8 %v5089
    %v5091 = vlaneseq
    %v5092 = vshrl.u32 %v5091, 7
    %v5093 = vsub.s32 %v5090, %v5092
    %v5094 = vrot.slane %v3599, %v5093
    %v5096 = vunpack.c.l.s4 1983009808
    %v5097 = vunpack.c.0.s8 %v5096
    %v5098 = vlaneseq
    %v5099 = vshrl.u32 %v5098, 7
    %v5100 = vsub.s32 %v5097, %v5099
    %v5101 = vrot.slane %v5087, %v5100
    %v5102 = vcombine.high %v5094, %v5094
    %v5103 = vcombine.high %v5101, %v5101
    %v5104 = vcombine.high %v3600, %v3600
    %v5106 = vunpack.c.l.s4 1983009808
    %v5107 = vunpack.c.0.s8 %v5106
    %v5108 = vlaneseq
    %v5109 = vshrl.u32 %v5108, 7
    %v5110 = vsub.s32 %v5107, %v5109
    %v5111 = vrot.slane %v3600, %v5110
    %v5113 = vunpack.c.l.s4 1983009808
    %v5114 = vunpack.c.0.s8 %v5113
    %v5115 = vlaneseq
    %v5116 = vshrl.u32 %v5115, 7
    %v5117 = vsub.s32 %v5114, %v5116
    %v5118 = vrot.slane %v5104, %v5117
    %v5119 = vcombine.high %v5111, %v5111
    %v5120 = vcombine.high %v5118, %v5118
    %v5121 = vcombine.high %v3601, %v3601
    %v5123 = vunpack.c.l.s4 1983009808
    %v5124 = vunpack.c.0.s8 %v5123
    %v5125 = vlaneseq
    %v5126 = vshrl.u32 %v5125, 7
    %v5127 = vsub.s32 %v5124, %v5126
    %v5128 = vrot.slane %v3601, %v5127
    %v5130 = vunpack.c.l.s4 1983009808
    %v5131 = vunpack.c.0.s8 %v5130
    %v5132 = vlaneseq
    %v5133 = vshrl.u32 %v5132, 7
    %v5134 = vsub.s32 %v5131, %v5133
    %v5135 = vrot.slane %v5121, %v5134
    %v5136 = vcombine.high %v5128, %v5128
    %v5137 = vcombine.high %v5135, %v5135
    %v5138 = vcombine.high %v3602, %v3602
    %v5140 = vunpack.c.l.s4 1983009808
    %v5141 = vunpack.c.0.s8 %v5140
    %v5142 = vlaneseq
    %v5143 = vshrl.u32 %v5142, 7
    %v5144 = vsub.s32 %v5141, %v5143
    %v5145 = vrot.slane %v3602, %v5144
    %v5147 = vunpack.c.l.s4 1983009808
    %v5148 = vunpack.c.0.s8 %v5147
    %v5149 = vlaneseq
    %v5150 = vshrl.u32 %v5149, 7
    %v5151 = vsub.s32 %v5148, %v5150
    %v5152 = vrot.slane %v5138, %v5151
    %v5153 = vcombine.high %v5145, %v5145
    %v5154 = vcombine.high %v5152, %v5152
    %v5155 = vcombine.high %v3603, %v3603
    %v5157 = vunpack.c.l.s4 1983009808
    %v5158 = vunpack.c.0.s8 %v5157
    %v5159 = vlaneseq
    %v5160 = vshrl.u32 %v5159, 7
    %v5161 = vsub.s32 %v5158, %v5160
    %v5162 = vrot.slane %v3603, %v5161
    %v5164 = vunpack.c.l.s4 1983009808
    %v5165 = vunpack.c.0.s8 %v5164
    %v5166 = vlaneseq
    %v5167 = vshrl.u32 %v5166, 7
    %v5168 = vsub.s32 %v5165, %v5167
    %v5169 = vrot.slane %v5155, %v5168
    %v5170 = vcombine.high %v5162, %v5162
    %v5171 = vcombine.high %v5169, %v5169
    %v5172 = vcombine.high %v3604, %v3604
    %v5174 = vunpack.c.l.s4 1983009808
    %v5175 = vunpack.c.0.s8 %v5174
    %v5176 = vlaneseq
    %v5177 = vshrl.u32 %v5176, 7
    %v5178 = vsub.s32 %v5175, %v5177
    %v5179 = vrot.slane %v3604, %v5178
    %v5181 = vunpack.c.l.s4 1983009808
    %v5182 = vunpack.c.0.s8 %v5181
    %v5183 = vlaneseq
    %v5184 = vshrl.u32 %v5183, 7
    %v5185 = vsub.s32 %v5182, %v5184
    %v5186 = vrot.slane %v5172, %v5185
    %v5187 = vcombine.high %v5179, %v5179
    %v5188 = vcombine.high %v5186, %v5186
    %v5189 = vcombine.high %v3605, %v3605
    %v5191 = vunpack.c.l.s4 1983009808
    %v5192 = vunpack.c.0.s8 %v5191
    %v5193 = vlaneseq
    %v5194 = vshrl.u32 %v5193, 7
    %v5195 = vsub.s32 %v5192, %v5194
    %v5196 = vrot.slane %v3605, %v5195
    %v5198 = vunpack.c.l.s4 1983009808
    %v5199 = vunpack.c.0.s8 %v5198
    %v5200 = vlaneseq
    %v5201 = vshrl.u32 %v5200, 7
    %v5202 = vsub.s32 %v5199, %v5201
    %v5203 = vrot.slane %v5189, %v5202
    %v5204 = vcombine.high %v5196, %v5196
    %v5205 = vcombine.high %v5203, %v5203
    %v5206 = vcombine.high %v3606, %v3606
    %v5208 = vunpack.c.l.s4 1983009808
    %v5209 = vunpack.c.0.s8 %v5208
    %v5210 = vlaneseq
    %v5211 = vshrl.u32 %v5210, 7
    %v5212 = vsub.s32 %v5209, %v5211
    %v5213 = vrot.slane %v3606, %v5212
    %v5215 = vunpack.c.l.s4 1983009808
    %v5216 = vunpack.c.0.s8 %v5215
    %v5217 = vlaneseq
    %v5218 = vshrl.u32 %v5217, 7
    %v5219 = vsub.s32 %v5216, %v5218
    %v5220 = vrot.slane %v5206, %v5219
    %v5221 = vcombine.high %v5213, %v5213
    %v5222 = vcombine.high %v5220, %v5220
    %v5223 = vcombine.high %v3607, %v3607
    %v5225 = vunpack.c.l.s4 1983009808
    %v5226 = vunpack.c.0.s8 %v5225
    %v5227 = vlaneseq
    %v5228 = vshrl.u32 %v5227, 7
    %v5229 = vsub.s32 %v5226, %v5228
    %v5230 = vrot.slane %v3607, %v5229
    %v5232 = vunpack.c.l.s4 1983009808
    %v5233 = vunpack.c.0.s8 %v5232
    %v5234 = vlaneseq
    %v5235 = vshrl.u32 %v5234, 7
    %v5236 = vsub.s32 %v5233, %v5235
    %v5237 = vrot.slane %v5223, %v5236
    %v5238 = vcombine.high %v5230, %v5230
    %v5239 = vcombine.high %v5237, %v5237
    %v5240 = vcombine.high %v3608, %v3608
    %v5242 = vunpack.c.l.s4 1983009808
    %v5243 = vunpack.c.0.s8 %v5242
    %v5244 = vlaneseq
    %v5245 = vshrl.u32 %v5244, 7
    %v5246 = vsub.s32 %v5243, %v5245
    %v5247 = vrot.slane %v3608, %v5246
    %v5249 = vunpack.c.l.s4 1983009808
    %v5250 = vunpack.c.0.s8 %v5249
    %v5251 = vlaneseq
    %v5252 = vshrl.u32 %v5251, 7
    %v5253 = vsub.s32 %v5250, %v5252
    %v5254 = vrot.slane %v5240, %v5253
    %v5255 = vcombine.high %v5247, %v5247
    %v5256 = vcombine.high %v5254, %v5254
    %v5257 = vcombine.high %v3609, %v3609
    %v5259 = vunpack.c.l.s4 1983009808
    %v5260 = vunpack.c.0.s8 %v5259
    %v5261 = vlaneseq
    %v5262 = vshrl.u32 %v5261, 7
    %v5263 = vsub.s32 %v5260, %v5262
    %v5264 = vrot.slane %v3609, %v5263
    %v5266 = vunpack.c.l.s4 1983009808
    %v5267 = vunpack.c.0.s8 %v5266
    %v5268 = vlaneseq
    %v5269 = vshrl.u32 %v5268, 7
    %v5270 = vsub.s32 %v5267, %v5269
    %v5271 = vrot.slane %v5257, %v5270
    %v5272 = vcombine.high %v5264, %v5264
    %v5273 = vcombine.high %v5271, %v5271
    %v5274 = vcombine.high %v3610, %v3610
    %v5276 = vunpack.c.l.s4 1983009808
    %v5277 = vunpack.c.0.s8 %v5276
    %v5278 = vlaneseq
    %v5279 = vshrl.u32 %v5278, 7
    %v5280 = vsub.s32 %v5277, %v5279
    %v5281 = vrot.slane %v3610, %v5280
    %v5283 = vunpack.c.l.s4 1983009808
    %v5284 = vunpack.c.0.s8 %v5283
    %v5285 = vlaneseq
    %v5286 = vshrl.u32 %v5285, 7
    %v5287 = vsub.s32 %v5284, %v5286
    %v5288 = vrot.slane %v5274, %v5287
    %v5289 = vcombine.high %v5281, %v5281
    %v5290 = vcombine.high %v5288, %v5288
    %v5291 = vcombine.high %v3611, %v3611
    %v5293 = vunpack.c.l.s4 1983009808
    %v5294 = vunpack.c.0.s8 %v5293
    %v5295 = vlaneseq
    %v5296 = vshrl.u32 %v5295, 7
    %v5297 = vsub.s32 %v5294, %v5296
    %v5298 = vrot.slane %v3611, %v5297
    %v5300 = vunpack.c.l.s4 1983009808
    %v5301 = vunpack.c.0.s8 %v5300
    %v5302 = vlaneseq
    %v5303 = vshrl.u32 %v5302, 7
    %v5304 = vsub.s32 %v5301, %v5303
    %v5305 = vrot.slane %v5291, %v5304
    %v5306 = vcombine.high %v5298, %v5298
    %v5307 = vcombine.high %v5305, %v5305
    %v5308 = vcombine.high %v3612, %v3612
    %v5310 = vunpack.c.l.s4 1983009808
    %v5311 = vunpack.c.0.s8 %v5310
    %v5312 = vlaneseq
    %v5313 = vshrl.u32 %v5312, 7
    %v5314 = vsub.s32 %v5311, %v5313
    %v5315 = vrot.slane %v3612, %v5314
    %v5317 = vunpack.c.l.s4 1983009808
    %v5318 = vunpack.c.0.s8 %v5317
    %v5319 = vlaneseq
    %v5320 = vshrl.u32 %v5319, 7
    %v5321 = vsub.s32 %v5318, %v5320
    %v5322 = vrot.slane %v5308, %v5321
    %v5323 = vcombine.high %v5315, %v5315
    %v5324 = vcombine.high %v5322, %v5322
    %v5325 = vcombine.high %v3613, %v3613
    %v5327 = vunpack.c.l.s4 1983009808
    %v5328 = vunpack.c.0.s8 %v5327
    %v5329 = vlaneseq
    %v5330 = vshrl.u32 %v5329, 7
    %v5331 = vsub.s32 %v5328, %v5330
    %v5332 = vrot.slane %v3613, %v5331
    %v5334 = vunpack.c.l.s4 1983009808
    %v5335 = vunpack.c.0.s8 %v5334
    %v5336 = vlaneseq
    %v5337 = vshrl.u32 %v5336, 7
    %v5338 = vsub.s32 %v5335, %v5337
    %v5339 = vrot.slane %v5325, %v5338
    %v5340 = vcombine.high %v5332, %v5332
    %v5341 = vcombine.high %v5339, %v5339
    %vm5726 = vcmask 1041408
    %v5727 = vsel %vm5726, %v3717, 0.0
    %v5728 = vsel %vm5726, %v3725, 0.0
    %v5729 = vadd.f32 %v5727, %v5728
    %v5730 = vsel %vm5726, %v3724, 0.0
    %v5731 = vadd.f32 %v5729, %v5730
    %v5732 = vsel %vm5726, %v3726, 0.0
    %v5733 = vadd.f32 %v5731, %v5732
    %v5734 = vsel %vm5726, %v3734, 0.0
    %v5735 = vadd.f32 %v5733, %v5734
    %v5736 = vsel %vm5726, %v3742, 0.0
    %v5737 = vadd.f32 %v5735, %v5736
    %v5738 = vsel %vm5726, %v3741, 0.0
    %v5739 = vadd.f32 %v5737, %v5738
    %v5740 = vsel %vm5726, %v3743, 0.0
    %v5741 = vadd.f32 %v5739, %v5740
    %v5742 = vsel %vm5726, %v3751, 0.0
    %v5743 = vadd.f32 %v5741, %v5742
    %v5744 = vsel %vm5726, %v3759, 0.0
    %v5745 = vadd.f32 %v5743, %v5744
    %v5746 = vsel %vm5726, %v3758, 0.0
    %v5747 = vadd.f32 %v5745, %v5746
    %v5748 = vsel %vm5726, %v3760, 0.0
    %v5749 = vadd.f32 %v5747, %v5748
    %v5750 = vsel %vm5726, %v3768, 0.0
    %v5751 = vadd.f32 %v5749, %v5750
    %v5752 = vsel %vm5726, %v3776, 0.0
    %v5753 = vadd.f32 %v5751, %v5752
    %v5754 = vsel %vm5726, %v3775, 0.0
    %v5755 = vadd.f32 %v5753, %v5754
    %v5756 = vsel %vm5726, %v3777, 0.0
    %v5757 = vadd.f32 %v5755, %v5756
    %v5758 = vsel %vm5726, %v3785, 0.0
    %v5759 = vadd.f32 %v5757, %v5758
    %v5760 = vsel %vm5726, %v3793, 0.0
    %v5761 = vadd.f32 %v5759, %v5760
    %v5762 = vsel %vm5726, %v3792, 0.0
    %v5763 = vadd.f32 %v5761, %v5762
    %v5764 = vsel %vm5726, %v3794, 0.0
    %v5765 = vadd.f32 %v5763, %v5764
    %v5766 = vsel %vm5726, %v3802, 0.0
    %v5767 = vadd.f32 %v5765, %v5766
    %v5768 = vsel %vm5726, %v3810, 0.0
    %v5769 = vadd.f32 %v5767, %v5768
    %v5770 = vsel %vm5726, %v3809, 0.0
    %v5771 = vadd.f32 %v5769, %v5770
    %v5772 = vsel %vm5726, %v3811, 0.0
    %v5773 = vadd.f32 %v5771, %v5772
    %v5774 = vsel %vm5726, %v3819, 0.0
    %v5775 = vadd.f32 %v5773, %v5774
    %v5776 = vsel %vm5726, %v3827, 0.0
    %v5777 = vadd.f32 %v5775, %v5776
    %v5778 = vsel %vm5726, %v3826, 0.0
    %v5779 = vadd.f32 %v5777, %v5778
    %v5780 = vsel %vm5726, %v3828, 0.0
    %v5781 = vadd.f32 %v5779, %v5780
    %v5782 = vsel %vm5726, %v3836, 0.0
    %v5783 = vadd.f32 %v5781, %v5782
    %v5784 = vsel %vm5726, %v3844, 0.0
    %v5785 = vadd.f32 %v5783, %v5784
    %v5786 = vsel %vm5726, %v3843, 0.0
    %v5787 = vadd.f32 %v5785, %v5786
    %v5788 = vsel %vm5726, %v3845, 0.0
    %v5789 = vadd.f32 %v5787, %v5788
    %v5790 = vsel %vm5726, %v3853, 0.0
    %v5791 = vadd.f32 %v5789, %v5790
    %v5792 = vsel %vm5726, %v3861, 0.0
    %v5793 = vadd.f32 %v5791, %v5792
    %v5794 = vsel %vm5726, %v3860, 0.0
    %v5795 = vadd.f32 %v5793, %v5794
    %v5796 = vsel %vm5726, %v3862, 0.0
    %v5797 = vadd.f32 %v5795, %v5796
    %v5798 = vsel %vm5726, %v3870, 0.0
    %v5799 = vadd.f32 %v5797, %v5798
    %v5800 = vsel %vm5726, %v3878, 0.0
    %v5801 = vadd.f32 %v5799, %v5800
    %v5802 = vsel %vm5726, %v3877, 0.0
    %v5803 = vadd.f32 %v5801, %v5802
    %v5804 = vsel %vm5726, %v3879, 0.0
    %v5805 = vadd.f32 %v5803, %v5804
    %v5806 = vsel %vm5726, %v3887, 0.0
    %v5807 = vadd.f32 %v5805, %v5806
    %v5808 = vsel %vm5726, %v3895, 0.0
    %v5809 = vadd.f32 %v5807, %v5808
    %v5810 = vsel %vm5726, %v3894, 0.0
    %v5811 = vadd.f32 %v5809, %v5810
    %v5812 = vsel %vm5726, %v3896, 0.0
    %v5813 = vadd.f32 %v5811, %v5812
    %v5814 = vsel %vm5726, %v3904, 0.0
    %v5815 = vadd.f32 %v5813, %v5814
    %v5816 = vsel %vm5726, %v3912, 0.0
    %v5817 = vadd.f32 %v5815, %v5816
    %v5818 = vsel %vm5726, %v3911, 0.0
    %v5819 = vadd.f32 %v5817, %v5818
    %v5820 = vsel %vm5726, %v3913, 0.0
    %v5821 = vadd.f32 %v5819, %v5820
    %v5822 = vsel %vm5726, %v3921, 0.0
    %v5823 = vadd.f32 %v5821, %v5822
    %v5824 = vsel %vm5726, %v3929, 0.0
    %v5825 = vadd.f32 %v5823, %v5824
    %v5826 = vsel %vm5726, %v3928, 0.0
    %v5827 = vadd.f32 %v5825, %v5826
    %v5828 = vsel %vm5726, %v3930, 0.0
    %v5829 = vadd.f32 %v5827, %v5828
    %v5830 = vsel %vm5726, %v3938, 0.0
    %v5831 = vadd.f32 %v5829, %v5830
    %v5832 = vsel %vm5726, %v3946, 0.0
    %v5833 = vadd.f32 %v5831, %v5832
    %v5834 = vsel %vm5726, %v3945, 0.0
    %v5835 = vadd.f32 %v5833, %v5834
    %v5836 = vsel %vm5726, %v3947, 0.0
    %v5837 = vadd.f32 %v5835, %v5836
    %v5838 = vsel %vm5726, %v3955, 0.0
    %v5839 = vadd.f32 %v5837, %v5838
    %v5840 = vsel %vm5726, %v3963, 0.0
    %v5841 = vadd.f32 %v5839, %v5840
    %v5842 = vsel %vm5726, %v3962, 0.0
    %v5843 = vadd.f32 %v5841, %v5842
    %v5844 = vsel %vm5726, %v3964, 0.0
    %v5845 = vadd.f32 %v5843, %v5844
    %v5846 = vsel %vm5726, %v3972, 0.0
    %v5847 = vadd.f32 %v5845, %v5846
    %v5848 = vsel %vm5726, %v3980, 0.0
    %v5849 = vadd.f32 %v5847, %v5848
    %v5850 = vsel %vm5726, %v3979, 0.0
    %v5851 = vadd.f32 %v5849, %v5850
    %v5852 = vsel %vm5726, %v3981, 0.0
    %v5853 = vadd.f32 %v5851, %v5852
    %v5854 = vsel %vm5726, %v3989, 0.0
    %v5855 = vadd.f32 %v5853, %v5854
    %v5856 = vsel %vm5726, %v3997, 0.0
    %v5857 = vadd.f32 %v5855, %v5856
    %v5858 = vsel %vm5726, %v3996, 0.0
    %v5859 = vadd.f32 %v5857, %v5858
    %v5860 = vsel %vm5726, %v3998, 0.0
    %v5861 = vadd.f32 %v5859, %v5860
    %v5862 = vsel %vm5726, %v4006, 0.0
    %v5863 = vadd.f32 %v5861, %v5862
    %v5864 = vsel %vm5726, %v4014, 0.0
    %v5865 = vadd.f32 %v5863, %v5864
    %v5866 = vsel %vm5726, %v4013, 0.0
    %v5867 = vadd.f32 %v5865, %v5866
    %v5868 = vsel %vm5726, %v4015, 0.0
    %v5869 = vadd.f32 %v5867, %v5868
    %v5870 = vsel %vm5726, %v4023, 0.0
    %v5871 = vadd.f32 %v5869, %v5870
    %v5872 = vsel %vm5726, %v4031, 0.0
    %v5873 = vadd.f32 %v5871, %v5872
    %v5874 = vsel %vm5726, %v4030, 0.0
    %v5875 = vadd.f32 %v5873, %v5874
    %v5876 = vsel %vm5726, %v4032, 0.0
    %v5877 = vadd.f32 %v5875, %v5876
    %v5878 = vsel %vm5726, %v4040, 0.0
    %v5879 = vadd.f32 %v5877, %v5878
    %v5880 = vsel %vm5726, %v4048, 0.0
    %v5881 = vadd.f32 %v5879, %v5880
    %v5882 = vsel %vm5726, %v4047, 0.0
    %v5883 = vadd.f32 %v5881, %v5882
    %v5884 = vsel %vm5726, %v4049, 0.0
    %v5885 = vadd.f32 %v5883, %v5884
    %v5886 = vsel %vm5726, %v4057, 0.0
    %v5887 = vadd.f32 %v5885, %v5886
    %v5888 = vsel %vm5726, %v4065, 0.0
    %v5889 = vadd.f32 %v5887, %v5888
    %v5890 = vsel %vm5726, %v4064, 0.0
    %v5891 = vadd.f32 %v5889, %v5890
    %v5892 = vsel %vm5726, %v4066, 0.0
    %v5893 = vadd.f32 %v5891, %v5892
    %v5894 = vsel %vm5726, %v4074, 0.0
    %v5895 = vadd.f32 %v5893, %v5894
    %v5896 = vsel %vm5726, %v4082, 0.0
    %v5897 = vadd.f32 %v5895, %v5896
    %v5898 = vsel %vm5726, %v4081, 0.0
    %v5899 = vadd.f32 %v5897, %v5898
    %v5900 = vsel %vm5726, %v4083, 0.0
    %v5901 = vadd.f32 %v5899, %v5900
    %v5902 = vsel %vm5726, %v4091, 0.0
    %v5903 = vadd.f32 %v5901, %v5902
    %v5904 = vsel %vm5726, %v4099, 0.0
    %v5905 = vadd.f32 %v5903, %v5904
    %v5906 = vsel %vm5726, %v4098, 0.0
    %v5907 = vadd.f32 %v5905, %v5906
    %v5908 = vsel %vm5726, %v4100, 0.0
    %v5909 = vadd.f32 %v5907, %v5908
    %v5910 = vsel %vm5726, %v4108, 0.0
    %v5911 = vadd.f32 %v5909, %v5910
    %v5912 = vsel %vm5726, %v4116, 0.0
    %v5913 = vadd.f32 %v5911, %v5912
    %v5914 = vsel %vm5726, %v4115, 0.0
    %v5915 = vadd.f32 %v5913, %v5914
    %v5916 = vsel %vm5726, %v4117, 0.0
    %v5917 = vadd.f32 %v5915, %v5916
    %v5918 = vsel %vm5726, %v4125, 0.0
    %v5919 = vadd.f32 %v5917, %v5918
    %v5920 = vsel %vm5726, %v4133, 0.0
    %v5921 = vadd.f32 %v5919, %v5920
    %v5922 = vsel %vm5726, %v4132, 0.0
    %v5923 = vadd.f32 %v5921, %v5922
    %v5924 = vsel %vm5726, %v4134, 0.0
    %v5925 = vadd.f32 %v5923, %v5924
    %v5926 = vsel %vm5726, %v4142, 0.0
    %v5927 = vadd.f32 %v5925, %v5926
    %v5928 = vsel %vm5726, %v4150, 0.0
    %v5929 = vadd.f32 %v5927, %v5928
    %v5930 = vsel %vm5726, %v4149, 0.0
    %v5931 = vadd.f32 %v5929, %v5930
    %v5932 = vsel %vm5726, %v4151, 0.0
    %v5933 = vadd.f32 %v5931, %v5932
    %v5934 = vsel %vm5726, %v4159, 0.0
    %v5935 = vadd.f32 %v5933, %v5934
    %v5936 = vsel %vm5726, %v4167, 0.0
    %v5937 = vadd.f32 %v5935, %v5936
    %v5938 = vsel %vm5726, %v4166, 0.0
    %v5939 = vadd.f32 %v5937, %v5938
    %v5940 = vsel %vm5726, %v4168, 0.0
    %v5941 = vadd.f32 %v5939, %v5940
    %v5942 = vsel %vm5726, %v4176, 0.0
    %v5943 = vadd.f32 %v5941, %v5942
    %v5944 = vsel %vm5726, %v4184, 0.0
    %v5945 = vadd.f32 %v5943, %v5944
    %v5946 = vsel %vm5726, %v4183, 0.0
    %v5947 = vadd.f32 %v5945, %v5946
    %v5948 = vsel %vm5726, %v4185, 0.0
    %v5949 = vadd.f32 %v5947, %v5948
    %v5950 = vsel %vm5726, %v4193, 0.0
    %v5951 = vadd.f32 %v5949, %v5950
    %v5952 = vsel %vm5726, %v4201, 0.0
    %v5953 = vadd.f32 %v5951, %v5952
    %v5954 = vsel %vm5726, %v4200, 0.0
    %v5955 = vadd.f32 %v5953, %v5954
    %v5956 = vsel %vm5726, %v4202, 0.0
    %v5957 = vadd.f32 %v5955, %v5956
    %v5958 = vsel %vm5726, %v4210, 0.0
    %v5959 = vadd.f32 %v5957, %v5958
    %v5960 = vsel %vm5726, %v4218, 0.0
    %v5961 = vadd.f32 %v5959, %v5960
    %v5962 = vsel %vm5726, %v4217, 0.0
    %v5963 = vadd.f32 %v5961, %v5962
    %v5964 = vsel %vm5726, %v4219, 0.0
    %v5965 = vadd.f32 %v5963, %v5964
    %v5966 = vsel %vm5726, %v4227, 0.0
    %v5967 = vadd.f32 %v5965, %v5966
    %v5968 = vsel %vm5726, %v4235, 0.0
    %v5969 = vadd.f32 %v5967, %v5968
    %v5970 = vsel %vm5726, %v4234, 0.0
    %v5971 = vadd.f32 %v5969, %v5970
    %v5972 = vsel %vm5726, %v4236, 0.0
    %v5973 = vadd.f32 %v5971, %v5972
    %v5974 = vsel %vm5726, %v4244, 0.0
    %v5975 = vadd.f32 %v5973, %v5974
    %v5976 = vsel %vm5726, %v4252, 0.0
    %v5977 = vadd.f32 %v5975, %v5976
    %v5978 = vsel %vm5726, %v4251, 0.0
    %v5979 = vadd.f32 %v5977, %v5978
    %v5980 = vsel %vm5726, %v4253, 0.0
    %v5981 = vadd.f32 %v5979, %v5980
    %v5982 = vsel %vm5726, %v4261, 0.0
    %v5983 = vadd.f32 %v5981, %v5982
    %v5984 = vsel %vm5726, %v4269, 0.0
    %v5985 = vadd.f32 %v5983, %v5984
    %v5986 = vsel %vm5726, %v4268, 0.0
    %v5987 = vadd.f32 %v5985, %v5986
    %v5988 = vsel %vm5726, %v4270, 0.0
    %v5989 = vadd.f32 %v5987, %v5988
    %v5990 = vsel %vm5726, %v4278, 0.0
    %v5991 = vadd.f32 %v5989, %v5990
    %v5992 = vsel %vm5726, %v4286, 0.0
    %v5993 = vadd.f32 %v5991, %v5992
    %v5994 = vsel %vm5726, %v4285, 0.0
    %v5995 = vadd.f32 %v5993, %v5994
    %v5996 = vsel %vm5726, %v4287, 0.0
    %v5997 = vadd.f32 %v5995, %v5996
    %v5998 = vsel %vm5726, %v4295, 0.0
    %v5999 = vadd.f32 %v5997, %v5998
    %v6000 = vsel %vm5726, %v4303, 0.0
    %v6001 = vadd.f32 %v5999, %v6000
    %v6002 = vsel %vm5726, %v4302, 0.0
    %v6003 = vadd.f32 %v6001, %v6002
    %v6004 = vsel %vm5726, %v4304, 0.0
    %v6005 = vadd.f32 %v6003, %v6004
    %v6006 = vsel %vm5726, %v4312, 0.0
    %v6007 = vadd.f32 %v6005, %v6006
    %v6008 = vsel %vm5726, %v4320, 0.0
    %v6009 = vadd.f32 %v6007, %v6008
    %v6010 = vsel %vm5726, %v4319, 0.0
    %v6011 = vadd.f32 %v6009, %v6010
    %v6012 = vsel %vm5726, %v4321, 0.0
    %v6013 = vadd.f32 %v6011, %v6012
    %v6014 = vsel %vm5726, %v4329, 0.0
    %v6015 = vadd.f32 %v6013, %v6014
    %v6016 = vsel %vm5726, %v4337, 0.0
    %v6017 = vadd.f32 %v6015, %v6016
    %v6018 = vsel %vm5726, %v4336, 0.0
    %v6019 = vadd.f32 %v6017, %v6018
    %v6020 = vsel %vm5726, %v4338, 0.0
    %v6021 = vadd.f32 %v6019, %v6020
    %v6022 = vsel %vm5726, %v4346, 0.0
    %v6023 = vadd.f32 %v6021, %v6022
    %v6024 = vsel %vm5726, %v4354, 0.0
    %v6025 = vadd.f32 %v6023, %v6024
    %v6026 = vsel %vm5726, %v4353, 0.0
    %v6027 = vadd.f32 %v6025, %v6026
    %v6028 = vsel %vm5726, %v4355, 0.0
    %v6029 = vadd.f32 %v6027, %v6028
    %v6030 = vsel %vm5726, %v4363, 0.0
    %v6031 = vadd.f32 %v6029, %v6030
    %v6032 = vsel %vm5726, %v4371, 0.0
    %v6033 = vadd.f32 %v6031, %v6032
    %v6034 = vsel %vm5726, %v4370, 0.0
    %v6035 = vadd.f32 %v6033, %v6034
    %v6036 = vsel %vm5726, %v4372, 0.0
    %v6037 = vadd.f32 %v6035, %v6036
    %v6038 = vsel %vm5726, %v4380, 0.0
    %v6039 = vadd.f32 %v6037, %v6038
    %v6040 = vsel %vm5726, %v4388, 0.0
    %v6041 = vadd.f32 %v6039, %v6040
    %v6042 = vsel %vm5726, %v4387, 0.0
    %v6043 = vadd.f32 %v6041, %v6042
    %v6044 = vsel %vm5726, %v4389, 0.0
    %v6045 = vadd.f32 %v6043, %v6044
    %v6046 = vsel %vm5726, %v4397, 0.0
    %v6047 = vadd.f32 %v6045, %v6046
    %v6048 = vsel %vm5726, %v4405, 0.0
    %v6049 = vadd.f32 %v6047, %v6048
    %v6050 = vsel %vm5726, %v4404, 0.0
    %v6051 = vadd.f32 %v6049, %v6050
    %v6052 = vsel %vm5726, %v4406, 0.0
    %v6053 = vadd.f32 %v6051, %v6052
    %v6054 = vsel %vm5726, %v4414, 0.0
    %v6055 = vadd.f32 %v6053, %v6054
    %v6056 = vsel %vm5726, %v4422, 0.0
    %v6057 = vadd.f32 %v6055, %v6056
    %v6058 = vsel %vm5726, %v4421, 0.0
    %v6059 = vadd.f32 %v6057, %v6058
    %v6060 = vsel %vm5726, %v4423, 0.0
    %v6061 = vadd.f32 %v6059, %v6060
    %v6062 = vsel %vm5726, %v4431, 0.0
    %v6063 = vadd.f32 %v6061, %v6062
    %v6064 = vsel %vm5726, %v4439, 0.0
    %v6065 = vadd.f32 %v6063, %v6064
    %v6066 = vsel %vm5726, %v4438, 0.0
    %v6067 = vadd.f32 %v6065, %v6066
    %v6068 = vsel %vm5726, %v4440, 0.0
    %v6069 = vadd.f32 %v6067, %v6068
    %v6070 = vsel %vm5726, %v4448, 0.0
    %v6071 = vadd.f32 %v6069, %v6070
    %v6072 = vsel %vm5726, %v4456, 0.0
    %v6073 = vadd.f32 %v6071, %v6072
    %v6074 = vsel %vm5726, %v4455, 0.0
    %v6075 = vadd.f32 %v6073, %v6074
    %v6076 = vsel %vm5726, %v4457, 0.0
    %v6077 = vadd.f32 %v6075, %v6076
    %v6078 = vsel %vm5726, %v4465, 0.0
    %v6079 = vadd.f32 %v6077, %v6078
    %v6080 = vsel %vm5726, %v4473, 0.0
    %v6081 = vadd.f32 %v6079, %v6080
    %v6082 = vsel %vm5726, %v4472, 0.0
    %v6083 = vadd.f32 %v6081, %v6082
    %v6084 = vsel %vm5726, %v4474, 0.0
    %v6085 = vadd.f32 %v6083, %v6084
    %v6086 = vsel %vm5726, %v4482, 0.0
    %v6087 = vadd.f32 %v6085, %v6086
    %v6088 = vsel %vm5726, %v4490, 0.0
    %v6089 = vadd.f32 %v6087, %v6088
    %v6090 = vsel %vm5726, %v4489, 0.0
    %v6091 = vadd.f32 %v6089, %v6090
    %v6092 = vsel %vm5726, %v4491, 0.0
    %v6093 = vadd.f32 %v6091, %v6092
    %v6094 = vsel %vm5726, %v4499, 0.0
    %v6095 = vadd.f32 %v6093, %v6094
    %v6096 = vsel %vm5726, %v4507, 0.0
    %v6097 = vadd.f32 %v6095, %v6096
    %v6098 = vsel %vm5726, %v4506, 0.0
    %v6099 = vadd.f32 %v6097, %v6098
    %v6100 = vsel %vm5726, %v4508, 0.0
    %v6101 = vadd.f32 %v6099, %v6100
    %v6102 = vsel %vm5726, %v4516, 0.0
    %v6103 = vadd.f32 %v6101, %v6102
    %v6104 = vsel %vm5726, %v4524, 0.0
    %v6105 = vadd.f32 %v6103, %v6104
    %v6106 = vsel %vm5726, %v4523, 0.0
    %v6107 = vadd.f32 %v6105, %v6106
    %v6108 = vsel %vm5726, %v4525, 0.0
    %v6109 = vadd.f32 %v6107, %v6108
    %v6110 = vsel %vm5726, %v4533, 0.0
    %v6111 = vadd.f32 %v6109, %v6110
    %v6112 = vsel %vm5726, %v4541, 0.0
    %v6113 = vadd.f32 %v6111, %v6112
    %v6114 = vsel %vm5726, %v4540, 0.0
    %v6115 = vadd.f32 %v6113, %v6114
    %v6116 = vsel %vm5726, %v4542, 0.0
    %v6117 = vadd.f32 %v6115, %v6116
    %v6118 = vsel %vm5726, %v4550, 0.0
    %v6119 = vadd.f32 %v6117, %v6118
    %v6120 = vsel %vm5726, %v4558, 0.0
    %v6121 = vadd.f32 %v6119, %v6120
    %v6122 = vsel %vm5726, %v4557, 0.0
    %v6123 = vadd.f32 %v6121, %v6122
    %v6124 = vsel %vm5726, %v4559, 0.0
    %v6125 = vadd.f32 %v6123, %v6124
    %v6126 = vsel %vm5726, %v4567, 0.0
    %v6127 = vadd.f32 %v6125, %v6126
    %v6128 = vsel %vm5726, %v4575, 0.0
    %v6129 = vadd.f32 %v6127, %v6128
    %v6130 = vsel %vm5726, %v4574, 0.0
    %v6131 = vadd.f32 %v6129, %v6130
    %v6132 = vsel %vm5726, %v4576, 0.0
    %v6133 = vadd.f32 %v6131, %v6132
    %v6134 = vsel %vm5726, %v4584, 0.0
    %v6135 = vadd.f32 %v6133, %v6134
    %v6136 = vsel %vm5726, %v4592, 0.0
    %v6137 = vadd.f32 %v6135, %v6136
    %v6138 = vsel %vm5726, %v4591, 0.0
    %v6139 = vadd.f32 %v6137, %v6138
    %v6140 = vsel %vm5726, %v4593, 0.0
    %v6141 = vadd.f32 %v6139, %v6140
    %v6142 = vsel %vm5726, %v4601, 0.0
    %v6143 = vadd.f32 %v6141, %v6142
    %v6144 = vsel %vm5726, %v4609, 0.0
    %v6145 = vadd.f32 %v6143, %v6144
    %v6146 = vsel %vm5726, %v4608, 0.0
    %v6147 = vadd.f32 %v6145, %v6146
    %v6148 = vsel %vm5726, %v4610, 0.0
    %v6149 = vadd.f32 %v6147, %v6148
    %v6150 = vsel %vm5726, %v4618, 0.0
    %v6151 = vadd.f32 %v6149, %v6150
    %v6152 = vsel %vm5726, %v4626, 0.0
    %v6153 = vadd.f32 %v6151, %v6152
    %v6154 = vsel %vm5726, %v4625, 0.0
    %v6155 = vadd.f32 %v6153, %v6154
    %v6156 = vsel %vm5726, %v4627, 0.0
    %v6157 = vadd.f32 %v6155, %v6156
    %v6158 = vsel %vm5726, %v4635, 0.0
    %v6159 = vadd.f32 %v6157, %v6158
    %v6160 = vsel %vm5726, %v4643, 0.0
    %v6161 = vadd.f32 %v6159, %v6160
    %v6162 = vsel %vm5726, %v4642, 0.0
    %v6163 = vadd.f32 %v6161, %v6162
    %v6164 = vsel %vm5726, %v4644, 0.0
    %v6165 = vadd.f32 %v6163, %v6164
    %v6166 = vsel %vm5726, %v4652, 0.0
    %v6167 = vadd.f32 %v6165, %v6166
    %v6168 = vsel %vm5726, %v4660, 0.0
    %v6169 = vadd.f32 %v6167, %v6168
    %v6170 = vsel %vm5726, %v4659, 0.0
    %v6171 = vadd.f32 %v6169, %v6170
    %v6172 = vsel %vm5726, %v4661, 0.0
    %v6173 = vadd.f32 %v6171, %v6172
    %v6174 = vsel %vm5726, %v4669, 0.0
    %v6175 = vadd.f32 %v6173, %v6174
    %v6176 = vsel %vm5726, %v4677, 0.0
    %v6177 = vadd.f32 %v6175, %v6176
    %v6178 = vsel %vm5726, %v4676, 0.0
    %v6179 = vadd.f32 %v6177, %v6178
    %v6180 = vsel %vm5726, %v4678, 0.0
    %v6181 = vadd.f32 %v6179, %v6180
    %v6182 = vsel %vm5726, %v4686, 0.0
    %v6183 = vadd.f32 %v6181, %v6182
    %v6184 = vsel %vm5726, %v4694, 0.0
    %v6185 = vadd.f32 %v6183, %v6184
    %v6186 = vsel %vm5726, %v4693, 0.0
    %v6187 = vadd.f32 %v6185, %v6186
    %v6188 = vsel %vm5726, %v4695, 0.0
    %v6189 = vadd.f32 %v6187, %v6188
    %v6190 = vsel %vm5726, %v4703, 0.0
    %v6191 = vadd.f32 %v6189, %v6190
    %v6192 = vsel %vm5726, %v4711, 0.0
    %v6193 = vadd.f32 %v6191, %v6192
    %v6194 = vsel %vm5726, %v4710, 0.0
    %v6195 = vadd.f32 %v6193, %v6194
    %v6196 = vsel %vm5726, %v4712, 0.0
    %v6197 = vadd.f32 %v6195, %v6196
    %v6198 = vsel %vm5726, %v4720, 0.0
    %v6199 = vadd.f32 %v6197, %v6198
    %v6200 = vsel %vm5726, %v4728, 0.0
    %v6201 = vadd.f32 %v6199, %v6200
    %v6202 = vsel %vm5726, %v4727, 0.0
    %v6203 = vadd.f32 %v6201, %v6202
    %v6204 = vsel %vm5726, %v4729, 0.0
    %v6205 = vadd.f32 %v6203, %v6204
    %v6206 = vsel %vm5726, %v4737, 0.0
    %v6207 = vadd.f32 %v6205, %v6206
    %v6208 = vsel %vm5726, %v4745, 0.0
    %v6209 = vadd.f32 %v6207, %v6208
    %v6210 = vsel %vm5726, %v4744, 0.0
    %v6211 = vadd.f32 %v6209, %v6210
    %v6212 = vsel %vm5726, %v4746, 0.0
    %v6213 = vadd.f32 %v6211, %v6212
    %v6214 = vsel %vm5726, %v4754, 0.0
    %v6215 = vadd.f32 %v6213, %v6214
    %v6216 = vsel %vm5726, %v4762, 0.0
    %v6217 = vadd.f32 %v6215, %v6216
    %v6218 = vsel %vm5726, %v4761, 0.0
    %v6219 = vadd.f32 %v6217, %v6218
    %v6220 = vsel %vm5726, %v4763, 0.0
    %v6221 = vadd.f32 %v6219, %v6220
    %v6222 = vsel %vm5726, %v4771, 0.0
    %v6223 = vadd.f32 %v6221, %v6222
    %v6224 = vsel %vm5726, %v4779, 0.0
    %v6225 = vadd.f32 %v6223, %v6224
    %v6226 = vsel %vm5726, %v4778, 0.0
    %v6227 = vadd.f32 %v6225, %v6226
    %v6228 = vsel %vm5726, %v4780, 0.0
    %v6229 = vadd.f32 %v6227, %v6228
    %v6230 = vsel %vm5726, %v4788, 0.0
    %v6231 = vadd.f32 %v6229, %v6230
    %v6232 = vsel %vm5726, %v4796, 0.0
    %v6233 = vadd.f32 %v6231, %v6232
    %v6234 = vsel %vm5726, %v4795, 0.0
    %v6235 = vadd.f32 %v6233, %v6234
    %v6236 = vsel %vm5726, %v4797, 0.0
    %v6237 = vadd.f32 %v6235, %v6236
    %v6238 = vsel %vm5726, %v4805, 0.0
    %v6239 = vadd.f32 %v6237, %v6238
    %v6240 = vsel %vm5726, %v4813, 0.0
    %v6241 = vadd.f32 %v6239, %v6240
    %v6242 = vsel %vm5726, %v4812, 0.0
    %v6243 = vadd.f32 %v6241, %v6242
    %v6244 = vsel %vm5726, %v4814, 0.0
    %v6245 = vadd.f32 %v6243, %v6244
    %v6246 = vsel %vm5726, %v4822, 0.0
    %v6247 = vadd.f32 %v6245, %v6246
    %v6248 = vsel %vm5726, %v4830, 0.0
    %v6249 = vadd.f32 %v6247, %v6248
    %v6250 = vsel %vm5726, %v4829, 0.0
    %v6251 = vadd.f32 %v6249, %v6250
    %v6252 = vsel %vm5726, %v4831, 0.0
    %v6253 = vadd.f32 %v6251, %v6252
    %v6254 = vsel %vm5726, %v4839, 0.0
    %v6255 = vadd.f32 %v6253, %v6254
    %v6256 = vsel %vm5726, %v4847, 0.0
    %v6257 = vadd.f32 %v6255, %v6256
    %v6258 = vsel %vm5726, %v4846, 0.0
    %v6259 = vadd.f32 %v6257, %v6258
    %v6260 = vsel %vm5726, %v4848, 0.0
    %v6261 = vadd.f32 %v6259, %v6260
    %v6262 = vsel %vm5726, %v4856, 0.0
    %v6263 = vadd.f32 %v6261, %v6262
    %v6264 = vsel %vm5726, %v4864, 0.0
    %v6265 = vadd.f32 %v6263, %v6264
    %v6266 = vsel %vm5726, %v4863, 0.0
    %v6267 = vadd.f32 %v6265, %v6266
    %v6268 = vsel %vm5726, %v4865, 0.0
    %v6269 = vadd.f32 %v6267, %v6268
    %v6270 = vsel %vm5726, %v4873, 0.0
    %v6271 = vadd.f32 %v6269, %v6270
    %v6272 = vsel %vm5726, %v4881, 0.0
    %v6273 = vadd.f32 %v6271, %v6272
    %v6274 = vsel %vm5726, %v4880, 0.0
    %v6275 = vadd.f32 %v6273, %v6274
    %v6276 = vsel %vm5726, %v4882, 0.0
    %v6277 = vadd.f32 %v6275, %v6276
    %v6278 = vsel %vm5726, %v4890, 0.0
    %v6279 = vadd.f32 %v6277, %v6278
    %v6280 = vsel %vm5726, %v4898, 0.0
    %v6281 = vadd.f32 %v6279, %v6280
    %v6282 = vsel %vm5726, %v4897, 0.0
    %v6283 = vadd.f32 %v6281, %v6282
    %v6284 = vsel %vm5726, %v4899, 0.0
    %v6285 = vadd.f32 %v6283, %v6284
    %v6286 = vsel %vm5726, %v4907, 0.0
    %v6287 = vadd.f32 %v6285, %v6286
    %v6288 = vsel %vm5726, %v4915, 0.0
    %v6289 = vadd.f32 %v6287, %v6288
    %v6290 = vsel %vm5726, %v4914, 0.0
    %v6291 = vadd.f32 %v6289, %v6290
    %v6292 = vsel %vm5726, %v4916, 0.0
    %v6293 = vadd.f32 %v6291, %v6292
    %v6294 = vsel %vm5726, %v4924, 0.0
    %v6295 = vadd.f32 %v6293, %v6294
    %v6296 = vsel %vm5726, %v4932, 0.0
    %v6297 = vadd.f32 %v6295, %v6296
    %v6298 = vsel %vm5726, %v4931, 0.0
    %v6299 = vadd.f32 %v6297, %v6298
    %v6300 = vsel %vm5726, %v4933, 0.0
    %v6301 = vadd.f32 %v6299, %v6300
    %v6302 = vsel %vm5726, %v4941, 0.0
    %v6303 = vadd.f32 %v6301, %v6302
    %v6304 = vsel %vm5726, %v4949, 0.0
    %v6305 = vadd.f32 %v6303, %v6304
    %v6306 = vsel %vm5726, %v4948, 0.0
    %v6307 = vadd.f32 %v6305, %v6306
    %v6308 = vsel %vm5726, %v4950, 0.0
    %v6309 = vadd.f32 %v6307, %v6308
    %v6310 = vsel %vm5726, %v4958, 0.0
    %v6311 = vadd.f32 %v6309, %v6310
    %v6312 = vsel %vm5726, %v4966, 0.0
    %v6313 = vadd.f32 %v6311, %v6312
    %v6314 = vsel %vm5726, %v4965, 0.0
    %v6315 = vadd.f32 %v6313, %v6314
    %v6316 = vsel %vm5726, %v4967, 0.0
    %v6317 = vadd.f32 %v6315, %v6316
    %v6318 = vsel %vm5726, %v4975, 0.0
    %v6319 = vadd.f32 %v6317, %v6318
    %v6320 = vsel %vm5726, %v4983, 0.0
    %v6321 = vadd.f32 %v6319, %v6320
    %v6322 = vsel %vm5726, %v4982, 0.0
    %v6323 = vadd.f32 %v6321, %v6322
    %v6324 = vsel %vm5726, %v4984, 0.0
    %v6325 = vadd.f32 %v6323, %v6324
    %v6326 = vsel %vm5726, %v4992, 0.0
    %v6327 = vadd.f32 %v6325, %v6326
    %v6328 = vsel %vm5726, %v5000, 0.0
    %v6329 = vadd.f32 %v6327, %v6328
    %v6330 = vsel %vm5726, %v4999, 0.0
    %v6331 = vadd.f32 %v6329, %v6330
    %v6332 = vsel %vm5726, %v5001, 0.0
    %v6333 = vadd.f32 %v6331, %v6332
    %v6334 = vsel %vm5726, %v5009, 0.0
    %v6335 = vadd.f32 %v6333, %v6334
    %v6336 = vsel %vm5726, %v5017, 0.0
    %v6337 = vadd.f32 %v6335, %v6336
    %v6338 = vsel %vm5726, %v5016, 0.0
    %v6339 = vadd.f32 %v6337, %v6338
    %v6340 = vsel %vm5726, %v5018, 0.0
    %v6341 = vadd.f32 %v6339, %v6340
    %v6342 = vsel %vm5726, %v5026, 0.0
    %v6343 = vadd.f32 %v6341, %v6342
    %v6344 = vsel %vm5726, %v5034, 0.0
    %v6345 = vadd.f32 %v6343, %v6344
    %v6346 = vsel %vm5726, %v5033, 0.0
    %v6347 = vadd.f32 %v6345, %v6346
    %v6348 = vsel %vm5726, %v5035, 0.0
    %v6349 = vadd.f32 %v6347, %v6348
    %v6350 = vsel %vm5726, %v5043, 0.0
    %v6351 = vadd.f32 %v6349, %v6350
    %v6352 = vsel %vm5726, %v5051, 0.0
    %v6353 = vadd.f32 %v6351, %v6352
    %v6354 = vsel %vm5726, %v5050, 0.0
    %v6355 = vadd.f32 %v6353, %v6354
    %v6356 = vsel %vm5726, %v5052, 0.0
    %v6357 = vadd.f32 %v6355, %v6356
    %v6358 = vsel %vm5726, %v5060, 0.0
    %v6359 = vadd.f32 %v6357, %v6358
    %v6360 = vsel %vm5726, %v5068, 0.0
    %v6361 = vadd.f32 %v6359, %v6360
    %v6362 = vsel %vm5726, %v5067, 0.0
    %v6363 = vadd.f32 %v6361, %v6362
    %v6364 = vsel %vm5726, %v5069, 0.0
    %v6365 = vadd.f32 %v6363, %v6364
    %v6366 = vsel %vm5726, %v5077, 0.0
    %v6367 = vadd.f32 %v6365, %v6366
    %v6368 = vsel %vm5726, %v5085, 0.0
    %v6369 = vadd.f32 %v6367, %v6368
    %v6370 = vsel %vm5726, %v5084, 0.0
    %v6371 = vadd.f32 %v6369, %v6370
    %v6372 = vsel %vm5726, %v5086, 0.0
    %v6373 = vadd.f32 %v6371, %v6372
    %v6374 = vsel %vm5726, %v5094, 0.0
    %v6375 = vadd.f32 %v6373, %v6374
    %v6376 = vsel %vm5726, %v5102, 0.0
    %v6377 = vadd.f32 %v6375, %v6376
    %v6378 = vsel %vm5726, %v5101, 0.0
    %v6379 = vadd.f32 %v6377, %v6378
    %v6380 = vsel %vm5726, %v5103, 0.0
    %v6381 = vadd.f32 %v6379, %v6380
    %v6382 = vsel %vm5726, %v5111, 0.0
    %v6383 = vadd.f32 %v6381, %v6382
    %v6384 = vsel %vm5726, %v5119, 0.0
    %v6385 = vadd.f32 %v6383, %v6384
    %v6386 = vsel %vm5726, %v5118, 0.0
    %v6387 = vadd.f32 %v6385, %v6386
    %v6388 = vsel %vm5726, %v5120, 0.0
    %v6389 = vadd.f32 %v6387, %v6388
    %v6390 = vsel %vm5726, %v5128, 0.0
    %v6391 = vadd.f32 %v6389, %v6390
    %v6392 = vsel %vm5726, %v5136, 0.0
    %v6393 = vadd.f32 %v6391, %v6392
    %v6394 = vsel %vm5726, %v5135, 0.0
    %v6395 = vadd.f32 %v6393, %v6394
    %v6396 = vsel %vm5726, %v5137, 0.0
    %v6397 = vadd.f32 %v6395, %v6396
    %v6398 = vsel %vm5726, %v5145, 0.0
    %v6399 = vadd.f32 %v6397, %v6398
    %v6400 = vsel %vm5726, %v5153, 0.0
    %v6401 = vadd.f32 %v6399, %v6400
    %v6402 = vsel %vm5726, %v5152, 0.0
    %v6403 = vadd.f32 %v6401, %v6402
    %v6404 = vsel %vm5726, %v5154, 0.0
    %v6405 = vadd.f32 %v6403, %v6404
    %v6406 = vsel %vm5726, %v5162, 0.0
    %v6407 = vadd.f32 %v6405, %v6406
    %v6408 = vsel %vm5726, %v5170, 0.0
    %v6409 = vadd.f32 %v6407, %v6408
    %v6410 = vsel %vm5726, %v5169, 0.0
    %v6411 = vadd.f32 %v6409, %v6410
    %v6412 = vsel %vm5726, %v5171, 0.0
    %v6413 = vadd.f32 %v6411, %v6412
    %v6414 = vsel %vm5726, %v5179, 0.0
    %v6415 = vadd.f32 %v6413, %v6414
    %v6416 = vsel %vm5726, %v5187, 0.0
    %v6417 = vadd.f32 %v6415, %v6416
    %v6418 = vsel %vm5726, %v5186, 0.0
    %v6419 = vadd.f32 %v6417, %v6418
    %v6420 = vsel %vm5726, %v5188, 0.0
    %v6421 = vadd.f32 %v6419, %v6420
    %v6422 = vsel %vm5726, %v5196, 0.0
    %v6423 = vadd.f32 %v6421, %v6422
    %v6424 = vsel %vm5726, %v5204, 0.0
    %v6425 = vadd.f32 %v6423, %v6424
    %v6426 = vsel %vm5726, %v5203, 0.0
    %v6427 = vadd.f32 %v6425, %v6426
    %v6428 = vsel %vm5726, %v5205, 0.0
    %v6429 = vadd.f32 %v6427, %v6428
    %v6430 = vsel %vm5726, %v5213, 0.0
    %v6431 = vadd.f32 %v6429, %v6430
    %v6432 = vsel %vm5726, %v5221, 0.0
    %v6433 = vadd.f32 %v6431, %v6432
    %v6434 = vsel %vm5726, %v5220, 0.0
    %v6435 = vadd.f32 %v6433, %v6434
    %v6436 = vsel %vm5726, %v5222, 0.0
    %v6437 = vadd.f32 %v6435, %v6436
    %v6438 = vsel %vm5726, %v5230, 0.0
    %v6439 = vadd.f32 %v6437, %v6438
    %v6440 = vsel %vm5726, %v5238, 0.0
    %v6441 = vadd.f32 %v6439, %v6440
    %v6442 = vsel %vm5726, %v5237, 0.0
    %v6443 = vadd.f32 %v6441, %v6442
    %v6444 = vsel %vm5726, %v5239, 0.0
    %v6445 = vadd.f32 %v6443, %v6444
    %v6446 = vsel %vm5726, %v5247, 0.0
    %v6447 = vadd.f32 %v6445, %v6446
    %v6448 = vsel %vm5726, %v5255, 0.0
    %v6449 = vadd.f32 %v6447, %v6448
    %v6450 = vsel %vm5726, %v5254, 0.0
    %v6451 = vadd.f32 %v6449, %v6450
    %v6452 = vsel %vm5726, %v5256, 0.0
    %v6453 = vadd.f32 %v6451, %v6452
    %v6454 = vsel %vm5726, %v5264, 0.0
    %v6455 = vadd.f32 %v6453, %v6454
    %v6456 = vsel %vm5726, %v5272, 0.0
    %v6457 = vadd.f32 %v6455, %v6456
    %v6458 = vsel %vm5726, %v5271, 0.0
    %v6459 = vadd.f32 %v6457, %v6458
    %v6460 = vsel %vm5726, %v5273, 0.0
    %v6461 = vadd.f32 %v6459, %v6460
    %v6462 = vsel %vm5726, %v5281, 0.0
    %v6463 = vadd.f32 %v6461, %v6462
    %v6464 = vsel %vm5726, %v5289, 0.0
    %v6465 = vadd.f32 %v6463, %v6464
    %v6466 = vsel %vm5726, %v5288, 0.0
    %v6467 = vadd.f32 %v6465, %v6466
    %v6468 = vsel %vm5726, %v5290, 0.0
    %v6469 = vadd.f32 %v6467, %v6468
    %v6470 = vsel %vm5726, %v5298, 0.0
    %v6471 = vadd.f32 %v6469, %v6470
    %v6472 = vsel %vm5726, %v5306, 0.0
    %v6473 = vadd.f32 %v6471, %v6472
    %v6474 = vsel %vm5726, %v5305, 0.0
    %v6475 = vadd.f32 %v6473, %v6474
    %v6476 = vsel %vm5726, %v5307, 0.0
    %v6477 = vadd.f32 %v6475, %v6476
    %v6478 = vsel %vm5726, %v5315, 0.0
    %v6479 = vadd.f32 %v6477, %v6478
    %v6480 = vsel %vm5726, %v5323, 0.0
    %v6481 = vadd.f32 %v6479, %v6480
    %v6482 = vsel %vm5726, %v5322, 0.0
    %v6483 = vadd.f32 %v6481, %v6482
    %v6484 = vsel %vm5726, %v5324, 0.0
    %v6485 = vadd.f32 %v6483, %v6484
    %v6486 = vsel %vm5726, %v5332, 0.0
    %v6487 = vadd.f32 %v6485, %v6486
    %v6488 = vsel %vm5726, %v5340, 0.0
    %v6489 = vadd.f32 %v6487, %v6488
    %v6490 = vsel %vm5726, %v5339, 0.0
    %v6491 = vadd.f32 %v6489, %v6490
    %v6492 = vsel %vm5726, %v5341, 0.0
    %v6493 = vadd.f32 %v6491, %v6492
    %6494 = vadd.xlane.f32.xlu0 %v6493
    %v6495 = vpop.xlane.xlu0 %6494
    %s6496 = scalar_lea.vmem %s1, 1
    %v6497 = vld [vmem:[%s6496] ss:$2 sm:$0xff]
    %s6498 = scalar_lea.vmem %s1, 17
    %v6499 = vld [vmem:[%s6498] ss:$2 sm:$0xff]
    %s6500 = scalar_lea.vmem %s1, 33
    %v6501 = vld [vmem:[%s6500] ss:$2 sm:$0xff]
    %s6502 = scalar_lea.vmem %s1, 49
    %v6503 = vld [vmem:[%s6502] ss:$2 sm:$0xff]
    %s6504 = scalar_lea.vmem %s1, 65
    %v6505 = vld [vmem:[%s6504] ss:$2 sm:$0xff]
    %s6506 = scalar_lea.vmem %s1, 81
    %v6507 = vld [vmem:[%s6506] ss:$2 sm:$0xff]
    %s6508 = scalar_lea.vmem %s1, 97
    %v6509 = vld [vmem:[%s6508] ss:$2 sm:$0xff]
    %s6510 = scalar_lea.vmem %s1, 113
    %v6511 = vld [vmem:[%s6510] ss:$2 sm:$0xff]
    %s6512 = scalar_lea.vmem %s1, 129
    %v6513 = vld [vmem:[%s6512] ss:$2 sm:$0xff]
    %s6514 = scalar_lea.vmem %s1, 145
    %v6515 = vld [vmem:[%s6514] ss:$2 sm:$0xff]
    %s6516 = scalar_lea.vmem %s1, 161
    %v6517 = vld [vmem:[%s6516] ss:$2 sm:$0xff]
    %s6518 = scalar_lea.vmem %s1, 177
    %v6519 = vld [vmem:[%s6518] ss:$2 sm:$0xff]
    %s6520 = scalar_lea.vmem %s1, 193
    %v6521 = vld [vmem:[%s6520] ss:$2 sm:$0xff]
    %s6522 = scalar_lea.vmem %s1, 209
    %v6523 = vld [vmem:[%s6522] ss:$2 sm:$0xff]
    %s6524 = scalar_lea.vmem %s1, 225
    %v6525 = vld [vmem:[%s6524] ss:$2 sm:$0xff]
    %s6526 = scalar_lea.vmem %s1, 241
    %v6527 = vld [vmem:[%s6526] ss:$2 sm:$0xff]
    %s6528 = scalar_lea.vmem %s1, 257
    %v6529 = vld [vmem:[%s6528] ss:$2 sm:$0xff]
    %s6530 = scalar_lea.vmem %s1, 273
    %v6531 = vld [vmem:[%s6530] ss:$2 sm:$0xff]
    %s6532 = scalar_lea.vmem %s1, 289
    %v6533 = vld [vmem:[%s6532] ss:$2 sm:$0xff]
    %s6534 = scalar_lea.vmem %s1, 305
    %v6535 = vld [vmem:[%s6534] ss:$2 sm:$0xff]
    %s6536 = scalar_lea.vmem %s1, 321
    %v6537 = vld [vmem:[%s6536] ss:$2 sm:$0xff]
    %s6538 = scalar_lea.vmem %s1, 337
    %v6539 = vld [vmem:[%s6538] ss:$2 sm:$0xff]
    %s6540 = scalar_lea.vmem %s1, 353
    %v6541 = vld [vmem:[%s6540] ss:$2 sm:$0xff]
    %s6542 = scalar_lea.vmem %s1, 369
    %v6543 = vld [vmem:[%s6542] ss:$2 sm:$0xff]
    %s6544 = scalar_lea.vmem %s1, 385
    %v6545 = vld [vmem:[%s6544] ss:$2 sm:$0xff]
    %s6546 = scalar_lea.vmem %s1, 401
    %v6547 = vld [vmem:[%s6546] ss:$2 sm:$0xff]
    %s6548 = scalar_lea.vmem %s1, 417
    %v6549 = vld [vmem:[%s6548] ss:$2 sm:$0xff]
    %s6550 = scalar_lea.vmem %s1, 433
    %v6551 = vld [vmem:[%s6550] ss:$2 sm:$0xff]
    %s6552 = scalar_lea.vmem %s1, 449
    %v6553 = vld [vmem:[%s6552] ss:$2 sm:$0xff]
    %s6554 = scalar_lea.vmem %s1, 465
    %v6555 = vld [vmem:[%s6554] ss:$2 sm:$0xff]
    %s6556 = scalar_lea.vmem %s1, 481
    %v6557 = vld [vmem:[%s6556] ss:$2 sm:$0xff]
    %s6558 = scalar_lea.vmem %s1, 497
    %v6559 = vld [vmem:[%s6558] ss:$2 sm:$0xff]
    %s6560 = scalar_lea.vmem %s1, 513
    %v6561 = vld [vmem:[%s6560] ss:$2 sm:$0xff]
    %s6562 = scalar_lea.vmem %s1, 529
    %v6563 = vld [vmem:[%s6562] ss:$2 sm:$0xff]
    %s6564 = scalar_lea.vmem %s1, 545
    %v6565 = vld [vmem:[%s6564] ss:$2 sm:$0xff]
    %s6566 = scalar_lea.vmem %s1, 561
    %v6567 = vld [vmem:[%s6566] ss:$2 sm:$0xff]
    %s6568 = scalar_lea.vmem %s1, 577
    %v6569 = vld [vmem:[%s6568] ss:$2 sm:$0xff]
    %s6570 = scalar_lea.vmem %s1, 593
    %v6571 = vld [vmem:[%s6570] ss:$2 sm:$0xff]
    %s6572 = scalar_lea.vmem %s1, 609
    %v6573 = vld [vmem:[%s6572] ss:$2 sm:$0xff]
    %s6574 = scalar_lea.vmem %s1, 625
    %v6575 = vld [vmem:[%s6574] ss:$2 sm:$0xff]
    %s6576 = scalar_lea.vmem %s1, 641
    %v6577 = vld [vmem:[%s6576] ss:$2 sm:$0xff]
    %s6578 = scalar_lea.vmem %s1, 657
    %v6579 = vld [vmem:[%s6578] ss:$2 sm:$0xff]
    %s6580 = scalar_lea.vmem %s1, 673
    %v6581 = vld [vmem:[%s6580] ss:$2 sm:$0xff]
    %s6582 = scalar_lea.vmem %s1, 689
    %v6583 = vld [vmem:[%s6582] ss:$2 sm:$0xff]
    %s6584 = scalar_lea.vmem %s1, 705
    %v6585 = vld [vmem:[%s6584] ss:$2 sm:$0xff]
    %s6586 = scalar_lea.vmem %s1, 721
    %v6587 = vld [vmem:[%s6586] ss:$2 sm:$0xff]
    %s6588 = scalar_lea.vmem %s1, 737
    %v6589 = vld [vmem:[%s6588] ss:$2 sm:$0xff]
    %s6590 = scalar_lea.vmem %s1, 753
    %v6591 = vld [vmem:[%s6590] ss:$2 sm:$0xff]
    %v6640 = vlaneseq
    %v6641 = vshrl.u32 %v6640, 7
    %v6642 = vsub.s32 0, %v6641
    %v6643 = vrot.slane %v6497, %v6642
    %v6644 = vlaneseq
    %v6645 = vshrl.u32 %v6644, 7
    %v6646 = vsub.s32 1, %v6645
    %v6647 = vrot.slane %v6497, %v6646
    %v6648 = vlaneseq
    %v6649 = vshrl.u32 %v6648, 7
    %v6650 = vsub.s32 2, %v6649
    %v6651 = vrot.slane %v6497, %v6650
    %v6652 = vlaneseq
    %v6653 = vshrl.u32 %v6652, 7
    %v6654 = vsub.s32 3, %v6653
    %v6655 = vrot.slane %v6497, %v6654
    %v6656 = vlaneseq
    %v6657 = vshrl.u32 %v6656, 7
    %v6658 = vsub.s32 4, %v6657
    %v6659 = vrot.slane %v6497, %v6658
    %v6660 = vlaneseq
    %v6661 = vshrl.u32 %v6660, 7
    %v6662 = vsub.s32 5, %v6661
    %v6663 = vrot.slane %v6497, %v6662
    %v6664 = vlaneseq
    %v6665 = vshrl.u32 %v6664, 7
    %v6666 = vsub.s32 6, %v6665
    %v6667 = vrot.slane %v6497, %v6666
    %v6668 = vlaneseq
    %v6669 = vshrl.u32 %v6668, 7
    %v6670 = vsub.s32 7, %v6669
    %v6671 = vrot.slane %v6497, %v6670
    %v6672 = vlaneseq
    %v6673 = vshrl.u32 %v6672, 7
    %v6674 = vsub.s32 0, %v6673
    %v6675 = vrot.slane %v6499, %v6674
    %v6676 = vlaneseq
    %v6677 = vshrl.u32 %v6676, 7
    %v6678 = vsub.s32 1, %v6677
    %v6679 = vrot.slane %v6499, %v6678
    %v6680 = vlaneseq
    %v6681 = vshrl.u32 %v6680, 7
    %v6682 = vsub.s32 2, %v6681
    %v6683 = vrot.slane %v6499, %v6682
    %v6684 = vlaneseq
    %v6685 = vshrl.u32 %v6684, 7
    %v6686 = vsub.s32 3, %v6685
    %v6687 = vrot.slane %v6499, %v6686
    %v6688 = vlaneseq
    %v6689 = vshrl.u32 %v6688, 7
    %v6690 = vsub.s32 4, %v6689
    %v6691 = vrot.slane %v6499, %v6690
    %v6692 = vlaneseq
    %v6693 = vshrl.u32 %v6692, 7
    %v6694 = vsub.s32 5, %v6693
    %v6695 = vrot.slane %v6499, %v6694
    %v6696 = vlaneseq
    %v6697 = vshrl.u32 %v6696, 7
    %v6698 = vsub.s32 6, %v6697
    %v6699 = vrot.slane %v6499, %v6698
    %v6700 = vlaneseq
    %v6701 = vshrl.u32 %v6700, 7
    %v6702 = vsub.s32 7, %v6701
    %v6703 = vrot.slane %v6499, %v6702
    %v6704 = vlaneseq
    %v6705 = vshrl.u32 %v6704, 7
    %v6706 = vsub.s32 0, %v6705
    %v6707 = vrot.slane %v6501, %v6706
    %v6708 = vlaneseq
    %v6709 = vshrl.u32 %v6708, 7
    %v6710 = vsub.s32 1, %v6709
    %v6711 = vrot.slane %v6501, %v6710
    %v6712 = vlaneseq
    %v6713 = vshrl.u32 %v6712, 7
    %v6714 = vsub.s32 2, %v6713
    %v6715 = vrot.slane %v6501, %v6714
    %v6716 = vlaneseq
    %v6717 = vshrl.u32 %v6716, 7
    %v6718 = vsub.s32 3, %v6717
    %v6719 = vrot.slane %v6501, %v6718
    %v6720 = vlaneseq
    %v6721 = vshrl.u32 %v6720, 7
    %v6722 = vsub.s32 4, %v6721
    %v6723 = vrot.slane %v6501, %v6722
    %v6724 = vlaneseq
    %v6725 = vshrl.u32 %v6724, 7
    %v6726 = vsub.s32 5, %v6725
    %v6727 = vrot.slane %v6501, %v6726
    %v6728 = vlaneseq
    %v6729 = vshrl.u32 %v6728, 7
    %v6730 = vsub.s32 6, %v6729
    %v6731 = vrot.slane %v6501, %v6730
    %v6732 = vlaneseq
    %v6733 = vshrl.u32 %v6732, 7
    %v6734 = vsub.s32 7, %v6733
    %v6735 = vrot.slane %v6501, %v6734
    %v6736 = vlaneseq
    %v6737 = vshrl.u32 %v6736, 7
    %v6738 = vsub.s32 0, %v6737
    %v6739 = vrot.slane %v6503, %v6738
    %v6740 = vlaneseq
    %v6741 = vshrl.u32 %v6740, 7
    %v6742 = vsub.s32 1, %v6741
    %v6743 = vrot.slane %v6503, %v6742
    %v6744 = vlaneseq
    %v6745 = vshrl.u32 %v6744, 7
    %v6746 = vsub.s32 2, %v6745
    %v6747 = vrot.slane %v6503, %v6746
    %v6748 = vlaneseq
    %v6749 = vshrl.u32 %v6748, 7
    %v6750 = vsub.s32 3, %v6749
    %v6751 = vrot.slane %v6503, %v6750
    %v6752 = vlaneseq
    %v6753 = vshrl.u32 %v6752, 7
    %v6754 = vsub.s32 4, %v6753
    %v6755 = vrot.slane %v6503, %v6754
    %v6756 = vlaneseq
    %v6757 = vshrl.u32 %v6756, 7
    %v6758 = vsub.s32 5, %v6757
    %v6759 = vrot.slane %v6503, %v6758
    %v6760 = vlaneseq
    %v6761 = vshrl.u32 %v6760, 7
    %v6762 = vsub.s32 6, %v6761
    %v6763 = vrot.slane %v6503, %v6762
    %v6764 = vlaneseq
    %v6765 = vshrl.u32 %v6764, 7
    %v6766 = vsub.s32 7, %v6765
    %v6767 = vrot.slane %v6503, %v6766
    %v6768 = vlaneseq
    %v6769 = vshrl.u32 %v6768, 7
    %v6770 = vsub.s32 0, %v6769
    %v6771 = vrot.slane %v6505, %v6770
    %v6772 = vlaneseq
    %v6773 = vshrl.u32 %v6772, 7
    %v6774 = vsub.s32 1, %v6773
    %v6775 = vrot.slane %v6505, %v6774
    %v6776 = vlaneseq
    %v6777 = vshrl.u32 %v6776, 7
    %v6778 = vsub.s32 2, %v6777
    %v6779 = vrot.slane %v6505, %v6778
    %v6780 = vlaneseq
    %v6781 = vshrl.u32 %v6780, 7
    %v6782 = vsub.s32 3, %v6781
    %v6783 = vrot.slane %v6505, %v6782
    %v6784 = vlaneseq
    %v6785 = vshrl.u32 %v6784, 7
    %v6786 = vsub.s32 4, %v6785
    %v6787 = vrot.slane %v6505, %v6786
    %v6788 = vlaneseq
    %v6789 = vshrl.u32 %v6788, 7
    %v6790 = vsub.s32 5, %v6789
    %v6791 = vrot.slane %v6505, %v6790
    %v6792 = vlaneseq
    %v6793 = vshrl.u32 %v6792, 7
    %v6794 = vsub.s32 6, %v6793
    %v6795 = vrot.slane %v6505, %v6794
    %v6796 = vlaneseq
    %v6797 = vshrl.u32 %v6796, 7
    %v6798 = vsub.s32 7, %v6797
    %v6799 = vrot.slane %v6505, %v6798
    %v6800 = vlaneseq
    %v6801 = vshrl.u32 %v6800, 7
    %v6802 = vsub.s32 0, %v6801
    %v6803 = vrot.slane %v6507, %v6802
    %v6804 = vlaneseq
    %v6805 = vshrl.u32 %v6804, 7
    %v6806 = vsub.s32 1, %v6805
    %v6807 = vrot.slane %v6507, %v6806
    %v6808 = vlaneseq
    %v6809 = vshrl.u32 %v6808, 7
    %v6810 = vsub.s32 2, %v6809
    %v6811 = vrot.slane %v6507, %v6810
    %v6812 = vlaneseq
    %v6813 = vshrl.u32 %v6812, 7
    %v6814 = vsub.s32 3, %v6813
    %v6815 = vrot.slane %v6507, %v6814
    %v6816 = vlaneseq
    %v6817 = vshrl.u32 %v6816, 7
    %v6818 = vsub.s32 4, %v6817
    %v6819 = vrot.slane %v6507, %v6818
    %v6820 = vlaneseq
    %v6821 = vshrl.u32 %v6820, 7
    %v6822 = vsub.s32 5, %v6821
    %v6823 = vrot.slane %v6507, %v6822
    %v6824 = vlaneseq
    %v6825 = vshrl.u32 %v6824, 7
    %v6826 = vsub.s32 6, %v6825
    %v6827 = vrot.slane %v6507, %v6826
    %v6828 = vlaneseq
    %v6829 = vshrl.u32 %v6828, 7
    %v6830 = vsub.s32 7, %v6829
    %v6831 = vrot.slane %v6507, %v6830
    %v6832 = vlaneseq
    %v6833 = vshrl.u32 %v6832, 7
    %v6834 = vsub.s32 0, %v6833
    %v6835 = vrot.slane %v6509, %v6834
    %v6836 = vlaneseq
    %v6837 = vshrl.u32 %v6836, 7
    %v6838 = vsub.s32 1, %v6837
    %v6839 = vrot.slane %v6509, %v6838
    %v6840 = vlaneseq
    %v6841 = vshrl.u32 %v6840, 7
    %v6842 = vsub.s32 2, %v6841
    %v6843 = vrot.slane %v6509, %v6842
    %v6844 = vlaneseq
    %v6845 = vshrl.u32 %v6844, 7
    %v6846 = vsub.s32 3, %v6845
    %v6847 = vrot.slane %v6509, %v6846
    %v6848 = vlaneseq
    %v6849 = vshrl.u32 %v6848, 7
    %v6850 = vsub.s32 4, %v6849
    %v6851 = vrot.slane %v6509, %v6850
    %v6852 = vlaneseq
    %v6853 = vshrl.u32 %v6852, 7
    %v6854 = vsub.s32 5, %v6853
    %v6855 = vrot.slane %v6509, %v6854
    %v6856 = vlaneseq
    %v6857 = vshrl.u32 %v6856, 7
    %v6858 = vsub.s32 6, %v6857
    %v6859 = vrot.slane %v6509, %v6858
    %v6860 = vlaneseq
    %v6861 = vshrl.u32 %v6860, 7
    %v6862 = vsub.s32 7, %v6861
    %v6863 = vrot.slane %v6509, %v6862
    %v6864 = vlaneseq
    %v6865 = vshrl.u32 %v6864, 7
    %v6866 = vsub.s32 0, %v6865
    %v6867 = vrot.slane %v6511, %v6866
    %v6868 = vlaneseq
    %v6869 = vshrl.u32 %v6868, 7
    %v6870 = vsub.s32 1, %v6869
    %v6871 = vrot.slane %v6511, %v6870
    %v6872 = vlaneseq
    %v6873 = vshrl.u32 %v6872, 7
    %v6874 = vsub.s32 2, %v6873
    %v6875 = vrot.slane %v6511, %v6874
    %v6876 = vlaneseq
    %v6877 = vshrl.u32 %v6876, 7
    %v6878 = vsub.s32 3, %v6877
    %v6879 = vrot.slane %v6511, %v6878
    %v6880 = vlaneseq
    %v6881 = vshrl.u32 %v6880, 7
    %v6882 = vsub.s32 4, %v6881
    %v6883 = vrot.slane %v6511, %v6882
    %v6884 = vlaneseq
    %v6885 = vshrl.u32 %v6884, 7
    %v6886 = vsub.s32 5, %v6885
    %v6887 = vrot.slane %v6511, %v6886
    %v6888 = vlaneseq
    %v6889 = vshrl.u32 %v6888, 7
    %v6890 = vsub.s32 6, %v6889
    %v6891 = vrot.slane %v6511, %v6890
    %v6892 = vlaneseq
    %v6893 = vshrl.u32 %v6892, 7
    %v6894 = vsub.s32 7, %v6893
    %v6895 = vrot.slane %v6511, %v6894
    %v6896 = vlaneseq
    %v6897 = vshrl.u32 %v6896, 7
    %v6898 = vsub.s32 0, %v6897
    %v6899 = vrot.slane %v6513, %v6898
    %v6900 = vlaneseq
    %v6901 = vshrl.u32 %v6900, 7
    %v6902 = vsub.s32 1, %v6901
    %v6903 = vrot.slane %v6513, %v6902
    %v6904 = vlaneseq
    %v6905 = vshrl.u32 %v6904, 7
    %v6906 = vsub.s32 2, %v6905
    %v6907 = vrot.slane %v6513, %v6906
    %v6908 = vlaneseq
    %v6909 = vshrl.u32 %v6908, 7
    %v6910 = vsub.s32 3, %v6909
    %v6911 = vrot.slane %v6513, %v6910
    %v6912 = vlaneseq
    %v6913 = vshrl.u32 %v6912, 7
    %v6914 = vsub.s32 4, %v6913
    %v6915 = vrot.slane %v6513, %v6914
    %v6916 = vlaneseq
    %v6917 = vshrl.u32 %v6916, 7
    %v6918 = vsub.s32 5, %v6917
    %v6919 = vrot.slane %v6513, %v6918
    %v6920 = vlaneseq
    %v6921 = vshrl.u32 %v6920, 7
    %v6922 = vsub.s32 6, %v6921
    %v6923 = vrot.slane %v6513, %v6922
    %v6924 = vlaneseq
    %v6925 = vshrl.u32 %v6924, 7
    %v6926 = vsub.s32 7, %v6925
    %v6927 = vrot.slane %v6513, %v6926
    %v6928 = vlaneseq
    %v6929 = vshrl.u32 %v6928, 7
    %v6930 = vsub.s32 0, %v6929
    %v6931 = vrot.slane %v6515, %v6930
    %v6932 = vlaneseq
    %v6933 = vshrl.u32 %v6932, 7
    %v6934 = vsub.s32 1, %v6933
    %v6935 = vrot.slane %v6515, %v6934
    %v6936 = vlaneseq
    %v6937 = vshrl.u32 %v6936, 7
    %v6938 = vsub.s32 2, %v6937
    %v6939 = vrot.slane %v6515, %v6938
    %v6940 = vlaneseq
    %v6941 = vshrl.u32 %v6940, 7
    %v6942 = vsub.s32 3, %v6941
    %v6943 = vrot.slane %v6515, %v6942
    %v6944 = vlaneseq
    %v6945 = vshrl.u32 %v6944, 7
    %v6946 = vsub.s32 4, %v6945
    %v6947 = vrot.slane %v6515, %v6946
    %v6948 = vlaneseq
    %v6949 = vshrl.u32 %v6948, 7
    %v6950 = vsub.s32 5, %v6949
    %v6951 = vrot.slane %v6515, %v6950
    %v6952 = vlaneseq
    %v6953 = vshrl.u32 %v6952, 7
    %v6954 = vsub.s32 6, %v6953
    %v6955 = vrot.slane %v6515, %v6954
    %v6956 = vlaneseq
    %v6957 = vshrl.u32 %v6956, 7
    %v6958 = vsub.s32 7, %v6957
    %v6959 = vrot.slane %v6515, %v6958
    %v6960 = vlaneseq
    %v6961 = vshrl.u32 %v6960, 7
    %v6962 = vsub.s32 0, %v6961
    %v6963 = vrot.slane %v6517, %v6962
    %v6964 = vlaneseq
    %v6965 = vshrl.u32 %v6964, 7
    %v6966 = vsub.s32 1, %v6965
    %v6967 = vrot.slane %v6517, %v6966
    %v6968 = vlaneseq
    %v6969 = vshrl.u32 %v6968, 7
    %v6970 = vsub.s32 2, %v6969
    %v6971 = vrot.slane %v6517, %v6970
    %v6972 = vlaneseq
    %v6973 = vshrl.u32 %v6972, 7
    %v6974 = vsub.s32 3, %v6973
    %v6975 = vrot.slane %v6517, %v6974
    %v6976 = vlaneseq
    %v6977 = vshrl.u32 %v6976, 7
    %v6978 = vsub.s32 4, %v6977
    %v6979 = vrot.slane %v6517, %v6978
    %v6980 = vlaneseq
    %v6981 = vshrl.u32 %v6980, 7
    %v6982 = vsub.s32 5, %v6981
    %v6983 = vrot.slane %v6517, %v6982
    %v6984 = vlaneseq
    %v6985 = vshrl.u32 %v6984, 7
    %v6986 = vsub.s32 6, %v6985
    %v6987 = vrot.slane %v6517, %v6986
    %v6988 = vlaneseq
    %v6989 = vshrl.u32 %v6988, 7
    %v6990 = vsub.s32 7, %v6989
    %v6991 = vrot.slane %v6517, %v6990
    %v6992 = vlaneseq
    %v6993 = vshrl.u32 %v6992, 7
    %v6994 = vsub.s32 0, %v6993
    %v6995 = vrot.slane %v6519, %v6994
    %v6996 = vlaneseq
    %v6997 = vshrl.u32 %v6996, 7
    %v6998 = vsub.s32 1, %v6997
    %v6999 = vrot.slane %v6519, %v6998
    %v7000 = vlaneseq
    %v7001 = vshrl.u32 %v7000, 7
    %v7002 = vsub.s32 2, %v7001
    %v7003 = vrot.slane %v6519, %v7002
    %v7004 = vlaneseq
    %v7005 = vshrl.u32 %v7004, 7
    %v7006 = vsub.s32 3, %v7005
    %v7007 = vrot.slane %v6519, %v7006
    %v7008 = vlaneseq
    %v7009 = vshrl.u32 %v7008, 7
    %v7010 = vsub.s32 4, %v7009
    %v7011 = vrot.slane %v6519, %v7010
    %v7012 = vlaneseq
    %v7013 = vshrl.u32 %v7012, 7
    %v7014 = vsub.s32 5, %v7013
    %v7015 = vrot.slane %v6519, %v7014
    %v7016 = vlaneseq
    %v7017 = vshrl.u32 %v7016, 7
    %v7018 = vsub.s32 6, %v7017
    %v7019 = vrot.slane %v6519, %v7018
    %v7020 = vlaneseq
    %v7021 = vshrl.u32 %v7020, 7
    %v7022 = vsub.s32 7, %v7021
    %v7023 = vrot.slane %v6519, %v7022
    %v7024 = vlaneseq
    %v7025 = vshrl.u32 %v7024, 7
    %v7026 = vsub.s32 0, %v7025
    %v7027 = vrot.slane %v6521, %v7026
    %v7028 = vlaneseq
    %v7029 = vshrl.u32 %v7028, 7
    %v7030 = vsub.s32 1, %v7029
    %v7031 = vrot.slane %v6521, %v7030
    %v7032 = vlaneseq
    %v7033 = vshrl.u32 %v7032, 7
    %v7034 = vsub.s32 2, %v7033
    %v7035 = vrot.slane %v6521, %v7034
    %v7036 = vlaneseq
    %v7037 = vshrl.u32 %v7036, 7
    %v7038 = vsub.s32 3, %v7037
    %v7039 = vrot.slane %v6521, %v7038
    %v7040 = vlaneseq
    %v7041 = vshrl.u32 %v7040, 7
    %v7042 = vsub.s32 4, %v7041
    %v7043 = vrot.slane %v6521, %v7042
    %v7044 = vlaneseq
    %v7045 = vshrl.u32 %v7044, 7
    %v7046 = vsub.s32 5, %v7045
    %v7047 = vrot.slane %v6521, %v7046
    %v7048 = vlaneseq
    %v7049 = vshrl.u32 %v7048, 7
    %v7050 = vsub.s32 6, %v7049
    %v7051 = vrot.slane %v6521, %v7050
    %v7052 = vlaneseq
    %v7053 = vshrl.u32 %v7052, 7
    %v7054 = vsub.s32 7, %v7053
    %v7055 = vrot.slane %v6521, %v7054
    %v7056 = vlaneseq
    %v7057 = vshrl.u32 %v7056, 7
    %v7058 = vsub.s32 0, %v7057
    %v7059 = vrot.slane %v6523, %v7058
    %v7060 = vlaneseq
    %v7061 = vshrl.u32 %v7060, 7
    %v7062 = vsub.s32 1, %v7061
    %v7063 = vrot.slane %v6523, %v7062
    %v7064 = vlaneseq
    %v7065 = vshrl.u32 %v7064, 7
    %v7066 = vsub.s32 2, %v7065
    %v7067 = vrot.slane %v6523, %v7066
    %v7068 = vlaneseq
    %v7069 = vshrl.u32 %v7068, 7
    %v7070 = vsub.s32 3, %v7069
    %v7071 = vrot.slane %v6523, %v7070
    %v7072 = vlaneseq
    %v7073 = vshrl.u32 %v7072, 7
    %v7074 = vsub.s32 4, %v7073
    %v7075 = vrot.slane %v6523, %v7074
    %v7076 = vlaneseq
    %v7077 = vshrl.u32 %v7076, 7
    %v7078 = vsub.s32 5, %v7077
    %v7079 = vrot.slane %v6523, %v7078
    %v7080 = vlaneseq
    %v7081 = vshrl.u32 %v7080, 7
    %v7082 = vsub.s32 6, %v7081
    %v7083 = vrot.slane %v6523, %v7082
    %v7084 = vlaneseq
    %v7085 = vshrl.u32 %v7084, 7
    %v7086 = vsub.s32 7, %v7085
    %v7087 = vrot.slane %v6523, %v7086
    %v7088 = vlaneseq
    %v7089 = vshrl.u32 %v7088, 7
    %v7090 = vsub.s32 0, %v7089
    %v7091 = vrot.slane %v6525, %v7090
    %v7092 = vlaneseq
    %v7093 = vshrl.u32 %v7092, 7
    %v7094 = vsub.s32 1, %v7093
    %v7095 = vrot.slane %v6525, %v7094
    %v7096 = vlaneseq
    %v7097 = vshrl.u32 %v7096, 7
    %v7098 = vsub.s32 2, %v7097
    %v7099 = vrot.slane %v6525, %v7098
    %v7100 = vlaneseq
    %v7101 = vshrl.u32 %v7100, 7
    %v7102 = vsub.s32 3, %v7101
    %v7103 = vrot.slane %v6525, %v7102
    %v7104 = vlaneseq
    %v7105 = vshrl.u32 %v7104, 7
    %v7106 = vsub.s32 4, %v7105
    %v7107 = vrot.slane %v6525, %v7106
    %v7108 = vlaneseq
    %v7109 = vshrl.u32 %v7108, 7
    %v7110 = vsub.s32 5, %v7109
    %v7111 = vrot.slane %v6525, %v7110
    %v7112 = vlaneseq
    %v7113 = vshrl.u32 %v7112, 7
    %v7114 = vsub.s32 6, %v7113
    %v7115 = vrot.slane %v6525, %v7114
    %v7116 = vlaneseq
    %v7117 = vshrl.u32 %v7116, 7
    %v7118 = vsub.s32 7, %v7117
    %v7119 = vrot.slane %v6525, %v7118
    %v7120 = vlaneseq
    %v7121 = vshrl.u32 %v7120, 7
    %v7122 = vsub.s32 0, %v7121
    %v7123 = vrot.slane %v6527, %v7122
    %v7124 = vlaneseq
    %v7125 = vshrl.u32 %v7124, 7
    %v7126 = vsub.s32 1, %v7125
    %v7127 = vrot.slane %v6527, %v7126
    %v7128 = vlaneseq
    %v7129 = vshrl.u32 %v7128, 7
    %v7130 = vsub.s32 2, %v7129
    %v7131 = vrot.slane %v6527, %v7130
    %v7132 = vlaneseq
    %v7133 = vshrl.u32 %v7132, 7
    %v7134 = vsub.s32 3, %v7133
    %v7135 = vrot.slane %v6527, %v7134
    %v7136 = vlaneseq
    %v7137 = vshrl.u32 %v7136, 7
    %v7138 = vsub.s32 4, %v7137
    %v7139 = vrot.slane %v6527, %v7138
    %v7140 = vlaneseq
    %v7141 = vshrl.u32 %v7140, 7
    %v7142 = vsub.s32 5, %v7141
    %v7143 = vrot.slane %v6527, %v7142
    %v7144 = vlaneseq
    %v7145 = vshrl.u32 %v7144, 7
    %v7146 = vsub.s32 6, %v7145
    %v7147 = vrot.slane %v6527, %v7146
    %v7148 = vlaneseq
    %v7149 = vshrl.u32 %v7148, 7
    %v7150 = vsub.s32 7, %v7149
    %v7151 = vrot.slane %v6527, %v7150
    %v7152 = vlaneseq
    %v7153 = vshrl.u32 %v7152, 7
    %v7154 = vsub.s32 0, %v7153
    %v7155 = vrot.slane %v6529, %v7154
    %v7156 = vlaneseq
    %v7157 = vshrl.u32 %v7156, 7
    %v7158 = vsub.s32 1, %v7157
    %v7159 = vrot.slane %v6529, %v7158
    %v7160 = vlaneseq
    %v7161 = vshrl.u32 %v7160, 7
    %v7162 = vsub.s32 2, %v7161
    %v7163 = vrot.slane %v6529, %v7162
    %v7164 = vlaneseq
    %v7165 = vshrl.u32 %v7164, 7
    %v7166 = vsub.s32 3, %v7165
    %v7167 = vrot.slane %v6529, %v7166
    %v7168 = vlaneseq
    %v7169 = vshrl.u32 %v7168, 7
    %v7170 = vsub.s32 4, %v7169
    %v7171 = vrot.slane %v6529, %v7170
    %v7172 = vlaneseq
    %v7173 = vshrl.u32 %v7172, 7
    %v7174 = vsub.s32 5, %v7173
    %v7175 = vrot.slane %v6529, %v7174
    %v7176 = vlaneseq
    %v7177 = vshrl.u32 %v7176, 7
    %v7178 = vsub.s32 6, %v7177
    %v7179 = vrot.slane %v6529, %v7178
    %v7180 = vlaneseq
    %v7181 = vshrl.u32 %v7180, 7
    %v7182 = vsub.s32 7, %v7181
    %v7183 = vrot.slane %v6529, %v7182
    %v7184 = vlaneseq
    %v7185 = vshrl.u32 %v7184, 7
    %v7186 = vsub.s32 0, %v7185
    %v7187 = vrot.slane %v6531, %v7186
    %v7188 = vlaneseq
    %v7189 = vshrl.u32 %v7188, 7
    %v7190 = vsub.s32 1, %v7189
    %v7191 = vrot.slane %v6531, %v7190
    %v7192 = vlaneseq
    %v7193 = vshrl.u32 %v7192, 7
    %v7194 = vsub.s32 2, %v7193
    %v7195 = vrot.slane %v6531, %v7194
    %v7196 = vlaneseq
    %v7197 = vshrl.u32 %v7196, 7
    %v7198 = vsub.s32 3, %v7197
    %v7199 = vrot.slane %v6531, %v7198
    %v7200 = vlaneseq
    %v7201 = vshrl.u32 %v7200, 7
    %v7202 = vsub.s32 4, %v7201
    %v7203 = vrot.slane %v6531, %v7202
    %v7204 = vlaneseq
    %v7205 = vshrl.u32 %v7204, 7
    %v7206 = vsub.s32 5, %v7205
    %v7207 = vrot.slane %v6531, %v7206
    %v7208 = vlaneseq
    %v7209 = vshrl.u32 %v7208, 7
    %v7210 = vsub.s32 6, %v7209
    %v7211 = vrot.slane %v6531, %v7210
    %v7212 = vlaneseq
    %v7213 = vshrl.u32 %v7212, 7
    %v7214 = vsub.s32 7, %v7213
    %v7215 = vrot.slane %v6531, %v7214
    %v7216 = vlaneseq
    %v7217 = vshrl.u32 %v7216, 7
    %v7218 = vsub.s32 0, %v7217
    %v7219 = vrot.slane %v6533, %v7218
    %v7220 = vlaneseq
    %v7221 = vshrl.u32 %v7220, 7
    %v7222 = vsub.s32 1, %v7221
    %v7223 = vrot.slane %v6533, %v7222
    %v7224 = vlaneseq
    %v7225 = vshrl.u32 %v7224, 7
    %v7226 = vsub.s32 2, %v7225
    %v7227 = vrot.slane %v6533, %v7226
    %v7228 = vlaneseq
    %v7229 = vshrl.u32 %v7228, 7
    %v7230 = vsub.s32 3, %v7229
    %v7231 = vrot.slane %v6533, %v7230
    %v7232 = vlaneseq
    %v7233 = vshrl.u32 %v7232, 7
    %v7234 = vsub.s32 4, %v7233
    %v7235 = vrot.slane %v6533, %v7234
    %v7236 = vlaneseq
    %v7237 = vshrl.u32 %v7236, 7
    %v7238 = vsub.s32 5, %v7237
    %v7239 = vrot.slane %v6533, %v7238
    %v7240 = vlaneseq
    %v7241 = vshrl.u32 %v7240, 7
    %v7242 = vsub.s32 6, %v7241
    %v7243 = vrot.slane %v6533, %v7242
    %v7244 = vlaneseq
    %v7245 = vshrl.u32 %v7244, 7
    %v7246 = vsub.s32 7, %v7245
    %v7247 = vrot.slane %v6533, %v7246
    %v7248 = vlaneseq
    %v7249 = vshrl.u32 %v7248, 7
    %v7250 = vsub.s32 0, %v7249
    %v7251 = vrot.slane %v6535, %v7250
    %v7252 = vlaneseq
    %v7253 = vshrl.u32 %v7252, 7
    %v7254 = vsub.s32 1, %v7253
    %v7255 = vrot.slane %v6535, %v7254
    %v7256 = vlaneseq
    %v7257 = vshrl.u32 %v7256, 7
    %v7258 = vsub.s32 2, %v7257
    %v7259 = vrot.slane %v6535, %v7258
    %v7260 = vlaneseq
    %v7261 = vshrl.u32 %v7260, 7
    %v7262 = vsub.s32 3, %v7261
    %v7263 = vrot.slane %v6535, %v7262
    %v7264 = vlaneseq
    %v7265 = vshrl.u32 %v7264, 7
    %v7266 = vsub.s32 4, %v7265
    %v7267 = vrot.slane %v6535, %v7266
    %v7268 = vlaneseq
    %v7269 = vshrl.u32 %v7268, 7
    %v7270 = vsub.s32 5, %v7269
    %v7271 = vrot.slane %v6535, %v7270
    %v7272 = vlaneseq
    %v7273 = vshrl.u32 %v7272, 7
    %v7274 = vsub.s32 6, %v7273
    %v7275 = vrot.slane %v6535, %v7274
    %v7276 = vlaneseq
    %v7277 = vshrl.u32 %v7276, 7
    %v7278 = vsub.s32 7, %v7277
    %v7279 = vrot.slane %v6535, %v7278
    %v7280 = vlaneseq
    %v7281 = vshrl.u32 %v7280, 7
    %v7282 = vsub.s32 0, %v7281
    %v7283 = vrot.slane %v6537, %v7282
    %v7284 = vlaneseq
    %v7285 = vshrl.u32 %v7284, 7
    %v7286 = vsub.s32 1, %v7285
    %v7287 = vrot.slane %v6537, %v7286
    %v7288 = vlaneseq
    %v7289 = vshrl.u32 %v7288, 7
    %v7290 = vsub.s32 2, %v7289
    %v7291 = vrot.slane %v6537, %v7290
    %v7292 = vlaneseq
    %v7293 = vshrl.u32 %v7292, 7
    %v7294 = vsub.s32 3, %v7293
    %v7295 = vrot.slane %v6537, %v7294
    %v7296 = vlaneseq
    %v7297 = vshrl.u32 %v7296, 7
    %v7298 = vsub.s32 4, %v7297
    %v7299 = vrot.slane %v6537, %v7298
    %v7300 = vlaneseq
    %v7301 = vshrl.u32 %v7300, 7
    %v7302 = vsub.s32 5, %v7301
    %v7303 = vrot.slane %v6537, %v7302
    %v7304 = vlaneseq
    %v7305 = vshrl.u32 %v7304, 7
    %v7306 = vsub.s32 6, %v7305
    %v7307 = vrot.slane %v6537, %v7306
    %v7308 = vlaneseq
    %v7309 = vshrl.u32 %v7308, 7
    %v7310 = vsub.s32 7, %v7309
    %v7311 = vrot.slane %v6537, %v7310
    %v7312 = vlaneseq
    %v7313 = vshrl.u32 %v7312, 7
    %v7314 = vsub.s32 0, %v7313
    %v7315 = vrot.slane %v6539, %v7314
    %v7316 = vlaneseq
    %v7317 = vshrl.u32 %v7316, 7
    %v7318 = vsub.s32 1, %v7317
    %v7319 = vrot.slane %v6539, %v7318
    %v7320 = vlaneseq
    %v7321 = vshrl.u32 %v7320, 7
    %v7322 = vsub.s32 2, %v7321
    %v7323 = vrot.slane %v6539, %v7322
    %v7324 = vlaneseq
    %v7325 = vshrl.u32 %v7324, 7
    %v7326 = vsub.s32 3, %v7325
    %v7327 = vrot.slane %v6539, %v7326
    %v7328 = vlaneseq
    %v7329 = vshrl.u32 %v7328, 7
    %v7330 = vsub.s32 4, %v7329
    %v7331 = vrot.slane %v6539, %v7330
    %v7332 = vlaneseq
    %v7333 = vshrl.u32 %v7332, 7
    %v7334 = vsub.s32 5, %v7333
    %v7335 = vrot.slane %v6539, %v7334
    %v7336 = vlaneseq
    %v7337 = vshrl.u32 %v7336, 7
    %v7338 = vsub.s32 6, %v7337
    %v7339 = vrot.slane %v6539, %v7338
    %v7340 = vlaneseq
    %v7341 = vshrl.u32 %v7340, 7
    %v7342 = vsub.s32 7, %v7341
    %v7343 = vrot.slane %v6539, %v7342
    %v7344 = vlaneseq
    %v7345 = vshrl.u32 %v7344, 7
    %v7346 = vsub.s32 0, %v7345
    %v7347 = vrot.slane %v6541, %v7346
    %v7348 = vlaneseq
    %v7349 = vshrl.u32 %v7348, 7
    %v7350 = vsub.s32 1, %v7349
    %v7351 = vrot.slane %v6541, %v7350
    %v7352 = vlaneseq
    %v7353 = vshrl.u32 %v7352, 7
    %v7354 = vsub.s32 2, %v7353
    %v7355 = vrot.slane %v6541, %v7354
    %v7356 = vlaneseq
    %v7357 = vshrl.u32 %v7356, 7
    %v7358 = vsub.s32 3, %v7357
    %v7359 = vrot.slane %v6541, %v7358
    %v7360 = vlaneseq
    %v7361 = vshrl.u32 %v7360, 7
    %v7362 = vsub.s32 4, %v7361
    %v7363 = vrot.slane %v6541, %v7362
    %v7364 = vlaneseq
    %v7365 = vshrl.u32 %v7364, 7
    %v7366 = vsub.s32 5, %v7365
    %v7367 = vrot.slane %v6541, %v7366
    %v7368 = vlaneseq
    %v7369 = vshrl.u32 %v7368, 7
    %v7370 = vsub.s32 6, %v7369
    %v7371 = vrot.slane %v6541, %v7370
    %v7372 = vlaneseq
    %v7373 = vshrl.u32 %v7372, 7
    %v7374 = vsub.s32 7, %v7373
    %v7375 = vrot.slane %v6541, %v7374
    %v7376 = vlaneseq
    %v7377 = vshrl.u32 %v7376, 7
    %v7378 = vsub.s32 0, %v7377
    %v7379 = vrot.slane %v6543, %v7378
    %v7380 = vlaneseq
    %v7381 = vshrl.u32 %v7380, 7
    %v7382 = vsub.s32 1, %v7381
    %v7383 = vrot.slane %v6543, %v7382
    %v7384 = vlaneseq
    %v7385 = vshrl.u32 %v7384, 7
    %v7386 = vsub.s32 2, %v7385
    %v7387 = vrot.slane %v6543, %v7386
    %v7388 = vlaneseq
    %v7389 = vshrl.u32 %v7388, 7
    %v7390 = vsub.s32 3, %v7389
    %v7391 = vrot.slane %v6543, %v7390
    %v7392 = vlaneseq
    %v7393 = vshrl.u32 %v7392, 7
    %v7394 = vsub.s32 4, %v7393
    %v7395 = vrot.slane %v6543, %v7394
    %v7396 = vlaneseq
    %v7397 = vshrl.u32 %v7396, 7
    %v7398 = vsub.s32 5, %v7397
    %v7399 = vrot.slane %v6543, %v7398
    %v7400 = vlaneseq
    %v7401 = vshrl.u32 %v7400, 7
    %v7402 = vsub.s32 6, %v7401
    %v7403 = vrot.slane %v6543, %v7402
    %v7404 = vlaneseq
    %v7405 = vshrl.u32 %v7404, 7
    %v7406 = vsub.s32 7, %v7405
    %v7407 = vrot.slane %v6543, %v7406
    %v7408 = vlaneseq
    %v7409 = vshrl.u32 %v7408, 7
    %v7410 = vsub.s32 0, %v7409
    %v7411 = vrot.slane %v6545, %v7410
    %v7412 = vlaneseq
    %v7413 = vshrl.u32 %v7412, 7
    %v7414 = vsub.s32 1, %v7413
    %v7415 = vrot.slane %v6545, %v7414
    %v7416 = vlaneseq
    %v7417 = vshrl.u32 %v7416, 7
    %v7418 = vsub.s32 2, %v7417
    %v7419 = vrot.slane %v6545, %v7418
    %v7420 = vlaneseq
    %v7421 = vshrl.u32 %v7420, 7
    %v7422 = vsub.s32 3, %v7421
    %v7423 = vrot.slane %v6545, %v7422
    %v7424 = vlaneseq
    %v7425 = vshrl.u32 %v7424, 7
    %v7426 = vsub.s32 4, %v7425
    %v7427 = vrot.slane %v6545, %v7426
    %v7428 = vlaneseq
    %v7429 = vshrl.u32 %v7428, 7
    %v7430 = vsub.s32 5, %v7429
    %v7431 = vrot.slane %v6545, %v7430
    %v7432 = vlaneseq
    %v7433 = vshrl.u32 %v7432, 7
    %v7434 = vsub.s32 6, %v7433
    %v7435 = vrot.slane %v6545, %v7434
    %v7436 = vlaneseq
    %v7437 = vshrl.u32 %v7436, 7
    %v7438 = vsub.s32 7, %v7437
    %v7439 = vrot.slane %v6545, %v7438
    %v7440 = vlaneseq
    %v7441 = vshrl.u32 %v7440, 7
    %v7442 = vsub.s32 0, %v7441
    %v7443 = vrot.slane %v6547, %v7442
    %v7444 = vlaneseq
    %v7445 = vshrl.u32 %v7444, 7
    %v7446 = vsub.s32 1, %v7445
    %v7447 = vrot.slane %v6547, %v7446
    %v7448 = vlaneseq
    %v7449 = vshrl.u32 %v7448, 7
    %v7450 = vsub.s32 2, %v7449
    %v7451 = vrot.slane %v6547, %v7450
    %v7452 = vlaneseq
    %v7453 = vshrl.u32 %v7452, 7
    %v7454 = vsub.s32 3, %v7453
    %v7455 = vrot.slane %v6547, %v7454
    %v7456 = vlaneseq
    %v7457 = vshrl.u32 %v7456, 7
    %v7458 = vsub.s32 4, %v7457
    %v7459 = vrot.slane %v6547, %v7458
    %v7460 = vlaneseq
    %v7461 = vshrl.u32 %v7460, 7
    %v7462 = vsub.s32 5, %v7461
    %v7463 = vrot.slane %v6547, %v7462
    %v7464 = vlaneseq
    %v7465 = vshrl.u32 %v7464, 7
    %v7466 = vsub.s32 6, %v7465
    %v7467 = vrot.slane %v6547, %v7466
    %v7468 = vlaneseq
    %v7469 = vshrl.u32 %v7468, 7
    %v7470 = vsub.s32 7, %v7469
    %v7471 = vrot.slane %v6547, %v7470
    %v7472 = vlaneseq
    %v7473 = vshrl.u32 %v7472, 7
    %v7474 = vsub.s32 0, %v7473
    %v7475 = vrot.slane %v6549, %v7474
    %v7476 = vlaneseq
    %v7477 = vshrl.u32 %v7476, 7
    %v7478 = vsub.s32 1, %v7477
    %v7479 = vrot.slane %v6549, %v7478
    %v7480 = vlaneseq
    %v7481 = vshrl.u32 %v7480, 7
    %v7482 = vsub.s32 2, %v7481
    %v7483 = vrot.slane %v6549, %v7482
    %v7484 = vlaneseq
    %v7485 = vshrl.u32 %v7484, 7
    %v7486 = vsub.s32 3, %v7485
    %v7487 = vrot.slane %v6549, %v7486
    %v7488 = vlaneseq
    %v7489 = vshrl.u32 %v7488, 7
    %v7490 = vsub.s32 4, %v7489
    %v7491 = vrot.slane %v6549, %v7490
    %v7492 = vlaneseq
    %v7493 = vshrl.u32 %v7492, 7
    %v7494 = vsub.s32 5, %v7493
    %v7495 = vrot.slane %v6549, %v7494
    %v7496 = vlaneseq
    %v7497 = vshrl.u32 %v7496, 7
    %v7498 = vsub.s32 6, %v7497
    %v7499 = vrot.slane %v6549, %v7498
    %v7500 = vlaneseq
    %v7501 = vshrl.u32 %v7500, 7
    %v7502 = vsub.s32 7, %v7501
    %v7503 = vrot.slane %v6549, %v7502
    %v7504 = vlaneseq
    %v7505 = vshrl.u32 %v7504, 7
    %v7506 = vsub.s32 0, %v7505
    %v7507 = vrot.slane %v6551, %v7506
    %v7508 = vlaneseq
    %v7509 = vshrl.u32 %v7508, 7
    %v7510 = vsub.s32 1, %v7509
    %v7511 = vrot.slane %v6551, %v7510
    %v7512 = vlaneseq
    %v7513 = vshrl.u32 %v7512, 7
    %v7514 = vsub.s32 2, %v7513
    %v7515 = vrot.slane %v6551, %v7514
    %v7516 = vlaneseq
    %v7517 = vshrl.u32 %v7516, 7
    %v7518 = vsub.s32 3, %v7517
    %v7519 = vrot.slane %v6551, %v7518
    %v7520 = vlaneseq
    %v7521 = vshrl.u32 %v7520, 7
    %v7522 = vsub.s32 4, %v7521
    %v7523 = vrot.slane %v6551, %v7522
    %v7524 = vlaneseq
    %v7525 = vshrl.u32 %v7524, 7
    %v7526 = vsub.s32 5, %v7525
    %v7527 = vrot.slane %v6551, %v7526
    %v7528 = vlaneseq
    %v7529 = vshrl.u32 %v7528, 7
    %v7530 = vsub.s32 6, %v7529
    %v7531 = vrot.slane %v6551, %v7530
    %v7532 = vlaneseq
    %v7533 = vshrl.u32 %v7532, 7
    %v7534 = vsub.s32 7, %v7533
    %v7535 = vrot.slane %v6551, %v7534
    %v7536 = vlaneseq
    %v7537 = vshrl.u32 %v7536, 7
    %v7538 = vsub.s32 0, %v7537
    %v7539 = vrot.slane %v6553, %v7538
    %v7540 = vlaneseq
    %v7541 = vshrl.u32 %v7540, 7
    %v7542 = vsub.s32 1, %v7541
    %v7543 = vrot.slane %v6553, %v7542
    %v7544 = vlaneseq
    %v7545 = vshrl.u32 %v7544, 7
    %v7546 = vsub.s32 2, %v7545
    %v7547 = vrot.slane %v6553, %v7546
    %v7548 = vlaneseq
    %v7549 = vshrl.u32 %v7548, 7
    %v7550 = vsub.s32 3, %v7549
    %v7551 = vrot.slane %v6553, %v7550
    %v7552 = vlaneseq
    %v7553 = vshrl.u32 %v7552, 7
    %v7554 = vsub.s32 4, %v7553
    %v7555 = vrot.slane %v6553, %v7554
    %v7556 = vlaneseq
    %v7557 = vshrl.u32 %v7556, 7
    %v7558 = vsub.s32 5, %v7557
    %v7559 = vrot.slane %v6553, %v7558
    %v7560 = vlaneseq
    %v7561 = vshrl.u32 %v7560, 7
    %v7562 = vsub.s32 6, %v7561
    %v7563 = vrot.slane %v6553, %v7562
    %v7564 = vlaneseq
    %v7565 = vshrl.u32 %v7564, 7
    %v7566 = vsub.s32 7, %v7565
    %v7567 = vrot.slane %v6553, %v7566
    %v7568 = vlaneseq
    %v7569 = vshrl.u32 %v7568, 7
    %v7570 = vsub.s32 0, %v7569
    %v7571 = vrot.slane %v6555, %v7570
    %v7572 = vlaneseq
    %v7573 = vshrl.u32 %v7572, 7
    %v7574 = vsub.s32 1, %v7573
    %v7575 = vrot.slane %v6555, %v7574
    %v7576 = vlaneseq
    %v7577 = vshrl.u32 %v7576, 7
    %v7578 = vsub.s32 2, %v7577
    %v7579 = vrot.slane %v6555, %v7578
    %v7580 = vlaneseq
    %v7581 = vshrl.u32 %v7580, 7
    %v7582 = vsub.s32 3, %v7581
    %v7583 = vrot.slane %v6555, %v7582
    %v7584 = vlaneseq
    %v7585 = vshrl.u32 %v7584, 7
    %v7586 = vsub.s32 4, %v7585
    %v7587 = vrot.slane %v6555, %v7586
    %v7588 = vlaneseq
    %v7589 = vshrl.u32 %v7588, 7
    %v7590 = vsub.s32 5, %v7589
    %v7591 = vrot.slane %v6555, %v7590
    %v7592 = vlaneseq
    %v7593 = vshrl.u32 %v7592, 7
    %v7594 = vsub.s32 6, %v7593
    %v7595 = vrot.slane %v6555, %v7594
    %v7596 = vlaneseq
    %v7597 = vshrl.u32 %v7596, 7
    %v7598 = vsub.s32 7, %v7597
    %v7599 = vrot.slane %v6555, %v7598
    %v7600 = vlaneseq
    %v7601 = vshrl.u32 %v7600, 7
    %v7602 = vsub.s32 0, %v7601
    %v7603 = vrot.slane %v6557, %v7602
    %v7604 = vlaneseq
    %v7605 = vshrl.u32 %v7604, 7
    %v7606 = vsub.s32 1, %v7605
    %v7607 = vrot.slane %v6557, %v7606
    %v7608 = vlaneseq
    %v7609 = vshrl.u32 %v7608, 7
    %v7610 = vsub.s32 2, %v7609
    %v7611 = vrot.slane %v6557, %v7610
    %v7612 = vlaneseq
    %v7613 = vshrl.u32 %v7612, 7
    %v7614 = vsub.s32 3, %v7613
    %v7615 = vrot.slane %v6557, %v7614
    %v7616 = vlaneseq
    %v7617 = vshrl.u32 %v7616, 7
    %v7618 = vsub.s32 4, %v7617
    %v7619 = vrot.slane %v6557, %v7618
    %v7620 = vlaneseq
    %v7621 = vshrl.u32 %v7620, 7
    %v7622 = vsub.s32 5, %v7621
    %v7623 = vrot.slane %v6557, %v7622
    %v7624 = vlaneseq
    %v7625 = vshrl.u32 %v7624, 7
    %v7626 = vsub.s32 6, %v7625
    %v7627 = vrot.slane %v6557, %v7626
    %v7628 = vlaneseq
    %v7629 = vshrl.u32 %v7628, 7
    %v7630 = vsub.s32 7, %v7629
    %v7631 = vrot.slane %v6557, %v7630
    %v7632 = vlaneseq
    %v7633 = vshrl.u32 %v7632, 7
    %v7634 = vsub.s32 0, %v7633
    %v7635 = vrot.slane %v6559, %v7634
    %v7636 = vlaneseq
    %v7637 = vshrl.u32 %v7636, 7
    %v7638 = vsub.s32 1, %v7637
    %v7639 = vrot.slane %v6559, %v7638
    %v7640 = vlaneseq
    %v7641 = vshrl.u32 %v7640, 7
    %v7642 = vsub.s32 2, %v7641
    %v7643 = vrot.slane %v6559, %v7642
    %v7644 = vlaneseq
    %v7645 = vshrl.u32 %v7644, 7
    %v7646 = vsub.s32 3, %v7645
    %v7647 = vrot.slane %v6559, %v7646
    %v7648 = vlaneseq
    %v7649 = vshrl.u32 %v7648, 7
    %v7650 = vsub.s32 4, %v7649
    %v7651 = vrot.slane %v6559, %v7650
    %v7652 = vlaneseq
    %v7653 = vshrl.u32 %v7652, 7
    %v7654 = vsub.s32 5, %v7653
    %v7655 = vrot.slane %v6559, %v7654
    %v7656 = vlaneseq
    %v7657 = vshrl.u32 %v7656, 7
    %v7658 = vsub.s32 6, %v7657
    %v7659 = vrot.slane %v6559, %v7658
    %v7660 = vlaneseq
    %v7661 = vshrl.u32 %v7660, 7
    %v7662 = vsub.s32 7, %v7661
    %v7663 = vrot.slane %v6559, %v7662
    %v7664 = vlaneseq
    %v7665 = vshrl.u32 %v7664, 7
    %v7666 = vsub.s32 0, %v7665
    %v7667 = vrot.slane %v6561, %v7666
    %v7668 = vlaneseq
    %v7669 = vshrl.u32 %v7668, 7
    %v7670 = vsub.s32 1, %v7669
    %v7671 = vrot.slane %v6561, %v7670
    %v7672 = vlaneseq
    %v7673 = vshrl.u32 %v7672, 7
    %v7674 = vsub.s32 2, %v7673
    %v7675 = vrot.slane %v6561, %v7674
    %v7676 = vlaneseq
    %v7677 = vshrl.u32 %v7676, 7
    %v7678 = vsub.s32 3, %v7677
    %v7679 = vrot.slane %v6561, %v7678
    %v7680 = vlaneseq
    %v7681 = vshrl.u32 %v7680, 7
    %v7682 = vsub.s32 4, %v7681
    %v7683 = vrot.slane %v6561, %v7682
    %v7684 = vlaneseq
    %v7685 = vshrl.u32 %v7684, 7
    %v7686 = vsub.s32 5, %v7685
    %v7687 = vrot.slane %v6561, %v7686
    %v7688 = vlaneseq
    %v7689 = vshrl.u32 %v7688, 7
    %v7690 = vsub.s32 6, %v7689
    %v7691 = vrot.slane %v6561, %v7690
    %v7692 = vlaneseq
    %v7693 = vshrl.u32 %v7692, 7
    %v7694 = vsub.s32 7, %v7693
    %v7695 = vrot.slane %v6561, %v7694
    %v7696 = vlaneseq
    %v7697 = vshrl.u32 %v7696, 7
    %v7698 = vsub.s32 0, %v7697
    %v7699 = vrot.slane %v6563, %v7698
    %v7700 = vlaneseq
    %v7701 = vshrl.u32 %v7700, 7
    %v7702 = vsub.s32 1, %v7701
    %v7703 = vrot.slane %v6563, %v7702
    %v7704 = vlaneseq
    %v7705 = vshrl.u32 %v7704, 7
    %v7706 = vsub.s32 2, %v7705
    %v7707 = vrot.slane %v6563, %v7706
    %v7708 = vlaneseq
    %v7709 = vshrl.u32 %v7708, 7
    %v7710 = vsub.s32 3, %v7709
    %v7711 = vrot.slane %v6563, %v7710
    %v7712 = vlaneseq
    %v7713 = vshrl.u32 %v7712, 7
    %v7714 = vsub.s32 4, %v7713
    %v7715 = vrot.slane %v6563, %v7714
    %v7716 = vlaneseq
    %v7717 = vshrl.u32 %v7716, 7
    %v7718 = vsub.s32 5, %v7717
    %v7719 = vrot.slane %v6563, %v7718
    %v7720 = vlaneseq
    %v7721 = vshrl.u32 %v7720, 7
    %v7722 = vsub.s32 6, %v7721
    %v7723 = vrot.slane %v6563, %v7722
    %v7724 = vlaneseq
    %v7725 = vshrl.u32 %v7724, 7
    %v7726 = vsub.s32 7, %v7725
    %v7727 = vrot.slane %v6563, %v7726
    %v7728 = vlaneseq
    %v7729 = vshrl.u32 %v7728, 7
    %v7730 = vsub.s32 0, %v7729
    %v7731 = vrot.slane %v6565, %v7730
    %v7732 = vlaneseq
    %v7733 = vshrl.u32 %v7732, 7
    %v7734 = vsub.s32 1, %v7733
    %v7735 = vrot.slane %v6565, %v7734
    %v7736 = vlaneseq
    %v7737 = vshrl.u32 %v7736, 7
    %v7738 = vsub.s32 2, %v7737
    %v7739 = vrot.slane %v6565, %v7738
    %v7740 = vlaneseq
    %v7741 = vshrl.u32 %v7740, 7
    %v7742 = vsub.s32 3, %v7741
    %v7743 = vrot.slane %v6565, %v7742
    %v7744 = vlaneseq
    %v7745 = vshrl.u32 %v7744, 7
    %v7746 = vsub.s32 4, %v7745
    %v7747 = vrot.slane %v6565, %v7746
    %v7748 = vlaneseq
    %v7749 = vshrl.u32 %v7748, 7
    %v7750 = vsub.s32 5, %v7749
    %v7751 = vrot.slane %v6565, %v7750
    %v7752 = vlaneseq
    %v7753 = vshrl.u32 %v7752, 7
    %v7754 = vsub.s32 6, %v7753
    %v7755 = vrot.slane %v6565, %v7754
    %v7756 = vlaneseq
    %v7757 = vshrl.u32 %v7756, 7
    %v7758 = vsub.s32 7, %v7757
    %v7759 = vrot.slane %v6565, %v7758
    %v7760 = vlaneseq
    %v7761 = vshrl.u32 %v7760, 7
    %v7762 = vsub.s32 0, %v7761
    %v7763 = vrot.slane %v6567, %v7762
    %v7764 = vlaneseq
    %v7765 = vshrl.u32 %v7764, 7
    %v7766 = vsub.s32 1, %v7765
    %v7767 = vrot.slane %v6567, %v7766
    %v7768 = vlaneseq
    %v7769 = vshrl.u32 %v7768, 7
    %v7770 = vsub.s32 2, %v7769
    %v7771 = vrot.slane %v6567, %v7770
    %v7772 = vlaneseq
    %v7773 = vshrl.u32 %v7772, 7
    %v7774 = vsub.s32 3, %v7773
    %v7775 = vrot.slane %v6567, %v7774
    %v7776 = vlaneseq
    %v7777 = vshrl.u32 %v7776, 7
    %v7778 = vsub.s32 4, %v7777
    %v7779 = vrot.slane %v6567, %v7778
    %v7780 = vlaneseq
    %v7781 = vshrl.u32 %v7780, 7
    %v7782 = vsub.s32 5, %v7781
    %v7783 = vrot.slane %v6567, %v7782
    %v7784 = vlaneseq
    %v7785 = vshrl.u32 %v7784, 7
    %v7786 = vsub.s32 6, %v7785
    %v7787 = vrot.slane %v6567, %v7786
    %v7788 = vlaneseq
    %v7789 = vshrl.u32 %v7788, 7
    %v7790 = vsub.s32 7, %v7789
    %v7791 = vrot.slane %v6567, %v7790
    %v7792 = vlaneseq
    %v7793 = vshrl.u32 %v7792, 7
    %v7794 = vsub.s32 0, %v7793
    %v7795 = vrot.slane %v6569, %v7794
    %v7796 = vlaneseq
    %v7797 = vshrl.u32 %v7796, 7
    %v7798 = vsub.s32 1, %v7797
    %v7799 = vrot.slane %v6569, %v7798
    %v7800 = vlaneseq
    %v7801 = vshrl.u32 %v7800, 7
    %v7802 = vsub.s32 2, %v7801
    %v7803 = vrot.slane %v6569, %v7802
    %v7804 = vlaneseq
    %v7805 = vshrl.u32 %v7804, 7
    %v7806 = vsub.s32 3, %v7805
    %v7807 = vrot.slane %v6569, %v7806
    %v7808 = vlaneseq
    %v7809 = vshrl.u32 %v7808, 7
    %v7810 = vsub.s32 4, %v7809
    %v7811 = vrot.slane %v6569, %v7810
    %v7812 = vlaneseq
    %v7813 = vshrl.u32 %v7812, 7
    %v7814 = vsub.s32 5, %v7813
    %v7815 = vrot.slane %v6569, %v7814
    %v7816 = vlaneseq
    %v7817 = vshrl.u32 %v7816, 7
    %v7818 = vsub.s32 6, %v7817
    %v7819 = vrot.slane %v6569, %v7818
    %v7820 = vlaneseq
    %v7821 = vshrl.u32 %v7820, 7
    %v7822 = vsub.s32 7, %v7821
    %v7823 = vrot.slane %v6569, %v7822
    %v7824 = vlaneseq
    %v7825 = vshrl.u32 %v7824, 7
    %v7826 = vsub.s32 0, %v7825
    %v7827 = vrot.slane %v6571, %v7826
    %v7828 = vlaneseq
    %v7829 = vshrl.u32 %v7828, 7
    %v7830 = vsub.s32 1, %v7829
    %v7831 = vrot.slane %v6571, %v7830
    %v7832 = vlaneseq
    %v7833 = vshrl.u32 %v7832, 7
    %v7834 = vsub.s32 2, %v7833
    %v7835 = vrot.slane %v6571, %v7834
    %v7836 = vlaneseq
    %v7837 = vshrl.u32 %v7836, 7
    %v7838 = vsub.s32 3, %v7837
    %v7839 = vrot.slane %v6571, %v7838
    %v7840 = vlaneseq
    %v7841 = vshrl.u32 %v7840, 7
    %v7842 = vsub.s32 4, %v7841
    %v7843 = vrot.slane %v6571, %v7842
    %v7844 = vlaneseq
    %v7845 = vshrl.u32 %v7844, 7
    %v7846 = vsub.s32 5, %v7845
    %v7847 = vrot.slane %v6571, %v7846
    %v7848 = vlaneseq
    %v7849 = vshrl.u32 %v7848, 7
    %v7850 = vsub.s32 6, %v7849
    %v7851 = vrot.slane %v6571, %v7850
    %v7852 = vlaneseq
    %v7853 = vshrl.u32 %v7852, 7
    %v7854 = vsub.s32 7, %v7853
    %v7855 = vrot.slane %v6571, %v7854
    %v7856 = vlaneseq
    %v7857 = vshrl.u32 %v7856, 7
    %v7858 = vsub.s32 0, %v7857
    %v7859 = vrot.slane %v6573, %v7858
    %v7860 = vlaneseq
    %v7861 = vshrl.u32 %v7860, 7
    %v7862 = vsub.s32 1, %v7861
    %v7863 = vrot.slane %v6573, %v7862
    %v7864 = vlaneseq
    %v7865 = vshrl.u32 %v7864, 7
    %v7866 = vsub.s32 2, %v7865
    %v7867 = vrot.slane %v6573, %v7866
    %v7868 = vlaneseq
    %v7869 = vshrl.u32 %v7868, 7
    %v7870 = vsub.s32 3, %v7869
    %v7871 = vrot.slane %v6573, %v7870
    %v7872 = vlaneseq
    %v7873 = vshrl.u32 %v7872, 7
    %v7874 = vsub.s32 4, %v7873
    %v7875 = vrot.slane %v6573, %v7874
    %v7876 = vlaneseq
    %v7877 = vshrl.u32 %v7876, 7
    %v7878 = vsub.s32 5, %v7877
    %v7879 = vrot.slane %v6573, %v7878
    %v7880 = vlaneseq
    %v7881 = vshrl.u32 %v7880, 7
    %v7882 = vsub.s32 6, %v7881
    %v7883 = vrot.slane %v6573, %v7882
    %v7884 = vlaneseq
    %v7885 = vshrl.u32 %v7884, 7
    %v7886 = vsub.s32 7, %v7885
    %v7887 = vrot.slane %v6573, %v7886
    %v7888 = vlaneseq
    %v7889 = vshrl.u32 %v7888, 7
    %v7890 = vsub.s32 0, %v7889
    %v7891 = vrot.slane %v6575, %v7890
    %v7892 = vlaneseq
    %v7893 = vshrl.u32 %v7892, 7
    %v7894 = vsub.s32 1, %v7893
    %v7895 = vrot.slane %v6575, %v7894
    %v7896 = vlaneseq
    %v7897 = vshrl.u32 %v7896, 7
    %v7898 = vsub.s32 2, %v7897
    %v7899 = vrot.slane %v6575, %v7898
    %v7900 = vlaneseq
    %v7901 = vshrl.u32 %v7900, 7
    %v7902 = vsub.s32 3, %v7901
    %v7903 = vrot.slane %v6575, %v7902
    %v7904 = vlaneseq
    %v7905 = vshrl.u32 %v7904, 7
    %v7906 = vsub.s32 4, %v7905
    %v7907 = vrot.slane %v6575, %v7906
    %v7908 = vlaneseq
    %v7909 = vshrl.u32 %v7908, 7
    %v7910 = vsub.s32 5, %v7909
    %v7911 = vrot.slane %v6575, %v7910
    %v7912 = vlaneseq
    %v7913 = vshrl.u32 %v7912, 7
    %v7914 = vsub.s32 6, %v7913
    %v7915 = vrot.slane %v6575, %v7914
    %v7916 = vlaneseq
    %v7917 = vshrl.u32 %v7916, 7
    %v7918 = vsub.s32 7, %v7917
    %v7919 = vrot.slane %v6575, %v7918
    %v7920 = vlaneseq
    %v7921 = vshrl.u32 %v7920, 7
    %v7922 = vsub.s32 0, %v7921
    %v7923 = vrot.slane %v6577, %v7922
    %v7924 = vlaneseq
    %v7925 = vshrl.u32 %v7924, 7
    %v7926 = vsub.s32 1, %v7925
    %v7927 = vrot.slane %v6577, %v7926
    %v7928 = vlaneseq
    %v7929 = vshrl.u32 %v7928, 7
    %v7930 = vsub.s32 2, %v7929
    %v7931 = vrot.slane %v6577, %v7930
    %v7932 = vlaneseq
    %v7933 = vshrl.u32 %v7932, 7
    %v7934 = vsub.s32 3, %v7933
    %v7935 = vrot.slane %v6577, %v7934
    %v7936 = vlaneseq
    %v7937 = vshrl.u32 %v7936, 7
    %v7938 = vsub.s32 4, %v7937
    %v7939 = vrot.slane %v6577, %v7938
    %v7940 = vlaneseq
    %v7941 = vshrl.u32 %v7940, 7
    %v7942 = vsub.s32 5, %v7941
    %v7943 = vrot.slane %v6577, %v7942
    %v7944 = vlaneseq
    %v7945 = vshrl.u32 %v7944, 7
    %v7946 = vsub.s32 6, %v7945
    %v7947 = vrot.slane %v6577, %v7946
    %v7948 = vlaneseq
    %v7949 = vshrl.u32 %v7948, 7
    %v7950 = vsub.s32 7, %v7949
    %v7951 = vrot.slane %v6577, %v7950
    %v7952 = vlaneseq
    %v7953 = vshrl.u32 %v7952, 7
    %v7954 = vsub.s32 0, %v7953
    %v7955 = vrot.slane %v6579, %v7954
    %v7956 = vlaneseq
    %v7957 = vshrl.u32 %v7956, 7
    %v7958 = vsub.s32 1, %v7957
    %v7959 = vrot.slane %v6579, %v7958
    %v7960 = vlaneseq
    %v7961 = vshrl.u32 %v7960, 7
    %v7962 = vsub.s32 2, %v7961
    %v7963 = vrot.slane %v6579, %v7962
    %v7964 = vlaneseq
    %v7965 = vshrl.u32 %v7964, 7
    %v7966 = vsub.s32 3, %v7965
    %v7967 = vrot.slane %v6579, %v7966
    %v7968 = vlaneseq
    %v7969 = vshrl.u32 %v7968, 7
    %v7970 = vsub.s32 4, %v7969
    %v7971 = vrot.slane %v6579, %v7970
    %v7972 = vlaneseq
    %v7973 = vshrl.u32 %v7972, 7
    %v7974 = vsub.s32 5, %v7973
    %v7975 = vrot.slane %v6579, %v7974
    %v7976 = vlaneseq
    %v7977 = vshrl.u32 %v7976, 7
    %v7978 = vsub.s32 6, %v7977
    %v7979 = vrot.slane %v6579, %v7978
    %v7980 = vlaneseq
    %v7981 = vshrl.u32 %v7980, 7
    %v7982 = vsub.s32 7, %v7981
    %v7983 = vrot.slane %v6579, %v7982
    %v7984 = vlaneseq
    %v7985 = vshrl.u32 %v7984, 7
    %v7986 = vsub.s32 0, %v7985
    %v7987 = vrot.slane %v6581, %v7986
    %v7988 = vlaneseq
    %v7989 = vshrl.u32 %v7988, 7
    %v7990 = vsub.s32 1, %v7989
    %v7991 = vrot.slane %v6581, %v7990
    %v7992 = vlaneseq
    %v7993 = vshrl.u32 %v7992, 7
    %v7994 = vsub.s32 2, %v7993
    %v7995 = vrot.slane %v6581, %v7994
    %v7996 = vlaneseq
    %v7997 = vshrl.u32 %v7996, 7
    %v7998 = vsub.s32 3, %v7997
    %v7999 = vrot.slane %v6581, %v7998
    %v8000 = vlaneseq
    %v8001 = vshrl.u32 %v8000, 7
    %v8002 = vsub.s32 4, %v8001
    %v8003 = vrot.slane %v6581, %v8002
    %v8004 = vlaneseq
    %v8005 = vshrl.u32 %v8004, 7
    %v8006 = vsub.s32 5, %v8005
    %v8007 = vrot.slane %v6581, %v8006
    %v8008 = vlaneseq
    %v8009 = vshrl.u32 %v8008, 7
    %v8010 = vsub.s32 6, %v8009
    %v8011 = vrot.slane %v6581, %v8010
    %v8012 = vlaneseq
    %v8013 = vshrl.u32 %v8012, 7
    %v8014 = vsub.s32 7, %v8013
    %v8015 = vrot.slane %v6581, %v8014
    %v8016 = vlaneseq
    %v8017 = vshrl.u32 %v8016, 7
    %v8018 = vsub.s32 0, %v8017
    %v8019 = vrot.slane %v6583, %v8018
    %v8020 = vlaneseq
    %v8021 = vshrl.u32 %v8020, 7
    %v8022 = vsub.s32 1, %v8021
    %v8023 = vrot.slane %v6583, %v8022
    %v8024 = vlaneseq
    %v8025 = vshrl.u32 %v8024, 7
    %v8026 = vsub.s32 2, %v8025
    %v8027 = vrot.slane %v6583, %v8026
    %v8028 = vlaneseq
    %v8029 = vshrl.u32 %v8028, 7
    %v8030 = vsub.s32 3, %v8029
    %v8031 = vrot.slane %v6583, %v8030
    %v8032 = vlaneseq
    %v8033 = vshrl.u32 %v8032, 7
    %v8034 = vsub.s32 4, %v8033
    %v8035 = vrot.slane %v6583, %v8034
    %v8036 = vlaneseq
    %v8037 = vshrl.u32 %v8036, 7
    %v8038 = vsub.s32 5, %v8037
    %v8039 = vrot.slane %v6583, %v8038
    %v8040 = vlaneseq
    %v8041 = vshrl.u32 %v8040, 7
    %v8042 = vsub.s32 6, %v8041
    %v8043 = vrot.slane %v6583, %v8042
    %v8044 = vlaneseq
    %v8045 = vshrl.u32 %v8044, 7
    %v8046 = vsub.s32 7, %v8045
    %v8047 = vrot.slane %v6583, %v8046
    %v8048 = vlaneseq
    %v8049 = vshrl.u32 %v8048, 7
    %v8050 = vsub.s32 0, %v8049
    %v8051 = vrot.slane %v6585, %v8050
    %v8052 = vlaneseq
    %v8053 = vshrl.u32 %v8052, 7
    %v8054 = vsub.s32 1, %v8053
    %v8055 = vrot.slane %v6585, %v8054
    %v8056 = vlaneseq
    %v8057 = vshrl.u32 %v8056, 7
    %v8058 = vsub.s32 2, %v8057
    %v8059 = vrot.slane %v6585, %v8058
    %v8060 = vlaneseq
    %v8061 = vshrl.u32 %v8060, 7
    %v8062 = vsub.s32 3, %v8061
    %v8063 = vrot.slane %v6585, %v8062
    %v8064 = vlaneseq
    %v8065 = vshrl.u32 %v8064, 7
    %v8066 = vsub.s32 4, %v8065
    %v8067 = vrot.slane %v6585, %v8066
    %v8068 = vlaneseq
    %v8069 = vshrl.u32 %v8068, 7
    %v8070 = vsub.s32 5, %v8069
    %v8071 = vrot.slane %v6585, %v8070
    %v8072 = vlaneseq
    %v8073 = vshrl.u32 %v8072, 7
    %v8074 = vsub.s32 6, %v8073
    %v8075 = vrot.slane %v6585, %v8074
    %v8076 = vlaneseq
    %v8077 = vshrl.u32 %v8076, 7
    %v8078 = vsub.s32 7, %v8077
    %v8079 = vrot.slane %v6585, %v8078
    %v8080 = vlaneseq
    %v8081 = vshrl.u32 %v8080, 7
    %v8082 = vsub.s32 0, %v8081
    %v8083 = vrot.slane %v6587, %v8082
    %v8084 = vlaneseq
    %v8085 = vshrl.u32 %v8084, 7
    %v8086 = vsub.s32 1, %v8085
    %v8087 = vrot.slane %v6587, %v8086
    %v8088 = vlaneseq
    %v8089 = vshrl.u32 %v8088, 7
    %v8090 = vsub.s32 2, %v8089
    %v8091 = vrot.slane %v6587, %v8090
    %v8092 = vlaneseq
    %v8093 = vshrl.u32 %v8092, 7
    %v8094 = vsub.s32 3, %v8093
    %v8095 = vrot.slane %v6587, %v8094
    %v8096 = vlaneseq
    %v8097 = vshrl.u32 %v8096, 7
    %v8098 = vsub.s32 4, %v8097
    %v8099 = vrot.slane %v6587, %v8098
    %v8100 = vlaneseq
    %v8101 = vshrl.u32 %v8100, 7
    %v8102 = vsub.s32 5, %v8101
    %v8103 = vrot.slane %v6587, %v8102
    %v8104 = vlaneseq
    %v8105 = vshrl.u32 %v8104, 7
    %v8106 = vsub.s32 6, %v8105
    %v8107 = vrot.slane %v6587, %v8106
    %v8108 = vlaneseq
    %v8109 = vshrl.u32 %v8108, 7
    %v8110 = vsub.s32 7, %v8109
    %v8111 = vrot.slane %v6587, %v8110
    %v8112 = vlaneseq
    %v8113 = vshrl.u32 %v8112, 7
    %v8114 = vsub.s32 0, %v8113
    %v8115 = vrot.slane %v6589, %v8114
    %v8116 = vlaneseq
    %v8117 = vshrl.u32 %v8116, 7
    %v8118 = vsub.s32 1, %v8117
    %v8119 = vrot.slane %v6589, %v8118
    %v8120 = vlaneseq
    %v8121 = vshrl.u32 %v8120, 7
    %v8122 = vsub.s32 2, %v8121
    %v8123 = vrot.slane %v6589, %v8122
    %v8124 = vlaneseq
    %v8125 = vshrl.u32 %v8124, 7
    %v8126 = vsub.s32 3, %v8125
    %v8127 = vrot.slane %v6589, %v8126
    %v8128 = vlaneseq
    %v8129 = vshrl.u32 %v8128, 7
    %v8130 = vsub.s32 4, %v8129
    %v8131 = vrot.slane %v6589, %v8130
    %v8132 = vlaneseq
    %v8133 = vshrl.u32 %v8132, 7
    %v8134 = vsub.s32 5, %v8133
    %v8135 = vrot.slane %v6589, %v8134
    %v8136 = vlaneseq
    %v8137 = vshrl.u32 %v8136, 7
    %v8138 = vsub.s32 6, %v8137
    %v8139 = vrot.slane %v6589, %v8138
    %v8140 = vlaneseq
    %v8141 = vshrl.u32 %v8140, 7
    %v8142 = vsub.s32 7, %v8141
    %v8143 = vrot.slane %v6589, %v8142
    %v8144 = vlaneseq
    %v8145 = vshrl.u32 %v8144, 7
    %v8146 = vsub.s32 0, %v8145
    %v8147 = vrot.slane %v6591, %v8146
    %v8148 = vlaneseq
    %v8149 = vshrl.u32 %v8148, 7
    %v8150 = vsub.s32 1, %v8149
    %v8151 = vrot.slane %v6591, %v8150
    %v8152 = vlaneseq
    %v8153 = vshrl.u32 %v8152, 7
    %v8154 = vsub.s32 2, %v8153
    %v8155 = vrot.slane %v6591, %v8154
    %v8156 = vlaneseq
    %v8157 = vshrl.u32 %v8156, 7
    %v8158 = vsub.s32 3, %v8157
    %v8159 = vrot.slane %v6591, %v8158
    %v8160 = vlaneseq
    %v8161 = vshrl.u32 %v8160, 7
    %v8162 = vsub.s32 4, %v8161
    %v8163 = vrot.slane %v6591, %v8162
    %v8164 = vlaneseq
    %v8165 = vshrl.u32 %v8164, 7
    %v8166 = vsub.s32 5, %v8165
    %v8167 = vrot.slane %v6591, %v8166
    %v8168 = vlaneseq
    %v8169 = vshrl.u32 %v8168, 7
    %v8170 = vsub.s32 6, %v8169
    %v8171 = vrot.slane %v6591, %v8170
    %v8172 = vlaneseq
    %v8173 = vshrl.u32 %v8172, 7
    %v8174 = vsub.s32 7, %v8173
    %v8175 = vrot.slane %v6591, %v8174
    %v8176 = vcombine.low %v6643, %v6647
    %v8177 = vcombine.low %v6651, %v6655
    %v8179 = vunpack.c.l.s4 1983009808
    %v8180 = vunpack.c.0.s8 %v8179
    %v8181 = vlaneseq
    %v8182 = vshrl.u32 %v8181, 7
    %v8183 = vsub.s32 %v8180, %v8182
    %v8184 = vrot.slane %v8176, %v8183
    %v8186 = vunpack.c.l.s4 1983009808
    %v8187 = vunpack.c.0.s8 %v8186
    %v8188 = vlaneseq
    %v8189 = vshrl.u32 %v8188, 7
    %v8190 = vsub.s32 %v8187, %v8189
    %v8191 = vrot.slane %v8177, %v8190
    %v8192 = vcombine.low %v8184, %v8191
    %v8193 = vcombine.low %v6659, %v6663
    %v8194 = vcombine.low %v6667, %v6671
    %v8196 = vunpack.c.l.s4 1983009808
    %v8197 = vunpack.c.0.s8 %v8196
    %v8198 = vlaneseq
    %v8199 = vshrl.u32 %v8198, 7
    %v8200 = vsub.s32 %v8197, %v8199
    %v8201 = vrot.slane %v8193, %v8200
    %v8203 = vunpack.c.l.s4 1983009808
    %v8204 = vunpack.c.0.s8 %v8203
    %v8205 = vlaneseq
    %v8206 = vshrl.u32 %v8205, 7
    %v8207 = vsub.s32 %v8204, %v8206
    %v8208 = vrot.slane %v8194, %v8207
    %v8209 = vcombine.low %v8201, %v8208
    %v8210 = vcombine.low %v6675, %v6679
    %v8211 = vcombine.low %v6683, %v6687
    %v8213 = vunpack.c.l.s4 1983009808
    %v8214 = vunpack.c.0.s8 %v8213
    %v8215 = vlaneseq
    %v8216 = vshrl.u32 %v8215, 7
    %v8217 = vsub.s32 %v8214, %v8216
    %v8218 = vrot.slane %v8210, %v8217
    %v8220 = vunpack.c.l.s4 1983009808
    %v8221 = vunpack.c.0.s8 %v8220
    %v8222 = vlaneseq
    %v8223 = vshrl.u32 %v8222, 7
    %v8224 = vsub.s32 %v8221, %v8223
    %v8225 = vrot.slane %v8211, %v8224
    %v8226 = vcombine.low %v8218, %v8225
    %v8227 = vcombine.low %v6691, %v6695
    %v8228 = vcombine.low %v6699, %v6703
    %v8230 = vunpack.c.l.s4 1983009808
    %v8231 = vunpack.c.0.s8 %v8230
    %v8232 = vlaneseq
    %v8233 = vshrl.u32 %v8232, 7
    %v8234 = vsub.s32 %v8231, %v8233
    %v8235 = vrot.slane %v8227, %v8234
    %v8237 = vunpack.c.l.s4 1983009808
    %v8238 = vunpack.c.0.s8 %v8237
    %v8239 = vlaneseq
    %v8240 = vshrl.u32 %v8239, 7
    %v8241 = vsub.s32 %v8238, %v8240
    %v8242 = vrot.slane %v8228, %v8241
    %v8243 = vcombine.low %v8235, %v8242
    %v8244 = vcombine.low %v6707, %v6711
    %v8245 = vcombine.low %v6715, %v6719
    %v8247 = vunpack.c.l.s4 1983009808
    %v8248 = vunpack.c.0.s8 %v8247
    %v8249 = vlaneseq
    %v8250 = vshrl.u32 %v8249, 7
    %v8251 = vsub.s32 %v8248, %v8250
    %v8252 = vrot.slane %v8244, %v8251
    %v8254 = vunpack.c.l.s4 1983009808
    %v8255 = vunpack.c.0.s8 %v8254
    %v8256 = vlaneseq
    %v8257 = vshrl.u32 %v8256, 7
    %v8258 = vsub.s32 %v8255, %v8257
    %v8259 = vrot.slane %v8245, %v8258
    %v8260 = vcombine.low %v8252, %v8259
    %v8261 = vcombine.low %v6723, %v6727
    %v8262 = vcombine.low %v6731, %v6735
    %v8264 = vunpack.c.l.s4 1983009808
    %v8265 = vunpack.c.0.s8 %v8264
    %v8266 = vlaneseq
    %v8267 = vshrl.u32 %v8266, 7
    %v8268 = vsub.s32 %v8265, %v8267
    %v8269 = vrot.slane %v8261, %v8268
    %v8271 = vunpack.c.l.s4 1983009808
    %v8272 = vunpack.c.0.s8 %v8271
    %v8273 = vlaneseq
    %v8274 = vshrl.u32 %v8273, 7
    %v8275 = vsub.s32 %v8272, %v8274
    %v8276 = vrot.slane %v8262, %v8275
    %v8277 = vcombine.low %v8269, %v8276
    %v8278 = vcombine.low %v6739, %v6743
    %v8279 = vcombine.low %v6747, %v6751
    %v8281 = vunpack.c.l.s4 1983009808
    %v8282 = vunpack.c.0.s8 %v8281
    %v8283 = vlaneseq
    %v8284 = vshrl.u32 %v8283, 7
    %v8285 = vsub.s32 %v8282, %v8284
    %v8286 = vrot.slane %v8278, %v8285
    %v8288 = vunpack.c.l.s4 1983009808
    %v8289 = vunpack.c.0.s8 %v8288
    %v8290 = vlaneseq
    %v8291 = vshrl.u32 %v8290, 7
    %v8292 = vsub.s32 %v8289, %v8291
    %v8293 = vrot.slane %v8279, %v8292
    %v8294 = vcombine.low %v8286, %v8293
    %v8295 = vcombine.low %v6755, %v6759
    %v8296 = vcombine.low %v6763, %v6767
    %v8298 = vunpack.c.l.s4 1983009808
    %v8299 = vunpack.c.0.s8 %v8298
    %v8300 = vlaneseq
    %v8301 = vshrl.u32 %v8300, 7
    %v8302 = vsub.s32 %v8299, %v8301
    %v8303 = vrot.slane %v8295, %v8302
    %v8305 = vunpack.c.l.s4 1983009808
    %v8306 = vunpack.c.0.s8 %v8305
    %v8307 = vlaneseq
    %v8308 = vshrl.u32 %v8307, 7
    %v8309 = vsub.s32 %v8306, %v8308
    %v8310 = vrot.slane %v8296, %v8309
    %v8311 = vcombine.low %v8303, %v8310
    %v8312 = vcombine.low %v6771, %v6775
    %v8313 = vcombine.low %v6779, %v6783
    %v8315 = vunpack.c.l.s4 1983009808
    %v8316 = vunpack.c.0.s8 %v8315
    %v8317 = vlaneseq
    %v8318 = vshrl.u32 %v8317, 7
    %v8319 = vsub.s32 %v8316, %v8318
    %v8320 = vrot.slane %v8312, %v8319
    %v8322 = vunpack.c.l.s4 1983009808
    %v8323 = vunpack.c.0.s8 %v8322
    %v8324 = vlaneseq
    %v8325 = vshrl.u32 %v8324, 7
    %v8326 = vsub.s32 %v8323, %v8325
    %v8327 = vrot.slane %v8313, %v8326
    %v8328 = vcombine.low %v8320, %v8327
    %v8329 = vcombine.low %v6787, %v6791
    %v8330 = vcombine.low %v6795, %v6799
    %v8332 = vunpack.c.l.s4 1983009808
    %v8333 = vunpack.c.0.s8 %v8332
    %v8334 = vlaneseq
    %v8335 = vshrl.u32 %v8334, 7
    %v8336 = vsub.s32 %v8333, %v8335
    %v8337 = vrot.slane %v8329, %v8336
    %v8339 = vunpack.c.l.s4 1983009808
    %v8340 = vunpack.c.0.s8 %v8339
    %v8341 = vlaneseq
    %v8342 = vshrl.u32 %v8341, 7
    %v8343 = vsub.s32 %v8340, %v8342
    %v8344 = vrot.slane %v8330, %v8343
    %v8345 = vcombine.low %v8337, %v8344
    %v8346 = vcombine.low %v6803, %v6807
    %v8347 = vcombine.low %v6811, %v6815
    %v8349 = vunpack.c.l.s4 1983009808
    %v8350 = vunpack.c.0.s8 %v8349
    %v8351 = vlaneseq
    %v8352 = vshrl.u32 %v8351, 7
    %v8353 = vsub.s32 %v8350, %v8352
    %v8354 = vrot.slane %v8346, %v8353
    %v8356 = vunpack.c.l.s4 1983009808
    %v8357 = vunpack.c.0.s8 %v8356
    %v8358 = vlaneseq
    %v8359 = vshrl.u32 %v8358, 7
    %v8360 = vsub.s32 %v8357, %v8359
    %v8361 = vrot.slane %v8347, %v8360
    %v8362 = vcombine.low %v8354, %v8361
    %v8363 = vcombine.low %v6819, %v6823
    %v8364 = vcombine.low %v6827, %v6831
    %v8366 = vunpack.c.l.s4 1983009808
    %v8367 = vunpack.c.0.s8 %v8366
    %v8368 = vlaneseq
    %v8369 = vshrl.u32 %v8368, 7
    %v8370 = vsub.s32 %v8367, %v8369
    %v8371 = vrot.slane %v8363, %v8370
    %v8373 = vunpack.c.l.s4 1983009808
    %v8374 = vunpack.c.0.s8 %v8373
    %v8375 = vlaneseq
    %v8376 = vshrl.u32 %v8375, 7
    %v8377 = vsub.s32 %v8374, %v8376
    %v8378 = vrot.slane %v8364, %v8377
    %v8379 = vcombine.low %v8371, %v8378
    %v8380 = vcombine.low %v6835, %v6839
    %v8381 = vcombine.low %v6843, %v6847
    %v8383 = vunpack.c.l.s4 1983009808
    %v8384 = vunpack.c.0.s8 %v8383
    %v8385 = vlaneseq
    %v8386 = vshrl.u32 %v8385, 7
    %v8387 = vsub.s32 %v8384, %v8386
    %v8388 = vrot.slane %v8380, %v8387
    %v8390 = vunpack.c.l.s4 1983009808
    %v8391 = vunpack.c.0.s8 %v8390
    %v8392 = vlaneseq
    %v8393 = vshrl.u32 %v8392, 7
    %v8394 = vsub.s32 %v8391, %v8393
    %v8395 = vrot.slane %v8381, %v8394
    %v8396 = vcombine.low %v8388, %v8395
    %v8397 = vcombine.low %v6851, %v6855
    %v8398 = vcombine.low %v6859, %v6863
    %v8400 = vunpack.c.l.s4 1983009808
    %v8401 = vunpack.c.0.s8 %v8400
    %v8402 = vlaneseq
    %v8403 = vshrl.u32 %v8402, 7
    %v8404 = vsub.s32 %v8401, %v8403
    %v8405 = vrot.slane %v8397, %v8404
    %v8407 = vunpack.c.l.s4 1983009808
    %v8408 = vunpack.c.0.s8 %v8407
    %v8409 = vlaneseq
    %v8410 = vshrl.u32 %v8409, 7
    %v8411 = vsub.s32 %v8408, %v8410
    %v8412 = vrot.slane %v8398, %v8411
    %v8413 = vcombine.low %v8405, %v8412
    %v8414 = vcombine.low %v6867, %v6871
    %v8415 = vcombine.low %v6875, %v6879
    %v8417 = vunpack.c.l.s4 1983009808
    %v8418 = vunpack.c.0.s8 %v8417
    %v8419 = vlaneseq
    %v8420 = vshrl.u32 %v8419, 7
    %v8421 = vsub.s32 %v8418, %v8420
    %v8422 = vrot.slane %v8414, %v8421
    %v8424 = vunpack.c.l.s4 1983009808
    %v8425 = vunpack.c.0.s8 %v8424
    %v8426 = vlaneseq
    %v8427 = vshrl.u32 %v8426, 7
    %v8428 = vsub.s32 %v8425, %v8427
    %v8429 = vrot.slane %v8415, %v8428
    %v8430 = vcombine.low %v8422, %v8429
    %v8431 = vcombine.low %v6883, %v6887
    %v8432 = vcombine.low %v6891, %v6895
    %v8434 = vunpack.c.l.s4 1983009808
    %v8435 = vunpack.c.0.s8 %v8434
    %v8436 = vlaneseq
    %v8437 = vshrl.u32 %v8436, 7
    %v8438 = vsub.s32 %v8435, %v8437
    %v8439 = vrot.slane %v8431, %v8438
    %v8441 = vunpack.c.l.s4 1983009808
    %v8442 = vunpack.c.0.s8 %v8441
    %v8443 = vlaneseq
    %v8444 = vshrl.u32 %v8443, 7
    %v8445 = vsub.s32 %v8442, %v8444
    %v8446 = vrot.slane %v8432, %v8445
    %v8447 = vcombine.low %v8439, %v8446
    %v8448 = vcombine.low %v6899, %v6903
    %v8449 = vcombine.low %v6907, %v6911
    %v8451 = vunpack.c.l.s4 1983009808
    %v8452 = vunpack.c.0.s8 %v8451
    %v8453 = vlaneseq
    %v8454 = vshrl.u32 %v8453, 7
    %v8455 = vsub.s32 %v8452, %v8454
    %v8456 = vrot.slane %v8448, %v8455
    %v8458 = vunpack.c.l.s4 1983009808
    %v8459 = vunpack.c.0.s8 %v8458
    %v8460 = vlaneseq
    %v8461 = vshrl.u32 %v8460, 7
    %v8462 = vsub.s32 %v8459, %v8461
    %v8463 = vrot.slane %v8449, %v8462
    %v8464 = vcombine.low %v8456, %v8463
    %v8465 = vcombine.low %v6915, %v6919
    %v8466 = vcombine.low %v6923, %v6927
    %v8468 = vunpack.c.l.s4 1983009808
    %v8469 = vunpack.c.0.s8 %v8468
    %v8470 = vlaneseq
    %v8471 = vshrl.u32 %v8470, 7
    %v8472 = vsub.s32 %v8469, %v8471
    %v8473 = vrot.slane %v8465, %v8472
    %v8475 = vunpack.c.l.s4 1983009808
    %v8476 = vunpack.c.0.s8 %v8475
    %v8477 = vlaneseq
    %v8478 = vshrl.u32 %v8477, 7
    %v8479 = vsub.s32 %v8476, %v8478
    %v8480 = vrot.slane %v8466, %v8479
    %v8481 = vcombine.low %v8473, %v8480
    %v8482 = vcombine.low %v6931, %v6935
    %v8483 = vcombine.low %v6939, %v6943
    %v8485 = vunpack.c.l.s4 1983009808
    %v8486 = vunpack.c.0.s8 %v8485
    %v8487 = vlaneseq
    %v8488 = vshrl.u32 %v8487, 7
    %v8489 = vsub.s32 %v8486, %v8488
    %v8490 = vrot.slane %v8482, %v8489
    %v8492 = vunpack.c.l.s4 1983009808
    %v8493 = vunpack.c.0.s8 %v8492
    %v8494 = vlaneseq
    %v8495 = vshrl.u32 %v8494, 7
    %v8496 = vsub.s32 %v8493, %v8495
    %v8497 = vrot.slane %v8483, %v8496
    %v8498 = vcombine.low %v8490, %v8497
    %v8499 = vcombine.low %v6947, %v6951
    %v8500 = vcombine.low %v6955, %v6959
    %v8502 = vunpack.c.l.s4 1983009808
    %v8503 = vunpack.c.0.s8 %v8502
    %v8504 = vlaneseq
    %v8505 = vshrl.u32 %v8504, 7
    %v8506 = vsub.s32 %v8503, %v8505
    %v8507 = vrot.slane %v8499, %v8506
    %v8509 = vunpack.c.l.s4 1983009808
    %v8510 = vunpack.c.0.s8 %v8509
    %v8511 = vlaneseq
    %v8512 = vshrl.u32 %v8511, 7
    %v8513 = vsub.s32 %v8510, %v8512
    %v8514 = vrot.slane %v8500, %v8513
    %v8515 = vcombine.low %v8507, %v8514
    %v8516 = vcombine.low %v6963, %v6967
    %v8517 = vcombine.low %v6971, %v6975
    %v8519 = vunpack.c.l.s4 1983009808
    %v8520 = vunpack.c.0.s8 %v8519
    %v8521 = vlaneseq
    %v8522 = vshrl.u32 %v8521, 7
    %v8523 = vsub.s32 %v8520, %v8522
    %v8524 = vrot.slane %v8516, %v8523
    %v8526 = vunpack.c.l.s4 1983009808
    %v8527 = vunpack.c.0.s8 %v8526
    %v8528 = vlaneseq
    %v8529 = vshrl.u32 %v8528, 7
    %v8530 = vsub.s32 %v8527, %v8529
    %v8531 = vrot.slane %v8517, %v8530
    %v8532 = vcombine.low %v8524, %v8531
    %v8533 = vcombine.low %v6979, %v6983
    %v8534 = vcombine.low %v6987, %v6991
    %v8536 = vunpack.c.l.s4 1983009808
    %v8537 = vunpack.c.0.s8 %v8536
    %v8538 = vlaneseq
    %v8539 = vshrl.u32 %v8538, 7
    %v8540 = vsub.s32 %v8537, %v8539
    %v8541 = vrot.slane %v8533, %v8540
    %v8543 = vunpack.c.l.s4 1983009808
    %v8544 = vunpack.c.0.s8 %v8543
    %v8545 = vlaneseq
    %v8546 = vshrl.u32 %v8545, 7
    %v8547 = vsub.s32 %v8544, %v8546
    %v8548 = vrot.slane %v8534, %v8547
    %v8549 = vcombine.low %v8541, %v8548
    %v8550 = vcombine.low %v6995, %v6999
    %v8551 = vcombine.low %v7003, %v7007
    %v8553 = vunpack.c.l.s4 1983009808
    %v8554 = vunpack.c.0.s8 %v8553
    %v8555 = vlaneseq
    %v8556 = vshrl.u32 %v8555, 7
    %v8557 = vsub.s32 %v8554, %v8556
    %v8558 = vrot.slane %v8550, %v8557
    %v8560 = vunpack.c.l.s4 1983009808
    %v8561 = vunpack.c.0.s8 %v8560
    %v8562 = vlaneseq
    %v8563 = vshrl.u32 %v8562, 7
    %v8564 = vsub.s32 %v8561, %v8563
    %v8565 = vrot.slane %v8551, %v8564
    %v8566 = vcombine.low %v8558, %v8565
    %v8567 = vcombine.low %v7011, %v7015
    %v8568 = vcombine.low %v7019, %v7023
    %v8570 = vunpack.c.l.s4 1983009808
    %v8571 = vunpack.c.0.s8 %v8570
    %v8572 = vlaneseq
    %v8573 = vshrl.u32 %v8572, 7
    %v8574 = vsub.s32 %v8571, %v8573
    %v8575 = vrot.slane %v8567, %v8574
    %v8577 = vunpack.c.l.s4 1983009808
    %v8578 = vunpack.c.0.s8 %v8577
    %v8579 = vlaneseq
    %v8580 = vshrl.u32 %v8579, 7
    %v8581 = vsub.s32 %v8578, %v8580
    %v8582 = vrot.slane %v8568, %v8581
    %v8583 = vcombine.low %v8575, %v8582
    %v8584 = vcombine.low %v7027, %v7031
    %v8585 = vcombine.low %v7035, %v7039
    %v8587 = vunpack.c.l.s4 1983009808
    %v8588 = vunpack.c.0.s8 %v8587
    %v8589 = vlaneseq
    %v8590 = vshrl.u32 %v8589, 7
    %v8591 = vsub.s32 %v8588, %v8590
    %v8592 = vrot.slane %v8584, %v8591
    %v8594 = vunpack.c.l.s4 1983009808
    %v8595 = vunpack.c.0.s8 %v8594
    %v8596 = vlaneseq
    %v8597 = vshrl.u32 %v8596, 7
    %v8598 = vsub.s32 %v8595, %v8597
    %v8599 = vrot.slane %v8585, %v8598
    %v8600 = vcombine.low %v8592, %v8599
    %v8601 = vcombine.low %v7043, %v7047
    %v8602 = vcombine.low %v7051, %v7055
    %v8604 = vunpack.c.l.s4 1983009808
    %v8605 = vunpack.c.0.s8 %v8604
    %v8606 = vlaneseq
    %v8607 = vshrl.u32 %v8606, 7
    %v8608 = vsub.s32 %v8605, %v8607
    %v8609 = vrot.slane %v8601, %v8608
    %v8611 = vunpack.c.l.s4 1983009808
    %v8612 = vunpack.c.0.s8 %v8611
    %v8613 = vlaneseq
    %v8614 = vshrl.u32 %v8613, 7
    %v8615 = vsub.s32 %v8612, %v8614
    %v8616 = vrot.slane %v8602, %v8615
    %v8617 = vcombine.low %v8609, %v8616
    %v8618 = vcombine.low %v7059, %v7063
    %v8619 = vcombine.low %v7067, %v7071
    %v8621 = vunpack.c.l.s4 1983009808
    %v8622 = vunpack.c.0.s8 %v8621
    %v8623 = vlaneseq
    %v8624 = vshrl.u32 %v8623, 7
    %v8625 = vsub.s32 %v8622, %v8624
    %v8626 = vrot.slane %v8618, %v8625
    %v8628 = vunpack.c.l.s4 1983009808
    %v8629 = vunpack.c.0.s8 %v8628
    %v8630 = vlaneseq
    %v8631 = vshrl.u32 %v8630, 7
    %v8632 = vsub.s32 %v8629, %v8631
    %v8633 = vrot.slane %v8619, %v8632
    %v8634 = vcombine.low %v8626, %v8633
    %v8635 = vcombine.low %v7075, %v7079
    %v8636 = vcombine.low %v7083, %v7087
    %v8638 = vunpack.c.l.s4 1983009808
    %v8639 = vunpack.c.0.s8 %v8638
    %v8640 = vlaneseq
    %v8641 = vshrl.u32 %v8640, 7
    %v8642 = vsub.s32 %v8639, %v8641
    %v8643 = vrot.slane %v8635, %v8642
    %v8645 = vunpack.c.l.s4 1983009808
    %v8646 = vunpack.c.0.s8 %v8645
    %v8647 = vlaneseq
    %v8648 = vshrl.u32 %v8647, 7
    %v8649 = vsub.s32 %v8646, %v8648
    %v8650 = vrot.slane %v8636, %v8649
    %v8651 = vcombine.low %v8643, %v8650
    %v8652 = vcombine.low %v7091, %v7095
    %v8653 = vcombine.low %v7099, %v7103
    %v8655 = vunpack.c.l.s4 1983009808
    %v8656 = vunpack.c.0.s8 %v8655
    %v8657 = vlaneseq
    %v8658 = vshrl.u32 %v8657, 7
    %v8659 = vsub.s32 %v8656, %v8658
    %v8660 = vrot.slane %v8652, %v8659
    %v8662 = vunpack.c.l.s4 1983009808
    %v8663 = vunpack.c.0.s8 %v8662
    %v8664 = vlaneseq
    %v8665 = vshrl.u32 %v8664, 7
    %v8666 = vsub.s32 %v8663, %v8665
    %v8667 = vrot.slane %v8653, %v8666
    %v8668 = vcombine.low %v8660, %v8667
    %v8669 = vcombine.low %v7107, %v7111
    %v8670 = vcombine.low %v7115, %v7119
    %v8672 = vunpack.c.l.s4 1983009808
    %v8673 = vunpack.c.0.s8 %v8672
    %v8674 = vlaneseq
    %v8675 = vshrl.u32 %v8674, 7
    %v8676 = vsub.s32 %v8673, %v8675
    %v8677 = vrot.slane %v8669, %v8676
    %v8679 = vunpack.c.l.s4 1983009808
    %v8680 = vunpack.c.0.s8 %v8679
    %v8681 = vlaneseq
    %v8682 = vshrl.u32 %v8681, 7
    %v8683 = vsub.s32 %v8680, %v8682
    %v8684 = vrot.slane %v8670, %v8683
    %v8685 = vcombine.low %v8677, %v8684
    %v8686 = vcombine.low %v7123, %v7127
    %v8687 = vcombine.low %v7131, %v7135
    %v8689 = vunpack.c.l.s4 1983009808
    %v8690 = vunpack.c.0.s8 %v8689
    %v8691 = vlaneseq
    %v8692 = vshrl.u32 %v8691, 7
    %v8693 = vsub.s32 %v8690, %v8692
    %v8694 = vrot.slane %v8686, %v8693
    %v8696 = vunpack.c.l.s4 1983009808
    %v8697 = vunpack.c.0.s8 %v8696
    %v8698 = vlaneseq
    %v8699 = vshrl.u32 %v8698, 7
    %v8700 = vsub.s32 %v8697, %v8699
    %v8701 = vrot.slane %v8687, %v8700
    %v8702 = vcombine.low %v8694, %v8701
    %v8703 = vcombine.low %v7139, %v7143
    %v8704 = vcombine.low %v7147, %v7151
    %v8706 = vunpack.c.l.s4 1983009808
    %v8707 = vunpack.c.0.s8 %v8706
    %v8708 = vlaneseq
    %v8709 = vshrl.u32 %v8708, 7
    %v8710 = vsub.s32 %v8707, %v8709
    %v8711 = vrot.slane %v8703, %v8710
    %v8713 = vunpack.c.l.s4 1983009808
    %v8714 = vunpack.c.0.s8 %v8713
    %v8715 = vlaneseq
    %v8716 = vshrl.u32 %v8715, 7
    %v8717 = vsub.s32 %v8714, %v8716
    %v8718 = vrot.slane %v8704, %v8717
    %v8719 = vcombine.low %v8711, %v8718
    %v8720 = vcombine.low %v7155, %v7159
    %v8721 = vcombine.low %v7163, %v7167
    %v8723 = vunpack.c.l.s4 1983009808
    %v8724 = vunpack.c.0.s8 %v8723
    %v8725 = vlaneseq
    %v8726 = vshrl.u32 %v8725, 7
    %v8727 = vsub.s32 %v8724, %v8726
    %v8728 = vrot.slane %v8720, %v8727
    %v8730 = vunpack.c.l.s4 1983009808
    %v8731 = vunpack.c.0.s8 %v8730
    %v8732 = vlaneseq
    %v8733 = vshrl.u32 %v8732, 7
    %v8734 = vsub.s32 %v8731, %v8733
    %v8735 = vrot.slane %v8721, %v8734
    %v8736 = vcombine.low %v8728, %v8735
    %v8737 = vcombine.low %v7171, %v7175
    %v8738 = vcombine.low %v7179, %v7183
    %v8740 = vunpack.c.l.s4 1983009808
    %v8741 = vunpack.c.0.s8 %v8740
    %v8742 = vlaneseq
    %v8743 = vshrl.u32 %v8742, 7
    %v8744 = vsub.s32 %v8741, %v8743
    %v8745 = vrot.slane %v8737, %v8744
    %v8747 = vunpack.c.l.s4 1983009808
    %v8748 = vunpack.c.0.s8 %v8747
    %v8749 = vlaneseq
    %v8750 = vshrl.u32 %v8749, 7
    %v8751 = vsub.s32 %v8748, %v8750
    %v8752 = vrot.slane %v8738, %v8751
    %v8753 = vcombine.low %v8745, %v8752
    %v8754 = vcombine.low %v7187, %v7191
    %v8755 = vcombine.low %v7195, %v7199
    %v8757 = vunpack.c.l.s4 1983009808
    %v8758 = vunpack.c.0.s8 %v8757
    %v8759 = vlaneseq
    %v8760 = vshrl.u32 %v8759, 7
    %v8761 = vsub.s32 %v8758, %v8760
    %v8762 = vrot.slane %v8754, %v8761
    %v8764 = vunpack.c.l.s4 1983009808
    %v8765 = vunpack.c.0.s8 %v8764
    %v8766 = vlaneseq
    %v8767 = vshrl.u32 %v8766, 7
    %v8768 = vsub.s32 %v8765, %v8767
    %v8769 = vrot.slane %v8755, %v8768
    %v8770 = vcombine.low %v8762, %v8769
    %v8771 = vcombine.low %v7203, %v7207
    %v8772 = vcombine.low %v7211, %v7215
    %v8774 = vunpack.c.l.s4 1983009808
    %v8775 = vunpack.c.0.s8 %v8774
    %v8776 = vlaneseq
    %v8777 = vshrl.u32 %v8776, 7
    %v8778 = vsub.s32 %v8775, %v8777
    %v8779 = vrot.slane %v8771, %v8778
    %v8781 = vunpack.c.l.s4 1983009808
    %v8782 = vunpack.c.0.s8 %v8781
    %v8783 = vlaneseq
    %v8784 = vshrl.u32 %v8783, 7
    %v8785 = vsub.s32 %v8782, %v8784
    %v8786 = vrot.slane %v8772, %v8785
    %v8787 = vcombine.low %v8779, %v8786
    %v8788 = vcombine.low %v7219, %v7223
    %v8789 = vcombine.low %v7227, %v7231
    %v8791 = vunpack.c.l.s4 1983009808
    %v8792 = vunpack.c.0.s8 %v8791
    %v8793 = vlaneseq
    %v8794 = vshrl.u32 %v8793, 7
    %v8795 = vsub.s32 %v8792, %v8794
    %v8796 = vrot.slane %v8788, %v8795
    %v8798 = vunpack.c.l.s4 1983009808
    %v8799 = vunpack.c.0.s8 %v8798
    %v8800 = vlaneseq
    %v8801 = vshrl.u32 %v8800, 7
    %v8802 = vsub.s32 %v8799, %v8801
    %v8803 = vrot.slane %v8789, %v8802
    %v8804 = vcombine.low %v8796, %v8803
    %v8805 = vcombine.low %v7235, %v7239
    %v8806 = vcombine.low %v7243, %v7247
    %v8808 = vunpack.c.l.s4 1983009808
    %v8809 = vunpack.c.0.s8 %v8808
    %v8810 = vlaneseq
    %v8811 = vshrl.u32 %v8810, 7
    %v8812 = vsub.s32 %v8809, %v8811
    %v8813 = vrot.slane %v8805, %v8812
    %v8815 = vunpack.c.l.s4 1983009808
    %v8816 = vunpack.c.0.s8 %v8815
    %v8817 = vlaneseq
    %v8818 = vshrl.u32 %v8817, 7
    %v8819 = vsub.s32 %v8816, %v8818
    %v8820 = vrot.slane %v8806, %v8819
    %v8821 = vcombine.low %v8813, %v8820
    %v8822 = vcombine.low %v7251, %v7255
    %v8823 = vcombine.low %v7259, %v7263
    %v8825 = vunpack.c.l.s4 1983009808
    %v8826 = vunpack.c.0.s8 %v8825
    %v8827 = vlaneseq
    %v8828 = vshrl.u32 %v8827, 7
    %v8829 = vsub.s32 %v8826, %v8828
    %v8830 = vrot.slane %v8822, %v8829
    %v8832 = vunpack.c.l.s4 1983009808
    %v8833 = vunpack.c.0.s8 %v8832
    %v8834 = vlaneseq
    %v8835 = vshrl.u32 %v8834, 7
    %v8836 = vsub.s32 %v8833, %v8835
    %v8837 = vrot.slane %v8823, %v8836
    %v8838 = vcombine.low %v8830, %v8837
    %v8839 = vcombine.low %v7267, %v7271
    %v8840 = vcombine.low %v7275, %v7279
    %v8842 = vunpack.c.l.s4 1983009808
    %v8843 = vunpack.c.0.s8 %v8842
    %v8844 = vlaneseq
    %v8845 = vshrl.u32 %v8844, 7
    %v8846 = vsub.s32 %v8843, %v8845
    %v8847 = vrot.slane %v8839, %v8846
    %v8849 = vunpack.c.l.s4 1983009808
    %v8850 = vunpack.c.0.s8 %v8849
    %v8851 = vlaneseq
    %v8852 = vshrl.u32 %v8851, 7
    %v8853 = vsub.s32 %v8850, %v8852
    %v8854 = vrot.slane %v8840, %v8853
    %v8855 = vcombine.low %v8847, %v8854
    %v8856 = vcombine.low %v7283, %v7287
    %v8857 = vcombine.low %v7291, %v7295
    %v8859 = vunpack.c.l.s4 1983009808
    %v8860 = vunpack.c.0.s8 %v8859
    %v8861 = vlaneseq
    %v8862 = vshrl.u32 %v8861, 7
    %v8863 = vsub.s32 %v8860, %v8862
    %v8864 = vrot.slane %v8856, %v8863
    %v8866 = vunpack.c.l.s4 1983009808
    %v8867 = vunpack.c.0.s8 %v8866
    %v8868 = vlaneseq
    %v8869 = vshrl.u32 %v8868, 7
    %v8870 = vsub.s32 %v8867, %v8869
    %v8871 = vrot.slane %v8857, %v8870
    %v8872 = vcombine.low %v8864, %v8871
    %v8873 = vcombine.low %v7299, %v7303
    %v8874 = vcombine.low %v7307, %v7311
    %v8876 = vunpack.c.l.s4 1983009808
    %v8877 = vunpack.c.0.s8 %v8876
    %v8878 = vlaneseq
    %v8879 = vshrl.u32 %v8878, 7
    %v8880 = vsub.s32 %v8877, %v8879
    %v8881 = vrot.slane %v8873, %v8880
    %v8883 = vunpack.c.l.s4 1983009808
    %v8884 = vunpack.c.0.s8 %v8883
    %v8885 = vlaneseq
    %v8886 = vshrl.u32 %v8885, 7
    %v8887 = vsub.s32 %v8884, %v8886
    %v8888 = vrot.slane %v8874, %v8887
    %v8889 = vcombine.low %v8881, %v8888
    %v8890 = vcombine.low %v7315, %v7319
    %v8891 = vcombine.low %v7323, %v7327
    %v8893 = vunpack.c.l.s4 1983009808
    %v8894 = vunpack.c.0.s8 %v8893
    %v8895 = vlaneseq
    %v8896 = vshrl.u32 %v8895, 7
    %v8897 = vsub.s32 %v8894, %v8896
    %v8898 = vrot.slane %v8890, %v8897
    %v8900 = vunpack.c.l.s4 1983009808
    %v8901 = vunpack.c.0.s8 %v8900
    %v8902 = vlaneseq
    %v8903 = vshrl.u32 %v8902, 7
    %v8904 = vsub.s32 %v8901, %v8903
    %v8905 = vrot.slane %v8891, %v8904
    %v8906 = vcombine.low %v8898, %v8905
    %v8907 = vcombine.low %v7331, %v7335
    %v8908 = vcombine.low %v7339, %v7343
    %v8910 = vunpack.c.l.s4 1983009808
    %v8911 = vunpack.c.0.s8 %v8910
    %v8912 = vlaneseq
    %v8913 = vshrl.u32 %v8912, 7
    %v8914 = vsub.s32 %v8911, %v8913
    %v8915 = vrot.slane %v8907, %v8914
    %v8917 = vunpack.c.l.s4 1983009808
    %v8918 = vunpack.c.0.s8 %v8917
    %v8919 = vlaneseq
    %v8920 = vshrl.u32 %v8919, 7
    %v8921 = vsub.s32 %v8918, %v8920
    %v8922 = vrot.slane %v8908, %v8921
    %v8923 = vcombine.low %v8915, %v8922
    %v8924 = vcombine.low %v7347, %v7351
    %v8925 = vcombine.low %v7355, %v7359
    %v8927 = vunpack.c.l.s4 1983009808
    %v8928 = vunpack.c.0.s8 %v8927
    %v8929 = vlaneseq
    %v8930 = vshrl.u32 %v8929, 7
    %v8931 = vsub.s32 %v8928, %v8930
    %v8932 = vrot.slane %v8924, %v8931
    %v8934 = vunpack.c.l.s4 1983009808
    %v8935 = vunpack.c.0.s8 %v8934
    %v8936 = vlaneseq
    %v8937 = vshrl.u32 %v8936, 7
    %v8938 = vsub.s32 %v8935, %v8937
    %v8939 = vrot.slane %v8925, %v8938
    %v8940 = vcombine.low %v8932, %v8939
    %v8941 = vcombine.low %v7363, %v7367
    %v8942 = vcombine.low %v7371, %v7375
    %v8944 = vunpack.c.l.s4 1983009808
    %v8945 = vunpack.c.0.s8 %v8944
    %v8946 = vlaneseq
    %v8947 = vshrl.u32 %v8946, 7
    %v8948 = vsub.s32 %v8945, %v8947
    %v8949 = vrot.slane %v8941, %v8948
    %v8951 = vunpack.c.l.s4 1983009808
    %v8952 = vunpack.c.0.s8 %v8951
    %v8953 = vlaneseq
    %v8954 = vshrl.u32 %v8953, 7
    %v8955 = vsub.s32 %v8952, %v8954
    %v8956 = vrot.slane %v8942, %v8955
    %v8957 = vcombine.low %v8949, %v8956
    %v8958 = vcombine.low %v7379, %v7383
    %v8959 = vcombine.low %v7387, %v7391
    %v8961 = vunpack.c.l.s4 1983009808
    %v8962 = vunpack.c.0.s8 %v8961
    %v8963 = vlaneseq
    %v8964 = vshrl.u32 %v8963, 7
    %v8965 = vsub.s32 %v8962, %v8964
    %v8966 = vrot.slane %v8958, %v8965
    %v8968 = vunpack.c.l.s4 1983009808
    %v8969 = vunpack.c.0.s8 %v8968
    %v8970 = vlaneseq
    %v8971 = vshrl.u32 %v8970, 7
    %v8972 = vsub.s32 %v8969, %v8971
    %v8973 = vrot.slane %v8959, %v8972
    %v8974 = vcombine.low %v8966, %v8973
    %v8975 = vcombine.low %v7395, %v7399
    %v8976 = vcombine.low %v7403, %v7407
    %v8978 = vunpack.c.l.s4 1983009808
    %v8979 = vunpack.c.0.s8 %v8978
    %v8980 = vlaneseq
    %v8981 = vshrl.u32 %v8980, 7
    %v8982 = vsub.s32 %v8979, %v8981
    %v8983 = vrot.slane %v8975, %v8982
    %v8985 = vunpack.c.l.s4 1983009808
    %v8986 = vunpack.c.0.s8 %v8985
    %v8987 = vlaneseq
    %v8988 = vshrl.u32 %v8987, 7
    %v8989 = vsub.s32 %v8986, %v8988
    %v8990 = vrot.slane %v8976, %v8989
    %v8991 = vcombine.low %v8983, %v8990
    %v8992 = vcombine.low %v7411, %v7415
    %v8993 = vcombine.low %v7419, %v7423
    %v8995 = vunpack.c.l.s4 1983009808
    %v8996 = vunpack.c.0.s8 %v8995
    %v8997 = vlaneseq
    %v8998 = vshrl.u32 %v8997, 7
    %v8999 = vsub.s32 %v8996, %v8998
    %v9000 = vrot.slane %v8992, %v8999
    %v9002 = vunpack.c.l.s4 1983009808
    %v9003 = vunpack.c.0.s8 %v9002
    %v9004 = vlaneseq
    %v9005 = vshrl.u32 %v9004, 7
    %v9006 = vsub.s32 %v9003, %v9005
    %v9007 = vrot.slane %v8993, %v9006
    %v9008 = vcombine.low %v9000, %v9007
    %v9009 = vcombine.low %v7427, %v7431
    %v9010 = vcombine.low %v7435, %v7439
    %v9012 = vunpack.c.l.s4 1983009808
    %v9013 = vunpack.c.0.s8 %v9012
    %v9014 = vlaneseq
    %v9015 = vshrl.u32 %v9014, 7
    %v9016 = vsub.s32 %v9013, %v9015
    %v9017 = vrot.slane %v9009, %v9016
    %v9019 = vunpack.c.l.s4 1983009808
    %v9020 = vunpack.c.0.s8 %v9019
    %v9021 = vlaneseq
    %v9022 = vshrl.u32 %v9021, 7
    %v9023 = vsub.s32 %v9020, %v9022
    %v9024 = vrot.slane %v9010, %v9023
    %v9025 = vcombine.low %v9017, %v9024
    %v9026 = vcombine.low %v7443, %v7447
    %v9027 = vcombine.low %v7451, %v7455
    %v9029 = vunpack.c.l.s4 1983009808
    %v9030 = vunpack.c.0.s8 %v9029
    %v9031 = vlaneseq
    %v9032 = vshrl.u32 %v9031, 7
    %v9033 = vsub.s32 %v9030, %v9032
    %v9034 = vrot.slane %v9026, %v9033
    %v9036 = vunpack.c.l.s4 1983009808
    %v9037 = vunpack.c.0.s8 %v9036
    %v9038 = vlaneseq
    %v9039 = vshrl.u32 %v9038, 7
    %v9040 = vsub.s32 %v9037, %v9039
    %v9041 = vrot.slane %v9027, %v9040
    %v9042 = vcombine.low %v9034, %v9041
    %v9043 = vcombine.low %v7459, %v7463
    %v9044 = vcombine.low %v7467, %v7471
    %v9046 = vunpack.c.l.s4 1983009808
    %v9047 = vunpack.c.0.s8 %v9046
    %v9048 = vlaneseq
    %v9049 = vshrl.u32 %v9048, 7
    %v9050 = vsub.s32 %v9047, %v9049
    %v9051 = vrot.slane %v9043, %v9050
    %v9053 = vunpack.c.l.s4 1983009808
    %v9054 = vunpack.c.0.s8 %v9053
    %v9055 = vlaneseq
    %v9056 = vshrl.u32 %v9055, 7
    %v9057 = vsub.s32 %v9054, %v9056
    %v9058 = vrot.slane %v9044, %v9057
    %v9059 = vcombine.low %v9051, %v9058
    %v9060 = vcombine.low %v7475, %v7479
    %v9061 = vcombine.low %v7483, %v7487
    %v9063 = vunpack.c.l.s4 1983009808
    %v9064 = vunpack.c.0.s8 %v9063
    %v9065 = vlaneseq
    %v9066 = vshrl.u32 %v9065, 7
    %v9067 = vsub.s32 %v9064, %v9066
    %v9068 = vrot.slane %v9060, %v9067
    %v9070 = vunpack.c.l.s4 1983009808
    %v9071 = vunpack.c.0.s8 %v9070
    %v9072 = vlaneseq
    %v9073 = vshrl.u32 %v9072, 7
    %v9074 = vsub.s32 %v9071, %v9073
    %v9075 = vrot.slane %v9061, %v9074
    %v9076 = vcombine.low %v9068, %v9075
    %v9077 = vcombine.low %v7491, %v7495
    %v9078 = vcombine.low %v7499, %v7503
    %v9080 = vunpack.c.l.s4 1983009808
    %v9081 = vunpack.c.0.s8 %v9080
    %v9082 = vlaneseq
    %v9083 = vshrl.u32 %v9082, 7
    %v9084 = vsub.s32 %v9081, %v9083
    %v9085 = vrot.slane %v9077, %v9084
    %v9087 = vunpack.c.l.s4 1983009808
    %v9088 = vunpack.c.0.s8 %v9087
    %v9089 = vlaneseq
    %v9090 = vshrl.u32 %v9089, 7
    %v9091 = vsub.s32 %v9088, %v9090
    %v9092 = vrot.slane %v9078, %v9091
    %v9093 = vcombine.low %v9085, %v9092
    %v9094 = vcombine.low %v7507, %v7511
    %v9095 = vcombine.low %v7515, %v7519
    %v9097 = vunpack.c.l.s4 1983009808
    %v9098 = vunpack.c.0.s8 %v9097
    %v9099 = vlaneseq
    %v9100 = vshrl.u32 %v9099, 7
    %v9101 = vsub.s32 %v9098, %v9100
    %v9102 = vrot.slane %v9094, %v9101
    %v9104 = vunpack.c.l.s4 1983009808
    %v9105 = vunpack.c.0.s8 %v9104
    %v9106 = vlaneseq
    %v9107 = vshrl.u32 %v9106, 7
    %v9108 = vsub.s32 %v9105, %v9107
    %v9109 = vrot.slane %v9095, %v9108
    %v9110 = vcombine.low %v9102, %v9109
    %v9111 = vcombine.low %v7523, %v7527
    %v9112 = vcombine.low %v7531, %v7535
    %v9114 = vunpack.c.l.s4 1983009808
    %v9115 = vunpack.c.0.s8 %v9114
    %v9116 = vlaneseq
    %v9117 = vshrl.u32 %v9116, 7
    %v9118 = vsub.s32 %v9115, %v9117
    %v9119 = vrot.slane %v9111, %v9118
    %v9121 = vunpack.c.l.s4 1983009808
    %v9122 = vunpack.c.0.s8 %v9121
    %v9123 = vlaneseq
    %v9124 = vshrl.u32 %v9123, 7
    %v9125 = vsub.s32 %v9122, %v9124
    %v9126 = vrot.slane %v9112, %v9125
    %v9127 = vcombine.low %v9119, %v9126
    %v9128 = vcombine.low %v7539, %v7543
    %v9129 = vcombine.low %v7547, %v7551
    %v9131 = vunpack.c.l.s4 1983009808
    %v9132 = vunpack.c.0.s8 %v9131
    %v9133 = vlaneseq
    %v9134 = vshrl.u32 %v9133, 7
    %v9135 = vsub.s32 %v9132, %v9134
    %v9136 = vrot.slane %v9128, %v9135
    %v9138 = vunpack.c.l.s4 1983009808
    %v9139 = vunpack.c.0.s8 %v9138
    %v9140 = vlaneseq
    %v9141 = vshrl.u32 %v9140, 7
    %v9142 = vsub.s32 %v9139, %v9141
    %v9143 = vrot.slane %v9129, %v9142
    %v9144 = vcombine.low %v9136, %v9143
    %v9145 = vcombine.low %v7555, %v7559
    %v9146 = vcombine.low %v7563, %v7567
    %v9148 = vunpack.c.l.s4 1983009808
    %v9149 = vunpack.c.0.s8 %v9148
    %v9150 = vlaneseq
    %v9151 = vshrl.u32 %v9150, 7
    %v9152 = vsub.s32 %v9149, %v9151
    %v9153 = vrot.slane %v9145, %v9152
    %v9155 = vunpack.c.l.s4 1983009808
    %v9156 = vunpack.c.0.s8 %v9155
    %v9157 = vlaneseq
    %v9158 = vshrl.u32 %v9157, 7
    %v9159 = vsub.s32 %v9156, %v9158
    %v9160 = vrot.slane %v9146, %v9159
    %v9161 = vcombine.low %v9153, %v9160
    %v9162 = vcombine.low %v7571, %v7575
    %v9163 = vcombine.low %v7579, %v7583
    %v9165 = vunpack.c.l.s4 1983009808
    %v9166 = vunpack.c.0.s8 %v9165
    %v9167 = vlaneseq
    %v9168 = vshrl.u32 %v9167, 7
    %v9169 = vsub.s32 %v9166, %v9168
    %v9170 = vrot.slane %v9162, %v9169
    %v9172 = vunpack.c.l.s4 1983009808
    %v9173 = vunpack.c.0.s8 %v9172
    %v9174 = vlaneseq
    %v9175 = vshrl.u32 %v9174, 7
    %v9176 = vsub.s32 %v9173, %v9175
    %v9177 = vrot.slane %v9163, %v9176
    %v9178 = vcombine.low %v9170, %v9177
    %v9179 = vcombine.low %v7587, %v7591
    %v9180 = vcombine.low %v7595, %v7599
    %v9182 = vunpack.c.l.s4 1983009808
    %v9183 = vunpack.c.0.s8 %v9182
    %v9184 = vlaneseq
    %v9185 = vshrl.u32 %v9184, 7
    %v9186 = vsub.s32 %v9183, %v9185
    %v9187 = vrot.slane %v9179, %v9186
    %v9189 = vunpack.c.l.s4 1983009808
    %v9190 = vunpack.c.0.s8 %v9189
    %v9191 = vlaneseq
    %v9192 = vshrl.u32 %v9191, 7
    %v9193 = vsub.s32 %v9190, %v9192
    %v9194 = vrot.slane %v9180, %v9193
    %v9195 = vcombine.low %v9187, %v9194
    %v9196 = vcombine.low %v7603, %v7607
    %v9197 = vcombine.low %v7611, %v7615
    %v9199 = vunpack.c.l.s4 1983009808
    %v9200 = vunpack.c.0.s8 %v9199
    %v9201 = vlaneseq
    %v9202 = vshrl.u32 %v9201, 7
    %v9203 = vsub.s32 %v9200, %v9202
    %v9204 = vrot.slane %v9196, %v9203
    %v9206 = vunpack.c.l.s4 1983009808
    %v9207 = vunpack.c.0.s8 %v9206
    %v9208 = vlaneseq
    %v9209 = vshrl.u32 %v9208, 7
    %v9210 = vsub.s32 %v9207, %v9209
    %v9211 = vrot.slane %v9197, %v9210
    %v9212 = vcombine.low %v9204, %v9211
    %v9213 = vcombine.low %v7619, %v7623
    %v9214 = vcombine.low %v7627, %v7631
    %v9216 = vunpack.c.l.s4 1983009808
    %v9217 = vunpack.c.0.s8 %v9216
    %v9218 = vlaneseq
    %v9219 = vshrl.u32 %v9218, 7
    %v9220 = vsub.s32 %v9217, %v9219
    %v9221 = vrot.slane %v9213, %v9220
    %v9223 = vunpack.c.l.s4 1983009808
    %v9224 = vunpack.c.0.s8 %v9223
    %v9225 = vlaneseq
    %v9226 = vshrl.u32 %v9225, 7
    %v9227 = vsub.s32 %v9224, %v9226
    %v9228 = vrot.slane %v9214, %v9227
    %v9229 = vcombine.low %v9221, %v9228
    %v9230 = vcombine.low %v7635, %v7639
    %v9231 = vcombine.low %v7643, %v7647
    %v9233 = vunpack.c.l.s4 1983009808
    %v9234 = vunpack.c.0.s8 %v9233
    %v9235 = vlaneseq
    %v9236 = vshrl.u32 %v9235, 7
    %v9237 = vsub.s32 %v9234, %v9236
    %v9238 = vrot.slane %v9230, %v9237
    %v9240 = vunpack.c.l.s4 1983009808
    %v9241 = vunpack.c.0.s8 %v9240
    %v9242 = vlaneseq
    %v9243 = vshrl.u32 %v9242, 7
    %v9244 = vsub.s32 %v9241, %v9243
    %v9245 = vrot.slane %v9231, %v9244
    %v9246 = vcombine.low %v9238, %v9245
    %v9247 = vcombine.low %v7651, %v7655
    %v9248 = vcombine.low %v7659, %v7663
    %v9250 = vunpack.c.l.s4 1983009808
    %v9251 = vunpack.c.0.s8 %v9250
    %v9252 = vlaneseq
    %v9253 = vshrl.u32 %v9252, 7
    %v9254 = vsub.s32 %v9251, %v9253
    %v9255 = vrot.slane %v9247, %v9254
    %v9257 = vunpack.c.l.s4 1983009808
    %v9258 = vunpack.c.0.s8 %v9257
    %v9259 = vlaneseq
    %v9260 = vshrl.u32 %v9259, 7
    %v9261 = vsub.s32 %v9258, %v9260
    %v9262 = vrot.slane %v9248, %v9261
    %v9263 = vcombine.low %v9255, %v9262
    %v9264 = vcombine.low %v7667, %v7671
    %v9265 = vcombine.low %v7675, %v7679
    %v9267 = vunpack.c.l.s4 1983009808
    %v9268 = vunpack.c.0.s8 %v9267
    %v9269 = vlaneseq
    %v9270 = vshrl.u32 %v9269, 7
    %v9271 = vsub.s32 %v9268, %v9270
    %v9272 = vrot.slane %v9264, %v9271
    %v9274 = vunpack.c.l.s4 1983009808
    %v9275 = vunpack.c.0.s8 %v9274
    %v9276 = vlaneseq
    %v9277 = vshrl.u32 %v9276, 7
    %v9278 = vsub.s32 %v9275, %v9277
    %v9279 = vrot.slane %v9265, %v9278
    %v9280 = vcombine.low %v9272, %v9279
    %v9281 = vcombine.low %v7683, %v7687
    %v9282 = vcombine.low %v7691, %v7695
    %v9284 = vunpack.c.l.s4 1983009808
    %v9285 = vunpack.c.0.s8 %v9284
    %v9286 = vlaneseq
    %v9287 = vshrl.u32 %v9286, 7
    %v9288 = vsub.s32 %v9285, %v9287
    %v9289 = vrot.slane %v9281, %v9288
    %v9291 = vunpack.c.l.s4 1983009808
    %v9292 = vunpack.c.0.s8 %v9291
    %v9293 = vlaneseq
    %v9294 = vshrl.u32 %v9293, 7
    %v9295 = vsub.s32 %v9292, %v9294
    %v9296 = vrot.slane %v9282, %v9295
    %v9297 = vcombine.low %v9289, %v9296
    %v9298 = vcombine.low %v7699, %v7703
    %v9299 = vcombine.low %v7707, %v7711
    %v9301 = vunpack.c.l.s4 1983009808
    %v9302 = vunpack.c.0.s8 %v9301
    %v9303 = vlaneseq
    %v9304 = vshrl.u32 %v9303, 7
    %v9305 = vsub.s32 %v9302, %v9304
    %v9306 = vrot.slane %v9298, %v9305
    %v9308 = vunpack.c.l.s4 1983009808
    %v9309 = vunpack.c.0.s8 %v9308
    %v9310 = vlaneseq
    %v9311 = vshrl.u32 %v9310, 7
    %v9312 = vsub.s32 %v9309, %v9311
    %v9313 = vrot.slane %v9299, %v9312
    %v9314 = vcombine.low %v9306, %v9313
    %v9315 = vcombine.low %v7715, %v7719
    %v9316 = vcombine.low %v7723, %v7727
    %v9318 = vunpack.c.l.s4 1983009808
    %v9319 = vunpack.c.0.s8 %v9318
    %v9320 = vlaneseq
    %v9321 = vshrl.u32 %v9320, 7
    %v9322 = vsub.s32 %v9319, %v9321
    %v9323 = vrot.slane %v9315, %v9322
    %v9325 = vunpack.c.l.s4 1983009808
    %v9326 = vunpack.c.0.s8 %v9325
    %v9327 = vlaneseq
    %v9328 = vshrl.u32 %v9327, 7
    %v9329 = vsub.s32 %v9326, %v9328
    %v9330 = vrot.slane %v9316, %v9329
    %v9331 = vcombine.low %v9323, %v9330
    %v9332 = vcombine.low %v7731, %v7735
    %v9333 = vcombine.low %v7739, %v7743
    %v9335 = vunpack.c.l.s4 1983009808
    %v9336 = vunpack.c.0.s8 %v9335
    %v9337 = vlaneseq
    %v9338 = vshrl.u32 %v9337, 7
    %v9339 = vsub.s32 %v9336, %v9338
    %v9340 = vrot.slane %v9332, %v9339
    %v9342 = vunpack.c.l.s4 1983009808
    %v9343 = vunpack.c.0.s8 %v9342
    %v9344 = vlaneseq
    %v9345 = vshrl.u32 %v9344, 7
    %v9346 = vsub.s32 %v9343, %v9345
    %v9347 = vrot.slane %v9333, %v9346
    %v9348 = vcombine.low %v9340, %v9347
    %v9349 = vcombine.low %v7747, %v7751
    %v9350 = vcombine.low %v7755, %v7759
    %v9352 = vunpack.c.l.s4 1983009808
    %v9353 = vunpack.c.0.s8 %v9352
    %v9354 = vlaneseq
    %v9355 = vshrl.u32 %v9354, 7
    %v9356 = vsub.s32 %v9353, %v9355
    %v9357 = vrot.slane %v9349, %v9356
    %v9359 = vunpack.c.l.s4 1983009808
    %v9360 = vunpack.c.0.s8 %v9359
    %v9361 = vlaneseq
    %v9362 = vshrl.u32 %v9361, 7
    %v9363 = vsub.s32 %v9360, %v9362
    %v9364 = vrot.slane %v9350, %v9363
    %v9365 = vcombine.low %v9357, %v9364
    %v9366 = vcombine.low %v7763, %v7767
    %v9367 = vcombine.low %v7771, %v7775
    %v9369 = vunpack.c.l.s4 1983009808
    %v9370 = vunpack.c.0.s8 %v9369
    %v9371 = vlaneseq
    %v9372 = vshrl.u32 %v9371, 7
    %v9373 = vsub.s32 %v9370, %v9372
    %v9374 = vrot.slane %v9366, %v9373
    %v9376 = vunpack.c.l.s4 1983009808
    %v9377 = vunpack.c.0.s8 %v9376
    %v9378 = vlaneseq
    %v9379 = vshrl.u32 %v9378, 7
    %v9380 = vsub.s32 %v9377, %v9379
    %v9381 = vrot.slane %v9367, %v9380
    %v9382 = vcombine.low %v9374, %v9381
    %v9383 = vcombine.low %v7779, %v7783
    %v9384 = vcombine.low %v7787, %v7791
    %v9386 = vunpack.c.l.s4 1983009808
    %v9387 = vunpack.c.0.s8 %v9386
    %v9388 = vlaneseq
    %v9389 = vshrl.u32 %v9388, 7
    %v9390 = vsub.s32 %v9387, %v9389
    %v9391 = vrot.slane %v9383, %v9390
    %v9393 = vunpack.c.l.s4 1983009808
    %v9394 = vunpack.c.0.s8 %v9393
    %v9395 = vlaneseq
    %v9396 = vshrl.u32 %v9395, 7
    %v9397 = vsub.s32 %v9394, %v9396
    %v9398 = vrot.slane %v9384, %v9397
    %v9399 = vcombine.low %v9391, %v9398
    %v9400 = vcombine.low %v7795, %v7799
    %v9401 = vcombine.low %v7803, %v7807
    %v9403 = vunpack.c.l.s4 1983009808
    %v9404 = vunpack.c.0.s8 %v9403
    %v9405 = vlaneseq
    %v9406 = vshrl.u32 %v9405, 7
    %v9407 = vsub.s32 %v9404, %v9406
    %v9408 = vrot.slane %v9400, %v9407
    %v9410 = vunpack.c.l.s4 1983009808
    %v9411 = vunpack.c.0.s8 %v9410
    %v9412 = vlaneseq
    %v9413 = vshrl.u32 %v9412, 7
    %v9414 = vsub.s32 %v9411, %v9413
    %v9415 = vrot.slane %v9401, %v9414
    %v9416 = vcombine.low %v9408, %v9415
    %v9417 = vcombine.low %v7811, %v7815
    %v9418 = vcombine.low %v7819, %v7823
    %v9420 = vunpack.c.l.s4 1983009808
    %v9421 = vunpack.c.0.s8 %v9420
    %v9422 = vlaneseq
    %v9423 = vshrl.u32 %v9422, 7
    %v9424 = vsub.s32 %v9421, %v9423
    %v9425 = vrot.slane %v9417, %v9424
    %v9427 = vunpack.c.l.s4 1983009808
    %v9428 = vunpack.c.0.s8 %v9427
    %v9429 = vlaneseq
    %v9430 = vshrl.u32 %v9429, 7
    %v9431 = vsub.s32 %v9428, %v9430
    %v9432 = vrot.slane %v9418, %v9431
    %v9433 = vcombine.low %v9425, %v9432
    %v9434 = vcombine.low %v7827, %v7831
    %v9435 = vcombine.low %v7835, %v7839
    %v9437 = vunpack.c.l.s4 1983009808
    %v9438 = vunpack.c.0.s8 %v9437
    %v9439 = vlaneseq
    %v9440 = vshrl.u32 %v9439, 7
    %v9441 = vsub.s32 %v9438, %v9440
    %v9442 = vrot.slane %v9434, %v9441
    %v9444 = vunpack.c.l.s4 1983009808
    %v9445 = vunpack.c.0.s8 %v9444
    %v9446 = vlaneseq
    %v9447 = vshrl.u32 %v9446, 7
    %v9448 = vsub.s32 %v9445, %v9447
    %v9449 = vrot.slane %v9435, %v9448
    %v9450 = vcombine.low %v9442, %v9449
    %v9451 = vcombine.low %v7843, %v7847
    %v9452 = vcombine.low %v7851, %v7855
    %v9454 = vunpack.c.l.s4 1983009808
    %v9455 = vunpack.c.0.s8 %v9454
    %v9456 = vlaneseq
    %v9457 = vshrl.u32 %v9456, 7
    %v9458 = vsub.s32 %v9455, %v9457
    %v9459 = vrot.slane %v9451, %v9458
    %v9461 = vunpack.c.l.s4 1983009808
    %v9462 = vunpack.c.0.s8 %v9461
    %v9463 = vlaneseq
    %v9464 = vshrl.u32 %v9463, 7
    %v9465 = vsub.s32 %v9462, %v9464
    %v9466 = vrot.slane %v9452, %v9465
    %v9467 = vcombine.low %v9459, %v9466
    %v9468 = vcombine.low %v7859, %v7863
    %v9469 = vcombine.low %v7867, %v7871
    %v9471 = vunpack.c.l.s4 1983009808
    %v9472 = vunpack.c.0.s8 %v9471
    %v9473 = vlaneseq
    %v9474 = vshrl.u32 %v9473, 7
    %v9475 = vsub.s32 %v9472, %v9474
    %v9476 = vrot.slane %v9468, %v9475
    %v9478 = vunpack.c.l.s4 1983009808
    %v9479 = vunpack.c.0.s8 %v9478
    %v9480 = vlaneseq
    %v9481 = vshrl.u32 %v9480, 7
    %v9482 = vsub.s32 %v9479, %v9481
    %v9483 = vrot.slane %v9469, %v9482
    %v9484 = vcombine.low %v9476, %v9483
    %v9485 = vcombine.low %v7875, %v7879
    %v9486 = vcombine.low %v7883, %v7887
    %v9488 = vunpack.c.l.s4 1983009808
    %v9489 = vunpack.c.0.s8 %v9488
    %v9490 = vlaneseq
    %v9491 = vshrl.u32 %v9490, 7
    %v9492 = vsub.s32 %v9489, %v9491
    %v9493 = vrot.slane %v9485, %v9492
    %v9495 = vunpack.c.l.s4 1983009808
    %v9496 = vunpack.c.0.s8 %v9495
    %v9497 = vlaneseq
    %v9498 = vshrl.u32 %v9497, 7
    %v9499 = vsub.s32 %v9496, %v9498
    %v9500 = vrot.slane %v9486, %v9499
    %v9501 = vcombine.low %v9493, %v9500
    %v9502 = vcombine.low %v7891, %v7895
    %v9503 = vcombine.low %v7899, %v7903
    %v9505 = vunpack.c.l.s4 1983009808
    %v9506 = vunpack.c.0.s8 %v9505
    %v9507 = vlaneseq
    %v9508 = vshrl.u32 %v9507, 7
    %v9509 = vsub.s32 %v9506, %v9508
    %v9510 = vrot.slane %v9502, %v9509
    %v9512 = vunpack.c.l.s4 1983009808
    %v9513 = vunpack.c.0.s8 %v9512
    %v9514 = vlaneseq
    %v9515 = vshrl.u32 %v9514, 7
    %v9516 = vsub.s32 %v9513, %v9515
    %v9517 = vrot.slane %v9503, %v9516
    %v9518 = vcombine.low %v9510, %v9517
    %v9519 = vcombine.low %v7907, %v7911
    %v9520 = vcombine.low %v7915, %v7919
    %v9522 = vunpack.c.l.s4 1983009808
    %v9523 = vunpack.c.0.s8 %v9522
    %v9524 = vlaneseq
    %v9525 = vshrl.u32 %v9524, 7
    %v9526 = vsub.s32 %v9523, %v9525
    %v9527 = vrot.slane %v9519, %v9526
    %v9529 = vunpack.c.l.s4 1983009808
    %v9530 = vunpack.c.0.s8 %v9529
    %v9531 = vlaneseq
    %v9532 = vshrl.u32 %v9531, 7
    %v9533 = vsub.s32 %v9530, %v9532
    %v9534 = vrot.slane %v9520, %v9533
    %v9535 = vcombine.low %v9527, %v9534
    %v9536 = vcombine.low %v7923, %v7927
    %v9537 = vcombine.low %v7931, %v7935
    %v9539 = vunpack.c.l.s4 1983009808
    %v9540 = vunpack.c.0.s8 %v9539
    %v9541 = vlaneseq
    %v9542 = vshrl.u32 %v9541, 7
    %v9543 = vsub.s32 %v9540, %v9542
    %v9544 = vrot.slane %v9536, %v9543
    %v9546 = vunpack.c.l.s4 1983009808
    %v9547 = vunpack.c.0.s8 %v9546
    %v9548 = vlaneseq
    %v9549 = vshrl.u32 %v9548, 7
    %v9550 = vsub.s32 %v9547, %v9549
    %v9551 = vrot.slane %v9537, %v9550
    %v9552 = vcombine.low %v9544, %v9551
    %v9553 = vcombine.low %v7939, %v7943
    %v9554 = vcombine.low %v7947, %v7951
    %v9556 = vunpack.c.l.s4 1983009808
    %v9557 = vunpack.c.0.s8 %v9556
    %v9558 = vlaneseq
    %v9559 = vshrl.u32 %v9558, 7
    %v9560 = vsub.s32 %v9557, %v9559
    %v9561 = vrot.slane %v9553, %v9560
    %v9563 = vunpack.c.l.s4 1983009808
    %v9564 = vunpack.c.0.s8 %v9563
    %v9565 = vlaneseq
    %v9566 = vshrl.u32 %v9565, 7
    %v9567 = vsub.s32 %v9564, %v9566
    %v9568 = vrot.slane %v9554, %v9567
    %v9569 = vcombine.low %v9561, %v9568
    %v9570 = vcombine.low %v7955, %v7959
    %v9571 = vcombine.low %v7963, %v7967
    %v9573 = vunpack.c.l.s4 1983009808
    %v9574 = vunpack.c.0.s8 %v9573
    %v9575 = vlaneseq
    %v9576 = vshrl.u32 %v9575, 7
    %v9577 = vsub.s32 %v9574, %v9576
    %v9578 = vrot.slane %v9570, %v9577
    %v9580 = vunpack.c.l.s4 1983009808
    %v9581 = vunpack.c.0.s8 %v9580
    %v9582 = vlaneseq
    %v9583 = vshrl.u32 %v9582, 7
    %v9584 = vsub.s32 %v9581, %v9583
    %v9585 = vrot.slane %v9571, %v9584
    %v9586 = vcombine.low %v9578, %v9585
    %v9587 = vcombine.low %v7971, %v7975
    %v9588 = vcombine.low %v7979, %v7983
    %v9590 = vunpack.c.l.s4 1983009808
    %v9591 = vunpack.c.0.s8 %v9590
    %v9592 = vlaneseq
    %v9593 = vshrl.u32 %v9592, 7
    %v9594 = vsub.s32 %v9591, %v9593
    %v9595 = vrot.slane %v9587, %v9594
    %v9597 = vunpack.c.l.s4 1983009808
    %v9598 = vunpack.c.0.s8 %v9597
    %v9599 = vlaneseq
    %v9600 = vshrl.u32 %v9599, 7
    %v9601 = vsub.s32 %v9598, %v9600
    %v9602 = vrot.slane %v9588, %v9601
    %v9603 = vcombine.low %v9595, %v9602
    %v9604 = vcombine.low %v7987, %v7991
    %v9605 = vcombine.low %v7995, %v7999
    %v9607 = vunpack.c.l.s4 1983009808
    %v9608 = vunpack.c.0.s8 %v9607
    %v9609 = vlaneseq
    %v9610 = vshrl.u32 %v9609, 7
    %v9611 = vsub.s32 %v9608, %v9610
    %v9612 = vrot.slane %v9604, %v9611
    %v9614 = vunpack.c.l.s4 1983009808
    %v9615 = vunpack.c.0.s8 %v9614
    %v9616 = vlaneseq
    %v9617 = vshrl.u32 %v9616, 7
    %v9618 = vsub.s32 %v9615, %v9617
    %v9619 = vrot.slane %v9605, %v9618
    %v9620 = vcombine.low %v9612, %v9619
    %v9621 = vcombine.low %v8003, %v8007
    %v9622 = vcombine.low %v8011, %v8015
    %v9624 = vunpack.c.l.s4 1983009808
    %v9625 = vunpack.c.0.s8 %v9624
    %v9626 = vlaneseq
    %v9627 = vshrl.u32 %v9626, 7
    %v9628 = vsub.s32 %v9625, %v9627
    %v9629 = vrot.slane %v9621, %v9628
    %v9631 = vunpack.c.l.s4 1983009808
    %v9632 = vunpack.c.0.s8 %v9631
    %v9633 = vlaneseq
    %v9634 = vshrl.u32 %v9633, 7
    %v9635 = vsub.s32 %v9632, %v9634
    %v9636 = vrot.slane %v9622, %v9635
    %v9637 = vcombine.low %v9629, %v9636
    %v9638 = vcombine.low %v8019, %v8023
    %v9639 = vcombine.low %v8027, %v8031
    %v9641 = vunpack.c.l.s4 1983009808
    %v9642 = vunpack.c.0.s8 %v9641
    %v9643 = vlaneseq
    %v9644 = vshrl.u32 %v9643, 7
    %v9645 = vsub.s32 %v9642, %v9644
    %v9646 = vrot.slane %v9638, %v9645
    %v9648 = vunpack.c.l.s4 1983009808
    %v9649 = vunpack.c.0.s8 %v9648
    %v9650 = vlaneseq
    %v9651 = vshrl.u32 %v9650, 7
    %v9652 = vsub.s32 %v9649, %v9651
    %v9653 = vrot.slane %v9639, %v9652
    %v9654 = vcombine.low %v9646, %v9653
    %v9655 = vcombine.low %v8035, %v8039
    %v9656 = vcombine.low %v8043, %v8047
    %v9658 = vunpack.c.l.s4 1983009808
    %v9659 = vunpack.c.0.s8 %v9658
    %v9660 = vlaneseq
    %v9661 = vshrl.u32 %v9660, 7
    %v9662 = vsub.s32 %v9659, %v9661
    %v9663 = vrot.slane %v9655, %v9662
    %v9665 = vunpack.c.l.s4 1983009808
    %v9666 = vunpack.c.0.s8 %v9665
    %v9667 = vlaneseq
    %v9668 = vshrl.u32 %v9667, 7
    %v9669 = vsub.s32 %v9666, %v9668
    %v9670 = vrot.slane %v9656, %v9669
    %v9671 = vcombine.low %v9663, %v9670
    %v9672 = vcombine.low %v8051, %v8055
    %v9673 = vcombine.low %v8059, %v8063
    %v9675 = vunpack.c.l.s4 1983009808
    %v9676 = vunpack.c.0.s8 %v9675
    %v9677 = vlaneseq
    %v9678 = vshrl.u32 %v9677, 7
    %v9679 = vsub.s32 %v9676, %v9678
    %v9680 = vrot.slane %v9672, %v9679
    %v9682 = vunpack.c.l.s4 1983009808
    %v9683 = vunpack.c.0.s8 %v9682
    %v9684 = vlaneseq
    %v9685 = vshrl.u32 %v9684, 7
    %v9686 = vsub.s32 %v9683, %v9685
    %v9687 = vrot.slane %v9673, %v9686
    %v9688 = vcombine.low %v9680, %v9687
    %v9689 = vcombine.low %v8067, %v8071
    %v9690 = vcombine.low %v8075, %v8079
    %v9692 = vunpack.c.l.s4 1983009808
    %v9693 = vunpack.c.0.s8 %v9692
    %v9694 = vlaneseq
    %v9695 = vshrl.u32 %v9694, 7
    %v9696 = vsub.s32 %v9693, %v9695
    %v9697 = vrot.slane %v9689, %v9696
    %v9699 = vunpack.c.l.s4 1983009808
    %v9700 = vunpack.c.0.s8 %v9699
    %v9701 = vlaneseq
    %v9702 = vshrl.u32 %v9701, 7
    %v9703 = vsub.s32 %v9700, %v9702
    %v9704 = vrot.slane %v9690, %v9703
    %v9705 = vcombine.low %v9697, %v9704
    %v9706 = vcombine.low %v8083, %v8087
    %v9707 = vcombine.low %v8091, %v8095
    %v9709 = vunpack.c.l.s4 1983009808
    %v9710 = vunpack.c.0.s8 %v9709
    %v9711 = vlaneseq
    %v9712 = vshrl.u32 %v9711, 7
    %v9713 = vsub.s32 %v9710, %v9712
    %v9714 = vrot.slane %v9706, %v9713
    %v9716 = vunpack.c.l.s4 1983009808
    %v9717 = vunpack.c.0.s8 %v9716
    %v9718 = vlaneseq
    %v9719 = vshrl.u32 %v9718, 7
    %v9720 = vsub.s32 %v9717, %v9719
    %v9721 = vrot.slane %v9707, %v9720
    %v9722 = vcombine.low %v9714, %v9721
    %v9723 = vcombine.low %v8099, %v8103
    %v9724 = vcombine.low %v8107, %v8111
    %v9726 = vunpack.c.l.s4 1983009808
    %v9727 = vunpack.c.0.s8 %v9726
    %v9728 = vlaneseq
    %v9729 = vshrl.u32 %v9728, 7
    %v9730 = vsub.s32 %v9727, %v9729
    %v9731 = vrot.slane %v9723, %v9730
    %v9733 = vunpack.c.l.s4 1983009808
    %v9734 = vunpack.c.0.s8 %v9733
    %v9735 = vlaneseq
    %v9736 = vshrl.u32 %v9735, 7
    %v9737 = vsub.s32 %v9734, %v9736
    %v9738 = vrot.slane %v9724, %v9737
    %v9739 = vcombine.low %v9731, %v9738
    %v9740 = vcombine.low %v8115, %v8119
    %v9741 = vcombine.low %v8123, %v8127
    %v9743 = vunpack.c.l.s4 1983009808
    %v9744 = vunpack.c.0.s8 %v9743
    %v9745 = vlaneseq
    %v9746 = vshrl.u32 %v9745, 7
    %v9747 = vsub.s32 %v9744, %v9746
    %v9748 = vrot.slane %v9740, %v9747
    %v9750 = vunpack.c.l.s4 1983009808
    %v9751 = vunpack.c.0.s8 %v9750
    %v9752 = vlaneseq
    %v9753 = vshrl.u32 %v9752, 7
    %v9754 = vsub.s32 %v9751, %v9753
    %v9755 = vrot.slane %v9741, %v9754
    %v9756 = vcombine.low %v9748, %v9755
    %v9757 = vcombine.low %v8131, %v8135
    %v9758 = vcombine.low %v8139, %v8143
    %v9760 = vunpack.c.l.s4 1983009808
    %v9761 = vunpack.c.0.s8 %v9760
    %v9762 = vlaneseq
    %v9763 = vshrl.u32 %v9762, 7
    %v9764 = vsub.s32 %v9761, %v9763
    %v9765 = vrot.slane %v9757, %v9764
    %v9767 = vunpack.c.l.s4 1983009808
    %v9768 = vunpack.c.0.s8 %v9767
    %v9769 = vlaneseq
    %v9770 = vshrl.u32 %v9769, 7
    %v9771 = vsub.s32 %v9768, %v9770
    %v9772 = vrot.slane %v9758, %v9771
    %v9773 = vcombine.low %v9765, %v9772
    %v9774 = vcombine.low %v8147, %v8151
    %v9775 = vcombine.low %v8155, %v8159
    %v9777 = vunpack.c.l.s4 1983009808
    %v9778 = vunpack.c.0.s8 %v9777
    %v9779 = vlaneseq
    %v9780 = vshrl.u32 %v9779, 7
    %v9781 = vsub.s32 %v9778, %v9780
    %v9782 = vrot.slane %v9774, %v9781
    %v9784 = vunpack.c.l.s4 1983009808
    %v9785 = vunpack.c.0.s8 %v9784
    %v9786 = vlaneseq
    %v9787 = vshrl.u32 %v9786, 7
    %v9788 = vsub.s32 %v9785, %v9787
    %v9789 = vrot.slane %v9775, %v9788
    %v9790 = vcombine.low %v9782, %v9789
    %v9791 = vcombine.low %v8163, %v8167
    %v9792 = vcombine.low %v8171, %v8175
    %v9794 = vunpack.c.l.s4 1983009808
    %v9795 = vunpack.c.0.s8 %v9794
    %v9796 = vlaneseq
    %v9797 = vshrl.u32 %v9796, 7
    %v9798 = vsub.s32 %v9795, %v9797
    %v9799 = vrot.slane %v9791, %v9798
    %v9801 = vunpack.c.l.s4 1983009808
    %v9802 = vunpack.c.0.s8 %v9801
    %v9803 = vlaneseq
    %v9804 = vshrl.u32 %v9803, 7
    %v9805 = vsub.s32 %v9802, %v9804
    %v9806 = vrot.slane %v9792, %v9805
    %v9807 = vcombine.low %v9799, %v9806
    %v9904 = vmul.f32 %v15, %v8192
    %v9905 = vmul.f32 %v16, %v8209
    %v9906 = vmul.f32 %v17, %v8226
    %v9907 = vmul.f32 %v18, %v8243
    %v9908 = vmul.f32 %v19, %v8260
    %v9909 = vmul.f32 %v20, %v8277
    %v9910 = vmul.f32 %v21, %v8294
    %v9911 = vmul.f32 %v22, %v8311
    %v9912 = vmul.f32 %v23, %v8328
    %v9913 = vmul.f32 %v24, %v8345
    %v9914 = vmul.f32 %v25, %v8362
    %v9915 = vmul.f32 %v26, %v8379
    %v9916 = vmul.f32 %v27, %v8396
    %v9917 = vmul.f32 %v28, %v8413
    %v9918 = vmul.f32 %v29, %v8430
    %v9919 = vmul.f32 %v30, %v8447
    %v9920 = vmul.f32 %v31, %v8464
    %v9921 = vmul.f32 %v32, %v8481
    %v9922 = vmul.f32 %v33, %v8498
    %v9923 = vmul.f32 %v34, %v8515
    %v9924 = vmul.f32 %v35, %v8532
    %v9925 = vmul.f32 %v36, %v8549
    %v9926 = vmul.f32 %v37, %v8566
    %v9927 = vmul.f32 %v38, %v8583
    %v9928 = vmul.f32 %v39, %v8600
    %v9929 = vmul.f32 %v40, %v8617
    %v9930 = vmul.f32 %v41, %v8634
    %v9931 = vmul.f32 %v42, %v8651
    %v9932 = vmul.f32 %v43, %v8668
    %v9933 = vmul.f32 %v44, %v8685
    %v9934 = vmul.f32 %v45, %v8702
    %v9935 = vmul.f32 %v46, %v8719
    %v9936 = vmul.f32 %v47, %v8736
    %v9937 = vmul.f32 %v48, %v8753
    %v9938 = vmul.f32 %v49, %v8770
    %v9939 = vmul.f32 %v50, %v8787
    %v9940 = vmul.f32 %v51, %v8804
    %v9941 = vmul.f32 %v52, %v8821
    %v9942 = vmul.f32 %v53, %v8838
    %v9943 = vmul.f32 %v54, %v8855
    %v9944 = vmul.f32 %v55, %v8872
    %v9945 = vmul.f32 %v56, %v8889
    %v9946 = vmul.f32 %v57, %v8906
    %v9947 = vmul.f32 %v58, %v8923
    %v9948 = vmul.f32 %v59, %v8940
    %v9949 = vmul.f32 %v60, %v8957
    %v9950 = vmul.f32 %v61, %v8974
    %v9951 = vmul.f32 %v62, %v8991
    %v9952 = vmul.f32 %v63, %v9008
    %v9953 = vmul.f32 %v64, %v9025
    %v9954 = vmul.f32 %v65, %v9042
    %v9955 = vmul.f32 %v66, %v9059
    %v9956 = vmul.f32 %v67, %v9076
    %v9957 = vmul.f32 %v68, %v9093
    %v9958 = vmul.f32 %v69, %v9110
    %v9959 = vmul.f32 %v70, %v9127
    %v9960 = vmul.f32 %v71, %v9144
    %v9961 = vmul.f32 %v72, %v9161
    %v9962 = vmul.f32 %v73, %v9178
    %v9963 = vmul.f32 %v74, %v9195
    %v9964 = vmul.f32 %v75, %v9212
    %v9965 = vmul.f32 %v76, %v9229
    %v9966 = vmul.f32 %v77, %v9246
    %v9967 = vmul.f32 %v78, %v9263
    %v9968 = vmul.f32 %v79, %v9280
    %v9969 = vmul.f32 %v80, %v9297
    %v9970 = vmul.f32 %v81, %v9314
    %v9971 = vmul.f32 %v82, %v9331
    %v9972 = vmul.f32 %v83, %v9348
    %v9973 = vmul.f32 %v84, %v9365
    %v9974 = vmul.f32 %v85, %v9382
    %v9975 = vmul.f32 %v86, %v9399
    %v9976 = vmul.f32 %v87, %v9416
    %v9977 = vmul.f32 %v88, %v9433
    %v9978 = vmul.f32 %v89, %v9450
    %v9979 = vmul.f32 %v90, %v9467
    %v9980 = vmul.f32 %v91, %v9484
    %v9981 = vmul.f32 %v92, %v9501
    %v9982 = vmul.f32 %v93, %v9518
    %v9983 = vmul.f32 %v94, %v9535
    %v9984 = vmul.f32 %v95, %v9552
    %v9985 = vmul.f32 %v96, %v9569
    %v9986 = vmul.f32 %v97, %v9586
    %v9987 = vmul.f32 %v98, %v9603
    %v9988 = vmul.f32 %v99, %v9620
    %v9989 = vmul.f32 %v100, %v9637
    %v9990 = vmul.f32 %v101, %v9654
    %v9991 = vmul.f32 %v102, %v9671
    %v9992 = vmul.f32 %v103, %v9688
    %v9993 = vmul.f32 %v104, %v9705
    %v9994 = vmul.f32 %v105, %v9722
    %v9995 = vmul.f32 %v106, %v9739
    %v9996 = vmul.f32 %v107, %v9756
    %v9997 = vmul.f32 %v108, %v9773
    %v9998 = vmul.f32 %v109, %v9790
    %v9999 = vmul.f32 %v110, %v9807
    %v10096 = vcombine.high %v9904, %v9904
    %v10098 = vunpack.c.l.s4 1983009808
    %v10099 = vunpack.c.0.s8 %v10098
    %v10100 = vlaneseq
    %v10101 = vshrl.u32 %v10100, 7
    %v10102 = vsub.s32 %v10099, %v10101
    %v10103 = vrot.slane %v9904, %v10102
    %v10105 = vunpack.c.l.s4 1983009808
    %v10106 = vunpack.c.0.s8 %v10105
    %v10107 = vlaneseq
    %v10108 = vshrl.u32 %v10107, 7
    %v10109 = vsub.s32 %v10106, %v10108
    %v10110 = vrot.slane %v10096, %v10109
    %v10111 = vcombine.high %v10103, %v10103
    %v10112 = vcombine.high %v10110, %v10110
    %v10113 = vcombine.high %v9905, %v9905
    %v10115 = vunpack.c.l.s4 1983009808
    %v10116 = vunpack.c.0.s8 %v10115
    %v10117 = vlaneseq
    %v10118 = vshrl.u32 %v10117, 7
    %v10119 = vsub.s32 %v10116, %v10118
    %v10120 = vrot.slane %v9905, %v10119
    %v10122 = vunpack.c.l.s4 1983009808
    %v10123 = vunpack.c.0.s8 %v10122
    %v10124 = vlaneseq
    %v10125 = vshrl.u32 %v10124, 7
    %v10126 = vsub.s32 %v10123, %v10125
    %v10127 = vrot.slane %v10113, %v10126
    %v10128 = vcombine.high %v10120, %v10120
    %v10129 = vcombine.high %v10127, %v10127
    %v10130 = vcombine.high %v9906, %v9906
    %v10132 = vunpack.c.l.s4 1983009808
    %v10133 = vunpack.c.0.s8 %v10132
    %v10134 = vlaneseq
    %v10135 = vshrl.u32 %v10134, 7
    %v10136 = vsub.s32 %v10133, %v10135
    %v10137 = vrot.slane %v9906, %v10136
    %v10139 = vunpack.c.l.s4 1983009808
    %v10140 = vunpack.c.0.s8 %v10139
    %v10141 = vlaneseq
    %v10142 = vshrl.u32 %v10141, 7
    %v10143 = vsub.s32 %v10140, %v10142
    %v10144 = vrot.slane %v10130, %v10143
    %v10145 = vcombine.high %v10137, %v10137
    %v10146 = vcombine.high %v10144, %v10144
    %v10147 = vcombine.high %v9907, %v9907
    %v10149 = vunpack.c.l.s4 1983009808
    %v10150 = vunpack.c.0.s8 %v10149
    %v10151 = vlaneseq
    %v10152 = vshrl.u32 %v10151, 7
    %v10153 = vsub.s32 %v10150, %v10152
    %v10154 = vrot.slane %v9907, %v10153
    %v10156 = vunpack.c.l.s4 1983009808
    %v10157 = vunpack.c.0.s8 %v10156
    %v10158 = vlaneseq
    %v10159 = vshrl.u32 %v10158, 7
    %v10160 = vsub.s32 %v10157, %v10159
    %v10161 = vrot.slane %v10147, %v10160
    %v10162 = vcombine.high %v10154, %v10154
    %v10163 = vcombine.high %v10161, %v10161
    %v10164 = vcombine.high %v9908, %v9908
    %v10166 = vunpack.c.l.s4 1983009808
    %v10167 = vunpack.c.0.s8 %v10166
    %v10168 = vlaneseq
    %v10169 = vshrl.u32 %v10168, 7
    %v10170 = vsub.s32 %v10167, %v10169
    %v10171 = vrot.slane %v9908, %v10170
    %v10173 = vunpack.c.l.s4 1983009808
    %v10174 = vunpack.c.0.s8 %v10173
    %v10175 = vlaneseq
    %v10176 = vshrl.u32 %v10175, 7
    %v10177 = vsub.s32 %v10174, %v10176
    %v10178 = vrot.slane %v10164, %v10177
    %v10179 = vcombine.high %v10171, %v10171
    %v10180 = vcombine.high %v10178, %v10178
    %v10181 = vcombine.high %v9909, %v9909
    %v10183 = vunpack.c.l.s4 1983009808
    %v10184 = vunpack.c.0.s8 %v10183
    %v10185 = vlaneseq
    %v10186 = vshrl.u32 %v10185, 7
    %v10187 = vsub.s32 %v10184, %v10186
    %v10188 = vrot.slane %v9909, %v10187
    %v10190 = vunpack.c.l.s4 1983009808
    %v10191 = vunpack.c.0.s8 %v10190
    %v10192 = vlaneseq
    %v10193 = vshrl.u32 %v10192, 7
    %v10194 = vsub.s32 %v10191, %v10193
    %v10195 = vrot.slane %v10181, %v10194
    %v10196 = vcombine.high %v10188, %v10188
    %v10197 = vcombine.high %v10195, %v10195
    %v10198 = vcombine.high %v9910, %v9910
    %v10200 = vunpack.c.l.s4 1983009808
    %v10201 = vunpack.c.0.s8 %v10200
    %v10202 = vlaneseq
    %v10203 = vshrl.u32 %v10202, 7
    %v10204 = vsub.s32 %v10201, %v10203
    %v10205 = vrot.slane %v9910, %v10204
    %v10207 = vunpack.c.l.s4 1983009808
    %v10208 = vunpack.c.0.s8 %v10207
    %v10209 = vlaneseq
    %v10210 = vshrl.u32 %v10209, 7
    %v10211 = vsub.s32 %v10208, %v10210
    %v10212 = vrot.slane %v10198, %v10211
    %v10213 = vcombine.high %v10205, %v10205
    %v10214 = vcombine.high %v10212, %v10212
    %v10215 = vcombine.high %v9911, %v9911
    %v10217 = vunpack.c.l.s4 1983009808
    %v10218 = vunpack.c.0.s8 %v10217
    %v10219 = vlaneseq
    %v10220 = vshrl.u32 %v10219, 7
    %v10221 = vsub.s32 %v10218, %v10220
    %v10222 = vrot.slane %v9911, %v10221
    %v10224 = vunpack.c.l.s4 1983009808
    %v10225 = vunpack.c.0.s8 %v10224
    %v10226 = vlaneseq
    %v10227 = vshrl.u32 %v10226, 7
    %v10228 = vsub.s32 %v10225, %v10227
    %v10229 = vrot.slane %v10215, %v10228
    %v10230 = vcombine.high %v10222, %v10222
    %v10231 = vcombine.high %v10229, %v10229
    %v10232 = vcombine.high %v9912, %v9912
    %v10234 = vunpack.c.l.s4 1983009808
    %v10235 = vunpack.c.0.s8 %v10234
    %v10236 = vlaneseq
    %v10237 = vshrl.u32 %v10236, 7
    %v10238 = vsub.s32 %v10235, %v10237
    %v10239 = vrot.slane %v9912, %v10238
    %v10241 = vunpack.c.l.s4 1983009808
    %v10242 = vunpack.c.0.s8 %v10241
    %v10243 = vlaneseq
    %v10244 = vshrl.u32 %v10243, 7
    %v10245 = vsub.s32 %v10242, %v10244
    %v10246 = vrot.slane %v10232, %v10245
    %v10247 = vcombine.high %v10239, %v10239
    %v10248 = vcombine.high %v10246, %v10246
    %v10249 = vcombine.high %v9913, %v9913
    %v10251 = vunpack.c.l.s4 1983009808
    %v10252 = vunpack.c.0.s8 %v10251
    %v10253 = vlaneseq
    %v10254 = vshrl.u32 %v10253, 7
    %v10255 = vsub.s32 %v10252, %v10254
    %v10256 = vrot.slane %v9913, %v10255
    %v10258 = vunpack.c.l.s4 1983009808
    %v10259 = vunpack.c.0.s8 %v10258
    %v10260 = vlaneseq
    %v10261 = vshrl.u32 %v10260, 7
    %v10262 = vsub.s32 %v10259, %v10261
    %v10263 = vrot.slane %v10249, %v10262
    %v10264 = vcombine.high %v10256, %v10256
    %v10265 = vcombine.high %v10263, %v10263
    %v10266 = vcombine.high %v9914, %v9914
    %v10268 = vunpack.c.l.s4 1983009808
    %v10269 = vunpack.c.0.s8 %v10268
    %v10270 = vlaneseq
    %v10271 = vshrl.u32 %v10270, 7
    %v10272 = vsub.s32 %v10269, %v10271
    %v10273 = vrot.slane %v9914, %v10272
    %v10275 = vunpack.c.l.s4 1983009808
    %v10276 = vunpack.c.0.s8 %v10275
    %v10277 = vlaneseq
    %v10278 = vshrl.u32 %v10277, 7
    %v10279 = vsub.s32 %v10276, %v10278
    %v10280 = vrot.slane %v10266, %v10279
    %v10281 = vcombine.high %v10273, %v10273
    %v10282 = vcombine.high %v10280, %v10280
    %v10283 = vcombine.high %v9915, %v9915
    %v10285 = vunpack.c.l.s4 1983009808
    %v10286 = vunpack.c.0.s8 %v10285
    %v10287 = vlaneseq
    %v10288 = vshrl.u32 %v10287, 7
    %v10289 = vsub.s32 %v10286, %v10288
    %v10290 = vrot.slane %v9915, %v10289
    %v10292 = vunpack.c.l.s4 1983009808
    %v10293 = vunpack.c.0.s8 %v10292
    %v10294 = vlaneseq
    %v10295 = vshrl.u32 %v10294, 7
    %v10296 = vsub.s32 %v10293, %v10295
    %v10297 = vrot.slane %v10283, %v10296
    %v10298 = vcombine.high %v10290, %v10290
    %v10299 = vcombine.high %v10297, %v10297
    %v10300 = vcombine.high %v9916, %v9916
    %v10302 = vunpack.c.l.s4 1983009808
    %v10303 = vunpack.c.0.s8 %v10302
    %v10304 = vlaneseq
    %v10305 = vshrl.u32 %v10304, 7
    %v10306 = vsub.s32 %v10303, %v10305
    %v10307 = vrot.slane %v9916, %v10306
    %v10309 = vunpack.c.l.s4 1983009808
    %v10310 = vunpack.c.0.s8 %v10309
    %v10311 = vlaneseq
    %v10312 = vshrl.u32 %v10311, 7
    %v10313 = vsub.s32 %v10310, %v10312
    %v10314 = vrot.slane %v10300, %v10313
    %v10315 = vcombine.high %v10307, %v10307
    %v10316 = vcombine.high %v10314, %v10314
    %v10317 = vcombine.high %v9917, %v9917
    %v10319 = vunpack.c.l.s4 1983009808
    %v10320 = vunpack.c.0.s8 %v10319
    %v10321 = vlaneseq
    %v10322 = vshrl.u32 %v10321, 7
    %v10323 = vsub.s32 %v10320, %v10322
    %v10324 = vrot.slane %v9917, %v10323
    %v10326 = vunpack.c.l.s4 1983009808
    %v10327 = vunpack.c.0.s8 %v10326
    %v10328 = vlaneseq
    %v10329 = vshrl.u32 %v10328, 7
    %v10330 = vsub.s32 %v10327, %v10329
    %v10331 = vrot.slane %v10317, %v10330
    %v10332 = vcombine.high %v10324, %v10324
    %v10333 = vcombine.high %v10331, %v10331
    %v10334 = vcombine.high %v9918, %v9918
    %v10336 = vunpack.c.l.s4 1983009808
    %v10337 = vunpack.c.0.s8 %v10336
    %v10338 = vlaneseq
    %v10339 = vshrl.u32 %v10338, 7
    %v10340 = vsub.s32 %v10337, %v10339
    %v10341 = vrot.slane %v9918, %v10340
    %v10343 = vunpack.c.l.s4 1983009808
    %v10344 = vunpack.c.0.s8 %v10343
    %v10345 = vlaneseq
    %v10346 = vshrl.u32 %v10345, 7
    %v10347 = vsub.s32 %v10344, %v10346
    %v10348 = vrot.slane %v10334, %v10347
    %v10349 = vcombine.high %v10341, %v10341
    %v10350 = vcombine.high %v10348, %v10348
    %v10351 = vcombine.high %v9919, %v9919
    %v10353 = vunpack.c.l.s4 1983009808
    %v10354 = vunpack.c.0.s8 %v10353
    %v10355 = vlaneseq
    %v10356 = vshrl.u32 %v10355, 7
    %v10357 = vsub.s32 %v10354, %v10356
    %v10358 = vrot.slane %v9919, %v10357
    %v10360 = vunpack.c.l.s4 1983009808
    %v10361 = vunpack.c.0.s8 %v10360
    %v10362 = vlaneseq
    %v10363 = vshrl.u32 %v10362, 7
    %v10364 = vsub.s32 %v10361, %v10363
    %v10365 = vrot.slane %v10351, %v10364
    %v10366 = vcombine.high %v10358, %v10358
    %v10367 = vcombine.high %v10365, %v10365
    %v10368 = vcombine.high %v9920, %v9920
    %v10370 = vunpack.c.l.s4 1983009808
    %v10371 = vunpack.c.0.s8 %v10370
    %v10372 = vlaneseq
    %v10373 = vshrl.u32 %v10372, 7
    %v10374 = vsub.s32 %v10371, %v10373
    %v10375 = vrot.slane %v9920, %v10374
    %v10377 = vunpack.c.l.s4 1983009808
    %v10378 = vunpack.c.0.s8 %v10377
    %v10379 = vlaneseq
    %v10380 = vshrl.u32 %v10379, 7
    %v10381 = vsub.s32 %v10378, %v10380
    %v10382 = vrot.slane %v10368, %v10381
    %v10383 = vcombine.high %v10375, %v10375
    %v10384 = vcombine.high %v10382, %v10382
    %v10385 = vcombine.high %v9921, %v9921
    %v10387 = vunpack.c.l.s4 1983009808
    %v10388 = vunpack.c.0.s8 %v10387
    %v10389 = vlaneseq
    %v10390 = vshrl.u32 %v10389, 7
    %v10391 = vsub.s32 %v10388, %v10390
    %v10392 = vrot.slane %v9921, %v10391
    %v10394 = vunpack.c.l.s4 1983009808
    %v10395 = vunpack.c.0.s8 %v10394
    %v10396 = vlaneseq
    %v10397 = vshrl.u32 %v10396, 7
    %v10398 = vsub.s32 %v10395, %v10397
    %v10399 = vrot.slane %v10385, %v10398
    %v10400 = vcombine.high %v10392, %v10392
    %v10401 = vcombine.high %v10399, %v10399
    %v10402 = vcombine.high %v9922, %v9922
    %v10404 = vunpack.c.l.s4 1983009808
    %v10405 = vunpack.c.0.s8 %v10404
    %v10406 = vlaneseq
    %v10407 = vshrl.u32 %v10406, 7
    %v10408 = vsub.s32 %v10405, %v10407
    %v10409 = vrot.slane %v9922, %v10408
    %v10411 = vunpack.c.l.s4 1983009808
    %v10412 = vunpack.c.0.s8 %v10411
    %v10413 = vlaneseq
    %v10414 = vshrl.u32 %v10413, 7
    %v10415 = vsub.s32 %v10412, %v10414
    %v10416 = vrot.slane %v10402, %v10415
    %v10417 = vcombine.high %v10409, %v10409
    %v10418 = vcombine.high %v10416, %v10416
    %v10419 = vcombine.high %v9923, %v9923
    %v10421 = vunpack.c.l.s4 1983009808
    %v10422 = vunpack.c.0.s8 %v10421
    %v10423 = vlaneseq
    %v10424 = vshrl.u32 %v10423, 7
    %v10425 = vsub.s32 %v10422, %v10424
    %v10426 = vrot.slane %v9923, %v10425
    %v10428 = vunpack.c.l.s4 1983009808
    %v10429 = vunpack.c.0.s8 %v10428
    %v10430 = vlaneseq
    %v10431 = vshrl.u32 %v10430, 7
    %v10432 = vsub.s32 %v10429, %v10431
    %v10433 = vrot.slane %v10419, %v10432
    %v10434 = vcombine.high %v10426, %v10426
    %v10435 = vcombine.high %v10433, %v10433
    %v10436 = vcombine.high %v9924, %v9924
    %v10438 = vunpack.c.l.s4 1983009808
    %v10439 = vunpack.c.0.s8 %v10438
    %v10440 = vlaneseq
    %v10441 = vshrl.u32 %v10440, 7
    %v10442 = vsub.s32 %v10439, %v10441
    %v10443 = vrot.slane %v9924, %v10442
    %v10445 = vunpack.c.l.s4 1983009808
    %v10446 = vunpack.c.0.s8 %v10445
    %v10447 = vlaneseq
    %v10448 = vshrl.u32 %v10447, 7
    %v10449 = vsub.s32 %v10446, %v10448
    %v10450 = vrot.slane %v10436, %v10449
    %v10451 = vcombine.high %v10443, %v10443
    %v10452 = vcombine.high %v10450, %v10450
    %v10453 = vcombine.high %v9925, %v9925
    %v10455 = vunpack.c.l.s4 1983009808
    %v10456 = vunpack.c.0.s8 %v10455
    %v10457 = vlaneseq
    %v10458 = vshrl.u32 %v10457, 7
    %v10459 = vsub.s32 %v10456, %v10458
    %v10460 = vrot.slane %v9925, %v10459
    %v10462 = vunpack.c.l.s4 1983009808
    %v10463 = vunpack.c.0.s8 %v10462
    %v10464 = vlaneseq
    %v10465 = vshrl.u32 %v10464, 7
    %v10466 = vsub.s32 %v10463, %v10465
    %v10467 = vrot.slane %v10453, %v10466
    %v10468 = vcombine.high %v10460, %v10460
    %v10469 = vcombine.high %v10467, %v10467
    %v10470 = vcombine.high %v9926, %v9926
    %v10472 = vunpack.c.l.s4 1983009808
    %v10473 = vunpack.c.0.s8 %v10472
    %v10474 = vlaneseq
    %v10475 = vshrl.u32 %v10474, 7
    %v10476 = vsub.s32 %v10473, %v10475
    %v10477 = vrot.slane %v9926, %v10476
    %v10479 = vunpack.c.l.s4 1983009808
    %v10480 = vunpack.c.0.s8 %v10479
    %v10481 = vlaneseq
    %v10482 = vshrl.u32 %v10481, 7
    %v10483 = vsub.s32 %v10480, %v10482
    %v10484 = vrot.slane %v10470, %v10483
    %v10485 = vcombine.high %v10477, %v10477
    %v10486 = vcombine.high %v10484, %v10484
    %v10487 = vcombine.high %v9927, %v9927
    %v10489 = vunpack.c.l.s4 1983009808
    %v10490 = vunpack.c.0.s8 %v10489
    %v10491 = vlaneseq
    %v10492 = vshrl.u32 %v10491, 7
    %v10493 = vsub.s32 %v10490, %v10492
    %v10494 = vrot.slane %v9927, %v10493
    %v10496 = vunpack.c.l.s4 1983009808
    %v10497 = vunpack.c.0.s8 %v10496
    %v10498 = vlaneseq
    %v10499 = vshrl.u32 %v10498, 7
    %v10500 = vsub.s32 %v10497, %v10499
    %v10501 = vrot.slane %v10487, %v10500
    %v10502 = vcombine.high %v10494, %v10494
    %v10503 = vcombine.high %v10501, %v10501
    %v10504 = vcombine.high %v9928, %v9928
    %v10506 = vunpack.c.l.s4 1983009808
    %v10507 = vunpack.c.0.s8 %v10506
    %v10508 = vlaneseq
    %v10509 = vshrl.u32 %v10508, 7
    %v10510 = vsub.s32 %v10507, %v10509
    %v10511 = vrot.slane %v9928, %v10510
    %v10513 = vunpack.c.l.s4 1983009808
    %v10514 = vunpack.c.0.s8 %v10513
    %v10515 = vlaneseq
    %v10516 = vshrl.u32 %v10515, 7
    %v10517 = vsub.s32 %v10514, %v10516
    %v10518 = vrot.slane %v10504, %v10517
    %v10519 = vcombine.high %v10511, %v10511
    %v10520 = vcombine.high %v10518, %v10518
    %v10521 = vcombine.high %v9929, %v9929
    %v10523 = vunpack.c.l.s4 1983009808
    %v10524 = vunpack.c.0.s8 %v10523
    %v10525 = vlaneseq
    %v10526 = vshrl.u32 %v10525, 7
    %v10527 = vsub.s32 %v10524, %v10526
    %v10528 = vrot.slane %v9929, %v10527
    %v10530 = vunpack.c.l.s4 1983009808
    %v10531 = vunpack.c.0.s8 %v10530
    %v10532 = vlaneseq
    %v10533 = vshrl.u32 %v10532, 7
    %v10534 = vsub.s32 %v10531, %v10533
    %v10535 = vrot.slane %v10521, %v10534
    %v10536 = vcombine.high %v10528, %v10528
    %v10537 = vcombine.high %v10535, %v10535
    %v10538 = vcombine.high %v9930, %v9930
    %v10540 = vunpack.c.l.s4 1983009808
    %v10541 = vunpack.c.0.s8 %v10540
    %v10542 = vlaneseq
    %v10543 = vshrl.u32 %v10542, 7
    %v10544 = vsub.s32 %v10541, %v10543
    %v10545 = vrot.slane %v9930, %v10544
    %v10547 = vunpack.c.l.s4 1983009808
    %v10548 = vunpack.c.0.s8 %v10547
    %v10549 = vlaneseq
    %v10550 = vshrl.u32 %v10549, 7
    %v10551 = vsub.s32 %v10548, %v10550
    %v10552 = vrot.slane %v10538, %v10551
    %v10553 = vcombine.high %v10545, %v10545
    %v10554 = vcombine.high %v10552, %v10552
    %v10555 = vcombine.high %v9931, %v9931
    %v10557 = vunpack.c.l.s4 1983009808
    %v10558 = vunpack.c.0.s8 %v10557
    %v10559 = vlaneseq
    %v10560 = vshrl.u32 %v10559, 7
    %v10561 = vsub.s32 %v10558, %v10560
    %v10562 = vrot.slane %v9931, %v10561
    %v10564 = vunpack.c.l.s4 1983009808
    %v10565 = vunpack.c.0.s8 %v10564
    %v10566 = vlaneseq
    %v10567 = vshrl.u32 %v10566, 7
    %v10568 = vsub.s32 %v10565, %v10567
    %v10569 = vrot.slane %v10555, %v10568
    %v10570 = vcombine.high %v10562, %v10562
    %v10571 = vcombine.high %v10569, %v10569
    %v10572 = vcombine.high %v9932, %v9932
    %v10574 = vunpack.c.l.s4 1983009808
    %v10575 = vunpack.c.0.s8 %v10574
    %v10576 = vlaneseq
    %v10577 = vshrl.u32 %v10576, 7
    %v10578 = vsub.s32 %v10575, %v10577
    %v10579 = vrot.slane %v9932, %v10578
    %v10581 = vunpack.c.l.s4 1983009808
    %v10582 = vunpack.c.0.s8 %v10581
    %v10583 = vlaneseq
    %v10584 = vshrl.u32 %v10583, 7
    %v10585 = vsub.s32 %v10582, %v10584
    %v10586 = vrot.slane %v10572, %v10585
    %v10587 = vcombine.high %v10579, %v10579
    %v10588 = vcombine.high %v10586, %v10586
    %v10589 = vcombine.high %v9933, %v9933
    %v10591 = vunpack.c.l.s4 1983009808
    %v10592 = vunpack.c.0.s8 %v10591
    %v10593 = vlaneseq
    %v10594 = vshrl.u32 %v10593, 7
    %v10595 = vsub.s32 %v10592, %v10594
    %v10596 = vrot.slane %v9933, %v10595
    %v10598 = vunpack.c.l.s4 1983009808
    %v10599 = vunpack.c.0.s8 %v10598
    %v10600 = vlaneseq
    %v10601 = vshrl.u32 %v10600, 7
    %v10602 = vsub.s32 %v10599, %v10601
    %v10603 = vrot.slane %v10589, %v10602
    %v10604 = vcombine.high %v10596, %v10596
    %v10605 = vcombine.high %v10603, %v10603
    %v10606 = vcombine.high %v9934, %v9934
    %v10608 = vunpack.c.l.s4 1983009808
    %v10609 = vunpack.c.0.s8 %v10608
    %v10610 = vlaneseq
    %v10611 = vshrl.u32 %v10610, 7
    %v10612 = vsub.s32 %v10609, %v10611
    %v10613 = vrot.slane %v9934, %v10612
    %v10615 = vunpack.c.l.s4 1983009808
    %v10616 = vunpack.c.0.s8 %v10615
    %v10617 = vlaneseq
    %v10618 = vshrl.u32 %v10617, 7
    %v10619 = vsub.s32 %v10616, %v10618
    %v10620 = vrot.slane %v10606, %v10619
    %v10621 = vcombine.high %v10613, %v10613
    %v10622 = vcombine.high %v10620, %v10620
    %v10623 = vcombine.high %v9935, %v9935
    %v10625 = vunpack.c.l.s4 1983009808
    %v10626 = vunpack.c.0.s8 %v10625
    %v10627 = vlaneseq
    %v10628 = vshrl.u32 %v10627, 7
    %v10629 = vsub.s32 %v10626, %v10628
    %v10630 = vrot.slane %v9935, %v10629
    %v10632 = vunpack.c.l.s4 1983009808
    %v10633 = vunpack.c.0.s8 %v10632
    %v10634 = vlaneseq
    %v10635 = vshrl.u32 %v10634, 7
    %v10636 = vsub.s32 %v10633, %v10635
    %v10637 = vrot.slane %v10623, %v10636
    %v10638 = vcombine.high %v10630, %v10630
    %v10639 = vcombine.high %v10637, %v10637
    %v10640 = vcombine.high %v9936, %v9936
    %v10642 = vunpack.c.l.s4 1983009808
    %v10643 = vunpack.c.0.s8 %v10642
    %v10644 = vlaneseq
    %v10645 = vshrl.u32 %v10644, 7
    %v10646 = vsub.s32 %v10643, %v10645
    %v10647 = vrot.slane %v9936, %v10646
    %v10649 = vunpack.c.l.s4 1983009808
    %v10650 = vunpack.c.0.s8 %v10649
    %v10651 = vlaneseq
    %v10652 = vshrl.u32 %v10651, 7
    %v10653 = vsub.s32 %v10650, %v10652
    %v10654 = vrot.slane %v10640, %v10653
    %v10655 = vcombine.high %v10647, %v10647
    %v10656 = vcombine.high %v10654, %v10654
    %v10657 = vcombine.high %v9937, %v9937
    %v10659 = vunpack.c.l.s4 1983009808
    %v10660 = vunpack.c.0.s8 %v10659
    %v10661 = vlaneseq
    %v10662 = vshrl.u32 %v10661, 7
    %v10663 = vsub.s32 %v10660, %v10662
    %v10664 = vrot.slane %v9937, %v10663
    %v10666 = vunpack.c.l.s4 1983009808
    %v10667 = vunpack.c.0.s8 %v10666
    %v10668 = vlaneseq
    %v10669 = vshrl.u32 %v10668, 7
    %v10670 = vsub.s32 %v10667, %v10669
    %v10671 = vrot.slane %v10657, %v10670
    %v10672 = vcombine.high %v10664, %v10664
    %v10673 = vcombine.high %v10671, %v10671
    %v10674 = vcombine.high %v9938, %v9938
    %v10676 = vunpack.c.l.s4 1983009808
    %v10677 = vunpack.c.0.s8 %v10676
    %v10678 = vlaneseq
    %v10679 = vshrl.u32 %v10678, 7
    %v10680 = vsub.s32 %v10677, %v10679
    %v10681 = vrot.slane %v9938, %v10680
    %v10683 = vunpack.c.l.s4 1983009808
    %v10684 = vunpack.c.0.s8 %v10683
    %v10685 = vlaneseq
    %v10686 = vshrl.u32 %v10685, 7
    %v10687 = vsub.s32 %v10684, %v10686
    %v10688 = vrot.slane %v10674, %v10687
    %v10689 = vcombine.high %v10681, %v10681
    %v10690 = vcombine.high %v10688, %v10688
    %v10691 = vcombine.high %v9939, %v9939
    %v10693 = vunpack.c.l.s4 1983009808
    %v10694 = vunpack.c.0.s8 %v10693
    %v10695 = vlaneseq
    %v10696 = vshrl.u32 %v10695, 7
    %v10697 = vsub.s32 %v10694, %v10696
    %v10698 = vrot.slane %v9939, %v10697
    %v10700 = vunpack.c.l.s4 1983009808
    %v10701 = vunpack.c.0.s8 %v10700
    %v10702 = vlaneseq
    %v10703 = vshrl.u32 %v10702, 7
    %v10704 = vsub.s32 %v10701, %v10703
    %v10705 = vrot.slane %v10691, %v10704
    %v10706 = vcombine.high %v10698, %v10698
    %v10707 = vcombine.high %v10705, %v10705
    %v10708 = vcombine.high %v9940, %v9940
    %v10710 = vunpack.c.l.s4 1983009808
    %v10711 = vunpack.c.0.s8 %v10710
    %v10712 = vlaneseq
    %v10713 = vshrl.u32 %v10712, 7
    %v10714 = vsub.s32 %v10711, %v10713
    %v10715 = vrot.slane %v9940, %v10714
    %v10717 = vunpack.c.l.s4 1983009808
    %v10718 = vunpack.c.0.s8 %v10717
    %v10719 = vlaneseq
    %v10720 = vshrl.u32 %v10719, 7
    %v10721 = vsub.s32 %v10718, %v10720
    %v10722 = vrot.slane %v10708, %v10721
    %v10723 = vcombine.high %v10715, %v10715
    %v10724 = vcombine.high %v10722, %v10722
    %v10725 = vcombine.high %v9941, %v9941
    %v10727 = vunpack.c.l.s4 1983009808
    %v10728 = vunpack.c.0.s8 %v10727
    %v10729 = vlaneseq
    %v10730 = vshrl.u32 %v10729, 7
    %v10731 = vsub.s32 %v10728, %v10730
    %v10732 = vrot.slane %v9941, %v10731
    %v10734 = vunpack.c.l.s4 1983009808
    %v10735 = vunpack.c.0.s8 %v10734
    %v10736 = vlaneseq
    %v10737 = vshrl.u32 %v10736, 7
    %v10738 = vsub.s32 %v10735, %v10737
    %v10739 = vrot.slane %v10725, %v10738
    %v10740 = vcombine.high %v10732, %v10732
    %v10741 = vcombine.high %v10739, %v10739
    %v10742 = vcombine.high %v9942, %v9942
    %v10744 = vunpack.c.l.s4 1983009808
    %v10745 = vunpack.c.0.s8 %v10744
    %v10746 = vlaneseq
    %v10747 = vshrl.u32 %v10746, 7
    %v10748 = vsub.s32 %v10745, %v10747
    %v10749 = vrot.slane %v9942, %v10748
    %v10751 = vunpack.c.l.s4 1983009808
    %v10752 = vunpack.c.0.s8 %v10751
    %v10753 = vlaneseq
    %v10754 = vshrl.u32 %v10753, 7
    %v10755 = vsub.s32 %v10752, %v10754
    %v10756 = vrot.slane %v10742, %v10755
    %v10757 = vcombine.high %v10749, %v10749
    %v10758 = vcombine.high %v10756, %v10756
    %v10759 = vcombine.high %v9943, %v9943
    %v10761 = vunpack.c.l.s4 1983009808
    %v10762 = vunpack.c.0.s8 %v10761
    %v10763 = vlaneseq
    %v10764 = vshrl.u32 %v10763, 7
    %v10765 = vsub.s32 %v10762, %v10764
    %v10766 = vrot.slane %v9943, %v10765
    %v10768 = vunpack.c.l.s4 1983009808
    %v10769 = vunpack.c.0.s8 %v10768
    %v10770 = vlaneseq
    %v10771 = vshrl.u32 %v10770, 7
    %v10772 = vsub.s32 %v10769, %v10771
    %v10773 = vrot.slane %v10759, %v10772
    %v10774 = vcombine.high %v10766, %v10766
    %v10775 = vcombine.high %v10773, %v10773
    %v10776 = vcombine.high %v9944, %v9944
    %v10778 = vunpack.c.l.s4 1983009808
    %v10779 = vunpack.c.0.s8 %v10778
    %v10780 = vlaneseq
    %v10781 = vshrl.u32 %v10780, 7
    %v10782 = vsub.s32 %v10779, %v10781
    %v10783 = vrot.slane %v9944, %v10782
    %v10785 = vunpack.c.l.s4 1983009808
    %v10786 = vunpack.c.0.s8 %v10785
    %v10787 = vlaneseq
    %v10788 = vshrl.u32 %v10787, 7
    %v10789 = vsub.s32 %v10786, %v10788
    %v10790 = vrot.slane %v10776, %v10789
    %v10791 = vcombine.high %v10783, %v10783
    %v10792 = vcombine.high %v10790, %v10790
    %v10793 = vcombine.high %v9945, %v9945
    %v10795 = vunpack.c.l.s4 1983009808
    %v10796 = vunpack.c.0.s8 %v10795
    %v10797 = vlaneseq
    %v10798 = vshrl.u32 %v10797, 7
    %v10799 = vsub.s32 %v10796, %v10798
    %v10800 = vrot.slane %v9945, %v10799
    %v10802 = vunpack.c.l.s4 1983009808
    %v10803 = vunpack.c.0.s8 %v10802
    %v10804 = vlaneseq
    %v10805 = vshrl.u32 %v10804, 7
    %v10806 = vsub.s32 %v10803, %v10805
    %v10807 = vrot.slane %v10793, %v10806
    %v10808 = vcombine.high %v10800, %v10800
    %v10809 = vcombine.high %v10807, %v10807
    %v10810 = vcombine.high %v9946, %v9946
    %v10812 = vunpack.c.l.s4 1983009808
    %v10813 = vunpack.c.0.s8 %v10812
    %v10814 = vlaneseq
    %v10815 = vshrl.u32 %v10814, 7
    %v10816 = vsub.s32 %v10813, %v10815
    %v10817 = vrot.slane %v9946, %v10816
    %v10819 = vunpack.c.l.s4 1983009808
    %v10820 = vunpack.c.0.s8 %v10819
    %v10821 = vlaneseq
    %v10822 = vshrl.u32 %v10821, 7
    %v10823 = vsub.s32 %v10820, %v10822
    %v10824 = vrot.slane %v10810, %v10823
    %v10825 = vcombine.high %v10817, %v10817
    %v10826 = vcombine.high %v10824, %v10824
    %v10827 = vcombine.high %v9947, %v9947
    %v10829 = vunpack.c.l.s4 1983009808
    %v10830 = vunpack.c.0.s8 %v10829
    %v10831 = vlaneseq
    %v10832 = vshrl.u32 %v10831, 7
    %v10833 = vsub.s32 %v10830, %v10832
    %v10834 = vrot.slane %v9947, %v10833
    %v10836 = vunpack.c.l.s4 1983009808
    %v10837 = vunpack.c.0.s8 %v10836
    %v10838 = vlaneseq
    %v10839 = vshrl.u32 %v10838, 7
    %v10840 = vsub.s32 %v10837, %v10839
    %v10841 = vrot.slane %v10827, %v10840
    %v10842 = vcombine.high %v10834, %v10834
    %v10843 = vcombine.high %v10841, %v10841
    %v10844 = vcombine.high %v9948, %v9948
    %v10846 = vunpack.c.l.s4 1983009808
    %v10847 = vunpack.c.0.s8 %v10846
    %v10848 = vlaneseq
    %v10849 = vshrl.u32 %v10848, 7
    %v10850 = vsub.s32 %v10847, %v10849
    %v10851 = vrot.slane %v9948, %v10850
    %v10853 = vunpack.c.l.s4 1983009808
    %v10854 = vunpack.c.0.s8 %v10853
    %v10855 = vlaneseq
    %v10856 = vshrl.u32 %v10855, 7
    %v10857 = vsub.s32 %v10854, %v10856
    %v10858 = vrot.slane %v10844, %v10857
    %v10859 = vcombine.high %v10851, %v10851
    %v10860 = vcombine.high %v10858, %v10858
    %v10861 = vcombine.high %v9949, %v9949
    %v10863 = vunpack.c.l.s4 1983009808
    %v10864 = vunpack.c.0.s8 %v10863
    %v10865 = vlaneseq
    %v10866 = vshrl.u32 %v10865, 7
    %v10867 = vsub.s32 %v10864, %v10866
    %v10868 = vrot.slane %v9949, %v10867
    %v10870 = vunpack.c.l.s4 1983009808
    %v10871 = vunpack.c.0.s8 %v10870
    %v10872 = vlaneseq
    %v10873 = vshrl.u32 %v10872, 7
    %v10874 = vsub.s32 %v10871, %v10873
    %v10875 = vrot.slane %v10861, %v10874
    %v10876 = vcombine.high %v10868, %v10868
    %v10877 = vcombine.high %v10875, %v10875
    %v10878 = vcombine.high %v9950, %v9950
    %v10880 = vunpack.c.l.s4 1983009808
    %v10881 = vunpack.c.0.s8 %v10880
    %v10882 = vlaneseq
    %v10883 = vshrl.u32 %v10882, 7
    %v10884 = vsub.s32 %v10881, %v10883
    %v10885 = vrot.slane %v9950, %v10884
    %v10887 = vunpack.c.l.s4 1983009808
    %v10888 = vunpack.c.0.s8 %v10887
    %v10889 = vlaneseq
    %v10890 = vshrl.u32 %v10889, 7
    %v10891 = vsub.s32 %v10888, %v10890
    %v10892 = vrot.slane %v10878, %v10891
    %v10893 = vcombine.high %v10885, %v10885
    %v10894 = vcombine.high %v10892, %v10892
    %v10895 = vcombine.high %v9951, %v9951
    %v10897 = vunpack.c.l.s4 1983009808
    %v10898 = vunpack.c.0.s8 %v10897
    %v10899 = vlaneseq
    %v10900 = vshrl.u32 %v10899, 7
    %v10901 = vsub.s32 %v10898, %v10900
    %v10902 = vrot.slane %v9951, %v10901
    %v10904 = vunpack.c.l.s4 1983009808
    %v10905 = vunpack.c.0.s8 %v10904
    %v10906 = vlaneseq
    %v10907 = vshrl.u32 %v10906, 7
    %v10908 = vsub.s32 %v10905, %v10907
    %v10909 = vrot.slane %v10895, %v10908
    %v10910 = vcombine.high %v10902, %v10902
    %v10911 = vcombine.high %v10909, %v10909
    %v10912 = vcombine.high %v9952, %v9952
    %v10914 = vunpack.c.l.s4 1983009808
    %v10915 = vunpack.c.0.s8 %v10914
    %v10916 = vlaneseq
    %v10917 = vshrl.u32 %v10916, 7
    %v10918 = vsub.s32 %v10915, %v10917
    %v10919 = vrot.slane %v9952, %v10918
    %v10921 = vunpack.c.l.s4 1983009808
    %v10922 = vunpack.c.0.s8 %v10921
    %v10923 = vlaneseq
    %v10924 = vshrl.u32 %v10923, 7
    %v10925 = vsub.s32 %v10922, %v10924
    %v10926 = vrot.slane %v10912, %v10925
    %v10927 = vcombine.high %v10919, %v10919
    %v10928 = vcombine.high %v10926, %v10926
    %v10929 = vcombine.high %v9953, %v9953
    %v10931 = vunpack.c.l.s4 1983009808
    %v10932 = vunpack.c.0.s8 %v10931
    %v10933 = vlaneseq
    %v10934 = vshrl.u32 %v10933, 7
    %v10935 = vsub.s32 %v10932, %v10934
    %v10936 = vrot.slane %v9953, %v10935
    %v10938 = vunpack.c.l.s4 1983009808
    %v10939 = vunpack.c.0.s8 %v10938
    %v10940 = vlaneseq
    %v10941 = vshrl.u32 %v10940, 7
    %v10942 = vsub.s32 %v10939, %v10941
    %v10943 = vrot.slane %v10929, %v10942
    %v10944 = vcombine.high %v10936, %v10936
    %v10945 = vcombine.high %v10943, %v10943
    %v10946 = vcombine.high %v9954, %v9954
    %v10948 = vunpack.c.l.s4 1983009808
    %v10949 = vunpack.c.0.s8 %v10948
    %v10950 = vlaneseq
    %v10951 = vshrl.u32 %v10950, 7
    %v10952 = vsub.s32 %v10949, %v10951
    %v10953 = vrot.slane %v9954, %v10952
    %v10955 = vunpack.c.l.s4 1983009808
    %v10956 = vunpack.c.0.s8 %v10955
    %v10957 = vlaneseq
    %v10958 = vshrl.u32 %v10957, 7
    %v10959 = vsub.s32 %v10956, %v10958
    %v10960 = vrot.slane %v10946, %v10959
    %v10961 = vcombine.high %v10953, %v10953
    %v10962 = vcombine.high %v10960, %v10960
    %v10963 = vcombine.high %v9955, %v9955
    %v10965 = vunpack.c.l.s4 1983009808
    %v10966 = vunpack.c.0.s8 %v10965
    %v10967 = vlaneseq
    %v10968 = vshrl.u32 %v10967, 7
    %v10969 = vsub.s32 %v10966, %v10968
    %v10970 = vrot.slane %v9955, %v10969
    %v10972 = vunpack.c.l.s4 1983009808
    %v10973 = vunpack.c.0.s8 %v10972
    %v10974 = vlaneseq
    %v10975 = vshrl.u32 %v10974, 7
    %v10976 = vsub.s32 %v10973, %v10975
    %v10977 = vrot.slane %v10963, %v10976
    %v10978 = vcombine.high %v10970, %v10970
    %v10979 = vcombine.high %v10977, %v10977
    %v10980 = vcombine.high %v9956, %v9956
    %v10982 = vunpack.c.l.s4 1983009808
    %v10983 = vunpack.c.0.s8 %v10982
    %v10984 = vlaneseq
    %v10985 = vshrl.u32 %v10984, 7
    %v10986 = vsub.s32 %v10983, %v10985
    %v10987 = vrot.slane %v9956, %v10986
    %v10989 = vunpack.c.l.s4 1983009808
    %v10990 = vunpack.c.0.s8 %v10989
    %v10991 = vlaneseq
    %v10992 = vshrl.u32 %v10991, 7
    %v10993 = vsub.s32 %v10990, %v10992
    %v10994 = vrot.slane %v10980, %v10993
    %v10995 = vcombine.high %v10987, %v10987
    %v10996 = vcombine.high %v10994, %v10994
    %v10997 = vcombine.high %v9957, %v9957
    %v10999 = vunpack.c.l.s4 1983009808
    %v11000 = vunpack.c.0.s8 %v10999
    %v11001 = vlaneseq
    %v11002 = vshrl.u32 %v11001, 7
    %v11003 = vsub.s32 %v11000, %v11002
    %v11004 = vrot.slane %v9957, %v11003
    %v11006 = vunpack.c.l.s4 1983009808
    %v11007 = vunpack.c.0.s8 %v11006
    %v11008 = vlaneseq
    %v11009 = vshrl.u32 %v11008, 7
    %v11010 = vsub.s32 %v11007, %v11009
    %v11011 = vrot.slane %v10997, %v11010
    %v11012 = vcombine.high %v11004, %v11004
    %v11013 = vcombine.high %v11011, %v11011
    %v11014 = vcombine.high %v9958, %v9958
    %v11016 = vunpack.c.l.s4 1983009808
    %v11017 = vunpack.c.0.s8 %v11016
    %v11018 = vlaneseq
    %v11019 = vshrl.u32 %v11018, 7
    %v11020 = vsub.s32 %v11017, %v11019
    %v11021 = vrot.slane %v9958, %v11020
    %v11023 = vunpack.c.l.s4 1983009808
    %v11024 = vunpack.c.0.s8 %v11023
    %v11025 = vlaneseq
    %v11026 = vshrl.u32 %v11025, 7
    %v11027 = vsub.s32 %v11024, %v11026
    %v11028 = vrot.slane %v11014, %v11027
    %v11029 = vcombine.high %v11021, %v11021
    %v11030 = vcombine.high %v11028, %v11028
    %v11031 = vcombine.high %v9959, %v9959
    %v11033 = vunpack.c.l.s4 1983009808
    %v11034 = vunpack.c.0.s8 %v11033
    %v11035 = vlaneseq
    %v11036 = vshrl.u32 %v11035, 7
    %v11037 = vsub.s32 %v11034, %v11036
    %v11038 = vrot.slane %v9959, %v11037
    %v11040 = vunpack.c.l.s4 1983009808
    %v11041 = vunpack.c.0.s8 %v11040
    %v11042 = vlaneseq
    %v11043 = vshrl.u32 %v11042, 7
    %v11044 = vsub.s32 %v11041, %v11043
    %v11045 = vrot.slane %v11031, %v11044
    %v11046 = vcombine.high %v11038, %v11038
    %v11047 = vcombine.high %v11045, %v11045
    %v11048 = vcombine.high %v9960, %v9960
    %v11050 = vunpack.c.l.s4 1983009808
    %v11051 = vunpack.c.0.s8 %v11050
    %v11052 = vlaneseq
    %v11053 = vshrl.u32 %v11052, 7
    %v11054 = vsub.s32 %v11051, %v11053
    %v11055 = vrot.slane %v9960, %v11054
    %v11057 = vunpack.c.l.s4 1983009808
    %v11058 = vunpack.c.0.s8 %v11057
    %v11059 = vlaneseq
    %v11060 = vshrl.u32 %v11059, 7
    %v11061 = vsub.s32 %v11058, %v11060
    %v11062 = vrot.slane %v11048, %v11061
    %v11063 = vcombine.high %v11055, %v11055
    %v11064 = vcombine.high %v11062, %v11062
    %v11065 = vcombine.high %v9961, %v9961
    %v11067 = vunpack.c.l.s4 1983009808
    %v11068 = vunpack.c.0.s8 %v11067
    %v11069 = vlaneseq
    %v11070 = vshrl.u32 %v11069, 7
    %v11071 = vsub.s32 %v11068, %v11070
    %v11072 = vrot.slane %v9961, %v11071
    %v11074 = vunpack.c.l.s4 1983009808
    %v11075 = vunpack.c.0.s8 %v11074
    %v11076 = vlaneseq
    %v11077 = vshrl.u32 %v11076, 7
    %v11078 = vsub.s32 %v11075, %v11077
    %v11079 = vrot.slane %v11065, %v11078
    %v11080 = vcombine.high %v11072, %v11072
    %v11081 = vcombine.high %v11079, %v11079
    %v11082 = vcombine.high %v9962, %v9962
    %v11084 = vunpack.c.l.s4 1983009808
    %v11085 = vunpack.c.0.s8 %v11084
    %v11086 = vlaneseq
    %v11087 = vshrl.u32 %v11086, 7
    %v11088 = vsub.s32 %v11085, %v11087
    %v11089 = vrot.slane %v9962, %v11088
    %v11091 = vunpack.c.l.s4 1983009808
    %v11092 = vunpack.c.0.s8 %v11091
    %v11093 = vlaneseq
    %v11094 = vshrl.u32 %v11093, 7
    %v11095 = vsub.s32 %v11092, %v11094
    %v11096 = vrot.slane %v11082, %v11095
    %v11097 = vcombine.high %v11089, %v11089
    %v11098 = vcombine.high %v11096, %v11096
    %v11099 = vcombine.high %v9963, %v9963
    %v11101 = vunpack.c.l.s4 1983009808
    %v11102 = vunpack.c.0.s8 %v11101
    %v11103 = vlaneseq
    %v11104 = vshrl.u32 %v11103, 7
    %v11105 = vsub.s32 %v11102, %v11104
    %v11106 = vrot.slane %v9963, %v11105
    %v11108 = vunpack.c.l.s4 1983009808
    %v11109 = vunpack.c.0.s8 %v11108
    %v11110 = vlaneseq
    %v11111 = vshrl.u32 %v11110, 7
    %v11112 = vsub.s32 %v11109, %v11111
    %v11113 = vrot.slane %v11099, %v11112
    %v11114 = vcombine.high %v11106, %v11106
    %v11115 = vcombine.high %v11113, %v11113
    %v11116 = vcombine.high %v9964, %v9964
    %v11118 = vunpack.c.l.s4 1983009808
    %v11119 = vunpack.c.0.s8 %v11118
    %v11120 = vlaneseq
    %v11121 = vshrl.u32 %v11120, 7
    %v11122 = vsub.s32 %v11119, %v11121
    %v11123 = vrot.slane %v9964, %v11122
    %v11125 = vunpack.c.l.s4 1983009808
    %v11126 = vunpack.c.0.s8 %v11125
    %v11127 = vlaneseq
    %v11128 = vshrl.u32 %v11127, 7
    %v11129 = vsub.s32 %v11126, %v11128
    %v11130 = vrot.slane %v11116, %v11129
    %v11131 = vcombine.high %v11123, %v11123
    %v11132 = vcombine.high %v11130, %v11130
    %v11133 = vcombine.high %v9965, %v9965
    %v11135 = vunpack.c.l.s4 1983009808
    %v11136 = vunpack.c.0.s8 %v11135
    %v11137 = vlaneseq
    %v11138 = vshrl.u32 %v11137, 7
    %v11139 = vsub.s32 %v11136, %v11138
    %v11140 = vrot.slane %v9965, %v11139
    %v11142 = vunpack.c.l.s4 1983009808
    %v11143 = vunpack.c.0.s8 %v11142
    %v11144 = vlaneseq
    %v11145 = vshrl.u32 %v11144, 7
    %v11146 = vsub.s32 %v11143, %v11145
    %v11147 = vrot.slane %v11133, %v11146
    %v11148 = vcombine.high %v11140, %v11140
    %v11149 = vcombine.high %v11147, %v11147
    %v11150 = vcombine.high %v9966, %v9966
    %v11152 = vunpack.c.l.s4 1983009808
    %v11153 = vunpack.c.0.s8 %v11152
    %v11154 = vlaneseq
    %v11155 = vshrl.u32 %v11154, 7
    %v11156 = vsub.s32 %v11153, %v11155
    %v11157 = vrot.slane %v9966, %v11156
    %v11159 = vunpack.c.l.s4 1983009808
    %v11160 = vunpack.c.0.s8 %v11159
    %v11161 = vlaneseq
    %v11162 = vshrl.u32 %v11161, 7
    %v11163 = vsub.s32 %v11160, %v11162
    %v11164 = vrot.slane %v11150, %v11163
    %v11165 = vcombine.high %v11157, %v11157
    %v11166 = vcombine.high %v11164, %v11164
    %v11167 = vcombine.high %v9967, %v9967
    %v11169 = vunpack.c.l.s4 1983009808
    %v11170 = vunpack.c.0.s8 %v11169
    %v11171 = vlaneseq
    %v11172 = vshrl.u32 %v11171, 7
    %v11173 = vsub.s32 %v11170, %v11172
    %v11174 = vrot.slane %v9967, %v11173
    %v11176 = vunpack.c.l.s4 1983009808
    %v11177 = vunpack.c.0.s8 %v11176
    %v11178 = vlaneseq
    %v11179 = vshrl.u32 %v11178, 7
    %v11180 = vsub.s32 %v11177, %v11179
    %v11181 = vrot.slane %v11167, %v11180
    %v11182 = vcombine.high %v11174, %v11174
    %v11183 = vcombine.high %v11181, %v11181
    %v11184 = vcombine.high %v9968, %v9968
    %v11186 = vunpack.c.l.s4 1983009808
    %v11187 = vunpack.c.0.s8 %v11186
    %v11188 = vlaneseq
    %v11189 = vshrl.u32 %v11188, 7
    %v11190 = vsub.s32 %v11187, %v11189
    %v11191 = vrot.slane %v9968, %v11190
    %v11193 = vunpack.c.l.s4 1983009808
    %v11194 = vunpack.c.0.s8 %v11193
    %v11195 = vlaneseq
    %v11196 = vshrl.u32 %v11195, 7
    %v11197 = vsub.s32 %v11194, %v11196
    %v11198 = vrot.slane %v11184, %v11197
    %v11199 = vcombine.high %v11191, %v11191
    %v11200 = vcombine.high %v11198, %v11198
    %v11201 = vcombine.high %v9969, %v9969
    %v11203 = vunpack.c.l.s4 1983009808
    %v11204 = vunpack.c.0.s8 %v11203
    %v11205 = vlaneseq
    %v11206 = vshrl.u32 %v11205, 7
    %v11207 = vsub.s32 %v11204, %v11206
    %v11208 = vrot.slane %v9969, %v11207
    %v11210 = vunpack.c.l.s4 1983009808
    %v11211 = vunpack.c.0.s8 %v11210
    %v11212 = vlaneseq
    %v11213 = vshrl.u32 %v11212, 7
    %v11214 = vsub.s32 %v11211, %v11213
    %v11215 = vrot.slane %v11201, %v11214
    %v11216 = vcombine.high %v11208, %v11208
    %v11217 = vcombine.high %v11215, %v11215
    %v11218 = vcombine.high %v9970, %v9970
    %v11220 = vunpack.c.l.s4 1983009808
    %v11221 = vunpack.c.0.s8 %v11220
    %v11222 = vlaneseq
    %v11223 = vshrl.u32 %v11222, 7
    %v11224 = vsub.s32 %v11221, %v11223
    %v11225 = vrot.slane %v9970, %v11224
    %v11227 = vunpack.c.l.s4 1983009808
    %v11228 = vunpack.c.0.s8 %v11227
    %v11229 = vlaneseq
    %v11230 = vshrl.u32 %v11229, 7
    %v11231 = vsub.s32 %v11228, %v11230
    %v11232 = vrot.slane %v11218, %v11231
    %v11233 = vcombine.high %v11225, %v11225
    %v11234 = vcombine.high %v11232, %v11232
    %v11235 = vcombine.high %v9971, %v9971
    %v11237 = vunpack.c.l.s4 1983009808
    %v11238 = vunpack.c.0.s8 %v11237
    %v11239 = vlaneseq
    %v11240 = vshrl.u32 %v11239, 7
    %v11241 = vsub.s32 %v11238, %v11240
    %v11242 = vrot.slane %v9971, %v11241
    %v11244 = vunpack.c.l.s4 1983009808
    %v11245 = vunpack.c.0.s8 %v11244
    %v11246 = vlaneseq
    %v11247 = vshrl.u32 %v11246, 7
    %v11248 = vsub.s32 %v11245, %v11247
    %v11249 = vrot.slane %v11235, %v11248
    %v11250 = vcombine.high %v11242, %v11242
    %v11251 = vcombine.high %v11249, %v11249
    %v11252 = vcombine.high %v9972, %v9972
    %v11254 = vunpack.c.l.s4 1983009808
    %v11255 = vunpack.c.0.s8 %v11254
    %v11256 = vlaneseq
    %v11257 = vshrl.u32 %v11256, 7
    %v11258 = vsub.s32 %v11255, %v11257
    %v11259 = vrot.slane %v9972, %v11258
    %v11261 = vunpack.c.l.s4 1983009808
    %v11262 = vunpack.c.0.s8 %v11261
    %v11263 = vlaneseq
    %v11264 = vshrl.u32 %v11263, 7
    %v11265 = vsub.s32 %v11262, %v11264
    %v11266 = vrot.slane %v11252, %v11265
    %v11267 = vcombine.high %v11259, %v11259
    %v11268 = vcombine.high %v11266, %v11266
    %v11269 = vcombine.high %v9973, %v9973
    %v11271 = vunpack.c.l.s4 1983009808
    %v11272 = vunpack.c.0.s8 %v11271
    %v11273 = vlaneseq
    %v11274 = vshrl.u32 %v11273, 7
    %v11275 = vsub.s32 %v11272, %v11274
    %v11276 = vrot.slane %v9973, %v11275
    %v11278 = vunpack.c.l.s4 1983009808
    %v11279 = vunpack.c.0.s8 %v11278
    %v11280 = vlaneseq
    %v11281 = vshrl.u32 %v11280, 7
    %v11282 = vsub.s32 %v11279, %v11281
    %v11283 = vrot.slane %v11269, %v11282
    %v11284 = vcombine.high %v11276, %v11276
    %v11285 = vcombine.high %v11283, %v11283
    %v11286 = vcombine.high %v9974, %v9974
    %v11288 = vunpack.c.l.s4 1983009808
    %v11289 = vunpack.c.0.s8 %v11288
    %v11290 = vlaneseq
    %v11291 = vshrl.u32 %v11290, 7
    %v11292 = vsub.s32 %v11289, %v11291
    %v11293 = vrot.slane %v9974, %v11292
    %v11295 = vunpack.c.l.s4 1983009808
    %v11296 = vunpack.c.0.s8 %v11295
    %v11297 = vlaneseq
    %v11298 = vshrl.u32 %v11297, 7
    %v11299 = vsub.s32 %v11296, %v11298
    %v11300 = vrot.slane %v11286, %v11299
    %v11301 = vcombine.high %v11293, %v11293
    %v11302 = vcombine.high %v11300, %v11300
    %v11303 = vcombine.high %v9975, %v9975
    %v11305 = vunpack.c.l.s4 1983009808
    %v11306 = vunpack.c.0.s8 %v11305
    %v11307 = vlaneseq
    %v11308 = vshrl.u32 %v11307, 7
    %v11309 = vsub.s32 %v11306, %v11308
    %v11310 = vrot.slane %v9975, %v11309
    %v11312 = vunpack.c.l.s4 1983009808
    %v11313 = vunpack.c.0.s8 %v11312
    %v11314 = vlaneseq
    %v11315 = vshrl.u32 %v11314, 7
    %v11316 = vsub.s32 %v11313, %v11315
    %v11317 = vrot.slane %v11303, %v11316
    %v11318 = vcombine.high %v11310, %v11310
    %v11319 = vcombine.high %v11317, %v11317
    %v11320 = vcombine.high %v9976, %v9976
    %v11322 = vunpack.c.l.s4 1983009808
    %v11323 = vunpack.c.0.s8 %v11322
    %v11324 = vlaneseq
    %v11325 = vshrl.u32 %v11324, 7
    %v11326 = vsub.s32 %v11323, %v11325
    %v11327 = vrot.slane %v9976, %v11326
    %v11329 = vunpack.c.l.s4 1983009808
    %v11330 = vunpack.c.0.s8 %v11329
    %v11331 = vlaneseq
    %v11332 = vshrl.u32 %v11331, 7
    %v11333 = vsub.s32 %v11330, %v11332
    %v11334 = vrot.slane %v11320, %v11333
    %v11335 = vcombine.high %v11327, %v11327
    %v11336 = vcombine.high %v11334, %v11334
    %v11337 = vcombine.high %v9977, %v9977
    %v11339 = vunpack.c.l.s4 1983009808
    %v11340 = vunpack.c.0.s8 %v11339
    %v11341 = vlaneseq
    %v11342 = vshrl.u32 %v11341, 7
    %v11343 = vsub.s32 %v11340, %v11342
    %v11344 = vrot.slane %v9977, %v11343
    %v11346 = vunpack.c.l.s4 1983009808
    %v11347 = vunpack.c.0.s8 %v11346
    %v11348 = vlaneseq
    %v11349 = vshrl.u32 %v11348, 7
    %v11350 = vsub.s32 %v11347, %v11349
    %v11351 = vrot.slane %v11337, %v11350
    %v11352 = vcombine.high %v11344, %v11344
    %v11353 = vcombine.high %v11351, %v11351
    %v11354 = vcombine.high %v9978, %v9978
    %v11356 = vunpack.c.l.s4 1983009808
    %v11357 = vunpack.c.0.s8 %v11356
    %v11358 = vlaneseq
    %v11359 = vshrl.u32 %v11358, 7
    %v11360 = vsub.s32 %v11357, %v11359
    %v11361 = vrot.slane %v9978, %v11360
    %v11363 = vunpack.c.l.s4 1983009808
    %v11364 = vunpack.c.0.s8 %v11363
    %v11365 = vlaneseq
    %v11366 = vshrl.u32 %v11365, 7
    %v11367 = vsub.s32 %v11364, %v11366
    %v11368 = vrot.slane %v11354, %v11367
    %v11369 = vcombine.high %v11361, %v11361
    %v11370 = vcombine.high %v11368, %v11368
    %v11371 = vcombine.high %v9979, %v9979
    %v11373 = vunpack.c.l.s4 1983009808
    %v11374 = vunpack.c.0.s8 %v11373
    %v11375 = vlaneseq
    %v11376 = vshrl.u32 %v11375, 7
    %v11377 = vsub.s32 %v11374, %v11376
    %v11378 = vrot.slane %v9979, %v11377
    %v11380 = vunpack.c.l.s4 1983009808
    %v11381 = vunpack.c.0.s8 %v11380
    %v11382 = vlaneseq
    %v11383 = vshrl.u32 %v11382, 7
    %v11384 = vsub.s32 %v11381, %v11383
    %v11385 = vrot.slane %v11371, %v11384
    %v11386 = vcombine.high %v11378, %v11378
    %v11387 = vcombine.high %v11385, %v11385
    %v11388 = vcombine.high %v9980, %v9980
    %v11390 = vunpack.c.l.s4 1983009808
    %v11391 = vunpack.c.0.s8 %v11390
    %v11392 = vlaneseq
    %v11393 = vshrl.u32 %v11392, 7
    %v11394 = vsub.s32 %v11391, %v11393
    %v11395 = vrot.slane %v9980, %v11394
    %v11397 = vunpack.c.l.s4 1983009808
    %v11398 = vunpack.c.0.s8 %v11397
    %v11399 = vlaneseq
    %v11400 = vshrl.u32 %v11399, 7
    %v11401 = vsub.s32 %v11398, %v11400
    %v11402 = vrot.slane %v11388, %v11401
    %v11403 = vcombine.high %v11395, %v11395
    %v11404 = vcombine.high %v11402, %v11402
    %v11405 = vcombine.high %v9981, %v9981
    %v11407 = vunpack.c.l.s4 1983009808
    %v11408 = vunpack.c.0.s8 %v11407
    %v11409 = vlaneseq
    %v11410 = vshrl.u32 %v11409, 7
    %v11411 = vsub.s32 %v11408, %v11410
    %v11412 = vrot.slane %v9981, %v11411
    %v11414 = vunpack.c.l.s4 1983009808
    %v11415 = vunpack.c.0.s8 %v11414
    %v11416 = vlaneseq
    %v11417 = vshrl.u32 %v11416, 7
    %v11418 = vsub.s32 %v11415, %v11417
    %v11419 = vrot.slane %v11405, %v11418
    %v11420 = vcombine.high %v11412, %v11412
    %v11421 = vcombine.high %v11419, %v11419
    %v11422 = vcombine.high %v9982, %v9982
    %v11424 = vunpack.c.l.s4 1983009808
    %v11425 = vunpack.c.0.s8 %v11424
    %v11426 = vlaneseq
    %v11427 = vshrl.u32 %v11426, 7
    %v11428 = vsub.s32 %v11425, %v11427
    %v11429 = vrot.slane %v9982, %v11428
    %v11431 = vunpack.c.l.s4 1983009808
    %v11432 = vunpack.c.0.s8 %v11431
    %v11433 = vlaneseq
    %v11434 = vshrl.u32 %v11433, 7
    %v11435 = vsub.s32 %v11432, %v11434
    %v11436 = vrot.slane %v11422, %v11435
    %v11437 = vcombine.high %v11429, %v11429
    %v11438 = vcombine.high %v11436, %v11436
    %v11439 = vcombine.high %v9983, %v9983
    %v11441 = vunpack.c.l.s4 1983009808
    %v11442 = vunpack.c.0.s8 %v11441
    %v11443 = vlaneseq
    %v11444 = vshrl.u32 %v11443, 7
    %v11445 = vsub.s32 %v11442, %v11444
    %v11446 = vrot.slane %v9983, %v11445
    %v11448 = vunpack.c.l.s4 1983009808
    %v11449 = vunpack.c.0.s8 %v11448
    %v11450 = vlaneseq
    %v11451 = vshrl.u32 %v11450, 7
    %v11452 = vsub.s32 %v11449, %v11451
    %v11453 = vrot.slane %v11439, %v11452
    %v11454 = vcombine.high %v11446, %v11446
    %v11455 = vcombine.high %v11453, %v11453
    %v11456 = vcombine.high %v9984, %v9984
    %v11458 = vunpack.c.l.s4 1983009808
    %v11459 = vunpack.c.0.s8 %v11458
    %v11460 = vlaneseq
    %v11461 = vshrl.u32 %v11460, 7
    %v11462 = vsub.s32 %v11459, %v11461
    %v11463 = vrot.slane %v9984, %v11462
    %v11465 = vunpack.c.l.s4 1983009808
    %v11466 = vunpack.c.0.s8 %v11465
    %v11467 = vlaneseq
    %v11468 = vshrl.u32 %v11467, 7
    %v11469 = vsub.s32 %v11466, %v11468
    %v11470 = vrot.slane %v11456, %v11469
    %v11471 = vcombine.high %v11463, %v11463
    %v11472 = vcombine.high %v11470, %v11470
    %v11473 = vcombine.high %v9985, %v9985
    %v11475 = vunpack.c.l.s4 1983009808
    %v11476 = vunpack.c.0.s8 %v11475
    %v11477 = vlaneseq
    %v11478 = vshrl.u32 %v11477, 7
    %v11479 = vsub.s32 %v11476, %v11478
    %v11480 = vrot.slane %v9985, %v11479
    %v11482 = vunpack.c.l.s4 1983009808
    %v11483 = vunpack.c.0.s8 %v11482
    %v11484 = vlaneseq
    %v11485 = vshrl.u32 %v11484, 7
    %v11486 = vsub.s32 %v11483, %v11485
    %v11487 = vrot.slane %v11473, %v11486
    %v11488 = vcombine.high %v11480, %v11480
    %v11489 = vcombine.high %v11487, %v11487
    %v11490 = vcombine.high %v9986, %v9986
    %v11492 = vunpack.c.l.s4 1983009808
    %v11493 = vunpack.c.0.s8 %v11492
    %v11494 = vlaneseq
    %v11495 = vshrl.u32 %v11494, 7
    %v11496 = vsub.s32 %v11493, %v11495
    %v11497 = vrot.slane %v9986, %v11496
    %v11499 = vunpack.c.l.s4 1983009808
    %v11500 = vunpack.c.0.s8 %v11499
    %v11501 = vlaneseq
    %v11502 = vshrl.u32 %v11501, 7
    %v11503 = vsub.s32 %v11500, %v11502
    %v11504 = vrot.slane %v11490, %v11503
    %v11505 = vcombine.high %v11497, %v11497
    %v11506 = vcombine.high %v11504, %v11504
    %v11507 = vcombine.high %v9987, %v9987
    %v11509 = vunpack.c.l.s4 1983009808
    %v11510 = vunpack.c.0.s8 %v11509
    %v11511 = vlaneseq
    %v11512 = vshrl.u32 %v11511, 7
    %v11513 = vsub.s32 %v11510, %v11512
    %v11514 = vrot.slane %v9987, %v11513
    %v11516 = vunpack.c.l.s4 1983009808
    %v11517 = vunpack.c.0.s8 %v11516
    %v11518 = vlaneseq
    %v11519 = vshrl.u32 %v11518, 7
    %v11520 = vsub.s32 %v11517, %v11519
    %v11521 = vrot.slane %v11507, %v11520
    %v11522 = vcombine.high %v11514, %v11514
    %v11523 = vcombine.high %v11521, %v11521
    %v11524 = vcombine.high %v9988, %v9988
    %v11526 = vunpack.c.l.s4 1983009808
    %v11527 = vunpack.c.0.s8 %v11526
    %v11528 = vlaneseq
    %v11529 = vshrl.u32 %v11528, 7
    %v11530 = vsub.s32 %v11527, %v11529
    %v11531 = vrot.slane %v9988, %v11530
    %v11533 = vunpack.c.l.s4 1983009808
    %v11534 = vunpack.c.0.s8 %v11533
    %v11535 = vlaneseq
    %v11536 = vshrl.u32 %v11535, 7
    %v11537 = vsub.s32 %v11534, %v11536
    %v11538 = vrot.slane %v11524, %v11537
    %v11539 = vcombine.high %v11531, %v11531
    %v11540 = vcombine.high %v11538, %v11538
    %v11541 = vcombine.high %v9989, %v9989
    %v11543 = vunpack.c.l.s4 1983009808
    %v11544 = vunpack.c.0.s8 %v11543
    %v11545 = vlaneseq
    %v11546 = vshrl.u32 %v11545, 7
    %v11547 = vsub.s32 %v11544, %v11546
    %v11548 = vrot.slane %v9989, %v11547
    %v11550 = vunpack.c.l.s4 1983009808
    %v11551 = vunpack.c.0.s8 %v11550
    %v11552 = vlaneseq
    %v11553 = vshrl.u32 %v11552, 7
    %v11554 = vsub.s32 %v11551, %v11553
    %v11555 = vrot.slane %v11541, %v11554
    %v11556 = vcombine.high %v11548, %v11548
    %v11557 = vcombine.high %v11555, %v11555
    %v11558 = vcombine.high %v9990, %v9990
    %v11560 = vunpack.c.l.s4 1983009808
    %v11561 = vunpack.c.0.s8 %v11560
    %v11562 = vlaneseq
    %v11563 = vshrl.u32 %v11562, 7
    %v11564 = vsub.s32 %v11561, %v11563
    %v11565 = vrot.slane %v9990, %v11564
    %v11567 = vunpack.c.l.s4 1983009808
    %v11568 = vunpack.c.0.s8 %v11567
    %v11569 = vlaneseq
    %v11570 = vshrl.u32 %v11569, 7
    %v11571 = vsub.s32 %v11568, %v11570
    %v11572 = vrot.slane %v11558, %v11571
    %v11573 = vcombine.high %v11565, %v11565
    %v11574 = vcombine.high %v11572, %v11572
    %v11575 = vcombine.high %v9991, %v9991
    %v11577 = vunpack.c.l.s4 1983009808
    %v11578 = vunpack.c.0.s8 %v11577
    %v11579 = vlaneseq
    %v11580 = vshrl.u32 %v11579, 7
    %v11581 = vsub.s32 %v11578, %v11580
    %v11582 = vrot.slane %v9991, %v11581
    %v11584 = vunpack.c.l.s4 1983009808
    %v11585 = vunpack.c.0.s8 %v11584
    %v11586 = vlaneseq
    %v11587 = vshrl.u32 %v11586, 7
    %v11588 = vsub.s32 %v11585, %v11587
    %v11589 = vrot.slane %v11575, %v11588
    %v11590 = vcombine.high %v11582, %v11582
    %v11591 = vcombine.high %v11589, %v11589
    %v11592 = vcombine.high %v9992, %v9992
    %v11594 = vunpack.c.l.s4 1983009808
    %v11595 = vunpack.c.0.s8 %v11594
    %v11596 = vlaneseq
    %v11597 = vshrl.u32 %v11596, 7
    %v11598 = vsub.s32 %v11595, %v11597
    %v11599 = vrot.slane %v9992, %v11598
    %v11601 = vunpack.c.l.s4 1983009808
    %v11602 = vunpack.c.0.s8 %v11601
    %v11603 = vlaneseq
    %v11604 = vshrl.u32 %v11603, 7
    %v11605 = vsub.s32 %v11602, %v11604
    %v11606 = vrot.slane %v11592, %v11605
    %v11607 = vcombine.high %v11599, %v11599
    %v11608 = vcombine.high %v11606, %v11606
    %v11609 = vcombine.high %v9993, %v9993
    %v11611 = vunpack.c.l.s4 1983009808
    %v11612 = vunpack.c.0.s8 %v11611
    %v11613 = vlaneseq
    %v11614 = vshrl.u32 %v11613, 7
    %v11615 = vsub.s32 %v11612, %v11614
    %v11616 = vrot.slane %v9993, %v11615
    %v11618 = vunpack.c.l.s4 1983009808
    %v11619 = vunpack.c.0.s8 %v11618
    %v11620 = vlaneseq
    %v11621 = vshrl.u32 %v11620, 7
    %v11622 = vsub.s32 %v11619, %v11621
    %v11623 = vrot.slane %v11609, %v11622
    %v11624 = vcombine.high %v11616, %v11616
    %v11625 = vcombine.high %v11623, %v11623
    %v11626 = vcombine.high %v9994, %v9994
    %v11628 = vunpack.c.l.s4 1983009808
    %v11629 = vunpack.c.0.s8 %v11628
    %v11630 = vlaneseq
    %v11631 = vshrl.u32 %v11630, 7
    %v11632 = vsub.s32 %v11629, %v11631
    %v11633 = vrot.slane %v9994, %v11632
    %v11635 = vunpack.c.l.s4 1983009808
    %v11636 = vunpack.c.0.s8 %v11635
    %v11637 = vlaneseq
    %v11638 = vshrl.u32 %v11637, 7
    %v11639 = vsub.s32 %v11636, %v11638
    %v11640 = vrot.slane %v11626, %v11639
    %v11641 = vcombine.high %v11633, %v11633
    %v11642 = vcombine.high %v11640, %v11640
    %v11643 = vcombine.high %v9995, %v9995
    %v11645 = vunpack.c.l.s4 1983009808
    %v11646 = vunpack.c.0.s8 %v11645
    %v11647 = vlaneseq
    %v11648 = vshrl.u32 %v11647, 7
    %v11649 = vsub.s32 %v11646, %v11648
    %v11650 = vrot.slane %v9995, %v11649
    %v11652 = vunpack.c.l.s4 1983009808
    %v11653 = vunpack.c.0.s8 %v11652
    %v11654 = vlaneseq
    %v11655 = vshrl.u32 %v11654, 7
    %v11656 = vsub.s32 %v11653, %v11655
    %v11657 = vrot.slane %v11643, %v11656
    %v11658 = vcombine.high %v11650, %v11650
    %v11659 = vcombine.high %v11657, %v11657
    %v11660 = vcombine.high %v9996, %v9996
    %v11662 = vunpack.c.l.s4 1983009808
    %v11663 = vunpack.c.0.s8 %v11662
    %v11664 = vlaneseq
    %v11665 = vshrl.u32 %v11664, 7
    %v11666 = vsub.s32 %v11663, %v11665
    %v11667 = vrot.slane %v9996, %v11666
    %v11669 = vunpack.c.l.s4 1983009808
    %v11670 = vunpack.c.0.s8 %v11669
    %v11671 = vlaneseq
    %v11672 = vshrl.u32 %v11671, 7
    %v11673 = vsub.s32 %v11670, %v11672
    %v11674 = vrot.slane %v11660, %v11673
    %v11675 = vcombine.high %v11667, %v11667
    %v11676 = vcombine.high %v11674, %v11674
    %v11677 = vcombine.high %v9997, %v9997
    %v11679 = vunpack.c.l.s4 1983009808
    %v11680 = vunpack.c.0.s8 %v11679
    %v11681 = vlaneseq
    %v11682 = vshrl.u32 %v11681, 7
    %v11683 = vsub.s32 %v11680, %v11682
    %v11684 = vrot.slane %v9997, %v11683
    %v11686 = vunpack.c.l.s4 1983009808
    %v11687 = vunpack.c.0.s8 %v11686
    %v11688 = vlaneseq
    %v11689 = vshrl.u32 %v11688, 7
    %v11690 = vsub.s32 %v11687, %v11689
    %v11691 = vrot.slane %v11677, %v11690
    %v11692 = vcombine.high %v11684, %v11684
    %v11693 = vcombine.high %v11691, %v11691
    %v11694 = vcombine.high %v9998, %v9998
    %v11696 = vunpack.c.l.s4 1983009808
    %v11697 = vunpack.c.0.s8 %v11696
    %v11698 = vlaneseq
    %v11699 = vshrl.u32 %v11698, 7
    %v11700 = vsub.s32 %v11697, %v11699
    %v11701 = vrot.slane %v9998, %v11700
    %v11703 = vunpack.c.l.s4 1983009808
    %v11704 = vunpack.c.0.s8 %v11703
    %v11705 = vlaneseq
    %v11706 = vshrl.u32 %v11705, 7
    %v11707 = vsub.s32 %v11704, %v11706
    %v11708 = vrot.slane %v11694, %v11707
    %v11709 = vcombine.high %v11701, %v11701
    %v11710 = vcombine.high %v11708, %v11708
    %v11711 = vcombine.high %v9999, %v9999
    %v11713 = vunpack.c.l.s4 1983009808
    %v11714 = vunpack.c.0.s8 %v11713
    %v11715 = vlaneseq
    %v11716 = vshrl.u32 %v11715, 7
    %v11717 = vsub.s32 %v11714, %v11716
    %v11718 = vrot.slane %v9999, %v11717
    %v11720 = vunpack.c.l.s4 1983009808
    %v11721 = vunpack.c.0.s8 %v11720
    %v11722 = vlaneseq
    %v11723 = vshrl.u32 %v11722, 7
    %v11724 = vsub.s32 %v11721, %v11723
    %v11725 = vrot.slane %v11711, %v11724
    %v11726 = vcombine.high %v11718, %v11718
    %v11727 = vcombine.high %v11725, %v11725
    %v12112 = vsel %vm5726, %v10103, 0.0
    %v12113 = vsel %vm5726, %v10111, 0.0
    %v12114 = vadd.f32 %v12112, %v12113
    %v12115 = vsel %vm5726, %v10110, 0.0
    %v12116 = vadd.f32 %v12114, %v12115
    %v12117 = vsel %vm5726, %v10112, 0.0
    %v12118 = vadd.f32 %v12116, %v12117
    %v12119 = vsel %vm5726, %v10120, 0.0
    %v12120 = vadd.f32 %v12118, %v12119
    %v12121 = vsel %vm5726, %v10128, 0.0
    %v12122 = vadd.f32 %v12120, %v12121
    %v12123 = vsel %vm5726, %v10127, 0.0
    %v12124 = vadd.f32 %v12122, %v12123
    %v12125 = vsel %vm5726, %v10129, 0.0
    %v12126 = vadd.f32 %v12124, %v12125
    %v12127 = vsel %vm5726, %v10137, 0.0
    %v12128 = vadd.f32 %v12126, %v12127
    %v12129 = vsel %vm5726, %v10145, 0.0
    %v12130 = vadd.f32 %v12128, %v12129
    %v12131 = vsel %vm5726, %v10144, 0.0
    %v12132 = vadd.f32 %v12130, %v12131
    %v12133 = vsel %vm5726, %v10146, 0.0
    %v12134 = vadd.f32 %v12132, %v12133
    %v12135 = vsel %vm5726, %v10154, 0.0
    %v12136 = vadd.f32 %v12134, %v12135
    %v12137 = vsel %vm5726, %v10162, 0.0
    %v12138 = vadd.f32 %v12136, %v12137
    %v12139 = vsel %vm5726, %v10161, 0.0
    %v12140 = vadd.f32 %v12138, %v12139
    %v12141 = vsel %vm5726, %v10163, 0.0
    %v12142 = vadd.f32 %v12140, %v12141
    %v12143 = vsel %vm5726, %v10171, 0.0
    %v12144 = vadd.f32 %v12142, %v12143
    %v12145 = vsel %vm5726, %v10179, 0.0
    %v12146 = vadd.f32 %v12144, %v12145
    %v12147 = vsel %vm5726, %v10178, 0.0
    %v12148 = vadd.f32 %v12146, %v12147
    %v12149 = vsel %vm5726, %v10180, 0.0
    %v12150 = vadd.f32 %v12148, %v12149
    %v12151 = vsel %vm5726, %v10188, 0.0
    %v12152 = vadd.f32 %v12150, %v12151
    %v12153 = vsel %vm5726, %v10196, 0.0
    %v12154 = vadd.f32 %v12152, %v12153
    %v12155 = vsel %vm5726, %v10195, 0.0
    %v12156 = vadd.f32 %v12154, %v12155
    %v12157 = vsel %vm5726, %v10197, 0.0
    %v12158 = vadd.f32 %v12156, %v12157
    %v12159 = vsel %vm5726, %v10205, 0.0
    %v12160 = vadd.f32 %v12158, %v12159
    %v12161 = vsel %vm5726, %v10213, 0.0
    %v12162 = vadd.f32 %v12160, %v12161
    %v12163 = vsel %vm5726, %v10212, 0.0
    %v12164 = vadd.f32 %v12162, %v12163
    %v12165 = vsel %vm5726, %v10214, 0.0
    %v12166 = vadd.f32 %v12164, %v12165
    %v12167 = vsel %vm5726, %v10222, 0.0
    %v12168 = vadd.f32 %v12166, %v12167
    %v12169 = vsel %vm5726, %v10230, 0.0
    %v12170 = vadd.f32 %v12168, %v12169
    %v12171 = vsel %vm5726, %v10229, 0.0
    %v12172 = vadd.f32 %v12170, %v12171
    %v12173 = vsel %vm5726, %v10231, 0.0
    %v12174 = vadd.f32 %v12172, %v12173
    %v12175 = vsel %vm5726, %v10239, 0.0
    %v12176 = vadd.f32 %v12174, %v12175
    %v12177 = vsel %vm5726, %v10247, 0.0
    %v12178 = vadd.f32 %v12176, %v12177
    %v12179 = vsel %vm5726, %v10246, 0.0
    %v12180 = vadd.f32 %v12178, %v12179
    %v12181 = vsel %vm5726, %v10248, 0.0
    %v12182 = vadd.f32 %v12180, %v12181
    %v12183 = vsel %vm5726, %v10256, 0.0
    %v12184 = vadd.f32 %v12182, %v12183
    %v12185 = vsel %vm5726, %v10264, 0.0
    %v12186 = vadd.f32 %v12184, %v12185
    %v12187 = vsel %vm5726, %v10263, 0.0
    %v12188 = vadd.f32 %v12186, %v12187
    %v12189 = vsel %vm5726, %v10265, 0.0
    %v12190 = vadd.f32 %v12188, %v12189
    %v12191 = vsel %vm5726, %v10273, 0.0
    %v12192 = vadd.f32 %v12190, %v12191
    %v12193 = vsel %vm5726, %v10281, 0.0
    %v12194 = vadd.f32 %v12192, %v12193
    %v12195 = vsel %vm5726, %v10280, 0.0
    %v12196 = vadd.f32 %v12194, %v12195
    %v12197 = vsel %vm5726, %v10282, 0.0
    %v12198 = vadd.f32 %v12196, %v12197
    %v12199 = vsel %vm5726, %v10290, 0.0
    %v12200 = vadd.f32 %v12198, %v12199
    %v12201 = vsel %vm5726, %v10298, 0.0
    %v12202 = vadd.f32 %v12200, %v12201
    %v12203 = vsel %vm5726, %v10297, 0.0
    %v12204 = vadd.f32 %v12202, %v12203
    %v12205 = vsel %vm5726, %v10299, 0.0
    %v12206 = vadd.f32 %v12204, %v12205
    %v12207 = vsel %vm5726, %v10307, 0.0
    %v12208 = vadd.f32 %v12206, %v12207
    %v12209 = vsel %vm5726, %v10315, 0.0
    %v12210 = vadd.f32 %v12208, %v12209
    %v12211 = vsel %vm5726, %v10314, 0.0
    %v12212 = vadd.f32 %v12210, %v12211
    %v12213 = vsel %vm5726, %v10316, 0.0
    %v12214 = vadd.f32 %v12212, %v12213
    %v12215 = vsel %vm5726, %v10324, 0.0
    %v12216 = vadd.f32 %v12214, %v12215
    %v12217 = vsel %vm5726, %v10332, 0.0
    %v12218 = vadd.f32 %v12216, %v12217
    %v12219 = vsel %vm5726, %v10331, 0.0
    %v12220 = vadd.f32 %v12218, %v12219
    %v12221 = vsel %vm5726, %v10333, 0.0
    %v12222 = vadd.f32 %v12220, %v12221
    %v12223 = vsel %vm5726, %v10341, 0.0
    %v12224 = vadd.f32 %v12222, %v12223
    %v12225 = vsel %vm5726, %v10349, 0.0
    %v12226 = vadd.f32 %v12224, %v12225
    %v12227 = vsel %vm5726, %v10348, 0.0
    %v12228 = vadd.f32 %v12226, %v12227
    %v12229 = vsel %vm5726, %v10350, 0.0
    %v12230 = vadd.f32 %v12228, %v12229
    %v12231 = vsel %vm5726, %v10358, 0.0
    %v12232 = vadd.f32 %v12230, %v12231
    %v12233 = vsel %vm5726, %v10366, 0.0
    %v12234 = vadd.f32 %v12232, %v12233
    %v12235 = vsel %vm5726, %v10365, 0.0
    %v12236 = vadd.f32 %v12234, %v12235
    %v12237 = vsel %vm5726, %v10367, 0.0
    %v12238 = vadd.f32 %v12236, %v12237
    %v12239 = vsel %vm5726, %v10375, 0.0
    %v12240 = vadd.f32 %v12238, %v12239
    %v12241 = vsel %vm5726, %v10383, 0.0
    %v12242 = vadd.f32 %v12240, %v12241
    %v12243 = vsel %vm5726, %v10382, 0.0
    %v12244 = vadd.f32 %v12242, %v12243
    %v12245 = vsel %vm5726, %v10384, 0.0
    %v12246 = vadd.f32 %v12244, %v12245
    %v12247 = vsel %vm5726, %v10392, 0.0
    %v12248 = vadd.f32 %v12246, %v12247
    %v12249 = vsel %vm5726, %v10400, 0.0
    %v12250 = vadd.f32 %v12248, %v12249
    %v12251 = vsel %vm5726, %v10399, 0.0
    %v12252 = vadd.f32 %v12250, %v12251
    %v12253 = vsel %vm5726, %v10401, 0.0
    %v12254 = vadd.f32 %v12252, %v12253
    %v12255 = vsel %vm5726, %v10409, 0.0
    %v12256 = vadd.f32 %v12254, %v12255
    %v12257 = vsel %vm5726, %v10417, 0.0
    %v12258 = vadd.f32 %v12256, %v12257
    %v12259 = vsel %vm5726, %v10416, 0.0
    %v12260 = vadd.f32 %v12258, %v12259
    %v12261 = vsel %vm5726, %v10418, 0.0
    %v12262 = vadd.f32 %v12260, %v12261
    %v12263 = vsel %vm5726, %v10426, 0.0
    %v12264 = vadd.f32 %v12262, %v12263
    %v12265 = vsel %vm5726, %v10434, 0.0
    %v12266 = vadd.f32 %v12264, %v12265
    %v12267 = vsel %vm5726, %v10433, 0.0
    %v12268 = vadd.f32 %v12266, %v12267
    %v12269 = vsel %vm5726, %v10435, 0.0
    %v12270 = vadd.f32 %v12268, %v12269
    %v12271 = vsel %vm5726, %v10443, 0.0
    %v12272 = vadd.f32 %v12270, %v12271
    %v12273 = vsel %vm5726, %v10451, 0.0
    %v12274 = vadd.f32 %v12272, %v12273
    %v12275 = vsel %vm5726, %v10450, 0.0
    %v12276 = vadd.f32 %v12274, %v12275
    %v12277 = vsel %vm5726, %v10452, 0.0
    %v12278 = vadd.f32 %v12276, %v12277
    %v12279 = vsel %vm5726, %v10460, 0.0
    %v12280 = vadd.f32 %v12278, %v12279
    %v12281 = vsel %vm5726, %v10468, 0.0
    %v12282 = vadd.f32 %v12280, %v12281
    %v12283 = vsel %vm5726, %v10467, 0.0
    %v12284 = vadd.f32 %v12282, %v12283
    %v12285 = vsel %vm5726, %v10469, 0.0
    %v12286 = vadd.f32 %v12284, %v12285
    %v12287 = vsel %vm5726, %v10477, 0.0
    %v12288 = vadd.f32 %v12286, %v12287
    %v12289 = vsel %vm5726, %v10485, 0.0
    %v12290 = vadd.f32 %v12288, %v12289
    %v12291 = vsel %vm5726, %v10484, 0.0
    %v12292 = vadd.f32 %v12290, %v12291
    %v12293 = vsel %vm5726, %v10486, 0.0
    %v12294 = vadd.f32 %v12292, %v12293
    %v12295 = vsel %vm5726, %v10494, 0.0
    %v12296 = vadd.f32 %v12294, %v12295
    %v12297 = vsel %vm5726, %v10502, 0.0
    %v12298 = vadd.f32 %v12296, %v12297
    %v12299 = vsel %vm5726, %v10501, 0.0
    %v12300 = vadd.f32 %v12298, %v12299
    %v12301 = vsel %vm5726, %v10503, 0.0
    %v12302 = vadd.f32 %v12300, %v12301
    %v12303 = vsel %vm5726, %v10511, 0.0
    %v12304 = vadd.f32 %v12302, %v12303
    %v12305 = vsel %vm5726, %v10519, 0.0
    %v12306 = vadd.f32 %v12304, %v12305
    %v12307 = vsel %vm5726, %v10518, 0.0
    %v12308 = vadd.f32 %v12306, %v12307
    %v12309 = vsel %vm5726, %v10520, 0.0
    %v12310 = vadd.f32 %v12308, %v12309
    %v12311 = vsel %vm5726, %v10528, 0.0
    %v12312 = vadd.f32 %v12310, %v12311
    %v12313 = vsel %vm5726, %v10536, 0.0
    %v12314 = vadd.f32 %v12312, %v12313
    %v12315 = vsel %vm5726, %v10535, 0.0
    %v12316 = vadd.f32 %v12314, %v12315
    %v12317 = vsel %vm5726, %v10537, 0.0
    %v12318 = vadd.f32 %v12316, %v12317
    %v12319 = vsel %vm5726, %v10545, 0.0
    %v12320 = vadd.f32 %v12318, %v12319
    %v12321 = vsel %vm5726, %v10553, 0.0
    %v12322 = vadd.f32 %v12320, %v12321
    %v12323 = vsel %vm5726, %v10552, 0.0
    %v12324 = vadd.f32 %v12322, %v12323
    %v12325 = vsel %vm5726, %v10554, 0.0
    %v12326 = vadd.f32 %v12324, %v12325
    %v12327 = vsel %vm5726, %v10562, 0.0
    %v12328 = vadd.f32 %v12326, %v12327
    %v12329 = vsel %vm5726, %v10570, 0.0
    %v12330 = vadd.f32 %v12328, %v12329
    %v12331 = vsel %vm5726, %v10569, 0.0
    %v12332 = vadd.f32 %v12330, %v12331
    %v12333 = vsel %vm5726, %v10571, 0.0
    %v12334 = vadd.f32 %v12332, %v12333
    %v12335 = vsel %vm5726, %v10579, 0.0
    %v12336 = vadd.f32 %v12334, %v12335
    %v12337 = vsel %vm5726, %v10587, 0.0
    %v12338 = vadd.f32 %v12336, %v12337
    %v12339 = vsel %vm5726, %v10586, 0.0
    %v12340 = vadd.f32 %v12338, %v12339
    %v12341 = vsel %vm5726, %v10588, 0.0
    %v12342 = vadd.f32 %v12340, %v12341
    %v12343 = vsel %vm5726, %v10596, 0.0
    %v12344 = vadd.f32 %v12342, %v12343
    %v12345 = vsel %vm5726, %v10604, 0.0
    %v12346 = vadd.f32 %v12344, %v12345
    %v12347 = vsel %vm5726, %v10603, 0.0
    %v12348 = vadd.f32 %v12346, %v12347
    %v12349 = vsel %vm5726, %v10605, 0.0
    %v12350 = vadd.f32 %v12348, %v12349
    %v12351 = vsel %vm5726, %v10613, 0.0
    %v12352 = vadd.f32 %v12350, %v12351
    %v12353 = vsel %vm5726, %v10621, 0.0
    %v12354 = vadd.f32 %v12352, %v12353
    %v12355 = vsel %vm5726, %v10620, 0.0
    %v12356 = vadd.f32 %v12354, %v12355
    %v12357 = vsel %vm5726, %v10622, 0.0
    %v12358 = vadd.f32 %v12356, %v12357
    %v12359 = vsel %vm5726, %v10630, 0.0
    %v12360 = vadd.f32 %v12358, %v12359
    %v12361 = vsel %vm5726, %v10638, 0.0
    %v12362 = vadd.f32 %v12360, %v12361
    %v12363 = vsel %vm5726, %v10637, 0.0
    %v12364 = vadd.f32 %v12362, %v12363
    %v12365 = vsel %vm5726, %v10639, 0.0
    %v12366 = vadd.f32 %v12364, %v12365
    %v12367 = vsel %vm5726, %v10647, 0.0
    %v12368 = vadd.f32 %v12366, %v12367
    %v12369 = vsel %vm5726, %v10655, 0.0
    %v12370 = vadd.f32 %v12368, %v12369
    %v12371 = vsel %vm5726, %v10654, 0.0
    %v12372 = vadd.f32 %v12370, %v12371
    %v12373 = vsel %vm5726, %v10656, 0.0
    %v12374 = vadd.f32 %v12372, %v12373
    %v12375 = vsel %vm5726, %v10664, 0.0
    %v12376 = vadd.f32 %v12374, %v12375
    %v12377 = vsel %vm5726, %v10672, 0.0
    %v12378 = vadd.f32 %v12376, %v12377
    %v12379 = vsel %vm5726, %v10671, 0.0
    %v12380 = vadd.f32 %v12378, %v12379
    %v12381 = vsel %vm5726, %v10673, 0.0
    %v12382 = vadd.f32 %v12380, %v12381
    %v12383 = vsel %vm5726, %v10681, 0.0
    %v12384 = vadd.f32 %v12382, %v12383
    %v12385 = vsel %vm5726, %v10689, 0.0
    %v12386 = vadd.f32 %v12384, %v12385
    %v12387 = vsel %vm5726, %v10688, 0.0
    %v12388 = vadd.f32 %v12386, %v12387
    %v12389 = vsel %vm5726, %v10690, 0.0
    %v12390 = vadd.f32 %v12388, %v12389
    %v12391 = vsel %vm5726, %v10698, 0.0
    %v12392 = vadd.f32 %v12390, %v12391
    %v12393 = vsel %vm5726, %v10706, 0.0
    %v12394 = vadd.f32 %v12392, %v12393
    %v12395 = vsel %vm5726, %v10705, 0.0
    %v12396 = vadd.f32 %v12394, %v12395
    %v12397 = vsel %vm5726, %v10707, 0.0
    %v12398 = vadd.f32 %v12396, %v12397
    %v12399 = vsel %vm5726, %v10715, 0.0
    %v12400 = vadd.f32 %v12398, %v12399
    %v12401 = vsel %vm5726, %v10723, 0.0
    %v12402 = vadd.f32 %v12400, %v12401
    %v12403 = vsel %vm5726, %v10722, 0.0
    %v12404 = vadd.f32 %v12402, %v12403
    %v12405 = vsel %vm5726, %v10724, 0.0
    %v12406 = vadd.f32 %v12404, %v12405
    %v12407 = vsel %vm5726, %v10732, 0.0
    %v12408 = vadd.f32 %v12406, %v12407
    %v12409 = vsel %vm5726, %v10740, 0.0
    %v12410 = vadd.f32 %v12408, %v12409
    %v12411 = vsel %vm5726, %v10739, 0.0
    %v12412 = vadd.f32 %v12410, %v12411
    %v12413 = vsel %vm5726, %v10741, 0.0
    %v12414 = vadd.f32 %v12412, %v12413
    %v12415 = vsel %vm5726, %v10749, 0.0
    %v12416 = vadd.f32 %v12414, %v12415
    %v12417 = vsel %vm5726, %v10757, 0.0
    %v12418 = vadd.f32 %v12416, %v12417
    %v12419 = vsel %vm5726, %v10756, 0.0
    %v12420 = vadd.f32 %v12418, %v12419
    %v12421 = vsel %vm5726, %v10758, 0.0
    %v12422 = vadd.f32 %v12420, %v12421
    %v12423 = vsel %vm5726, %v10766, 0.0
    %v12424 = vadd.f32 %v12422, %v12423
    %v12425 = vsel %vm5726, %v10774, 0.0
    %v12426 = vadd.f32 %v12424, %v12425
    %v12427 = vsel %vm5726, %v10773, 0.0
    %v12428 = vadd.f32 %v12426, %v12427
    %v12429 = vsel %vm5726, %v10775, 0.0
    %v12430 = vadd.f32 %v12428, %v12429
    %v12431 = vsel %vm5726, %v10783, 0.0
    %v12432 = vadd.f32 %v12430, %v12431
    %v12433 = vsel %vm5726, %v10791, 0.0
    %v12434 = vadd.f32 %v12432, %v12433
    %v12435 = vsel %vm5726, %v10790, 0.0
    %v12436 = vadd.f32 %v12434, %v12435
    %v12437 = vsel %vm5726, %v10792, 0.0
    %v12438 = vadd.f32 %v12436, %v12437
    %v12439 = vsel %vm5726, %v10800, 0.0
    %v12440 = vadd.f32 %v12438, %v12439
    %v12441 = vsel %vm5726, %v10808, 0.0
    %v12442 = vadd.f32 %v12440, %v12441
    %v12443 = vsel %vm5726, %v10807, 0.0
    %v12444 = vadd.f32 %v12442, %v12443
    %v12445 = vsel %vm5726, %v10809, 0.0
    %v12446 = vadd.f32 %v12444, %v12445
    %v12447 = vsel %vm5726, %v10817, 0.0
    %v12448 = vadd.f32 %v12446, %v12447
    %v12449 = vsel %vm5726, %v10825, 0.0
    %v12450 = vadd.f32 %v12448, %v12449
    %v12451 = vsel %vm5726, %v10824, 0.0
    %v12452 = vadd.f32 %v12450, %v12451
    %v12453 = vsel %vm5726, %v10826, 0.0
    %v12454 = vadd.f32 %v12452, %v12453
    %v12455 = vsel %vm5726, %v10834, 0.0
    %v12456 = vadd.f32 %v12454, %v12455
    %v12457 = vsel %vm5726, %v10842, 0.0
    %v12458 = vadd.f32 %v12456, %v12457
    %v12459 = vsel %vm5726, %v10841, 0.0
    %v12460 = vadd.f32 %v12458, %v12459
    %v12461 = vsel %vm5726, %v10843, 0.0
    %v12462 = vadd.f32 %v12460, %v12461
    %v12463 = vsel %vm5726, %v10851, 0.0
    %v12464 = vadd.f32 %v12462, %v12463
    %v12465 = vsel %vm5726, %v10859, 0.0
    %v12466 = vadd.f32 %v12464, %v12465
    %v12467 = vsel %vm5726, %v10858, 0.0
    %v12468 = vadd.f32 %v12466, %v12467
    %v12469 = vsel %vm5726, %v10860, 0.0
    %v12470 = vadd.f32 %v12468, %v12469
    %v12471 = vsel %vm5726, %v10868, 0.0
    %v12472 = vadd.f32 %v12470, %v12471
    %v12473 = vsel %vm5726, %v10876, 0.0
    %v12474 = vadd.f32 %v12472, %v12473
    %v12475 = vsel %vm5726, %v10875, 0.0
    %v12476 = vadd.f32 %v12474, %v12475
    %v12477 = vsel %vm5726, %v10877, 0.0
    %v12478 = vadd.f32 %v12476, %v12477
    %v12479 = vsel %vm5726, %v10885, 0.0
    %v12480 = vadd.f32 %v12478, %v12479
    %v12481 = vsel %vm5726, %v10893, 0.0
    %v12482 = vadd.f32 %v12480, %v12481
    %v12483 = vsel %vm5726, %v10892, 0.0
    %v12484 = vadd.f32 %v12482, %v12483
    %v12485 = vsel %vm5726, %v10894, 0.0
    %v12486 = vadd.f32 %v12484, %v12485
    %v12487 = vsel %vm5726, %v10902, 0.0
    %v12488 = vadd.f32 %v12486, %v12487
    %v12489 = vsel %vm5726, %v10910, 0.0
    %v12490 = vadd.f32 %v12488, %v12489
    %v12491 = vsel %vm5726, %v10909, 0.0
    %v12492 = vadd.f32 %v12490, %v12491
    %v12493 = vsel %vm5726, %v10911, 0.0
    %v12494 = vadd.f32 %v12492, %v12493
    %v12495 = vsel %vm5726, %v10919, 0.0
    %v12496 = vadd.f32 %v12494, %v12495
    %v12497 = vsel %vm5726, %v10927, 0.0
    %v12498 = vadd.f32 %v12496, %v12497
    %v12499 = vsel %vm5726, %v10926, 0.0
    %v12500 = vadd.f32 %v12498, %v12499
    %v12501 = vsel %vm5726, %v10928, 0.0
    %v12502 = vadd.f32 %v12500, %v12501
    %v12503 = vsel %vm5726, %v10936, 0.0
    %v12504 = vadd.f32 %v12502, %v12503
    %v12505 = vsel %vm5726, %v10944, 0.0
    %v12506 = vadd.f32 %v12504, %v12505
    %v12507 = vsel %vm5726, %v10943, 0.0
    %v12508 = vadd.f32 %v12506, %v12507
    %v12509 = vsel %vm5726, %v10945, 0.0
    %v12510 = vadd.f32 %v12508, %v12509
    %v12511 = vsel %vm5726, %v10953, 0.0
    %v12512 = vadd.f32 %v12510, %v12511
    %v12513 = vsel %vm5726, %v10961, 0.0
    %v12514 = vadd.f32 %v12512, %v12513
    %v12515 = vsel %vm5726, %v10960, 0.0
    %v12516 = vadd.f32 %v12514, %v12515
    %v12517 = vsel %vm5726, %v10962, 0.0
    %v12518 = vadd.f32 %v12516, %v12517
    %v12519 = vsel %vm5726, %v10970, 0.0
    %v12520 = vadd.f32 %v12518, %v12519
    %v12521 = vsel %vm5726, %v10978, 0.0
    %v12522 = vadd.f32 %v12520, %v12521
    %v12523 = vsel %vm5726, %v10977, 0.0
    %v12524 = vadd.f32 %v12522, %v12523
    %v12525 = vsel %vm5726, %v10979, 0.0
    %v12526 = vadd.f32 %v12524, %v12525
    %v12527 = vsel %vm5726, %v10987, 0.0
    %v12528 = vadd.f32 %v12526, %v12527
    %v12529 = vsel %vm5726, %v10995, 0.0
    %v12530 = vadd.f32 %v12528, %v12529
    %v12531 = vsel %vm5726, %v10994, 0.0
    %v12532 = vadd.f32 %v12530, %v12531
    %v12533 = vsel %vm5726, %v10996, 0.0
    %v12534 = vadd.f32 %v12532, %v12533
    %v12535 = vsel %vm5726, %v11004, 0.0
    %v12536 = vadd.f32 %v12534, %v12535
    %v12537 = vsel %vm5726, %v11012, 0.0
    %v12538 = vadd.f32 %v12536, %v12537
    %v12539 = vsel %vm5726, %v11011, 0.0
    %v12540 = vadd.f32 %v12538, %v12539
    %v12541 = vsel %vm5726, %v11013, 0.0
    %v12542 = vadd.f32 %v12540, %v12541
    %v12543 = vsel %vm5726, %v11021, 0.0
    %v12544 = vadd.f32 %v12542, %v12543
    %v12545 = vsel %vm5726, %v11029, 0.0
    %v12546 = vadd.f32 %v12544, %v12545
    %v12547 = vsel %vm5726, %v11028, 0.0
    %v12548 = vadd.f32 %v12546, %v12547
    %v12549 = vsel %vm5726, %v11030, 0.0
    %v12550 = vadd.f32 %v12548, %v12549
    %v12551 = vsel %vm5726, %v11038, 0.0
    %v12552 = vadd.f32 %v12550, %v12551
    %v12553 = vsel %vm5726, %v11046, 0.0
    %v12554 = vadd.f32 %v12552, %v12553
    %v12555 = vsel %vm5726, %v11045, 0.0
    %v12556 = vadd.f32 %v12554, %v12555
    %v12557 = vsel %vm5726, %v11047, 0.0
    %v12558 = vadd.f32 %v12556, %v12557
    %v12559 = vsel %vm5726, %v11055, 0.0
    %v12560 = vadd.f32 %v12558, %v12559
    %v12561 = vsel %vm5726, %v11063, 0.0
    %v12562 = vadd.f32 %v12560, %v12561
    %v12563 = vsel %vm5726, %v11062, 0.0
    %v12564 = vadd.f32 %v12562, %v12563
    %v12565 = vsel %vm5726, %v11064, 0.0
    %v12566 = vadd.f32 %v12564, %v12565
    %v12567 = vsel %vm5726, %v11072, 0.0
    %v12568 = vadd.f32 %v12566, %v12567
    %v12569 = vsel %vm5726, %v11080, 0.0
    %v12570 = vadd.f32 %v12568, %v12569
    %v12571 = vsel %vm5726, %v11079, 0.0
    %v12572 = vadd.f32 %v12570, %v12571
    %v12573 = vsel %vm5726, %v11081, 0.0
    %v12574 = vadd.f32 %v12572, %v12573
    %v12575 = vsel %vm5726, %v11089, 0.0
    %v12576 = vadd.f32 %v12574, %v12575
    %v12577 = vsel %vm5726, %v11097, 0.0
    %v12578 = vadd.f32 %v12576, %v12577
    %v12579 = vsel %vm5726, %v11096, 0.0
    %v12580 = vadd.f32 %v12578, %v12579
    %v12581 = vsel %vm5726, %v11098, 0.0
    %v12582 = vadd.f32 %v12580, %v12581
    %v12583 = vsel %vm5726, %v11106, 0.0
    %v12584 = vadd.f32 %v12582, %v12583
    %v12585 = vsel %vm5726, %v11114, 0.0
    %v12586 = vadd.f32 %v12584, %v12585
    %v12587 = vsel %vm5726, %v11113, 0.0
    %v12588 = vadd.f32 %v12586, %v12587
    %v12589 = vsel %vm5726, %v11115, 0.0
    %v12590 = vadd.f32 %v12588, %v12589
    %v12591 = vsel %vm5726, %v11123, 0.0
    %v12592 = vadd.f32 %v12590, %v12591
    %v12593 = vsel %vm5726, %v11131, 0.0
    %v12594 = vadd.f32 %v12592, %v12593
    %v12595 = vsel %vm5726, %v11130, 0.0
    %v12596 = vadd.f32 %v12594, %v12595
    %v12597 = vsel %vm5726, %v11132, 0.0
    %v12598 = vadd.f32 %v12596, %v12597
    %v12599 = vsel %vm5726, %v11140, 0.0
    %v12600 = vadd.f32 %v12598, %v12599
    %v12601 = vsel %vm5726, %v11148, 0.0
    %v12602 = vadd.f32 %v12600, %v12601
    %v12603 = vsel %vm5726, %v11147, 0.0
    %v12604 = vadd.f32 %v12602, %v12603
    %v12605 = vsel %vm5726, %v11149, 0.0
    %v12606 = vadd.f32 %v12604, %v12605
    %v12607 = vsel %vm5726, %v11157, 0.0
    %v12608 = vadd.f32 %v12606, %v12607
    %v12609 = vsel %vm5726, %v11165, 0.0
    %v12610 = vadd.f32 %v12608, %v12609
    %v12611 = vsel %vm5726, %v11164, 0.0
    %v12612 = vadd.f32 %v12610, %v12611
    %v12613 = vsel %vm5726, %v11166, 0.0
    %v12614 = vadd.f32 %v12612, %v12613
    %v12615 = vsel %vm5726, %v11174, 0.0
    %v12616 = vadd.f32 %v12614, %v12615
    %v12617 = vsel %vm5726, %v11182, 0.0
    %v12618 = vadd.f32 %v12616, %v12617
    %v12619 = vsel %vm5726, %v11181, 0.0
    %v12620 = vadd.f32 %v12618, %v12619
    %v12621 = vsel %vm5726, %v11183, 0.0
    %v12622 = vadd.f32 %v12620, %v12621
    %v12623 = vsel %vm5726, %v11191, 0.0
    %v12624 = vadd.f32 %v12622, %v12623
    %v12625 = vsel %vm5726, %v11199, 0.0
    %v12626 = vadd.f32 %v12624, %v12625
    %v12627 = vsel %vm5726, %v11198, 0.0
    %v12628 = vadd.f32 %v12626, %v12627
    %v12629 = vsel %vm5726, %v11200, 0.0
    %v12630 = vadd.f32 %v12628, %v12629
    %v12631 = vsel %vm5726, %v11208, 0.0
    %v12632 = vadd.f32 %v12630, %v12631
    %v12633 = vsel %vm5726, %v11216, 0.0
    %v12634 = vadd.f32 %v12632, %v12633
    %v12635 = vsel %vm5726, %v11215, 0.0
    %v12636 = vadd.f32 %v12634, %v12635
    %v12637 = vsel %vm5726, %v11217, 0.0
    %v12638 = vadd.f32 %v12636, %v12637
    %v12639 = vsel %vm5726, %v11225, 0.0
    %v12640 = vadd.f32 %v12638, %v12639
    %v12641 = vsel %vm5726, %v11233, 0.0
    %v12642 = vadd.f32 %v12640, %v12641
    %v12643 = vsel %vm5726, %v11232, 0.0
    %v12644 = vadd.f32 %v12642, %v12643
    %v12645 = vsel %vm5726, %v11234, 0.0
    %v12646 = vadd.f32 %v12644, %v12645
    %v12647 = vsel %vm5726, %v11242, 0.0
    %v12648 = vadd.f32 %v12646, %v12647
    %v12649 = vsel %vm5726, %v11250, 0.0
    %v12650 = vadd.f32 %v12648, %v12649
    %v12651 = vsel %vm5726, %v11249, 0.0
    %v12652 = vadd.f32 %v12650, %v12651
    %v12653 = vsel %vm5726, %v11251, 0.0
    %v12654 = vadd.f32 %v12652, %v12653
    %v12655 = vsel %vm5726, %v11259, 0.0
    %v12656 = vadd.f32 %v12654, %v12655
    %v12657 = vsel %vm5726, %v11267, 0.0
    %v12658 = vadd.f32 %v12656, %v12657
    %v12659 = vsel %vm5726, %v11266, 0.0
    %v12660 = vadd.f32 %v12658, %v12659
    %v12661 = vsel %vm5726, %v11268, 0.0
    %v12662 = vadd.f32 %v12660, %v12661
    %v12663 = vsel %vm5726, %v11276, 0.0
    %v12664 = vadd.f32 %v12662, %v12663
    %v12665 = vsel %vm5726, %v11284, 0.0
    %v12666 = vadd.f32 %v12664, %v12665
    %v12667 = vsel %vm5726, %v11283, 0.0
    %v12668 = vadd.f32 %v12666, %v12667
    %v12669 = vsel %vm5726, %v11285, 0.0
    %v12670 = vadd.f32 %v12668, %v12669
    %v12671 = vsel %vm5726, %v11293, 0.0
    %v12672 = vadd.f32 %v12670, %v12671
    %v12673 = vsel %vm5726, %v11301, 0.0
    %v12674 = vadd.f32 %v12672, %v12673
    %v12675 = vsel %vm5726, %v11300, 0.0
    %v12676 = vadd.f32 %v12674, %v12675
    %v12677 = vsel %vm5726, %v11302, 0.0
    %v12678 = vadd.f32 %v12676, %v12677
    %v12679 = vsel %vm5726, %v11310, 0.0
    %v12680 = vadd.f32 %v12678, %v12679
    %v12681 = vsel %vm5726, %v11318, 0.0
    %v12682 = vadd.f32 %v12680, %v12681
    %v12683 = vsel %vm5726, %v11317, 0.0
    %v12684 = vadd.f32 %v12682, %v12683
    %v12685 = vsel %vm5726, %v11319, 0.0
    %v12686 = vadd.f32 %v12684, %v12685
    %v12687 = vsel %vm5726, %v11327, 0.0
    %v12688 = vadd.f32 %v12686, %v12687
    %v12689 = vsel %vm5726, %v11335, 0.0
    %v12690 = vadd.f32 %v12688, %v12689
    %v12691 = vsel %vm5726, %v11334, 0.0
    %v12692 = vadd.f32 %v12690, %v12691
    %v12693 = vsel %vm5726, %v11336, 0.0
    %v12694 = vadd.f32 %v12692, %v12693
    %v12695 = vsel %vm5726, %v11344, 0.0
    %v12696 = vadd.f32 %v12694, %v12695
    %v12697 = vsel %vm5726, %v11352, 0.0
    %v12698 = vadd.f32 %v12696, %v12697
    %v12699 = vsel %vm5726, %v11351, 0.0
    %v12700 = vadd.f32 %v12698, %v12699
    %v12701 = vsel %vm5726, %v11353, 0.0
    %v12702 = vadd.f32 %v12700, %v12701
    %v12703 = vsel %vm5726, %v11361, 0.0
    %v12704 = vadd.f32 %v12702, %v12703
    %v12705 = vsel %vm5726, %v11369, 0.0
    %v12706 = vadd.f32 %v12704, %v12705
    %v12707 = vsel %vm5726, %v11368, 0.0
    %v12708 = vadd.f32 %v12706, %v12707
    %v12709 = vsel %vm5726, %v11370, 0.0
    %v12710 = vadd.f32 %v12708, %v12709
    %v12711 = vsel %vm5726, %v11378, 0.0
    %v12712 = vadd.f32 %v12710, %v12711
    %v12713 = vsel %vm5726, %v11386, 0.0
    %v12714 = vadd.f32 %v12712, %v12713
    %v12715 = vsel %vm5726, %v11385, 0.0
    %v12716 = vadd.f32 %v12714, %v12715
    %v12717 = vsel %vm5726, %v11387, 0.0
    %v12718 = vadd.f32 %v12716, %v12717
    %v12719 = vsel %vm5726, %v11395, 0.0
    %v12720 = vadd.f32 %v12718, %v12719
    %v12721 = vsel %vm5726, %v11403, 0.0
    %v12722 = vadd.f32 %v12720, %v12721
    %v12723 = vsel %vm5726, %v11402, 0.0
    %v12724 = vadd.f32 %v12722, %v12723
    %v12725 = vsel %vm5726, %v11404, 0.0
    %v12726 = vadd.f32 %v12724, %v12725
    %v12727 = vsel %vm5726, %v11412, 0.0
    %v12728 = vadd.f32 %v12726, %v12727
    %v12729 = vsel %vm5726, %v11420, 0.0
    %v12730 = vadd.f32 %v12728, %v12729
    %v12731 = vsel %vm5726, %v11419, 0.0
    %v12732 = vadd.f32 %v12730, %v12731
    %v12733 = vsel %vm5726, %v11421, 0.0
    %v12734 = vadd.f32 %v12732, %v12733
    %v12735 = vsel %vm5726, %v11429, 0.0
    %v12736 = vadd.f32 %v12734, %v12735
    %v12737 = vsel %vm5726, %v11437, 0.0
    %v12738 = vadd.f32 %v12736, %v12737
    %v12739 = vsel %vm5726, %v11436, 0.0
    %v12740 = vadd.f32 %v12738, %v12739
    %v12741 = vsel %vm5726, %v11438, 0.0
    %v12742 = vadd.f32 %v12740, %v12741
    %v12743 = vsel %vm5726, %v11446, 0.0
    %v12744 = vadd.f32 %v12742, %v12743
    %v12745 = vsel %vm5726, %v11454, 0.0
    %v12746 = vadd.f32 %v12744, %v12745
    %v12747 = vsel %vm5726, %v11453, 0.0
    %v12748 = vadd.f32 %v12746, %v12747
    %v12749 = vsel %vm5726, %v11455, 0.0
    %v12750 = vadd.f32 %v12748, %v12749
    %v12751 = vsel %vm5726, %v11463, 0.0
    %v12752 = vadd.f32 %v12750, %v12751
    %v12753 = vsel %vm5726, %v11471, 0.0
    %v12754 = vadd.f32 %v12752, %v12753
    %v12755 = vsel %vm5726, %v11470, 0.0
    %v12756 = vadd.f32 %v12754, %v12755
    %v12757 = vsel %vm5726, %v11472, 0.0
    %v12758 = vadd.f32 %v12756, %v12757
    %v12759 = vsel %vm5726, %v11480, 0.0
    %v12760 = vadd.f32 %v12758, %v12759
    %v12761 = vsel %vm5726, %v11488, 0.0
    %v12762 = vadd.f32 %v12760, %v12761
    %v12763 = vsel %vm5726, %v11487, 0.0
    %v12764 = vadd.f32 %v12762, %v12763
    %v12765 = vsel %vm5726, %v11489, 0.0
    %v12766 = vadd.f32 %v12764, %v12765
    %v12767 = vsel %vm5726, %v11497, 0.0
    %v12768 = vadd.f32 %v12766, %v12767
    %v12769 = vsel %vm5726, %v11505, 0.0
    %v12770 = vadd.f32 %v12768, %v12769
    %v12771 = vsel %vm5726, %v11504, 0.0
    %v12772 = vadd.f32 %v12770, %v12771
    %v12773 = vsel %vm5726, %v11506, 0.0
    %v12774 = vadd.f32 %v12772, %v12773
    %v12775 = vsel %vm5726, %v11514, 0.0
    %v12776 = vadd.f32 %v12774, %v12775
    %v12777 = vsel %vm5726, %v11522, 0.0
    %v12778 = vadd.f32 %v12776, %v12777
    %v12779 = vsel %vm5726, %v11521, 0.0
    %v12780 = vadd.f32 %v12778, %v12779
    %v12781 = vsel %vm5726, %v11523, 0.0
    %v12782 = vadd.f32 %v12780, %v12781
    %v12783 = vsel %vm5726, %v11531, 0.0
    %v12784 = vadd.f32 %v12782, %v12783
    %v12785 = vsel %vm5726, %v11539, 0.0
    %v12786 = vadd.f32 %v12784, %v12785
    %v12787 = vsel %vm5726, %v11538, 0.0
    %v12788 = vadd.f32 %v12786, %v12787
    %v12789 = vsel %vm5726, %v11540, 0.0
    %v12790 = vadd.f32 %v12788, %v12789
    %v12791 = vsel %vm5726, %v11548, 0.0
    %v12792 = vadd.f32 %v12790, %v12791
    %v12793 = vsel %vm5726, %v11556, 0.0
    %v12794 = vadd.f32 %v12792, %v12793
    %v12795 = vsel %vm5726, %v11555, 0.0
    %v12796 = vadd.f32 %v12794, %v12795
    %v12797 = vsel %vm5726, %v11557, 0.0
    %v12798 = vadd.f32 %v12796, %v12797
    %v12799 = vsel %vm5726, %v11565, 0.0
    %v12800 = vadd.f32 %v12798, %v12799
    %v12801 = vsel %vm5726, %v11573, 0.0
    %v12802 = vadd.f32 %v12800, %v12801
    %v12803 = vsel %vm5726, %v11572, 0.0
    %v12804 = vadd.f32 %v12802, %v12803
    %v12805 = vsel %vm5726, %v11574, 0.0
    %v12806 = vadd.f32 %v12804, %v12805
    %v12807 = vsel %vm5726, %v11582, 0.0
    %v12808 = vadd.f32 %v12806, %v12807
    %v12809 = vsel %vm5726, %v11590, 0.0
    %v12810 = vadd.f32 %v12808, %v12809
    %v12811 = vsel %vm5726, %v11589, 0.0
    %v12812 = vadd.f32 %v12810, %v12811
    %v12813 = vsel %vm5726, %v11591, 0.0
    %v12814 = vadd.f32 %v12812, %v12813
    %v12815 = vsel %vm5726, %v11599, 0.0
    %v12816 = vadd.f32 %v12814, %v12815
    %v12817 = vsel %vm5726, %v11607, 0.0
    %v12818 = vadd.f32 %v12816, %v12817
    %v12819 = vsel %vm5726, %v11606, 0.0
    %v12820 = vadd.f32 %v12818, %v12819
    %v12821 = vsel %vm5726, %v11608, 0.0
    %v12822 = vadd.f32 %v12820, %v12821
    %v12823 = vsel %vm5726, %v11616, 0.0
    %v12824 = vadd.f32 %v12822, %v12823
    %v12825 = vsel %vm5726, %v11624, 0.0
    %v12826 = vadd.f32 %v12824, %v12825
    %v12827 = vsel %vm5726, %v11623, 0.0
    %v12828 = vadd.f32 %v12826, %v12827
    %v12829 = vsel %vm5726, %v11625, 0.0
    %v12830 = vadd.f32 %v12828, %v12829
    %v12831 = vsel %vm5726, %v11633, 0.0
    %v12832 = vadd.f32 %v12830, %v12831
    %v12833 = vsel %vm5726, %v11641, 0.0
    %v12834 = vadd.f32 %v12832, %v12833
    %v12835 = vsel %vm5726, %v11640, 0.0
    %v12836 = vadd.f32 %v12834, %v12835
    %v12837 = vsel %vm5726, %v11642, 0.0
    %v12838 = vadd.f32 %v12836, %v12837
    %v12839 = vsel %vm5726, %v11650, 0.0
    %v12840 = vadd.f32 %v12838, %v12839
    %v12841 = vsel %vm5726, %v11658, 0.0
    %v12842 = vadd.f32 %v12840, %v12841
    %v12843 = vsel %vm5726, %v11657, 0.0
    %v12844 = vadd.f32 %v12842, %v12843
    %v12845 = vsel %vm5726, %v11659, 0.0
    %v12846 = vadd.f32 %v12844, %v12845
    %v12847 = vsel %vm5726, %v11667, 0.0
    %v12848 = vadd.f32 %v12846, %v12847
    %v12849 = vsel %vm5726, %v11675, 0.0
    %v12850 = vadd.f32 %v12848, %v12849
    %v12851 = vsel %vm5726, %v11674, 0.0
    %v12852 = vadd.f32 %v12850, %v12851
    %v12853 = vsel %vm5726, %v11676, 0.0
    %v12854 = vadd.f32 %v12852, %v12853
    %v12855 = vsel %vm5726, %v11684, 0.0
    %v12856 = vadd.f32 %v12854, %v12855
    %v12857 = vsel %vm5726, %v11692, 0.0
    %v12858 = vadd.f32 %v12856, %v12857
    %v12859 = vsel %vm5726, %v11691, 0.0
    %v12860 = vadd.f32 %v12858, %v12859
    %v12861 = vsel %vm5726, %v11693, 0.0
    %v12862 = vadd.f32 %v12860, %v12861
    %v12863 = vsel %vm5726, %v11701, 0.0
    %v12864 = vadd.f32 %v12862, %v12863
    %v12865 = vsel %vm5726, %v11709, 0.0
    %v12866 = vadd.f32 %v12864, %v12865
    %v12867 = vsel %vm5726, %v11708, 0.0
    %v12868 = vadd.f32 %v12866, %v12867
    %v12869 = vsel %vm5726, %v11710, 0.0
    %v12870 = vadd.f32 %v12868, %v12869
    %v12871 = vsel %vm5726, %v11718, 0.0
    %v12872 = vadd.f32 %v12870, %v12871
    %v12873 = vsel %vm5726, %v11726, 0.0
    %v12874 = vadd.f32 %v12872, %v12873
    %v12875 = vsel %vm5726, %v11725, 0.0
    %v12876 = vadd.f32 %v12874, %v12875
    %v12877 = vsel %vm5726, %v11727, 0.0
    %v12878 = vadd.f32 %v12876, %v12877
    %12879 = vadd.xlane.f32.xlu0 %v12878
    %v12880 = vpop.xlane.xlu0 %12879
    %v12881 = vlaneseq
    %v12882 = vand.u32 %v12881, 127
    %vm12883 = vcmp.eq.s32.totalorder %v12882, 0
    %v12884 = vsel %vm12883, %v6495, %v12880
    %v12885 = vld [vmem:[%s2] sm:$0x1]
    %v12887 = vlaneseq
    %v12888 = vshrl.u32 %v12887, 7
    %v12889 = vsub.s32 0, %v12888
    %v12890 = vrot.slane %v12885, %v12889
    %v12892 = vadd.f32 %v12884, %v12890
    %vm12893 = vcmask 9216
    %12894 = vst.msk [vmem:[#allocation2] sm:$0x3] %vm12893, %v12892
    // Predicated region
    $region14: #{dense_forward.1} parent=1 // pred_check
      _
    $region15: #{dense_forward.1} parent=1 // pred_check_branch
      %12896 = sbr.rel (0) target = $region17
    $region16: #{dense_forward.1} parent=1 // pred_region
      %s12898 = ssub.s32 32, 32
      %12899 = vsyncadd [#allocation3], %s12898
      %s12901 = sshll.u32 [#allocation2], 4
      %s12902 = int_to_ptr.vmem [resolvable:$true] %s12901
      %12904 = dma.vmem_to_hbm [thread:$0]  %s12902, 32, %s3, [#allocation3]
    $region17: #{dense_forward.1} parent=1 // pred_fallthru
      _
    // Predicated region
    $region18: #{dense_forward.1} parent=1 // pred_check
      _
    $region19: #{dense_forward.1} parent=1 // pred_check_branch
      %12906 = sbr.rel (0) target = $region21
    $region20: #{dense_forward.1} parent=1 // pred_region
      %12907 = dma.done [#allocation3], 32
    $region21: #{dense_forward.1} parent=1 // pred_fallthru
      _
    %12908 = vsyncpa [#allocation3], 1

</llo_original>
